<compile_context>
chip_gen: v6e
topology: v6e:2x2x1
jax: 0.10.0
libtpu: 0.0.40
codegen_flags: <defaults>
</compile_context>

<pallas_src>
import jax
import jax.numpy as jnp
from jax.experimental import pallas as pl
from jax.experimental.pallas import tpu as pltpu

# ---- model hyper-parameters (match the PyTorch __init__ defaults) ----
OBS_DIM    = 12
N_ACTIONS  = 6
SEQ_LEN    = 8
D_MODEL    = 64
NHEAD      = 4
NUM_LAYERS = 2
DIM_FF     = 2048          # nn.TransformerEncoderLayer default dim_feedforward
EPS        = 1e-5          # default layer_norm_eps
BATCH      = 2


def _layernorm(x, w, b):
    mu = jnp.mean(x, axis=-1, keepdims=True)
    var = jnp.mean((x - mu) ** 2, axis=-1, keepdims=True)
    return (x - mu) * jax.lax.rsqrt(var + EPS) * w + b


def transformer_qnet_kernel(x_ref, wi_ref, bi_ref,
                            wq_ref, bq_ref, wk_ref, bk_ref, wv_ref, bv_ref,
                            wo_ref, bo_ref,
                            ln1w_ref, ln1b_ref, ln2w_ref, ln2b_ref,
                            f1w_ref, f1b_ref, f2w_ref, f2b_ref,
                            hw_ref, hb_ref,
                            out_ref):
    B, S, D, H = BATCH, SEQ_LEN, D_MODEL, NHEAD
    hd = D // H
    scale = 1.0 / (hd ** 0.5)

    x = x_ref[...]                                   # (B*S, OBS_DIM) f32
    # input projection (weights pre-transposed: plain (M,K)x(K,N) matmul)
    z = jnp.dot(x, wi_ref[...], preferred_element_type=jnp.float32) + bi_ref[...]

    for l in range(NUM_LAYERS):
        # ---- multi-head self-attention (pre-split, pre-transposed bf16 qkv weights) ----
        zb = z.astype(jnp.bfloat16)
        q = jnp.dot(zb, wq_ref[l], preferred_element_type=jnp.float32) + bq_ref[l]
        k = jnp.dot(zb, wk_ref[l], preferred_element_type=jnp.float32) + bk_ref[l]
        v = jnp.dot(zb, wv_ref[l], preferred_element_type=jnp.float32) + bv_ref[l]

        head_outs = []
        for h in range(H):
            cols = slice(h * hd, (h + 1) * hd)
            qh = q[:, cols].reshape(B, S, hd)
            kh = k[:, cols].reshape(B, S, hd)
            vh = v[:, cols].reshape(B, S, hd)
            s = jnp.einsum('bqd,bkd->bqk', qh, kh,
                           preferred_element_type=jnp.float32) * scale
            s = s - jnp.max(s, axis=-1, keepdims=True)
            p = jnp.exp(s)
            p = p * pl.reciprocal(jnp.sum(p, axis=-1, keepdims=True), approx=True)
            oh = jnp.einsum('bqk,bkd->bqd', p, vh,
                            preferred_element_type=jnp.float32)        # (B, S, hd)
            head_outs.append(oh.reshape(B * S, hd))
        attn = jnp.concatenate(head_outs, axis=-1)                     # (B*S, D), in registers
        attn = jnp.dot(attn.astype(jnp.bfloat16), wo_ref[l],
                       preferred_element_type=jnp.float32) + bo_ref[l]

        # residual + norm1 (post-norm, norm_first=False) -- all f32
        z = _layernorm(z + attn, ln1w_ref[l], ln1b_ref[l])

        # ---- feed-forward (relu), bf16 weights / f32 accumulation ----
        ff = jnp.dot(z.astype(jnp.bfloat16), f1w_ref[l],
                     preferred_element_type=jnp.float32) + f1b_ref[l]
        ff = jnp.maximum(ff, 0.0)
        ff = jnp.dot(ff.astype(jnp.bfloat16), f2w_ref[l],
                     preferred_element_type=jnp.float32) + f2b_ref[l]

        # residual + norm2
        z = _layernorm(z + ff, ln2w_ref[l], ln2b_ref[l])

    # head applied only to the last token of each sequence -> (B, N_ACTIONS)
    last = jnp.concatenate([z[(b + 1) * S - 1:(b + 1) * S, :] for b in range(B)], axis=0)
    out_ref[...] = jnp.dot(last, hw_ref[...],
                           preferred_element_type=jnp.float32) + hb_ref[...]


def init_torch_params(key):
    """Parameters in the same shapes PyTorch uses (nn.Linear weight = (out, in))."""
    ks = jax.random.split(key, 12)

    def rn(k, shape, scale=0.05):
        return (scale * jax.random.normal(k, shape)).astype(jnp.float32)

    L, D, A = NUM_LAYERS, D_MODEL, N_ACTIONS
    return dict(
        wi=rn(ks[0], (D, OBS_DIM)),          bi=rn(ks[1], (D,)),
        in_w=rn(ks[2], (L, 3 * D, D)),       in_b=rn(ks[3], (L, 3 * D)),
        ow=rn(ks[4], (L, D, D)),             ob=rn(ks[5], (L, D)),
        ln1w=jnp.ones((L, D), jnp.float32),  ln1b=jnp.zeros((L, D), jnp.float32),
        ln2w=jnp.ones((L, D), jnp.float32),  ln2b=jnp.zeros((L, D), jnp.float32),
        f1w=rn(ks[6], (L, DIM_FF, D)),       f1b=rn(ks[7], (L, DIM_FF)),
        f2w=rn(ks[8], (L, D, DIM_FF)),       f2b=rn(ks[9], (L, D)),
        hw=rn(ks[10], (A, D)),               hb=rn(ks[11], (A,)),
    )


def prepare_params(p):
    """Wrapper-side layout plumbing (done once, outside the kernel): pre-transpose every
    weight, split the packed qkv projection per q/k/v, cast large weights to bf16."""
    L, D = NUM_LAYERS, D_MODEL
    bf16 = jnp.bfloat16
    wq = jnp.transpose(p['in_w'][:, 0 * D:1 * D, :], (0, 2, 1)).astype(bf16)
    wk = jnp.transpose(p['in_w'][:, 1 * D:2 * D, :], (0, 2, 1)).astype(bf16)
    wv = jnp.transpose(p['in_w'][:, 2 * D:3 * D, :], (0, 2, 1)).astype(bf16)
    bq = p['in_b'][:, 0 * D:1 * D].reshape(L, 1, D)
    bk = p['in_b'][:, 1 * D:2 * D].reshape(L, 1, D)
    bv = p['in_b'][:, 2 * D:3 * D].reshape(L, 1, D)
    return (
        p['wi'].T,                                      # (OBS_DIM, D) f32
        p['bi'].reshape(1, D),
        wq, bq, wk, bk, wv, bv,                         # (L, D, D) bf16 / (L, 1, D) f32
        jnp.transpose(p['ow'], (0, 2, 1)).astype(bf16), # (L, D, D) bf16
        p['ob'].reshape(L, 1, D),
        p['ln1w'].reshape(L, 1, D), p['ln1b'].reshape(L, 1, D),
        p['ln2w'].reshape(L, 1, D), p['ln2b'].reshape(L, 1, D),
        jnp.transpose(p['f1w'], (0, 2, 1)).astype(bf16),   # (L, D, DIM_FF) bf16
        p['f1b'].reshape(L, 1, DIM_FF),
        jnp.transpose(p['f2w'], (0, 2, 1)).astype(bf16),   # (L, DIM_FF, D) bf16
        p['f2b'].reshape(L, 1, D),
        p['hw'].T,                                      # (D, N_ACTIONS) f32
        p['hb'].reshape(1, N_ACTIONS),
    )


def transformer_qnet(x_seq, kernel_params):
    """x_seq: [B, S, obs_dim] float32 -> [B, n_actions] float32."""
    B, S, _ = x_seq.shape
    assert B == BATCH and S == SEQ_LEN
    x2d = x_seq.reshape(B * S, OBS_DIM)        # flatten in the wrapper (free in XLA)
    vmem = pl.BlockSpec(memory_space=pltpu.MemorySpace.VMEM)
    n_inputs = 1 + len(kernel_params)
    return pl.pallas_call(
        transformer_qnet_kernel,
        out_shape=jax.ShapeDtypeStruct((B, N_ACTIONS), jnp.float32),
        in_specs=[vmem] * n_inputs,
        out_specs=vmem,
    )(x2d, *kernel_params)


if __name__ == "__main__":
    key = jax.random.PRNGKey(0)
    k_x, k_p = jax.random.split(key)
    x_seq = jax.random.normal(k_x, (BATCH, SEQ_LEN, OBS_DIM), dtype=jnp.float32)
    params = prepare_params(init_torch_params(k_p))

    q_values = transformer_qnet(x_seq, params)
    q_values = jax.block_until_ready(q_values)

    assert q_values.shape == (BATCH, N_ACTIONS)
    assert bool(jnp.all(jnp.isfinite(q_values)))
    # TODO(synk): dropout inside TransformerEncoderLayer is treated as eval-mode identity.
    print("KERNEL_OK")
</pallas_src>

<mosaic_0001>
module attributes {stable_mosaic.version = 11 : i64} {
  func.func @transformer_qnet_kernel(%arg0: memref<16x12xf32, #tpu.memory_space<vmem>>, %arg1: memref<12x64xf32, #tpu.memory_space<vmem>>, %arg2: memref<1x64xf32, #tpu.memory_space<vmem>>, %arg3: memref<2x64x64xbf16, #tpu.memory_space<vmem>>, %arg4: memref<2x1x64xf32, #tpu.memory_space<vmem>>, %arg5: memref<2x64x64xbf16, #tpu.memory_space<vmem>>, %arg6: memref<2x1x64xf32, #tpu.memory_space<vmem>>, %arg7: memref<2x64x64xbf16, #tpu.memory_space<vmem>>, %arg8: memref<2x1x64xf32, #tpu.memory_space<vmem>>, %arg9: memref<2x64x64xbf16, #tpu.memory_space<vmem>>, %arg10: memref<2x1x64xf32, #tpu.memory_space<vmem>>, %arg11: memref<2x1x64xf32, #tpu.memory_space<vmem>>, %arg12: memref<2x1x64xf32, #tpu.memory_space<vmem>>, %arg13: memref<2x1x64xf32, #tpu.memory_space<vmem>>, %arg14: memref<2x1x64xf32, #tpu.memory_space<vmem>>, %arg15: memref<2x64x2048xbf16, #tpu.memory_space<vmem>>, %arg16: memref<2x1x2048xf32, #tpu.memory_space<vmem>>, %arg17: memref<2x2048x64xbf16, #tpu.memory_space<vmem>>, %arg18: memref<2x1x64xf32, #tpu.memory_space<vmem>>, %arg19: memref<64x6xf32, #tpu.memory_space<vmem>>, %arg20: memref<1x6xf32, #tpu.memory_space<vmem>>, %arg21: memref<2x6xf32, #tpu.memory_space<vmem>>) attributes {dimension_semantics = [], scalar_prefetch = 0 : i64, scratch_operands = 0 : i64, tpu.core_type = #tpu.core_type<tc>} {
    %c0 = arith.constant 0 : index
    %c0_0 = arith.constant 0 : index
    %0 = vector.load %arg0[%c0, %c0_0] : memref<16x12xf32, #tpu.memory_space<vmem>>, vector<16x12xf32>
    %c0_1 = arith.constant 0 : index
    %c0_2 = arith.constant 0 : index
    %1 = vector.load %arg1[%c0_1, %c0_2] : memref<12x64xf32, #tpu.memory_space<vmem>>, vector<12x64xf32>
    %cst = arith.constant dense<0.000000e+00> : vector<16x64xf32>
    %2 = tpu.matmul %0, %1, %cst {dimension_numbers = #tpu.dot_dimension_numbers<[1], [0], [0], [1], [0, 0, 1, 1], [], []>} : vector<16x12xf32>, vector<12x64xf32>, vector<16x64xf32> -> vector<16x64xf32>
    %c0_3 = arith.constant 0 : index
    %c0_4 = arith.constant 0 : index
    %3 = vector.load %arg2[%c0_3, %c0_4] : memref<1x64xf32, #tpu.memory_space<vmem>>, vector<1x64xf32>
    %4 = vector.broadcast %3 : vector<1x64xf32> to vector<16x64xf32>
    %5 = arith.addf %2, %4 : vector<16x64xf32>
    %6 = arith.truncf %5 : vector<16x64xf32> to vector<16x64xbf16>
    %c0_5 = arith.constant 0 : index
    %c0_6 = arith.constant 0 : index
    %c0_7 = arith.constant 0 : index
    %7 = vector.load %arg3[%c0_5, %c0_6, %c0_7] : memref<2x64x64xbf16, #tpu.memory_space<vmem>>, vector<1x64x64xbf16>
    %8 = vector.shape_cast %7 : vector<1x64x64xbf16> to vector<64x64xbf16>
    %cst_8 = arith.constant dense<0.000000e+00> : vector<16x64xf32>
    %9 = tpu.matmul %6, %8, %cst_8 {dimension_numbers = #tpu.dot_dimension_numbers<[1], [0], [0], [1], [0, 0, 1, 1], [], []>} : vector<16x64xbf16>, vector<64x64xbf16>, vector<16x64xf32> -> vector<16x64xf32>
    %c0_9 = arith.constant 0 : index
    %c0_10 = arith.constant 0 : index
    %c0_11 = arith.constant 0 : index
    %10 = vector.load %arg4[%c0_9, %c0_10, %c0_11] : memref<2x1x64xf32, #tpu.memory_space<vmem>>, vector<1x1x64xf32>
    %11 = vector.shape_cast %10 : vector<1x1x64xf32> to vector<1x64xf32>
    %12 = vector.broadcast %11 : vector<1x64xf32> to vector<16x64xf32>
    %13 = arith.addf %9, %12 : vector<16x64xf32>
    %c0_12 = arith.constant 0 : index
    %c0_13 = arith.constant 0 : index
    %c0_14 = arith.constant 0 : index
    %14 = vector.load %arg5[%c0_12, %c0_13, %c0_14] : memref<2x64x64xbf16, #tpu.memory_space<vmem>>, vector<1x64x64xbf16>
    %15 = vector.shape_cast %14 : vector<1x64x64xbf16> to vector<64x64xbf16>
    %cst_15 = arith.constant dense<0.000000e+00> : vector<16x64xf32>
    %16 = tpu.matmul %6, %15, %cst_15 {dimension_numbers = #tpu.dot_dimension_numbers<[1], [0], [0], [1], [0, 0, 1, 1], [], []>} : vector<16x64xbf16>, vector<64x64xbf16>, vector<16x64xf32> -> vector<16x64xf32>
    %c0_16 = arith.constant 0 : index
    %c0_17 = arith.constant 0 : index
    %c0_18 = arith.constant 0 : index
    %17 = vector.load %arg6[%c0_16, %c0_17, %c0_18] : memref<2x1x64xf32, #tpu.memory_space<vmem>>, vector<1x1x64xf32>
    %18 = vector.shape_cast %17 : vector<1x1x64xf32> to vector<1x64xf32>
    %19 = vector.broadcast %18 : vector<1x64xf32> to vector<16x64xf32>
    %20 = arith.addf %16, %19 : vector<16x64xf32>
    %c0_19 = arith.constant 0 : index
    %c0_20 = arith.constant 0 : index
    %c0_21 = arith.constant 0 : index
    %21 = vector.load %arg7[%c0_19, %c0_20, %c0_21] : memref<2x64x64xbf16, #tpu.memory_space<vmem>>, vector<1x64x64xbf16>
    %22 = vector.shape_cast %21 : vector<1x64x64xbf16> to vector<64x64xbf16>
    %cst_22 = arith.constant dense<0.000000e+00> : vector<16x64xf32>
    %23 = tpu.matmul %6, %22, %cst_22 {dimension_numbers = #tpu.dot_dimension_numbers<[1], [0], [0], [1], [0, 0, 1, 1], [], []>} : vector<16x64xbf16>, vector<64x64xbf16>, vector<16x64xf32> -> vector<16x64xf32>
    %c0_23 = arith.constant 0 : index
    %c0_24 = arith.constant 0 : index
    %c0_25 = arith.constant 0 : index
    %24 = vector.load %arg8[%c0_23, %c0_24, %c0_25] : memref<2x1x64xf32, #tpu.memory_space<vmem>>, vector<1x1x64xf32>
    %25 = vector.shape_cast %24 : vector<1x1x64xf32> to vector<1x64xf32>
    %26 = vector.broadcast %25 : vector<1x64xf32> to vector<16x64xf32>
    %27 = arith.addf %23, %26 : vector<16x64xf32>
    %28 = vector.extract_strided_slice %13 {offsets = [0, 0], sizes = [16, 16], strides = [1, 1]} : vector<16x64xf32> to vector<16x16xf32>
    %29 = vector.shape_cast %28 : vector<16x16xf32> to vector<2x8x16xf32>
    %30 = vector.extract_strided_slice %20 {offsets = [0, 0], sizes = [16, 16], strides = [1, 1]} : vector<16x64xf32> to vector<16x16xf32>
    %31 = vector.shape_cast %30 : vector<16x16xf32> to vector<2x8x16xf32>
    %32 = vector.extract_strided_slice %27 {offsets = [0, 0], sizes = [16, 16], strides = [1, 1]} : vector<16x64xf32> to vector<16x16xf32>
    %33 = vector.shape_cast %32 : vector<16x16xf32> to vector<2x8x16xf32>
    "tpu.trace_start"() <{level = 10 : i32, message = "bqd,bkd->bqk"}> : () -> ()
    %cst_26 = arith.constant dense<0.000000e+00> : vector<2x8x8xf32>
    %34 = tpu.matmul %29, %31, %cst_26 {dimension_numbers = #tpu.dot_dimension_numbers<[2], [2], [1], [1], [0, 0, 0, 1, 1, 1], [0], [0]>} : vector<2x8x16xf32>, vector<2x8x16xf32>, vector<2x8x8xf32> -> vector<2x8x8xf32>
    "tpu.trace_stop"() : () -> ()
    %cst_27 = arith.constant 2.500000e-01 : f32
    %35 = vector.broadcast %cst_27 : f32 to vector<2x8x8xf32>
    %36 = arith.mulf %34, %35 : vector<2x8x8xf32>
    %cst_28 = arith.constant dense<0xFF800000> : vector<2x8xf32>
    %37 = vector.multi_reduction <maximumf>, %36, %cst_28 [2] : vector<2x8x8xf32> to vector<2x8xf32>
    %38 = vector.shape_cast %37 : vector<2x8xf32> to vector<2x8x1xf32>
    %39 = vector.broadcast %38 : vector<2x8x1xf32> to vector<2x8x8xf32>
    %40 = arith.subf %36, %39 : vector<2x8x8xf32>
    %41 = math.exp %40 : vector<2x8x8xf32>
    %cst_29 = arith.constant dense<0.000000e+00> : vector<2x8xf32>
    %42 = vector.multi_reduction <add>, %41, %cst_29 [2] : vector<2x8x8xf32> to vector<2x8xf32>
    %43 = vector.shape_cast %42 : vector<2x8xf32> to vector<2x8x1xf32>
    %44 = tpu.reciprocal %43 {approx = true} : vector<2x8x1xf32> -> vector<2x8x1xf32>
    %45 = vector.broadcast %44 : vector<2x8x1xf32> to vector<2x8x8xf32>
    %46 = arith.mulf %41, %45 : vector<2x8x8xf32>
    "tpu.trace_start"() <{level = 10 : i32, message = "bqk,bkd->bqd"}> : () -> ()
    %cst_30 = arith.constant dense<0.000000e+00> : vector<2x8x16xf32>
    %47 = tpu.matmul %46, %33, %cst_30 {dimension_numbers = #tpu.dot_dimension_numbers<[2], [1], [1], [2], [0, 0, 0, 1, 1, 2], [0], [0]>} : vector<2x8x8xf32>, vector<2x8x16xf32>, vector<2x8x16xf32> -> vector<2x8x16xf32>
    "tpu.trace_stop"() : () -> ()
    %48 = vector.shape_cast %47 : vector<2x8x16xf32> to vector<16x16xf32>
    %49 = vector.extract_strided_slice %13 {offsets = [0, 16], sizes = [16, 16], strides = [1, 1]} : vector<16x64xf32> to vector<16x16xf32>
    %50 = vector.shape_cast %49 : vector<16x16xf32> to vector<2x8x16xf32>
    %51 = vector.extract_strided_slice %20 {offsets = [0, 16], sizes = [16, 16], strides = [1, 1]} : vector<16x64xf32> to vector<16x16xf32>
    %52 = vector.shape_cast %51 : vector<16x16xf32> to vector<2x8x16xf32>
    %53 = vector.extract_strided_slice %27 {offsets = [0, 16], sizes = [16, 16], strides = [1, 1]} : vector<16x64xf32> to vector<16x16xf32>
    %54 = vector.shape_cast %53 : vector<16x16xf32> to vector<2x8x16xf32>
    "tpu.trace_start"() <{level = 10 : i32, message = "bqd,bkd->bqk"}> : () -> ()
    %cst_31 = arith.constant dense<0.000000e+00> : vector<2x8x8xf32>
    %55 = tpu.matmul %50, %52, %cst_31 {dimension_numbers = #tpu.dot_dimension_numbers<[2], [2], [1], [1], [0, 0, 0, 1, 1, 1], [0], [0]>} : vector<2x8x16xf32>, vector<2x8x16xf32>, vector<2x8x8xf32> -> vector<2x8x8xf32>
    "tpu.trace_stop"() : () -> ()
    %cst_32 = arith.constant 2.500000e-01 : f32
    %56 = vector.broadcast %cst_32 : f32 to vector<2x8x8xf32>
    %57 = arith.mulf %55, %56 : vector<2x8x8xf32>
    %cst_33 = arith.constant dense<0xFF800000> : vector<2x8xf32>
    %58 = vector.multi_reduction <maximumf>, %57, %cst_33 [2] : vector<2x8x8xf32> to vector<2x8xf32>
    %59 = vector.shape_cast %58 : vector<2x8xf32> to vector<2x8x1xf32>
    %60 = vector.broadcast %59 : vector<2x8x1xf32> to vector<2x8x8xf32>
    %61 = arith.subf %57, %60 : vector<2x8x8xf32>
    %62 = math.exp %61 : vector<2x8x8xf32>
    %cst_34 = arith.constant dense<0.000000e+00> : vector<2x8xf32>
    %63 = vector.multi_reduction <add>, %62, %cst_34 [2] : vector<2x8x8xf32> to vector<2x8xf32>
    %64 = vector.shape_cast %63 : vector<2x8xf32> to vector<2x8x1xf32>
    %65 = tpu.reciprocal %64 {approx = true} : vector<2x8x1xf32> -> vector<2x8x1xf32>
    %66 = vector.broadcast %65 : vector<2x8x1xf32> to vector<2x8x8xf32>
    %67 = arith.mulf %62, %66 : vector<2x8x8xf32>
    "tpu.trace_start"() <{level = 10 : i32, message = "bqk,bkd->bqd"}> : () -> ()
    %cst_35 = arith.constant dense<0.000000e+00> : vector<2x8x16xf32>
    %68 = tpu.matmul %67, %54, %cst_35 {dimension_numbers = #tpu.dot_dimension_numbers<[2], [1], [1], [2], [0, 0, 0, 1, 1, 2], [0], [0]>} : vector<2x8x8xf32>, vector<2x8x16xf32>, vector<2x8x16xf32> -> vector<2x8x16xf32>
    "tpu.trace_stop"() : () -> ()
    %69 = vector.shape_cast %68 : vector<2x8x16xf32> to vector<16x16xf32>
    %70 = vector.extract_strided_slice %13 {offsets = [0, 32], sizes = [16, 16], strides = [1, 1]} : vector<16x64xf32> to vector<16x16xf32>
    %71 = vector.shape_cast %70 : vector<16x16xf32> to vector<2x8x16xf32>
    %72 = vector.extract_strided_slice %20 {offsets = [0, 32], sizes = [16, 16], strides = [1, 1]} : vector<16x64xf32> to vector<16x16xf32>
    %73 = vector.shape_cast %72 : vector<16x16xf32> to vector<2x8x16xf32>
    %74 = vector.extract_strided_slice %27 {offsets = [0, 32], sizes = [16, 16], strides = [1, 1]} : vector<16x64xf32> to vector<16x16xf32>
    %75 = vector.shape_cast %74 : vector<16x16xf32> to vector<2x8x16xf32>
    "tpu.trace_start"() <{level = 10 : i32, message = "bqd,bkd->bqk"}> : () -> ()
    %cst_36 = arith.constant dense<0.000000e+00> : vector<2x8x8xf32>
    %76 = tpu.matmul %71, %73, %cst_36 {dimension_numbers = #tpu.dot_dimension_numbers<[2], [2], [1], [1], [0, 0, 0, 1, 1, 1], [0], [0]>} : vector<2x8x16xf32>, vector<2x8x16xf32>, vector<2x8x8xf32> -> vector<2x8x8xf32>
    "tpu.trace_stop"() : () -> ()
    %cst_37 = arith.constant 2.500000e-01 : f32
    %77 = vector.broadcast %cst_37 : f32 to vector<2x8x8xf32>
    %78 = arith.mulf %76, %77 : vector<2x8x8xf32>
    %cst_38 = arith.constant dense<0xFF800000> : vector<2x8xf32>
    %79 = vector.multi_reduction <maximumf>, %78, %cst_38 [2] : vector<2x8x8xf32> to vector<2x8xf32>
    %80 = vector.shape_cast %79 : vector<2x8xf32> to vector<2x8x1xf32>
    %81 = vector.broadcast %80 : vector<2x8x1xf32> to vector<2x8x8xf32>
    %82 = arith.subf %78, %81 : vector<2x8x8xf32>
    %83 = math.exp %82 : vector<2x8x8xf32>
    %cst_39 = arith.constant dense<0.000000e+00> : vector<2x8xf32>
    %84 = vector.multi_reduction <add>, %83, %cst_39 [2] : vector<2x8x8xf32> to vector<2x8xf32>
    %85 = vector.shape_cast %84 : vector<2x8xf32> to vector<2x8x1xf32>
    %86 = tpu.reciprocal %85 {approx = true} : vector<2x8x1xf32> -> vector<2x8x1xf32>
    %87 = vector.broadcast %86 : vector<2x8x1xf32> to vector<2x8x8xf32>
    %88 = arith.mulf %83, %87 : vector<2x8x8xf32>
    "tpu.trace_start"() <{level = 10 : i32, message = "bqk,bkd->bqd"}> : () -> ()
    %cst_40 = arith.constant dense<0.000000e+00> : vector<2x8x16xf32>
    %89 = tpu.matmul %88, %75, %cst_40 {dimension_numbers = #tpu.dot_dimension_numbers<[2], [1], [1], [2], [0, 0, 0, 1, 1, 2], [0], [0]>} : vector<2x8x8xf32>, vector<2x8x16xf32>, vector<2x8x16xf32> -> vector<2x8x16xf32>
    "tpu.trace_stop"() : () -> ()
    %90 = vector.shape_cast %89 : vector<2x8x16xf32> to vector<16x16xf32>
    %91 = vector.extract_strided_slice %13 {offsets = [0, 48], sizes = [16, 16], strides = [1, 1]} : vector<16x64xf32> to vector<16x16xf32>
    %92 = vector.shape_cast %91 : vector<16x16xf32> to vector<2x8x16xf32>
    %93 = vector.extract_strided_slice %20 {offsets = [0, 48], sizes = [16, 16], strides = [1, 1]} : vector<16x64xf32> to vector<16x16xf32>
    %94 = vector.shape_cast %93 : vector<16x16xf32> to vector<2x8x16xf32>
    %95 = vector.extract_strided_slice %27 {offsets = [0, 48], sizes = [16, 16], strides = [1, 1]} : vector<16x64xf32> to vector<16x16xf32>
    %96 = vector.shape_cast %95 : vector<16x16xf32> to vector<2x8x16xf32>
    "tpu.trace_start"() <{level = 10 : i32, message = "bqd,bkd->bqk"}> : () -> ()
    %cst_41 = arith.constant dense<0.000000e+00> : vector<2x8x8xf32>
    %97 = tpu.matmul %92, %94, %cst_41 {dimension_numbers = #tpu.dot_dimension_numbers<[2], [2], [1], [1], [0, 0, 0, 1, 1, 1], [0], [0]>} : vector<2x8x16xf32>, vector<2x8x16xf32>, vector<2x8x8xf32> -> vector<2x8x8xf32>
    "tpu.trace_stop"() : () -> ()
    %cst_42 = arith.constant 2.500000e-01 : f32
    %98 = vector.broadcast %cst_42 : f32 to vector<2x8x8xf32>
    %99 = arith.mulf %97, %98 : vector<2x8x8xf32>
    %cst_43 = arith.constant dense<0xFF800000> : vector<2x8xf32>
    %100 = vector.multi_reduction <maximumf>, %99, %cst_43 [2] : vector<2x8x8xf32> to vector<2x8xf32>
    %101 = vector.shape_cast %100 : vector<2x8xf32> to vector<2x8x1xf32>
    %102 = vector.broadcast %101 : vector<2x8x1xf32> to vector<2x8x8xf32>
    %103 = arith.subf %99, %102 : vector<2x8x8xf32>
    %104 = math.exp %103 : vector<2x8x8xf32>
    %cst_44 = arith.constant dense<0.000000e+00> : vector<2x8xf32>
    %105 = vector.multi_reduction <add>, %104, %cst_44 [2] : vector<2x8x8xf32> to vector<2x8xf32>
    %106 = vector.shape_cast %105 : vector<2x8xf32> to vector<2x8x1xf32>
    %107 = tpu.reciprocal %106 {approx = true} : vector<2x8x1xf32> -> vector<2x8x1xf32>
    %108 = vector.broadcast %107 : vector<2x8x1xf32> to vector<2x8x8xf32>
    %109 = arith.mulf %104, %108 : vector<2x8x8xf32>
    "tpu.trace_start"() <{level = 10 : i32, message = "bqk,bkd->bqd"}> : () -> ()
    %cst_45 = arith.constant dense<0.000000e+00> : vector<2x8x16xf32>
    %110 = tpu.matmul %109, %96, %cst_45 {dimension_numbers = #tpu.dot_dimension_numbers<[2], [1], [1], [2], [0, 0, 0, 1, 1, 2], [0], [0]>} : vector<2x8x8xf32>, vector<2x8x16xf32>, vector<2x8x16xf32> -> vector<2x8x16xf32>
    "tpu.trace_stop"() : () -> ()
    %111 = vector.shape_cast %110 : vector<2x8x16xf32> to vector<16x16xf32>
    %112 = tpu.concatenate %48, %69, %90, %111 in 1 : vector<16x16xf32>, vector<16x16xf32>, vector<16x16xf32>, vector<16x16xf32> -> vector<16x64xf32>
    %113 = arith.truncf %112 : vector<16x64xf32> to vector<16x64xbf16>
    %c0_46 = arith.constant 0 : index
    %c0_47 = arith.constant 0 : index
    %c0_48 = arith.constant 0 : index
    %114 = vector.load %arg9[%c0_46, %c0_47, %c0_48] : memref<2x64x64xbf16, #tpu.memory_space<vmem>>, vector<1x64x64xbf16>
    %115 = vector.shape_cast %114 : vector<1x64x64xbf16> to vector<64x64xbf16>
    %cst_49 = arith.constant dense<0.000000e+00> : vector<16x64xf32>
    %116 = tpu.matmul %113, %115, %cst_49 {dimension_numbers = #tpu.dot_dimension_numbers<[1], [0], [0], [1], [0, 0, 1, 1], [], []>} : vector<16x64xbf16>, vector<64x64xbf16>, vector<16x64xf32> -> vector<16x64xf32>
    %c0_50 = arith.constant 0 : index
    %c0_51 = arith.constant 0 : index
    %c0_52 = arith.constant 0 : index
    %117 = vector.load %arg10[%c0_50, %c0_51, %c0_52] : memref<2x1x64xf32, #tpu.memory_space<vmem>>, vector<1x1x64xf32>
    %118 = vector.shape_cast %117 : vector<1x1x64xf32> to vector<1x64xf32>
    %119 = vector.broadcast %118 : vector<1x64xf32> to vector<16x64xf32>
    %120 = arith.addf %116, %119 : vector<16x64xf32>
    %121 = arith.addf %5, %120 : vector<16x64xf32>
    %c0_53 = arith.constant 0 : index
    %c0_54 = arith.constant 0 : index
    %c0_55 = arith.constant 0 : index
    %122 = vector.load %arg11[%c0_53, %c0_54, %c0_55] : memref<2x1x64xf32, #tpu.memory_space<vmem>>, vector<1x1x64xf32>
    %123 = vector.shape_cast %122 : vector<1x1x64xf32> to vector<1x64xf32>
    %c0_56 = arith.constant 0 : index
    %c0_57 = arith.constant 0 : index
    %c0_58 = arith.constant 0 : index
    %124 = vector.load %arg12[%c0_56, %c0_57, %c0_58] : memref<2x1x64xf32, #tpu.memory_space<vmem>>, vector<1x1x64xf32>
    %125 = vector.shape_cast %124 : vector<1x1x64xf32> to vector<1x64xf32>
    %cst_59 = arith.constant dense<0.000000e+00> : vector<16xf32>
    %126 = vector.multi_reduction <add>, %121, %cst_59 [1] : vector<16x64xf32> to vector<16xf32>
    %127 = vector.shape_cast %126 : vector<16xf32> to vector<16x1xf32>
    %cst_60 = arith.constant 6.400000e+01 : f32
    %128 = vector.broadcast %cst_60 : f32 to vector<16x1xf32>
    %129 = arith.divf %127, %128 : vector<16x1xf32>
    %130 = vector.broadcast %129 : vector<16x1xf32> to vector<16x64xf32>
    %131 = arith.subf %121, %130 : vector<16x64xf32>
    %132 = arith.mulf %131, %131 : vector<16x64xf32>
    %cst_61 = arith.constant dense<0.000000e+00> : vector<16xf32>
    %133 = vector.multi_reduction <add>, %132, %cst_61 [1] : vector<16x64xf32> to vector<16xf32>
    %134 = vector.shape_cast %133 : vector<16xf32> to vector<16x1xf32>
    %cst_62 = arith.constant 6.400000e+01 : f32
    %135 = vector.broadcast %cst_62 : f32 to vector<16x1xf32>
    %136 = arith.divf %134, %135 : vector<16x1xf32>
    %137 = vector.broadcast %129 : vector<16x1xf32> to vector<16x64xf32>
    %138 = arith.subf %121, %137 : vector<16x64xf32>
    %cst_63 = arith.constant 9.99999974E-6 : f32
    %139 = vector.broadcast %cst_63 : f32 to vector<16x1xf32>
    %140 = arith.addf %136, %139 : vector<16x1xf32>
    %141 = math.rsqrt %140 : vector<16x1xf32>
    %142 = vector.broadcast %141 : vector<16x1xf32> to vector<16x64xf32>
    %143 = arith.mulf %138, %142 : vector<16x64xf32>
    %144 = vector.broadcast %123 : vector<1x64xf32> to vector<16x64xf32>
    %145 = arith.mulf %143, %144 : vector<16x64xf32>
    %146 = vector.broadcast %125 : vector<1x64xf32> to vector<16x64xf32>
    %147 = arith.addf %145, %146 : vector<16x64xf32>
    %148 = arith.truncf %147 : vector<16x64xf32> to vector<16x64xbf16>
    %c0_64 = arith.constant 0 : index
    %c0_65 = arith.constant 0 : index
    %c0_66 = arith.constant 0 : index
    %149 = vector.load %arg15[%c0_64, %c0_65, %c0_66] : memref<2x64x2048xbf16, #tpu.memory_space<vmem>>, vector<1x64x2048xbf16>
    %150 = vector.shape_cast %149 : vector<1x64x2048xbf16> to vector<64x2048xbf16>
    %cst_67 = arith.constant dense<0.000000e+00> : vector<16x2048xf32>
    %151 = tpu.matmul %148, %150, %cst_67 {dimension_numbers = #tpu.dot_dimension_numbers<[1], [0], [0], [1], [0, 0, 1, 1], [], []>} : vector<16x64xbf16>, vector<64x2048xbf16>, vector<16x2048xf32> -> vector<16x2048xf32>
    %c0_68 = arith.constant 0 : index
    %c0_69 = arith.constant 0 : index
    %c0_70 = arith.constant 0 : index
    %152 = vector.load %arg16[%c0_68, %c0_69, %c0_70] : memref<2x1x2048xf32, #tpu.memory_space<vmem>>, vector<1x1x2048xf32>
    %153 = vector.shape_cast %152 : vector<1x1x2048xf32> to vector<1x2048xf32>
    %154 = vector.broadcast %153 : vector<1x2048xf32> to vector<16x2048xf32>
    %155 = arith.addf %151, %154 : vector<16x2048xf32>
    %cst_71 = arith.constant 0.000000e+00 : f32
    %156 = vector.broadcast %cst_71 : f32 to vector<16x2048xf32>
    %157 = arith.maximumf %155, %156 : vector<16x2048xf32>
    %158 = arith.truncf %157 : vector<16x2048xf32> to vector<16x2048xbf16>
    %c0_72 = arith.constant 0 : index
    %c0_73 = arith.constant 0 : index
    %c0_74 = arith.constant 0 : index
    %159 = vector.load %arg17[%c0_72, %c0_73, %c0_74] : memref<2x2048x64xbf16, #tpu.memory_space<vmem>>, vector<1x2048x64xbf16>
    %160 = vector.shape_cast %159 : vector<1x2048x64xbf16> to vector<2048x64xbf16>
    %cst_75 = arith.constant dense<0.000000e+00> : vector<16x64xf32>
    %161 = tpu.matmul %158, %160, %cst_75 {dimension_numbers = #tpu.dot_dimension_numbers<[1], [0], [0], [1], [0, 0, 1, 1], [], []>} : vector<16x2048xbf16>, vector<2048x64xbf16>, vector<16x64xf32> -> vector<16x64xf32>
    %c0_76 = arith.constant 0 : index
    %c0_77 = arith.constant 0 : index
    %c0_78 = arith.constant 0 : index
    %162 = vector.load %arg18[%c0_76, %c0_77, %c0_78] : memref<2x1x64xf32, #tpu.memory_space<vmem>>, vector<1x1x64xf32>
    %163 = vector.shape_cast %162 : vector<1x1x64xf32> to vector<1x64xf32>
    %164 = vector.broadcast %163 : vector<1x64xf32> to vector<16x64xf32>
    %165 = arith.addf %161, %164 : vector<16x64xf32>
    %166 = arith.addf %147, %165 : vector<16x64xf32>
    %c0_79 = arith.constant 0 : index
    %c0_80 = arith.constant 0 : index
    %c0_81 = arith.constant 0 : index
    %167 = vector.load %arg13[%c0_79, %c0_80, %c0_81] : memref<2x1x64xf32, #tpu.memory_space<vmem>>, vector<1x1x64xf32>
    %168 = vector.shape_cast %167 : vector<1x1x64xf32> to vector<1x64xf32>
    %c0_82 = arith.constant 0 : index
    %c0_83 = arith.constant 0 : index
    %c0_84 = arith.constant 0 : index
    %169 = vector.load %arg14[%c0_82, %c0_83, %c0_84] : memref<2x1x64xf32, #tpu.memory_space<vmem>>, vector<1x1x64xf32>
    %170 = vector.shape_cast %169 : vector<1x1x64xf32> to vector<1x64xf32>
    %cst_85 = arith.constant dense<0.000000e+00> : vector<16xf32>
    %171 = vector.multi_reduction <add>, %166, %cst_85 [1] : vector<16x64xf32> to vector<16xf32>
    %172 = vector.shape_cast %171 : vector<16xf32> to vector<16x1xf32>
    %cst_86 = arith.constant 6.400000e+01 : f32
    %173 = vector.broadcast %cst_86 : f32 to vector<16x1xf32>
    %174 = arith.divf %172, %173 : vector<16x1xf32>
    %175 = vector.broadcast %174 : vector<16x1xf32> to vector<16x64xf32>
    %176 = arith.subf %166, %175 : vector<16x64xf32>
    %177 = arith.mulf %176, %176 : vector<16x64xf32>
    %cst_87 = arith.constant dense<0.000000e+00> : vector<16xf32>
    %178 = vector.multi_reduction <add>, %177, %cst_87 [1] : vector<16x64xf32> to vector<16xf32>
    %179 = vector.shape_cast %178 : vector<16xf32> to vector<16x1xf32>
    %cst_88 = arith.constant 6.400000e+01 : f32
    %180 = vector.broadcast %cst_88 : f32 to vector<16x1xf32>
    %181 = arith.divf %179, %180 : vector<16x1xf32>
    %182 = vector.broadcast %174 : vector<16x1xf32> to vector<16x64xf32>
    %183 = arith.subf %166, %182 : vector<16x64xf32>
    %cst_89 = arith.constant 9.99999974E-6 : f32
    %184 = vector.broadcast %cst_89 : f32 to vector<16x1xf32>
    %185 = arith.addf %181, %184 : vector<16x1xf32>
    %186 = math.rsqrt %185 : vector<16x1xf32>
    %187 = vector.broadcast %186 : vector<16x1xf32> to vector<16x64xf32>
    %188 = arith.mulf %183, %187 : vector<16x64xf32>
    %189 = vector.broadcast %168 : vector<1x64xf32> to vector<16x64xf32>
    %190 = arith.mulf %188, %189 : vector<16x64xf32>
    %191 = vector.broadcast %170 : vector<1x64xf32> to vector<16x64xf32>
    %192 = arith.addf %190, %191 : vector<16x64xf32>
    %193 = arith.truncf %192 : vector<16x64xf32> to vector<16x64xbf16>
    %c1 = arith.constant 1 : index
    %c0_90 = arith.constant 0 : index
    %c0_91 = arith.constant 0 : index
    %194 = vector.load %arg3[%c1, %c0_90, %c0_91] : memref<2x64x64xbf16, #tpu.memory_space<vmem>>, vector<1x64x64xbf16>
    %195 = vector.shape_cast %194 : vector<1x64x64xbf16> to vector<64x64xbf16>
    %cst_92 = arith.constant dense<0.000000e+00> : vector<16x64xf32>
    %196 = tpu.matmul %193, %195, %cst_92 {dimension_numbers = #tpu.dot_dimension_numbers<[1], [0], [0], [1], [0, 0, 1, 1], [], []>} : vector<16x64xbf16>, vector<64x64xbf16>, vector<16x64xf32> -> vector<16x64xf32>
    %c1_93 = arith.constant 1 : index
    %c0_94 = arith.constant 0 : index
    %c0_95 = arith.constant 0 : index
    %197 = vector.load %arg4[%c1_93, %c0_94, %c0_95] : memref<2x1x64xf32, #tpu.memory_space<vmem>>, vector<1x1x64xf32>
    %198 = vector.shape_cast %197 : vector<1x1x64xf32> to vector<1x64xf32>
    %199 = vector.broadcast %198 : vector<1x64xf32> to vector<16x64xf32>
    %200 = arith.addf %196, %199 : vector<16x64xf32>
    %c1_96 = arith.constant 1 : index
    %c0_97 = arith.constant 0 : index
    %c0_98 = arith.constant 0 : index
    %201 = vector.load %arg5[%c1_96, %c0_97, %c0_98] : memref<2x64x64xbf16, #tpu.memory_space<vmem>>, vector<1x64x64xbf16>
    %202 = vector.shape_cast %201 : vector<1x64x64xbf16> to vector<64x64xbf16>
    %cst_99 = arith.constant dense<0.000000e+00> : vector<16x64xf32>
    %203 = tpu.matmul %193, %202, %cst_99 {dimension_numbers = #tpu.dot_dimension_numbers<[1], [0], [0], [1], [0, 0, 1, 1], [], []>} : vector<16x64xbf16>, vector<64x64xbf16>, vector<16x64xf32> -> vector<16x64xf32>
    %c1_100 = arith.constant 1 : index
    %c0_101 = arith.constant 0 : index
    %c0_102 = arith.constant 0 : index
    %204 = vector.load %arg6[%c1_100, %c0_101, %c0_102] : memref<2x1x64xf32, #tpu.memory_space<vmem>>, vector<1x1x64xf32>
    %205 = vector.shape_cast %204 : vector<1x1x64xf32> to vector<1x64xf32>
    %206 = vector.broadcast %205 : vector<1x64xf32> to vector<16x64xf32>
    %207 = arith.addf %203, %206 : vector<16x64xf32>
    %c1_103 = arith.constant 1 : index
    %c0_104 = arith.constant 0 : index
    %c0_105 = arith.constant 0 : index
    %208 = vector.load %arg7[%c1_103, %c0_104, %c0_105] : memref<2x64x64xbf16, #tpu.memory_space<vmem>>, vector<1x64x64xbf16>
    %209 = vector.shape_cast %208 : vector<1x64x64xbf16> to vector<64x64xbf16>
    %cst_106 = arith.constant dense<0.000000e+00> : vector<16x64xf32>
    %210 = tpu.matmul %193, %209, %cst_106 {dimension_numbers = #tpu.dot_dimension_numbers<[1], [0], [0], [1], [0, 0, 1, 1], [], []>} : vector<16x64xbf16>, vector<64x64xbf16>, vector<16x64xf32> -> vector<16x64xf32>
    %c1_107 = arith.constant 1 : index
    %c0_108 = arith.constant 0 : index
    %c0_109 = arith.constant 0 : index
    %211 = vector.load %arg8[%c1_107, %c0_108, %c0_109] : memref<2x1x64xf32, #tpu.memory_space<vmem>>, vector<1x1x64xf32>
    %212 = vector.shape_cast %211 : vector<1x1x64xf32> to vector<1x64xf32>
    %213 = vector.broadcast %212 : vector<1x64xf32> to vector<16x64xf32>
    %214 = arith.addf %210, %213 : vector<16x64xf32>
    %215 = vector.extract_strided_slice %200 {offsets = [0, 0], sizes = [16, 16], strides = [1, 1]} : vector<16x64xf32> to vector<16x16xf32>
    %216 = vector.shape_cast %215 : vector<16x16xf32> to vector<2x8x16xf32>
    %217 = vector.extract_strided_slice %207 {offsets = [0, 0], sizes = [16, 16], strides = [1, 1]} : vector<16x64xf32> to vector<16x16xf32>
    %218 = vector.shape_cast %217 : vector<16x16xf32> to vector<2x8x16xf32>
    %219 = vector.extract_strided_slice %214 {offsets = [0, 0], sizes = [16, 16], strides = [1, 1]} : vector<16x64xf32> to vector<16x16xf32>
    %220 = vector.shape_cast %219 : vector<16x16xf32> to vector<2x8x16xf32>
    "tpu.trace_start"() <{level = 10 : i32, message = "bqd,bkd->bqk"}> : () -> ()
    %cst_110 = arith.constant dense<0.000000e+00> : vector<2x8x8xf32>
    %221 = tpu.matmul %216, %218, %cst_110 {dimension_numbers = #tpu.dot_dimension_numbers<[2], [2], [1], [1], [0, 0, 0, 1, 1, 1], [0], [0]>} : vector<2x8x16xf32>, vector<2x8x16xf32>, vector<2x8x8xf32> -> vector<2x8x8xf32>
    "tpu.trace_stop"() : () -> ()
    %cst_111 = arith.constant 2.500000e-01 : f32
    %222 = vector.broadcast %cst_111 : f32 to vector<2x8x8xf32>
    %223 = arith.mulf %221, %222 : vector<2x8x8xf32>
    %cst_112 = arith.constant dense<0xFF800000> : vector<2x8xf32>
    %224 = vector.multi_reduction <maximumf>, %223, %cst_112 [2] : vector<2x8x8xf32> to vector<2x8xf32>
    %225 = vector.shape_cast %224 : vector<2x8xf32> to vector<2x8x1xf32>
    %226 = vector.broadcast %225 : vector<2x8x1xf32> to vector<2x8x8xf32>
    %227 = arith.subf %223, %226 : vector<2x8x8xf32>
    %228 = math.exp %227 : vector<2x8x8xf32>
    %cst_113 = arith.constant dense<0.000000e+00> : vector<2x8xf32>
    %229 = vector.multi_reduction <add>, %228, %cst_113 [2] : vector<2x8x8xf32> to vector<2x8xf32>
    %230 = vector.shape_cast %229 : vector<2x8xf32> to vector<2x8x1xf32>
    %231 = tpu.reciprocal %230 {approx = true} : vector<2x8x1xf32> -> vector<2x8x1xf32>
    %232 = vector.broadcast %231 : vector<2x8x1xf32> to vector<2x8x8xf32>
    %233 = arith.mulf %228, %232 : vector<2x8x8xf32>
    "tpu.trace_start"() <{level = 10 : i32, message = "bqk,bkd->bqd"}> : () -> ()
    %cst_114 = arith.constant dense<0.000000e+00> : vector<2x8x16xf32>
    %234 = tpu.matmul %233, %220, %cst_114 {dimension_numbers = #tpu.dot_dimension_numbers<[2], [1], [1], [2], [0, 0, 0, 1, 1, 2], [0], [0]>} : vector<2x8x8xf32>, vector<2x8x16xf32>, vector<2x8x16xf32> -> vector<2x8x16xf32>
    "tpu.trace_stop"() : () -> ()
    %235 = vector.shape_cast %234 : vector<2x8x16xf32> to vector<16x16xf32>
    %236 = vector.extract_strided_slice %200 {offsets = [0, 16], sizes = [16, 16], strides = [1, 1]} : vector<16x64xf32> to vector<16x16xf32>
    %237 = vector.shape_cast %236 : vector<16x16xf32> to vector<2x8x16xf32>
    %238 = vector.extract_strided_slice %207 {offsets = [0, 16], sizes = [16, 16], strides = [1, 1]} : vector<16x64xf32> to vector<16x16xf32>
    %239 = vector.shape_cast %238 : vector<16x16xf32> to vector<2x8x16xf32>
    %240 = vector.extract_strided_slice %214 {offsets = [0, 16], sizes = [16, 16], strides = [1, 1]} : vector<16x64xf32> to vector<16x16xf32>
    %241 = vector.shape_cast %240 : vector<16x16xf32> to vector<2x8x16xf32>
    "tpu.trace_start"() <{level = 10 : i32, message = "bqd,bkd->bqk"}> : () -> ()
    %cst_115 = arith.constant dense<0.000000e+00> : vector<2x8x8xf32>
    %242 = tpu.matmul %237, %239, %cst_115 {dimension_numbers = #tpu.dot_dimension_numbers<[2], [2], [1], [1], [0, 0, 0, 1, 1, 1], [0], [0]>} : vector<2x8x16xf32>, vector<2x8x16xf32>, vector<2x8x8xf32> -> vector<2x8x8xf32>
    "tpu.trace_stop"() : () -> ()
    %cst_116 = arith.constant 2.500000e-01 : f32
    %243 = vector.broadcast %cst_116 : f32 to vector<2x8x8xf32>
    %244 = arith.mulf %242, %243 : vector<2x8x8xf32>
    %cst_117 = arith.constant dense<0xFF800000> : vector<2x8xf32>
    %245 = vector.multi_reduction <maximumf>, %244, %cst_117 [2] : vector<2x8x8xf32> to vector<2x8xf32>
    %246 = vector.shape_cast %245 : vector<2x8xf32> to vector<2x8x1xf32>
    %247 = vector.broadcast %246 : vector<2x8x1xf32> to vector<2x8x8xf32>
    %248 = arith.subf %244, %247 : vector<2x8x8xf32>
    %249 = math.exp %248 : vector<2x8x8xf32>
    %cst_118 = arith.constant dense<0.000000e+00> : vector<2x8xf32>
    %250 = vector.multi_reduction <add>, %249, %cst_118 [2] : vector<2x8x8xf32> to vector<2x8xf32>
    %251 = vector.shape_cast %250 : vector<2x8xf32> to vector<2x8x1xf32>
    %252 = tpu.reciprocal %251 {approx = true} : vector<2x8x1xf32> -> vector<2x8x1xf32>
    %253 = vector.broadcast %252 : vector<2x8x1xf32> to vector<2x8x8xf32>
    %254 = arith.mulf %249, %253 : vector<2x8x8xf32>
    "tpu.trace_start"() <{level = 10 : i32, message = "bqk,bkd->bqd"}> : () -> ()
    %cst_119 = arith.constant dense<0.000000e+00> : vector<2x8x16xf32>
    %255 = tpu.matmul %254, %241, %cst_119 {dimension_numbers = #tpu.dot_dimension_numbers<[2], [1], [1], [2], [0, 0, 0, 1, 1, 2], [0], [0]>} : vector<2x8x8xf32>, vector<2x8x16xf32>, vector<2x8x16xf32> -> vector<2x8x16xf32>
    "tpu.trace_stop"() : () -> ()
    %256 = vector.shape_cast %255 : vector<2x8x16xf32> to vector<16x16xf32>
    %257 = vector.extract_strided_slice %200 {offsets = [0, 32], sizes = [16, 16], strides = [1, 1]} : vector<16x64xf32> to vector<16x16xf32>
    %258 = vector.shape_cast %257 : vector<16x16xf32> to vector<2x8x16xf32>
    %259 = vector.extract_strided_slice %207 {offsets = [0, 32], sizes = [16, 16], strides = [1, 1]} : vector<16x64xf32> to vector<16x16xf32>
    %260 = vector.shape_cast %259 : vector<16x16xf32> to vector<2x8x16xf32>
    %261 = vector.extract_strided_slice %214 {offsets = [0, 32], sizes = [16, 16], strides = [1, 1]} : vector<16x64xf32> to vector<16x16xf32>
    %262 = vector.shape_cast %261 : vector<16x16xf32> to vector<2x8x16xf32>
    "tpu.trace_start"() <{level = 10 : i32, message = "bqd,bkd->bqk"}> : () -> ()
    %cst_120 = arith.constant dense<0.000000e+00> : vector<2x8x8xf32>
    %263 = tpu.matmul %258, %260, %cst_120 {dimension_numbers = #tpu.dot_dimension_numbers<[2], [2], [1], [1], [0, 0, 0, 1, 1, 1], [0], [0]>} : vector<2x8x16xf32>, vector<2x8x16xf32>, vector<2x8x8xf32> -> vector<2x8x8xf32>
    "tpu.trace_stop"() : () -> ()
    %cst_121 = arith.constant 2.500000e-01 : f32
    %264 = vector.broadcast %cst_121 : f32 to vector<2x8x8xf32>
    %265 = arith.mulf %263, %264 : vector<2x8x8xf32>
    %cst_122 = arith.constant dense<0xFF800000> : vector<2x8xf32>
    %266 = vector.multi_reduction <maximumf>, %265, %cst_122 [2] : vector<2x8x8xf32> to vector<2x8xf32>
    %267 = vector.shape_cast %266 : vector<2x8xf32> to vector<2x8x1xf32>
    %268 = vector.broadcast %267 : vector<2x8x1xf32> to vector<2x8x8xf32>
    %269 = arith.subf %265, %268 : vector<2x8x8xf32>
    %270 = math.exp %269 : vector<2x8x8xf32>
    %cst_123 = arith.constant dense<0.000000e+00> : vector<2x8xf32>
    %271 = vector.multi_reduction <add>, %270, %cst_123 [2] : vector<2x8x8xf32> to vector<2x8xf32>
    %272 = vector.shape_cast %271 : vector<2x8xf32> to vector<2x8x1xf32>
    %273 = tpu.reciprocal %272 {approx = true} : vector<2x8x1xf32> -> vector<2x8x1xf32>
    %274 = vector.broadcast %273 : vector<2x8x1xf32> to vector<2x8x8xf32>
    %275 = arith.mulf %270, %274 : vector<2x8x8xf32>
    "tpu.trace_start"() <{level = 10 : i32, message = "bqk,bkd->bqd"}> : () -> ()
    %cst_124 = arith.constant dense<0.000000e+00> : vector<2x8x16xf32>
    %276 = tpu.matmul %275, %262, %cst_124 {dimension_numbers = #tpu.dot_dimension_numbers<[2], [1], [1], [2], [0, 0, 0, 1, 1, 2], [0], [0]>} : vector<2x8x8xf32>, vector<2x8x16xf32>, vector<2x8x16xf32> -> vector<2x8x16xf32>
    "tpu.trace_stop"() : () -> ()
    %277 = vector.shape_cast %276 : vector<2x8x16xf32> to vector<16x16xf32>
    %278 = vector.extract_strided_slice %200 {offsets = [0, 48], sizes = [16, 16], strides = [1, 1]} : vector<16x64xf32> to vector<16x16xf32>
    %279 = vector.shape_cast %278 : vector<16x16xf32> to vector<2x8x16xf32>
    %280 = vector.extract_strided_slice %207 {offsets = [0, 48], sizes = [16, 16], strides = [1, 1]} : vector<16x64xf32> to vector<16x16xf32>
    %281 = vector.shape_cast %280 : vector<16x16xf32> to vector<2x8x16xf32>
    %282 = vector.extract_strided_slice %214 {offsets = [0, 48], sizes = [16, 16], strides = [1, 1]} : vector<16x64xf32> to vector<16x16xf32>
    %283 = vector.shape_cast %282 : vector<16x16xf32> to vector<2x8x16xf32>
    "tpu.trace_start"() <{level = 10 : i32, message = "bqd,bkd->bqk"}> : () -> ()
    %cst_125 = arith.constant dense<0.000000e+00> : vector<2x8x8xf32>
    %284 = tpu.matmul %279, %281, %cst_125 {dimension_numbers = #tpu.dot_dimension_numbers<[2], [2], [1], [1], [0, 0, 0, 1, 1, 1], [0], [0]>} : vector<2x8x16xf32>, vector<2x8x16xf32>, vector<2x8x8xf32> -> vector<2x8x8xf32>
    "tpu.trace_stop"() : () -> ()
    %cst_126 = arith.constant 2.500000e-01 : f32
    %285 = vector.broadcast %cst_126 : f32 to vector<2x8x8xf32>
    %286 = arith.mulf %284, %285 : vector<2x8x8xf32>
    %cst_127 = arith.constant dense<0xFF800000> : vector<2x8xf32>
    %287 = vector.multi_reduction <maximumf>, %286, %cst_127 [2] : vector<2x8x8xf32> to vector<2x8xf32>
    %288 = vector.shape_cast %287 : vector<2x8xf32> to vector<2x8x1xf32>
    %289 = vector.broadcast %288 : vector<2x8x1xf32> to vector<2x8x8xf32>
    %290 = arith.subf %286, %289 : vector<2x8x8xf32>
    %291 = math.exp %290 : vector<2x8x8xf32>
    %cst_128 = arith.constant dense<0.000000e+00> : vector<2x8xf32>
    %292 = vector.multi_reduction <add>, %291, %cst_128 [2] : vector<2x8x8xf32> to vector<2x8xf32>
    %293 = vector.shape_cast %292 : vector<2x8xf32> to vector<2x8x1xf32>
    %294 = tpu.reciprocal %293 {approx = true} : vector<2x8x1xf32> -> vector<2x8x1xf32>
    %295 = vector.broadcast %294 : vector<2x8x1xf32> to vector<2x8x8xf32>
    %296 = arith.mulf %291, %295 : vector<2x8x8xf32>
    "tpu.trace_start"() <{level = 10 : i32, message = "bqk,bkd->bqd"}> : () -> ()
    %cst_129 = arith.constant dense<0.000000e+00> : vector<2x8x16xf32>
    %297 = tpu.matmul %296, %283, %cst_129 {dimension_numbers = #tpu.dot_dimension_numbers<[2], [1], [1], [2], [0, 0, 0, 1, 1, 2], [0], [0]>} : vector<2x8x8xf32>, vector<2x8x16xf32>, vector<2x8x16xf32> -> vector<2x8x16xf32>
    "tpu.trace_stop"() : () -> ()
    %298 = vector.shape_cast %297 : vector<2x8x16xf32> to vector<16x16xf32>
    %299 = tpu.concatenate %235, %256, %277, %298 in 1 : vector<16x16xf32>, vector<16x16xf32>, vector<16x16xf32>, vector<16x16xf32> -> vector<16x64xf32>
    %300 = arith.truncf %299 : vector<16x64xf32> to vector<16x64xbf16>
    %c1_130 = arith.constant 1 : index
    %c0_131 = arith.constant 0 : index
    %c0_132 = arith.constant 0 : index
    %301 = vector.load %arg9[%c1_130, %c0_131, %c0_132] : memref<2x64x64xbf16, #tpu.memory_space<vmem>>, vector<1x64x64xbf16>
    %302 = vector.shape_cast %301 : vector<1x64x64xbf16> to vector<64x64xbf16>
    %cst_133 = arith.constant dense<0.000000e+00> : vector<16x64xf32>
    %303 = tpu.matmul %300, %302, %cst_133 {dimension_numbers = #tpu.dot_dimension_numbers<[1], [0], [0], [1], [0, 0, 1, 1], [], []>} : vector<16x64xbf16>, vector<64x64xbf16>, vector<16x64xf32> -> vector<16x64xf32>
    %c1_134 = arith.constant 1 : index
    %c0_135 = arith.constant 0 : index
    %c0_136 = arith.constant 0 : index
    %304 = vector.load %arg10[%c1_134, %c0_135, %c0_136] : memref<2x1x64xf32, #tpu.memory_space<vmem>>, vector<1x1x64xf32>
    %305 = vector.shape_cast %304 : vector<1x1x64xf32> to vector<1x64xf32>
    %306 = vector.broadcast %305 : vector<1x64xf32> to vector<16x64xf32>
    %307 = arith.addf %303, %306 : vector<16x64xf32>
    %308 = arith.addf %192, %307 : vector<16x64xf32>
    %c1_137 = arith.constant 1 : index
    %c0_138 = arith.constant 0 : index
    %c0_139 = arith.constant 0 : index
    %309 = vector.load %arg11[%c1_137, %c0_138, %c0_139] : memref<2x1x64xf32, #tpu.memory_space<vmem>>, vector<1x1x64xf32>
    %310 = vector.shape_cast %309 : vector<1x1x64xf32> to vector<1x64xf32>
    %c1_140 = arith.constant 1 : index
    %c0_141 = arith.constant 0 : index
    %c0_142 = arith.constant 0 : index
    %311 = vector.load %arg12[%c1_140, %c0_141, %c0_142] : memref<2x1x64xf32, #tpu.memory_space<vmem>>, vector<1x1x64xf32>
    %312 = vector.shape_cast %311 : vector<1x1x64xf32> to vector<1x64xf32>
    %cst_143 = arith.constant dense<0.000000e+00> : vector<16xf32>
    %313 = vector.multi_reduction <add>, %308, %cst_143 [1] : vector<16x64xf32> to vector<16xf32>
    %314 = vector.shape_cast %313 : vector<16xf32> to vector<16x1xf32>
    %cst_144 = arith.constant 6.400000e+01 : f32
    %315 = vector.broadcast %cst_144 : f32 to vector<16x1xf32>
    %316 = arith.divf %314, %315 : vector<16x1xf32>
    %317 = vector.broadcast %316 : vector<16x1xf32> to vector<16x64xf32>
    %318 = arith.subf %308, %317 : vector<16x64xf32>
    %319 = arith.mulf %318, %318 : vector<16x64xf32>
    %cst_145 = arith.constant dense<0.000000e+00> : vector<16xf32>
    %320 = vector.multi_reduction <add>, %319, %cst_145 [1] : vector<16x64xf32> to vector<16xf32>
    %321 = vector.shape_cast %320 : vector<16xf32> to vector<16x1xf32>
    %cst_146 = arith.constant 6.400000e+01 : f32
    %322 = vector.broadcast %cst_146 : f32 to vector<16x1xf32>
    %323 = arith.divf %321, %322 : vector<16x1xf32>
    %324 = vector.broadcast %316 : vector<16x1xf32> to vector<16x64xf32>
    %325 = arith.subf %308, %324 : vector<16x64xf32>
    %cst_147 = arith.constant 9.99999974E-6 : f32
    %326 = vector.broadcast %cst_147 : f32 to vector<16x1xf32>
    %327 = arith.addf %323, %326 : vector<16x1xf32>
    %328 = math.rsqrt %327 : vector<16x1xf32>
    %329 = vector.broadcast %328 : vector<16x1xf32> to vector<16x64xf32>
    %330 = arith.mulf %325, %329 : vector<16x64xf32>
    %331 = vector.broadcast %310 : vector<1x64xf32> to vector<16x64xf32>
    %332 = arith.mulf %330, %331 : vector<16x64xf32>
    %333 = vector.broadcast %312 : vector<1x64xf32> to vector<16x64xf32>
    %334 = arith.addf %332, %333 : vector<16x64xf32>
    %335 = arith.truncf %334 : vector<16x64xf32> to vector<16x64xbf16>
    %c1_148 = arith.constant 1 : index
    %c0_149 = arith.constant 0 : index
    %c0_150 = arith.constant 0 : index
    %336 = vector.load %arg15[%c1_148, %c0_149, %c0_150] : memref<2x64x2048xbf16, #tpu.memory_space<vmem>>, vector<1x64x2048xbf16>
    %337 = vector.shape_cast %336 : vector<1x64x2048xbf16> to vector<64x2048xbf16>
    %cst_151 = arith.constant dense<0.000000e+00> : vector<16x2048xf32>
    %338 = tpu.matmul %335, %337, %cst_151 {dimension_numbers = #tpu.dot_dimension_numbers<[1], [0], [0], [1], [0, 0, 1, 1], [], []>} : vector<16x64xbf16>, vector<64x2048xbf16>, vector<16x2048xf32> -> vector<16x2048xf32>
    %c1_152 = arith.constant 1 : index
    %c0_153 = arith.constant 0 : index
    %c0_154 = arith.constant 0 : index
    %339 = vector.load %arg16[%c1_152, %c0_153, %c0_154] : memref<2x1x2048xf32, #tpu.memory_space<vmem>>, vector<1x1x2048xf32>
    %340 = vector.shape_cast %339 : vector<1x1x2048xf32> to vector<1x2048xf32>
    %341 = vector.broadcast %340 : vector<1x2048xf32> to vector<16x2048xf32>
    %342 = arith.addf %338, %341 : vector<16x2048xf32>
    %cst_155 = arith.constant 0.000000e+00 : f32
    %343 = vector.broadcast %cst_155 : f32 to vector<16x2048xf32>
    %344 = arith.maximumf %342, %343 : vector<16x2048xf32>
    %345 = arith.truncf %344 : vector<16x2048xf32> to vector<16x2048xbf16>
    %c1_156 = arith.constant 1 : index
    %c0_157 = arith.constant 0 : index
    %c0_158 = arith.constant 0 : index
    %346 = vector.load %arg17[%c1_156, %c0_157, %c0_158] : memref<2x2048x64xbf16, #tpu.memory_space<vmem>>, vector<1x2048x64xbf16>
    %347 = vector.shape_cast %346 : vector<1x2048x64xbf16> to vector<2048x64xbf16>
    %cst_159 = arith.constant dense<0.000000e+00> : vector<16x64xf32>
    %348 = tpu.matmul %345, %347, %cst_159 {dimension_numbers = #tpu.dot_dimension_numbers<[1], [0], [0], [1], [0, 0, 1, 1], [], []>} : vector<16x2048xbf16>, vector<2048x64xbf16>, vector<16x64xf32> -> vector<16x64xf32>
    %c1_160 = arith.constant 1 : index
    %c0_161 = arith.constant 0 : index
    %c0_162 = arith.constant 0 : index
    %349 = vector.load %arg18[%c1_160, %c0_161, %c0_162] : memref<2x1x64xf32, #tpu.memory_space<vmem>>, vector<1x1x64xf32>
    %350 = vector.shape_cast %349 : vector<1x1x64xf32> to vector<1x64xf32>
    %351 = vector.broadcast %350 : vector<1x64xf32> to vector<16x64xf32>
    %352 = arith.addf %348, %351 : vector<16x64xf32>
    %353 = arith.addf %334, %352 : vector<16x64xf32>
    %c1_163 = arith.constant 1 : index
    %c0_164 = arith.constant 0 : index
    %c0_165 = arith.constant 0 : index
    %354 = vector.load %arg13[%c1_163, %c0_164, %c0_165] : memref<2x1x64xf32, #tpu.memory_space<vmem>>, vector<1x1x64xf32>
    %355 = vector.shape_cast %354 : vector<1x1x64xf32> to vector<1x64xf32>
    %c1_166 = arith.constant 1 : index
    %c0_167 = arith.constant 0 : index
    %c0_168 = arith.constant 0 : index
    %356 = vector.load %arg14[%c1_166, %c0_167, %c0_168] : memref<2x1x64xf32, #tpu.memory_space<vmem>>, vector<1x1x64xf32>
    %357 = vector.shape_cast %356 : vector<1x1x64xf32> to vector<1x64xf32>
    %cst_169 = arith.constant dense<0.000000e+00> : vector<16xf32>
    %358 = vector.multi_reduction <add>, %353, %cst_169 [1] : vector<16x64xf32> to vector<16xf32>
    %359 = vector.shape_cast %358 : vector<16xf32> to vector<16x1xf32>
    %cst_170 = arith.constant 6.400000e+01 : f32
    %360 = vector.broadcast %cst_170 : f32 to vector<16x1xf32>
    %361 = arith.divf %359, %360 : vector<16x1xf32>
    %362 = vector.broadcast %361 : vector<16x1xf32> to vector<16x64xf32>
    %363 = arith.subf %353, %362 : vector<16x64xf32>
    %364 = arith.mulf %363, %363 : vector<16x64xf32>
    %cst_171 = arith.constant dense<0.000000e+00> : vector<16xf32>
    %365 = vector.multi_reduction <add>, %364, %cst_171 [1] : vector<16x64xf32> to vector<16xf32>
    %366 = vector.shape_cast %365 : vector<16xf32> to vector<16x1xf32>
    %cst_172 = arith.constant 6.400000e+01 : f32
    %367 = vector.broadcast %cst_172 : f32 to vector<16x1xf32>
    %368 = arith.divf %366, %367 : vector<16x1xf32>
    %369 = vector.broadcast %361 : vector<16x1xf32> to vector<16x64xf32>
    %370 = arith.subf %353, %369 : vector<16x64xf32>
    %cst_173 = arith.constant 9.99999974E-6 : f32
    %371 = vector.broadcast %cst_173 : f32 to vector<16x1xf32>
    %372 = arith.addf %368, %371 : vector<16x1xf32>
    %373 = math.rsqrt %372 : vector<16x1xf32>
    %374 = vector.broadcast %373 : vector<16x1xf32> to vector<16x64xf32>
    %375 = arith.mulf %370, %374 : vector<16x64xf32>
    %376 = vector.broadcast %355 : vector<1x64xf32> to vector<16x64xf32>
    %377 = arith.mulf %375, %376 : vector<16x64xf32>
    %378 = vector.broadcast %357 : vector<1x64xf32> to vector<16x64xf32>
    %379 = arith.addf %377, %378 : vector<16x64xf32>
    %380 = vector.extract_strided_slice %379 {offsets = [7, 0], sizes = [1, 64], strides = [1, 1]} : vector<16x64xf32> to vector<1x64xf32>
    %381 = vector.extract_strided_slice %379 {offsets = [15, 0], sizes = [1, 64], strides = [1, 1]} : vector<16x64xf32> to vector<1x64xf32>
    %382 = tpu.concatenate %380, %381 in 0 : vector<1x64xf32>, vector<1x64xf32> -> vector<2x64xf32>
    %c0_174 = arith.constant 0 : index
    %c0_175 = arith.constant 0 : index
    %383 = vector.load %arg19[%c0_174, %c0_175] : memref<64x6xf32, #tpu.memory_space<vmem>>, vector<64x6xf32>
    %cst_176 = arith.constant dense<0.000000e+00> : vector<2x6xf32>
    %384 = tpu.matmul %382, %383, %cst_176 {dimension_numbers = #tpu.dot_dimension_numbers<[1], [0], [0], [1], [0, 0, 1, 1], [], []>} : vector<2x64xf32>, vector<64x6xf32>, vector<2x6xf32> -> vector<2x6xf32>
    %c0_177 = arith.constant 0 : index
    %c0_178 = arith.constant 0 : index
    %385 = vector.load %arg20[%c0_177, %c0_178] : memref<1x6xf32, #tpu.memory_space<vmem>>, vector<1x6xf32>
    %386 = vector.broadcast %385 : vector<1x6xf32> to vector<2x6xf32>
    %387 = arith.addf %384, %386 : vector<2x6xf32>
    %c0_179 = arith.constant 0 : index
    %c0_180 = arith.constant 0 : index
    %388 = vector.load %arg21[%c0_179, %c0_180] : memref<2x6xf32, #tpu.memory_space<vmem>>, vector<2x6xf32>
    tpu.vector_store %arg21[%c0_179, %c0_180], %387 {strides = array<i32>} : memref<2x6xf32, #tpu.memory_space<vmem>>, vector<2x6xf32>,
    return
  }
}

</mosaic_0001>

<llo_original>
// kernel: tpu_custom_call.1
$region0: #{tpu_custom_call.1}
  #allocation0 [shape = 'u32[]', space=smem, size = 0x4, offset = 0x4, fixed_abs, tag = 'smem constant byte address 0x4 - core index']
  #allocation1 [shape = 'u32[144,128]{1,0:T(1,128)}', space=vmem, size = 0x12000, scoped, tag = 'internal scratch']
  %s0 = inlined_call_operand.vmem [shape: f32[16,12], index: 0, kind: input, shape index: {}]
  %s1 = inlined_call_operand.vmem [shape: f32[12,64], index: 1, kind: input, shape index: {}]
  %s2 = inlined_call_operand.vmem [shape: f32[1,64], index: 2, kind: input, shape index: {}]
  %s3 = inlined_call_operand.vmem [shape: bf16[2,64,64], index: 3, kind: input, shape index: {}]
  %s4 = inlined_call_operand.vmem [shape: f32[2,1,64], index: 4, kind: input, shape index: {}]
  %s5 = inlined_call_operand.vmem [shape: bf16[2,64,64], index: 5, kind: input, shape index: {}]
  %s6 = inlined_call_operand.vmem [shape: f32[2,1,64], index: 6, kind: input, shape index: {}]
  %s7 = inlined_call_operand.vmem [shape: bf16[2,64,64], index: 7, kind: input, shape index: {}]
  %s8 = inlined_call_operand.vmem [shape: f32[2,1,64], index: 8, kind: input, shape index: {}]
  %s9 = inlined_call_operand.vmem [shape: bf16[2,64,64], index: 9, kind: input, shape index: {}]
  %s10 = inlined_call_operand.vmem [shape: f32[2,1,64], index: 10, kind: input, shape index: {}]
  %s11 = inlined_call_operand.vmem [shape: f32[2,1,64], index: 11, kind: input, shape index: {}]
  %s12 = inlined_call_operand.vmem [shape: f32[2,1,64], index: 12, kind: input, shape index: {}]
  %s13 = inlined_call_operand.vmem [shape: f32[2,1,64], index: 13, kind: input, shape index: {}]
  %s14 = inlined_call_operand.vmem [shape: f32[2,1,64], index: 14, kind: input, shape index: {}]
  %s15 = inlined_call_operand.vmem [shape: bf16[2,64,2048], index: 15, kind: input, shape index: {}]
  %s16 = inlined_call_operand.vmem [shape: f32[2,1,2048], index: 16, kind: input, shape index: {}]
  %s17 = inlined_call_operand.vmem [shape: bf16[2,2048,64], index: 17, kind: input, shape index: {}]
  %s18 = inlined_call_operand.vmem [shape: f32[2,1,64], index: 18, kind: input, shape index: {}]
  %s19 = inlined_call_operand.vmem [shape: f32[64,6], index: 19, kind: input, shape index: {}]
  %s20 = inlined_call_operand.vmem [shape: f32[1,6], index: 20, kind: input, shape index: {}]
  %s21 = inlined_call_operand.hbm [shape: f32[2,6], index: 21, kind: output, shape index: {}]
  %s22 = sld [smem:[#allocation0]]
  $region94: #{tpu_custom_call.1} parent=0
    _
  %s24 = ssub.s32 1, %s22
  %s25 = scalar_select 0, %s24, %s22
  $region1: #{tpu_custom_call.1} parent=0
    #allocation2 [shape = 'u8[1024]{0}', space=vmem, size = 0x400, scoped, tag = 'output window, operand 0, single buffered']
    #allocation3 [shape = 's32[1]{0}', space=sflag, size = 0x4, scoped, tag = 'scoped memory for tpu_custom_call.1']
    %26 = vsyncpa [#allocation3], 0
    // Predicated region
    $region2: #{tpu_custom_call.1} parent=1 // pred_check
      _
    $region3: #{tpu_custom_call.1} parent=1 // pred_check_branch
      %28 = sbr.rel (0) target = $region5
    $region4: #{tpu_custom_call.1} parent=1 // pred_region
      _
    $region5: #{tpu_custom_call.1} parent=1 // pred_fallthru
      _
    // Predicated region
    $region6: #{tpu_custom_call.1} parent=1 // pred_check
      _
    $region7: #{tpu_custom_call.1} parent=1 // pred_check_branch
      %30 = sbr.rel (0) target = $region9
    $region8: #{tpu_custom_call.1} parent=1 // pred_region
      _
    $region9: #{tpu_custom_call.1} parent=1 // pred_fallthru
      _
    // Predicated region
    $region10: #{tpu_custom_call.1} parent=1 // pred_check
      _
    $region11: #{tpu_custom_call.1} parent=1 // pred_check_branch
      %32 = sbr.rel (0) target = $region13
    $region12: #{tpu_custom_call.1} parent=1 // pred_region
      _
    $region13: #{tpu_custom_call.1} parent=1 // pred_fallthru
      _
    // Predicated region
    $region14: #{tpu_custom_call.1} parent=1 // pred_check
      _
    $region15: #{tpu_custom_call.1} parent=1 // pred_check_branch
      %34 = sbr.rel (0) target = $region17
    $region16: #{tpu_custom_call.1} parent=1 // pred_region
      _
    $region17: #{tpu_custom_call.1} parent=1 // pred_fallthru
      _
    // Predicated region
    $region18: #{tpu_custom_call.1} parent=1 // pred_check
      _
    $region19: #{tpu_custom_call.1} parent=1 // pred_check_branch
      %36 = sbr.rel (0) target = $region21
    $region20: #{tpu_custom_call.1} parent=1 // pred_region
      _
    $region21: #{tpu_custom_call.1} parent=1 // pred_fallthru
      _
    // Predicated region
    $region22: #{tpu_custom_call.1} parent=1 // pred_check
      _
    $region23: #{tpu_custom_call.1} parent=1 // pred_check_branch
      %38 = sbr.rel (0) target = $region25
    $region24: #{tpu_custom_call.1} parent=1 // pred_region
      _
    $region25: #{tpu_custom_call.1} parent=1 // pred_fallthru
      _
    // Predicated region
    $region26: #{tpu_custom_call.1} parent=1 // pred_check
      _
    $region27: #{tpu_custom_call.1} parent=1 // pred_check_branch
      %40 = sbr.rel (0) target = $region29
    $region28: #{tpu_custom_call.1} parent=1 // pred_region
      _
    $region29: #{tpu_custom_call.1} parent=1 // pred_fallthru
      _
    // Predicated region
    $region30: #{tpu_custom_call.1} parent=1 // pred_check
      _
    $region31: #{tpu_custom_call.1} parent=1 // pred_check_branch
      %42 = sbr.rel (0) target = $region33
    $region32: #{tpu_custom_call.1} parent=1 // pred_region
      _
    $region33: #{tpu_custom_call.1} parent=1 // pred_fallthru
      _
    // Predicated region
    $region34: #{tpu_custom_call.1} parent=1 // pred_check
      _
    $region35: #{tpu_custom_call.1} parent=1 // pred_check_branch
      %44 = sbr.rel (0) target = $region37
    $region36: #{tpu_custom_call.1} parent=1 // pred_region
      _
    $region37: #{tpu_custom_call.1} parent=1 // pred_fallthru
      _
    // Predicated region
    $region38: #{tpu_custom_call.1} parent=1 // pred_check
      _
    $region39: #{tpu_custom_call.1} parent=1 // pred_check_branch
      %46 = sbr.rel (0) target = $region41
    $region40: #{tpu_custom_call.1} parent=1 // pred_region
      _
    $region41: #{tpu_custom_call.1} parent=1 // pred_fallthru
      _
    // Predicated region
    $region42: #{tpu_custom_call.1} parent=1 // pred_check
      _
    $region43: #{tpu_custom_call.1} parent=1 // pred_check_branch
      %48 = sbr.rel (0) target = $region45
    $region44: #{tpu_custom_call.1} parent=1 // pred_region
      _
    $region45: #{tpu_custom_call.1} parent=1 // pred_fallthru
      _
    // Predicated region
    $region46: #{tpu_custom_call.1} parent=1 // pred_check
      _
    $region47: #{tpu_custom_call.1} parent=1 // pred_check_branch
      %50 = sbr.rel (0) target = $region49
    $region48: #{tpu_custom_call.1} parent=1 // pred_region
      _
    $region49: #{tpu_custom_call.1} parent=1 // pred_fallthru
      _
    // Predicated region
    $region50: #{tpu_custom_call.1} parent=1 // pred_check
      _
    $region51: #{tpu_custom_call.1} parent=1 // pred_check_branch
      %52 = sbr.rel (0) target = $region53
    $region52: #{tpu_custom_call.1} parent=1 // pred_region
      _
    $region53: #{tpu_custom_call.1} parent=1 // pred_fallthru
      _
    // Predicated region
    $region54: #{tpu_custom_call.1} parent=1 // pred_check
      _
    $region55: #{tpu_custom_call.1} parent=1 // pred_check_branch
      %54 = sbr.rel (0) target = $region57
    $region56: #{tpu_custom_call.1} parent=1 // pred_region
      _
    $region57: #{tpu_custom_call.1} parent=1 // pred_fallthru
      _
    // Predicated region
    $region58: #{tpu_custom_call.1} parent=1 // pred_check
      _
    $region59: #{tpu_custom_call.1} parent=1 // pred_check_branch
      %56 = sbr.rel (0) target = $region61
    $region60: #{tpu_custom_call.1} parent=1 // pred_region
      _
    $region61: #{tpu_custom_call.1} parent=1 // pred_fallthru
      _
    // Predicated region
    $region62: #{tpu_custom_call.1} parent=1 // pred_check
      _
    $region63: #{tpu_custom_call.1} parent=1 // pred_check_branch
      %58 = sbr.rel (0) target = $region65
    $region64: #{tpu_custom_call.1} parent=1 // pred_region
      _
    $region65: #{tpu_custom_call.1} parent=1 // pred_fallthru
      _
    // Predicated region
    $region66: #{tpu_custom_call.1} parent=1 // pred_check
      _
    $region67: #{tpu_custom_call.1} parent=1 // pred_check_branch
      %60 = sbr.rel (0) target = $region69
    $region68: #{tpu_custom_call.1} parent=1 // pred_region
      _
    $region69: #{tpu_custom_call.1} parent=1 // pred_fallthru
      _
    // Predicated region
    $region70: #{tpu_custom_call.1} parent=1 // pred_check
      _
    $region71: #{tpu_custom_call.1} parent=1 // pred_check_branch
      %62 = sbr.rel (0) target = $region73
    $region72: #{tpu_custom_call.1} parent=1 // pred_region
      _
    $region73: #{tpu_custom_call.1} parent=1 // pred_fallthru
      _
    // Predicated region
    $region74: #{tpu_custom_call.1} parent=1 // pred_check
      _
    $region75: #{tpu_custom_call.1} parent=1 // pred_check_branch
      %64 = sbr.rel (0) target = $region77
    $region76: #{tpu_custom_call.1} parent=1 // pred_region
      _
    $region77: #{tpu_custom_call.1} parent=1 // pred_fallthru
      _
    // Predicated region
    $region78: #{tpu_custom_call.1} parent=1 // pred_check
      _
    $region79: #{tpu_custom_call.1} parent=1 // pred_check_branch
      %66 = sbr.rel (0) target = $region81
    $region80: #{tpu_custom_call.1} parent=1 // pred_region
      _
    $region81: #{tpu_custom_call.1} parent=1 // pred_fallthru
      _
    // Predicated region
    $region82: #{tpu_custom_call.1} parent=1 // pred_check
      _
    $region83: #{tpu_custom_call.1} parent=1 // pred_check_branch
      %68 = sbr.rel (0) target = $region85
    $region84: #{tpu_custom_call.1} parent=1 // pred_region
      _
    $region85: #{tpu_custom_call.1} parent=1 // pred_fallthru
      _
    %v70 = vld [vmem:[%s0] sm:$0xff]
    %v71 = vld [vmem:[%s0 + $0x8] sm:$0xff]
    %v72 = vld [vmem:[%s1] sm:$0xff]
    %v73 = vld [vmem:[%s1 + $0x8] sm:$0xf]
    %v74 = vld [vmem:[%s2] sm:$0x1]
    %v76 = vlaneseq
    %v77 = vshrl.u32 %v76, 7
    %v78 = vsub.s32 0, %v77
    %v79 = vrot.slane %v74, %v78
    %vm81 = vcmask 97280
    %v83 = vsel %vm81, %v70, 0
    %v86 = vsel %vm81, %v71, 0
    %vm88 = vcmask 1043456
    %v90 = vsel %vm88, %v73, 0
    %92 = vmatprep.subr.mxu0 0.0
    %93 = vmatpush1.msra.mxu0 0.0
    %94 = vmatprep.subr.mxu0 0.0
    %95 = vmatpush1.msra.mxu0 0.0
    %96 = vmatprep.subr.mxu0 0.0
    %97 = vmatpush1.msra.mxu0 0.0
    %98 = vmatprep.subr.mxu0 0.0
    %99 = vmatpush1.msra.mxu0 0.0
    %100 = vmatprep.subr.mxu0 0.0
    %101 = vmatpush1.msra.mxu0 0.0
    %102 = vmatprep.subr.mxu0 0.0
    %103 = vmatpush1.msra.mxu0 0.0
    %104 = vmatprep.subr.mxu0 0.0
    %105 = vmatpush1.msra.mxu0 0.0
    %106 = vmatprep.subr.mxu0 0.0
    %107 = vmatpush1.msra.mxu0 0.0
    %108 = vmatprep.subr.mxu0 0.0
    %109 = vmatpush1.msra.mxu0 0.0
    %110 = vmatprep.subr.mxu0 0.0
    %111 = vmatpush1.msra.mxu0 0.0
    %112 = vmatprep.subr.mxu0 0.0
    %113 = vmatpush1.msra.mxu0 0.0
    %114 = vmatprep.subr.mxu0 0.0
    %115 = vmatpush1.msra.mxu0 0.0
    %116 = vmatprep.subr.mxu0 0.0
    %117 = vmatpush1.msra.mxu0 0.0
    %118 = vmatprep.subr.mxu0 0.0
    %119 = vmatpush1.msra.mxu0 0.0
    %120 = vmatprep.subr.mxu0 0.0
    %121 = vmatpush1.msra.mxu0 %v90
    %122 = vmatprep.subr.mxu0 0.0
    %123 = vmatpush1.msra.mxu0 %v72
    %124 = vmatprep.subr.mxu0 0.0
    %125 = vmatpush2.msra.mxu0 0.0
    %126 = vmatprep.subr.mxu0 0.0
    %127 = vmatpush2.msra.mxu0 0.0
    %128 = vmatprep.subr.mxu0 0.0
    %129 = vmatpush2.msra.mxu0 0.0
    %130 = vmatprep.subr.mxu0 0.0
    %131 = vmatpush2.msra.mxu0 0.0
    %132 = vmatprep.subr.mxu0 0.0
    %133 = vmatpush2.msra.mxu0 0.0
    %134 = vmatprep.subr.mxu0 0.0
    %135 = vmatpush2.msra.mxu0 0.0
    %136 = vmatprep.subr.mxu0 0.0
    %137 = vmatpush2.msra.mxu0 0.0
    %138 = vmatprep.subr.mxu0 0.0
    %139 = vmatpush2.msra.mxu0 0.0
    %140 = vmatprep.subr.mxu0 0.0
    %141 = vmatpush2.msra.mxu0 0.0
    %142 = vmatprep.subr.mxu0 0.0
    %143 = vmatpush2.msra.mxu0 0.0
    %144 = vmatprep.subr.mxu0 0.0
    %145 = vmatpush2.msra.mxu0 0.0
    %146 = vmatprep.subr.mxu0 0.0
    %147 = vmatpush2.msra.mxu0 0.0
    %148 = vmatprep.subr.mxu0 0.0
    %149 = vmatpush2.msra.mxu0 0.0
    %150 = vmatprep.subr.mxu0 0.0
    %151 = vmatpush2.msra.mxu0 0.0
    %152 = vmatprep.subr.mxu0 0.0
    %153 = vmatpush2.msra.mxu0 0.0
    %154 = vmatprep.subr.mxu0 0.0
    %155 = vmatpush2.msra.mxu0 0.0
    %156 = vmatprep.mubr.f32.mxu0 0.0
    %157 = vmatmul.mubr.f32.gmra.mxu0 %v83
    %v158 = vpop.f32.mrf.mxu0
    %v159 = vadd.f32 %v79, %v158
    %v160 = vpop.f32.mrf.mxu0
    %161 = vmatprep.mubr.f32.mxu0 0.0
    %162 = vmatmul.mubr.f32.gmra.mxu0 %v86
    %v163 = vpop.f32.mrf.mxu0
    %v164 = vadd.f32 %v79, %v163
    %v165 = vpop.f32.mrf.mxu0
    %166 = vdwg.mxu0
    %v167 = vpack.c.bf16 %v164, %v159
    %v168 = vld [vmem:[%s3] sm:$0xf]
    %v169 = vld [vmem:[%s3 + $0x4] sm:$0xf]
    %v170 = vld [vmem:[%s3 + $0x8] sm:$0xf]
    %v171 = vld [vmem:[%s3 + $0xc] sm:$0xf]
    %v172 = vld [vmem:[%s3 + $0x10] sm:$0xf]
    %v173 = vld [vmem:[%s3 + $0x14] sm:$0xf]
    %v174 = vld [vmem:[%s3 + $0x18] sm:$0xf]
    %v175 = vld [vmem:[%s3 + $0x1c] sm:$0xf]
    %v176 = vld [vmem:[%s4] sm:$0x1]
    %v178 = vlaneseq
    %v179 = vshrl.u32 %v178, 7
    %v180 = vsub.s32 0, %v179
    %v181 = vrot.slane %v176, %v180
    %v191 = vunpack.c.l.b16 %v168
    %v192 = vunpack.c.l.b16 %v169
    %v193 = vunpack.c.l.b16 %v170
    %v194 = vunpack.c.l.b16 %v171
    %v195 = vunpack.c.l.b16 %v172
    %v196 = vunpack.c.l.b16 %v173
    %v197 = vunpack.c.l.b16 %v174
    %v198 = vunpack.c.l.b16 %v175
    %v199 = vpack.c.b16 %v192, %v191
    %v200 = vpack.c.b16 %v194, %v193
    %v201 = vpack.c.b16 %v196, %v195
    %v202 = vpack.c.b16 %v198, %v197
    %vm207 = vcmask 523264
    %v209 = vsel %vm207, %v167, 0
    %211 = vmatprep.subr.bf16.mxu0 0
    %212 = vmatpush1.bf16.msra.mxu0 0
    %213 = vmatprep.subr.bf16.mxu0 0
    %214 = vmatpush1.bf16.msra.mxu0 0
    %215 = vmatprep.subr.bf16.mxu0 0
    %216 = vmatpush1.bf16.msra.mxu0 0
    %217 = vmatprep.subr.bf16.mxu0 0
    %218 = vmatpush1.bf16.msra.mxu0 0
    %219 = vmatprep.subr.bf16.mxu0 0
    %220 = vmatpush1.bf16.msra.mxu0 %v202
    %221 = vmatprep.subr.bf16.mxu0 0
    %222 = vmatpush1.bf16.msra.mxu0 %v201
    %223 = vmatprep.subr.bf16.mxu0 0
    %224 = vmatpush1.bf16.msra.mxu0 %v200
    %225 = vmatprep.subr.bf16.mxu0 0
    %226 = vmatpush1.bf16.msra.mxu0 %v199
    %227 = vmatprep.subr.bf16.mxu0 0
    %228 = vmatpush2.bf16.msra.mxu0 0
    %229 = vmatprep.subr.bf16.mxu0 0
    %230 = vmatpush2.bf16.msra.mxu0 0
    %231 = vmatprep.subr.bf16.mxu0 0
    %232 = vmatpush2.bf16.msra.mxu0 0
    %233 = vmatprep.subr.bf16.mxu0 0
    %234 = vmatpush2.bf16.msra.mxu0 0
    %235 = vmatprep.subr.bf16.mxu0 0
    %236 = vmatpush2.bf16.msra.mxu0 0
    %237 = vmatprep.subr.bf16.mxu0 0
    %238 = vmatpush2.bf16.msra.mxu0 0
    %239 = vmatprep.subr.bf16.mxu0 0
    %240 = vmatpush2.bf16.msra.mxu0 0
    %241 = vmatprep.subr.bf16.mxu0 0
    %242 = vmatpush2.bf16.msra.mxu0 0
    %243 = vmatprep.mubr.bf16.mxu0 0
    %244 = vmatmul.mubr.bf16.gmra.mxu0 %v209
    %v245 = vpop.f32.mrf.mxu0
    %v246 = vadd.f32 %v181, %v245
    %v247 = vpop.f32.mrf.mxu0
    %v248 = vpop.f32.mrf.mxu0
    %v249 = vadd.f32 %v181, %v248
    %v250 = vpop.f32.mrf.mxu0
    %251 = vdwg.mxu0
    %v252 = vld [vmem:[%s5] sm:$0xf]
    %v253 = vld [vmem:[%s5 + $0x4] sm:$0xf]
    %v254 = vld [vmem:[%s5 + $0x8] sm:$0xf]
    %v255 = vld [vmem:[%s5 + $0xc] sm:$0xf]
    %v256 = vld [vmem:[%s5 + $0x10] sm:$0xf]
    %v257 = vld [vmem:[%s5 + $0x14] sm:$0xf]
    %v258 = vld [vmem:[%s5 + $0x18] sm:$0xf]
    %v259 = vld [vmem:[%s5 + $0x1c] sm:$0xf]
    %v260 = vld [vmem:[%s6] sm:$0x1]
    %v262 = vlaneseq
    %v263 = vshrl.u32 %v262, 7
    %v264 = vsub.s32 0, %v263
    %v265 = vrot.slane %v260, %v264
    %v275 = vunpack.c.l.b16 %v252
    %v276 = vunpack.c.l.b16 %v253
    %v277 = vunpack.c.l.b16 %v254
    %v278 = vunpack.c.l.b16 %v255
    %v279 = vunpack.c.l.b16 %v256
    %v280 = vunpack.c.l.b16 %v257
    %v281 = vunpack.c.l.b16 %v258
    %v282 = vunpack.c.l.b16 %v259
    %v283 = vpack.c.b16 %v276, %v275
    %v284 = vpack.c.b16 %v278, %v277
    %v285 = vpack.c.b16 %v280, %v279
    %v286 = vpack.c.b16 %v282, %v281
    %291 = vmatprep.subr.bf16.mxu0 0
    %292 = vmatpush1.bf16.msra.mxu0 0
    %293 = vmatprep.subr.bf16.mxu0 0
    %294 = vmatpush1.bf16.msra.mxu0 0
    %295 = vmatprep.subr.bf16.mxu0 0
    %296 = vmatpush1.bf16.msra.mxu0 0
    %297 = vmatprep.subr.bf16.mxu0 0
    %298 = vmatpush1.bf16.msra.mxu0 0
    %299 = vmatprep.subr.bf16.mxu0 0
    %300 = vmatpush1.bf16.msra.mxu0 %v286
    %301 = vmatprep.subr.bf16.mxu0 0
    %302 = vmatpush1.bf16.msra.mxu0 %v285
    %303 = vmatprep.subr.bf16.mxu0 0
    %304 = vmatpush1.bf16.msra.mxu0 %v284
    %305 = vmatprep.subr.bf16.mxu0 0
    %306 = vmatpush1.bf16.msra.mxu0 %v283
    %307 = vmatprep.subr.bf16.mxu0 0
    %308 = vmatpush2.bf16.msra.mxu0 0
    %309 = vmatprep.subr.bf16.mxu0 0
    %310 = vmatpush2.bf16.msra.mxu0 0
    %311 = vmatprep.subr.bf16.mxu0 0
    %312 = vmatpush2.bf16.msra.mxu0 0
    %313 = vmatprep.subr.bf16.mxu0 0
    %314 = vmatpush2.bf16.msra.mxu0 0
    %315 = vmatprep.subr.bf16.mxu0 0
    %316 = vmatpush2.bf16.msra.mxu0 0
    %317 = vmatprep.subr.bf16.mxu0 0
    %318 = vmatpush2.bf16.msra.mxu0 0
    %319 = vmatprep.subr.bf16.mxu0 0
    %320 = vmatpush2.bf16.msra.mxu0 0
    %321 = vmatprep.subr.bf16.mxu0 0
    %322 = vmatpush2.bf16.msra.mxu0 0
    %323 = vmatprep.mubr.bf16.mxu0 0
    %324 = vmatmul.mubr.bf16.gmra.mxu0 %v209
    %v325 = vpop.f32.mrf.mxu0
    %v326 = vadd.f32 %v265, %v325
    %v327 = vpop.f32.mrf.mxu0
    %v328 = vpop.f32.mrf.mxu0
    %v329 = vadd.f32 %v265, %v328
    %v330 = vpop.f32.mrf.mxu0
    %331 = vdwg.mxu0
    %v332 = vld [vmem:[%s7] sm:$0xf]
    %v333 = vld [vmem:[%s7 + $0x4] sm:$0xf]
    %v334 = vld [vmem:[%s7 + $0x8] sm:$0xf]
    %v335 = vld [vmem:[%s7 + $0xc] sm:$0xf]
    %v336 = vld [vmem:[%s7 + $0x10] sm:$0xf]
    %v337 = vld [vmem:[%s7 + $0x14] sm:$0xf]
    %v338 = vld [vmem:[%s7 + $0x18] sm:$0xf]
    %v339 = vld [vmem:[%s7 + $0x1c] sm:$0xf]
    %v340 = vld [vmem:[%s8] sm:$0x1]
    %v342 = vlaneseq
    %v343 = vshrl.u32 %v342, 7
    %v344 = vsub.s32 0, %v343
    %v345 = vrot.slane %v340, %v344
    %v355 = vunpack.c.l.b16 %v332
    %v356 = vunpack.c.l.b16 %v333
    %v357 = vunpack.c.l.b16 %v334
    %v358 = vunpack.c.l.b16 %v335
    %v359 = vunpack.c.l.b16 %v336
    %v360 = vunpack.c.l.b16 %v337
    %v361 = vunpack.c.l.b16 %v338
    %v362 = vunpack.c.l.b16 %v339
    %v363 = vpack.c.b16 %v356, %v355
    %v364 = vpack.c.b16 %v358, %v357
    %v365 = vpack.c.b16 %v360, %v359
    %v366 = vpack.c.b16 %v362, %v361
    %371 = vmatprep.subr.bf16.mxu0 0
    %372 = vmatpush1.bf16.msra.mxu0 0
    %373 = vmatprep.subr.bf16.mxu0 0
    %374 = vmatpush1.bf16.msra.mxu0 0
    %375 = vmatprep.subr.bf16.mxu0 0
    %376 = vmatpush1.bf16.msra.mxu0 0
    %377 = vmatprep.subr.bf16.mxu0 0
    %378 = vmatpush1.bf16.msra.mxu0 0
    %379 = vmatprep.subr.bf16.mxu0 0
    %380 = vmatpush1.bf16.msra.mxu0 %v366
    %381 = vmatprep.subr.bf16.mxu0 0
    %382 = vmatpush1.bf16.msra.mxu0 %v365
    %383 = vmatprep.subr.bf16.mxu0 0
    %384 = vmatpush1.bf16.msra.mxu0 %v364
    %385 = vmatprep.subr.bf16.mxu0 0
    %386 = vmatpush1.bf16.msra.mxu0 %v363
    %387 = vmatprep.subr.bf16.mxu0 0
    %388 = vmatpush2.bf16.msra.mxu0 0
    %389 = vmatprep.subr.bf16.mxu0 0
    %390 = vmatpush2.bf16.msra.mxu0 0
    %391 = vmatprep.subr.bf16.mxu0 0
    %392 = vmatpush2.bf16.msra.mxu0 0
    %393 = vmatprep.subr.bf16.mxu0 0
    %394 = vmatpush2.bf16.msra.mxu0 0
    %395 = vmatprep.subr.bf16.mxu0 0
    %396 = vmatpush2.bf16.msra.mxu0 0
    %397 = vmatprep.subr.bf16.mxu0 0
    %398 = vmatpush2.bf16.msra.mxu0 0
    %399 = vmatprep.subr.bf16.mxu0 0
    %400 = vmatpush2.bf16.msra.mxu0 0
    %401 = vmatprep.subr.bf16.mxu0 0
    %402 = vmatpush2.bf16.msra.mxu0 0
    %403 = vmatprep.mubr.bf16.mxu0 0
    %404 = vmatmul.mubr.bf16.gmra.mxu0 %v209
    %v405 = vpop.f32.mrf.mxu0
    %v406 = vadd.f32 %v345, %v405
    %v407 = vpop.f32.mrf.mxu0
    %v408 = vpop.f32.mrf.mxu0
    %v409 = vadd.f32 %v345, %v408
    %v410 = vpop.f32.mrf.mxu0
    %411 = vdwg.mxu0
    %vm412 = vcmask 130048
    %v414 = vsel %vm412, %v246, 0
    %v417 = vsel %vm412, %v326, 0
    %419 = vmatprep.subr.mxu0 0.0
    %420 = vmatpush1.xpose.msra.mxu0 0.0
    %421 = vmatprep.subr.mxu0 0.0
    %422 = vmatpush1.xpose.msra.mxu0 0.0
    %423 = vmatprep.subr.mxu0 0.0
    %424 = vmatpush1.xpose.msra.mxu0 0.0
    %425 = vmatprep.subr.mxu0 0.0
    %426 = vmatpush1.xpose.msra.mxu0 0.0
    %427 = vmatprep.subr.mxu0 0.0
    %428 = vmatpush1.xpose.msra.mxu0 0.0
    %429 = vmatprep.subr.mxu0 0.0
    %430 = vmatpush1.xpose.msra.mxu0 0.0
    %431 = vmatprep.subr.mxu0 0.0
    %432 = vmatpush1.xpose.msra.mxu0 0.0
    %433 = vmatprep.subr.mxu0 0.0
    %434 = vmatpush1.xpose.msra.mxu0 0.0
    %435 = vmatprep.subr.mxu0 0.0
    %436 = vmatpush1.xpose.msra.mxu0 0.0
    %437 = vmatprep.subr.mxu0 0.0
    %438 = vmatpush1.xpose.msra.mxu0 0.0
    %439 = vmatprep.subr.mxu0 0.0
    %440 = vmatpush1.xpose.msra.mxu0 0.0
    %441 = vmatprep.subr.mxu0 0.0
    %442 = vmatpush1.xpose.msra.mxu0 0.0
    %443 = vmatprep.subr.mxu0 0.0
    %444 = vmatpush1.xpose.msra.mxu0 0.0
    %445 = vmatprep.subr.mxu0 0.0
    %446 = vmatpush1.xpose.msra.mxu0 0.0
    %447 = vmatprep.subr.mxu0 0.0
    %448 = vmatpush1.xpose.msra.mxu0 0.0
    %449 = vmatprep.subr.mxu0 0.0
    %450 = vmatpush1.xpose.msra.mxu0 %v417
    %451 = vmatprep.subr.mxu0 0.0
    %452 = vmatpush2.xpose.msra.mxu0 0.0
    %453 = vmatprep.subr.mxu0 0.0
    %454 = vmatpush2.xpose.msra.mxu0 0.0
    %455 = vmatprep.subr.mxu0 0.0
    %456 = vmatpush2.xpose.msra.mxu0 0.0
    %457 = vmatprep.subr.mxu0 0.0
    %458 = vmatpush2.xpose.msra.mxu0 0.0
    %459 = vmatprep.subr.mxu0 0.0
    %460 = vmatpush2.xpose.msra.mxu0 0.0
    %461 = vmatprep.subr.mxu0 0.0
    %462 = vmatpush2.xpose.msra.mxu0 0.0
    %463 = vmatprep.subr.mxu0 0.0
    %464 = vmatpush2.xpose.msra.mxu0 0.0
    %465 = vmatprep.subr.mxu0 0.0
    %466 = vmatpush2.xpose.msra.mxu0 0.0
    %467 = vmatprep.subr.mxu0 0.0
    %468 = vmatpush2.xpose.msra.mxu0 0.0
    %469 = vmatprep.subr.mxu0 0.0
    %470 = vmatpush2.xpose.msra.mxu0 0.0
    %471 = vmatprep.subr.mxu0 0.0
    %472 = vmatpush2.xpose.msra.mxu0 0.0
    %473 = vmatprep.subr.mxu0 0.0
    %474 = vmatpush2.xpose.msra.mxu0 0.0
    %475 = vmatprep.subr.mxu0 0.0
    %476 = vmatpush2.xpose.msra.mxu0 0.0
    %477 = vmatprep.subr.mxu0 0.0
    %478 = vmatpush2.xpose.msra.mxu0 0.0
    %479 = vmatprep.subr.mxu0 0.0
    %480 = vmatpush2.xpose.msra.mxu0 0.0
    %481 = vmatprep.subr.mxu0 0.0
    %482 = vmatpush2.xpose.msra.mxu0 0.0
    %483 = vmatprep.mubr.f32.mxu0 0.0
    %484 = vmatmul.mubr.f32.gmra.mxu0 %v414
    %v485 = vpop.f32.mrf.mxu0
    %v486 = vadd.f32 0.0, %v485
    %v487 = vpop.f32.mrf.mxu0
    %488 = vdwg.mxu0
    %v490 = vsel %vm412, %v249, 0
    %v493 = vsel %vm412, %v329, 0
    %495 = vmatprep.subr.mxu0 0.0
    %496 = vmatpush1.xpose.msra.mxu0 0.0
    %497 = vmatprep.subr.mxu0 0.0
    %498 = vmatpush1.xpose.msra.mxu0 0.0
    %499 = vmatprep.subr.mxu0 0.0
    %500 = vmatpush1.xpose.msra.mxu0 0.0
    %501 = vmatprep.subr.mxu0 0.0
    %502 = vmatpush1.xpose.msra.mxu0 0.0
    %503 = vmatprep.subr.mxu0 0.0
    %504 = vmatpush1.xpose.msra.mxu0 0.0
    %505 = vmatprep.subr.mxu0 0.0
    %506 = vmatpush1.xpose.msra.mxu0 0.0
    %507 = vmatprep.subr.mxu0 0.0
    %508 = vmatpush1.xpose.msra.mxu0 0.0
    %509 = vmatprep.subr.mxu0 0.0
    %510 = vmatpush1.xpose.msra.mxu0 0.0
    %511 = vmatprep.subr.mxu0 0.0
    %512 = vmatpush1.xpose.msra.mxu0 0.0
    %513 = vmatprep.subr.mxu0 0.0
    %514 = vmatpush1.xpose.msra.mxu0 0.0
    %515 = vmatprep.subr.mxu0 0.0
    %516 = vmatpush1.xpose.msra.mxu0 0.0
    %517 = vmatprep.subr.mxu0 0.0
    %518 = vmatpush1.xpose.msra.mxu0 0.0
    %519 = vmatprep.subr.mxu0 0.0
    %520 = vmatpush1.xpose.msra.mxu0 0.0
    %521 = vmatprep.subr.mxu0 0.0
    %522 = vmatpush1.xpose.msra.mxu0 0.0
    %523 = vmatprep.subr.mxu0 0.0
    %524 = vmatpush1.xpose.msra.mxu0 0.0
    %525 = vmatprep.subr.mxu0 0.0
    %526 = vmatpush1.xpose.msra.mxu0 %v493
    %527 = vmatprep.subr.mxu0 0.0
    %528 = vmatpush2.xpose.msra.mxu0 0.0
    %529 = vmatprep.subr.mxu0 0.0
    %530 = vmatpush2.xpose.msra.mxu0 0.0
    %531 = vmatprep.subr.mxu0 0.0
    %532 = vmatpush2.xpose.msra.mxu0 0.0
    %533 = vmatprep.subr.mxu0 0.0
    %534 = vmatpush2.xpose.msra.mxu0 0.0
    %535 = vmatprep.subr.mxu0 0.0
    %536 = vmatpush2.xpose.msra.mxu0 0.0
    %537 = vmatprep.subr.mxu0 0.0
    %538 = vmatpush2.xpose.msra.mxu0 0.0
    %539 = vmatprep.subr.mxu0 0.0
    %540 = vmatpush2.xpose.msra.mxu0 0.0
    %541 = vmatprep.subr.mxu0 0.0
    %542 = vmatpush2.xpose.msra.mxu0 0.0
    %543 = vmatprep.subr.mxu0 0.0
    %544 = vmatpush2.xpose.msra.mxu0 0.0
    %545 = vmatprep.subr.mxu0 0.0
    %546 = vmatpush2.xpose.msra.mxu0 0.0
    %547 = vmatprep.subr.mxu0 0.0
    %548 = vmatpush2.xpose.msra.mxu0 0.0
    %549 = vmatprep.subr.mxu0 0.0
    %550 = vmatpush2.xpose.msra.mxu0 0.0
    %551 = vmatprep.subr.mxu0 0.0
    %552 = vmatpush2.xpose.msra.mxu0 0.0
    %553 = vmatprep.subr.mxu0 0.0
    %554 = vmatpush2.xpose.msra.mxu0 0.0
    %555 = vmatprep.subr.mxu0 0.0
    %556 = vmatpush2.xpose.msra.mxu0 0.0
    %557 = vmatprep.subr.mxu0 0.0
    %558 = vmatpush2.xpose.msra.mxu0 0.0
    %559 = vmatprep.mubr.f32.mxu0 0.0
    %560 = vmatmul.mubr.f32.gmra.mxu0 %v490
    %v561 = vpop.f32.mrf.mxu0
    %v562 = vadd.f32 0.0, %v561
    %v563 = vpop.f32.mrf.mxu0
    %564 = vdwg.mxu0
    %v565 = vmul.f32 %v486, 0.25
    %v566 = vmul.f32 %v562, 0.25
    %vm567 = vcmask 64512
    %v568 = vsel %vm567, %v565, -inf
    %569 = vmax.xlane.f32.xlu0 %v568
    %v570 = vpop.xlane.xlu0 %569
    %v571 = vsel %vm567, %v566, -inf
    %572 = vmax.xlane.f32.xlu0 %v571
    %v573 = vpop.xlane.xlu0 %572
    %v574 = vsub.f32 %v565, %v570
    %v575 = vsub.f32 %v566, %v573
    %v576 = vmul.f32 %v574, 1.442695
    %v577 = vpow.pop %v576
    %v578 = vmul.f32 %v575, 1.442695
    %v579 = vpow.pop %v578
    %v580 = vsel %vm567, %v577, 0.0
    %581 = vadd.xlane.f32.xlu0 %v580
    %v582 = vpop.xlane.xlu0 %581
    %v583 = vsel %vm567, %v579, 0.0
    %584 = vadd.xlane.f32.xlu0 %v583
    %v585 = vpop.xlane.xlu0 %584
    %v586 = vrcp.pop %v582
    %v587 = vrcp.pop %v585
    %v588 = vmul.f32 %v577, %v586
    %v589 = vmul.f32 %v579, %v587
    %v591 = vsel %vm567, %v588, 0
    %593 = vmatprep.subr.mxu0 0.0
    %594 = vmatpush1.msra.mxu0 0.0
    %595 = vmatprep.subr.mxu0 0.0
    %596 = vmatpush1.msra.mxu0 0.0
    %597 = vmatprep.subr.mxu0 0.0
    %598 = vmatpush1.msra.mxu0 0.0
    %599 = vmatprep.subr.mxu0 0.0
    %600 = vmatpush1.msra.mxu0 0.0
    %601 = vmatprep.subr.mxu0 0.0
    %602 = vmatpush1.msra.mxu0 0.0
    %603 = vmatprep.subr.mxu0 0.0
    %604 = vmatpush1.msra.mxu0 0.0
    %605 = vmatprep.subr.mxu0 0.0
    %606 = vmatpush1.msra.mxu0 0.0
    %607 = vmatprep.subr.mxu0 0.0
    %608 = vmatpush1.msra.mxu0 0.0
    %609 = vmatprep.subr.mxu0 0.0
    %610 = vmatpush1.msra.mxu0 0.0
    %611 = vmatprep.subr.mxu0 0.0
    %612 = vmatpush1.msra.mxu0 0.0
    %613 = vmatprep.subr.mxu0 0.0
    %614 = vmatpush1.msra.mxu0 0.0
    %615 = vmatprep.subr.mxu0 0.0
    %616 = vmatpush1.msra.mxu0 0.0
    %617 = vmatprep.subr.mxu0 0.0
    %618 = vmatpush1.msra.mxu0 0.0
    %619 = vmatprep.subr.mxu0 0.0
    %620 = vmatpush1.msra.mxu0 0.0
    %621 = vmatprep.subr.mxu0 0.0
    %622 = vmatpush1.msra.mxu0 0.0
    %623 = vmatprep.subr.mxu0 0.0
    %624 = vmatpush1.msra.mxu0 %v406
    %625 = vmatprep.subr.mxu0 0.0
    %626 = vmatpush2.msra.mxu0 0.0
    %627 = vmatprep.subr.mxu0 0.0
    %628 = vmatpush2.msra.mxu0 0.0
    %629 = vmatprep.subr.mxu0 0.0
    %630 = vmatpush2.msra.mxu0 0.0
    %631 = vmatprep.subr.mxu0 0.0
    %632 = vmatpush2.msra.mxu0 0.0
    %633 = vmatprep.subr.mxu0 0.0
    %634 = vmatpush2.msra.mxu0 0.0
    %635 = vmatprep.subr.mxu0 0.0
    %636 = vmatpush2.msra.mxu0 0.0
    %637 = vmatprep.subr.mxu0 0.0
    %638 = vmatpush2.msra.mxu0 0.0
    %639 = vmatprep.subr.mxu0 0.0
    %640 = vmatpush2.msra.mxu0 0.0
    %641 = vmatprep.subr.mxu0 0.0
    %642 = vmatpush2.msra.mxu0 0.0
    %643 = vmatprep.subr.mxu0 0.0
    %644 = vmatpush2.msra.mxu0 0.0
    %645 = vmatprep.subr.mxu0 0.0
    %646 = vmatpush2.msra.mxu0 0.0
    %647 = vmatprep.subr.mxu0 0.0
    %648 = vmatpush2.msra.mxu0 0.0
    %649 = vmatprep.subr.mxu0 0.0
    %650 = vmatpush2.msra.mxu0 0.0
    %651 = vmatprep.subr.mxu0 0.0
    %652 = vmatpush2.msra.mxu0 0.0
    %653 = vmatprep.subr.mxu0 0.0
    %654 = vmatpush2.msra.mxu0 0.0
    %655 = vmatprep.subr.mxu0 0.0
    %656 = vmatpush2.msra.mxu0 0.0
    %657 = vmatprep.mubr.f32.mxu0 0.0
    %658 = vmatmul.mubr.f32.gmra.mxu0 %v591
    %v659 = vpop.f32.mrf.mxu0
    %v660 = vadd.f32 0.0, %v659
    %v661 = vpop.f32.mrf.mxu0
    %662 = vdwg.mxu0
    %v664 = vsel %vm567, %v589, 0
    %666 = vmatprep.subr.mxu0 0.0
    %667 = vmatpush1.msra.mxu0 0.0
    %668 = vmatprep.subr.mxu0 0.0
    %669 = vmatpush1.msra.mxu0 0.0
    %670 = vmatprep.subr.mxu0 0.0
    %671 = vmatpush1.msra.mxu0 0.0
    %672 = vmatprep.subr.mxu0 0.0
    %673 = vmatpush1.msra.mxu0 0.0
    %674 = vmatprep.subr.mxu0 0.0
    %675 = vmatpush1.msra.mxu0 0.0
    %676 = vmatprep.subr.mxu0 0.0
    %677 = vmatpush1.msra.mxu0 0.0
    %678 = vmatprep.subr.mxu0 0.0
    %679 = vmatpush1.msra.mxu0 0.0
    %680 = vmatprep.subr.mxu0 0.0
    %681 = vmatpush1.msra.mxu0 0.0
    %682 = vmatprep.subr.mxu0 0.0
    %683 = vmatpush1.msra.mxu0 0.0
    %684 = vmatprep.subr.mxu0 0.0
    %685 = vmatpush1.msra.mxu0 0.0
    %686 = vmatprep.subr.mxu0 0.0
    %687 = vmatpush1.msra.mxu0 0.0
    %688 = vmatprep.subr.mxu0 0.0
    %689 = vmatpush1.msra.mxu0 0.0
    %690 = vmatprep.subr.mxu0 0.0
    %691 = vmatpush1.msra.mxu0 0.0
    %692 = vmatprep.subr.mxu0 0.0
    %693 = vmatpush1.msra.mxu0 0.0
    %694 = vmatprep.subr.mxu0 0.0
    %695 = vmatpush1.msra.mxu0 0.0
    %696 = vmatprep.subr.mxu0 0.0
    %697 = vmatpush1.msra.mxu0 %v409
    %698 = vmatprep.subr.mxu0 0.0
    %699 = vmatpush2.msra.mxu0 0.0
    %700 = vmatprep.subr.mxu0 0.0
    %701 = vmatpush2.msra.mxu0 0.0
    %702 = vmatprep.subr.mxu0 0.0
    %703 = vmatpush2.msra.mxu0 0.0
    %704 = vmatprep.subr.mxu0 0.0
    %705 = vmatpush2.msra.mxu0 0.0
    %706 = vmatprep.subr.mxu0 0.0
    %707 = vmatpush2.msra.mxu0 0.0
    %708 = vmatprep.subr.mxu0 0.0
    %709 = vmatpush2.msra.mxu0 0.0
    %710 = vmatprep.subr.mxu0 0.0
    %711 = vmatpush2.msra.mxu0 0.0
    %712 = vmatprep.subr.mxu0 0.0
    %713 = vmatpush2.msra.mxu0 0.0
    %714 = vmatprep.subr.mxu0 0.0
    %715 = vmatpush2.msra.mxu0 0.0
    %716 = vmatprep.subr.mxu0 0.0
    %717 = vmatpush2.msra.mxu0 0.0
    %718 = vmatprep.subr.mxu0 0.0
    %719 = vmatpush2.msra.mxu0 0.0
    %720 = vmatprep.subr.mxu0 0.0
    %721 = vmatpush2.msra.mxu0 0.0
    %722 = vmatprep.subr.mxu0 0.0
    %723 = vmatpush2.msra.mxu0 0.0
    %724 = vmatprep.subr.mxu0 0.0
    %725 = vmatpush2.msra.mxu0 0.0
    %726 = vmatprep.subr.mxu0 0.0
    %727 = vmatpush2.msra.mxu0 0.0
    %728 = vmatprep.subr.mxu0 0.0
    %729 = vmatpush2.msra.mxu0 0.0
    %730 = vmatprep.mubr.f32.mxu0 0.0
    %731 = vmatmul.mubr.f32.gmra.mxu0 %v664
    %v732 = vpop.f32.mrf.mxu0
    %v733 = vadd.f32 0.0, %v732
    %v734 = vpop.f32.mrf.mxu0
    %735 = vdwg.mxu0
    %736 = vrot.lane.b32.xlu0 %v246, 112
    %v737 = vpop.permute.xlu0 %736
    %738 = vrot.lane.b32.xlu0 %v326, 112
    %v739 = vpop.permute.xlu0 %738
    %v740 = vsel %vm412, %v737, 0
    %v742 = vsel %vm412, %v739, 0
    %744 = vmatprep.subr.mxu0 0.0
    %745 = vmatpush1.xpose.msra.mxu0 0.0
    %746 = vmatprep.subr.mxu0 0.0
    %747 = vmatpush1.xpose.msra.mxu0 0.0
    %748 = vmatprep.subr.mxu0 0.0
    %749 = vmatpush1.xpose.msra.mxu0 0.0
    %750 = vmatprep.subr.mxu0 0.0
    %751 = vmatpush1.xpose.msra.mxu0 0.0
    %752 = vmatprep.subr.mxu0 0.0
    %753 = vmatpush1.xpose.msra.mxu0 0.0
    %754 = vmatprep.subr.mxu0 0.0
    %755 = vmatpush1.xpose.msra.mxu0 0.0
    %756 = vmatprep.subr.mxu0 0.0
    %757 = vmatpush1.xpose.msra.mxu0 0.0
    %758 = vmatprep.subr.mxu0 0.0
    %759 = vmatpush1.xpose.msra.mxu0 0.0
    %760 = vmatprep.subr.mxu0 0.0
    %761 = vmatpush1.xpose.msra.mxu0 0.0
    %762 = vmatprep.subr.mxu0 0.0
    %763 = vmatpush1.xpose.msra.mxu0 0.0
    %764 = vmatprep.subr.mxu0 0.0
    %765 = vmatpush1.xpose.msra.mxu0 0.0
    %766 = vmatprep.subr.mxu0 0.0
    %767 = vmatpush1.xpose.msra.mxu0 0.0
    %768 = vmatprep.subr.mxu0 0.0
    %769 = vmatpush1.xpose.msra.mxu0 0.0
    %770 = vmatprep.subr.mxu0 0.0
    %771 = vmatpush1.xpose.msra.mxu0 0.0
    %772 = vmatprep.subr.mxu0 0.0
    %773 = vmatpush1.xpose.msra.mxu0 0.0
    %774 = vmatprep.subr.mxu0 0.0
    %775 = vmatpush1.xpose.msra.mxu0 %v742
    %776 = vmatprep.subr.mxu0 0.0
    %777 = vmatpush2.xpose.msra.mxu0 0.0
    %778 = vmatprep.subr.mxu0 0.0
    %779 = vmatpush2.xpose.msra.mxu0 0.0
    %780 = vmatprep.subr.mxu0 0.0
    %781 = vmatpush2.xpose.msra.mxu0 0.0
    %782 = vmatprep.subr.mxu0 0.0
    %783 = vmatpush2.xpose.msra.mxu0 0.0
    %784 = vmatprep.subr.mxu0 0.0
    %785 = vmatpush2.xpose.msra.mxu0 0.0
    %786 = vmatprep.subr.mxu0 0.0
    %787 = vmatpush2.xpose.msra.mxu0 0.0
    %788 = vmatprep.subr.mxu0 0.0
    %789 = vmatpush2.xpose.msra.mxu0 0.0
    %790 = vmatprep.subr.mxu0 0.0
    %791 = vmatpush2.xpose.msra.mxu0 0.0
    %792 = vmatprep.subr.mxu0 0.0
    %793 = vmatpush2.xpose.msra.mxu0 0.0
    %794 = vmatprep.subr.mxu0 0.0
    %795 = vmatpush2.xpose.msra.mxu0 0.0
    %796 = vmatprep.subr.mxu0 0.0
    %797 = vmatpush2.xpose.msra.mxu0 0.0
    %798 = vmatprep.subr.mxu0 0.0
    %799 = vmatpush2.xpose.msra.mxu0 0.0
    %800 = vmatprep.subr.mxu0 0.0
    %801 = vmatpush2.xpose.msra.mxu0 0.0
    %802 = vmatprep.subr.mxu0 0.0
    %803 = vmatpush2.xpose.msra.mxu0 0.0
    %804 = vmatprep.subr.mxu0 0.0
    %805 = vmatpush2.xpose.msra.mxu0 0.0
    %806 = vmatprep.subr.mxu0 0.0
    %807 = vmatpush2.xpose.msra.mxu0 0.0
    %808 = vmatprep.mubr.f32.mxu0 0.0
    %809 = vmatmul.mubr.f32.gmra.mxu0 %v740
    %v810 = vpop.f32.mrf.mxu0
    %v811 = vadd.f32 0.0, %v810
    %v812 = vpop.f32.mrf.mxu0
    %813 = vdwg.mxu0
    %814 = vrot.lane.b32.xlu0 %v249, 112
    %v815 = vpop.permute.xlu0 %814
    %816 = vrot.lane.b32.xlu0 %v329, 112
    %v817 = vpop.permute.xlu0 %816
    %v818 = vsel %vm412, %v815, 0
    %v820 = vsel %vm412, %v817, 0
    %822 = vmatprep.subr.mxu0 0.0
    %823 = vmatpush1.xpose.msra.mxu0 0.0
    %824 = vmatprep.subr.mxu0 0.0
    %825 = vmatpush1.xpose.msra.mxu0 0.0
    %826 = vmatprep.subr.mxu0 0.0
    %827 = vmatpush1.xpose.msra.mxu0 0.0
    %828 = vmatprep.subr.mxu0 0.0
    %829 = vmatpush1.xpose.msra.mxu0 0.0
    %830 = vmatprep.subr.mxu0 0.0
    %831 = vmatpush1.xpose.msra.mxu0 0.0
    %832 = vmatprep.subr.mxu0 0.0
    %833 = vmatpush1.xpose.msra.mxu0 0.0
    %834 = vmatprep.subr.mxu0 0.0
    %835 = vmatpush1.xpose.msra.mxu0 0.0
    %836 = vmatprep.subr.mxu0 0.0
    %837 = vmatpush1.xpose.msra.mxu0 0.0
    %838 = vmatprep.subr.mxu0 0.0
    %839 = vmatpush1.xpose.msra.mxu0 0.0
    %840 = vmatprep.subr.mxu0 0.0
    %841 = vmatpush1.xpose.msra.mxu0 0.0
    %842 = vmatprep.subr.mxu0 0.0
    %843 = vmatpush1.xpose.msra.mxu0 0.0
    %844 = vmatprep.subr.mxu0 0.0
    %845 = vmatpush1.xpose.msra.mxu0 0.0
    %846 = vmatprep.subr.mxu0 0.0
    %847 = vmatpush1.xpose.msra.mxu0 0.0
    %848 = vmatprep.subr.mxu0 0.0
    %849 = vmatpush1.xpose.msra.mxu0 0.0
    %850 = vmatprep.subr.mxu0 0.0
    %851 = vmatpush1.xpose.msra.mxu0 0.0
    %852 = vmatprep.subr.mxu0 0.0
    %853 = vmatpush1.xpose.msra.mxu0 %v820
    %854 = vmatprep.subr.mxu0 0.0
    %855 = vmatpush2.xpose.msra.mxu0 0.0
    %856 = vmatprep.subr.mxu0 0.0
    %857 = vmatpush2.xpose.msra.mxu0 0.0
    %858 = vmatprep.subr.mxu0 0.0
    %859 = vmatpush2.xpose.msra.mxu0 0.0
    %860 = vmatprep.subr.mxu0 0.0
    %861 = vmatpush2.xpose.msra.mxu0 0.0
    %862 = vmatprep.subr.mxu0 0.0
    %863 = vmatpush2.xpose.msra.mxu0 0.0
    %864 = vmatprep.subr.mxu0 0.0
    %865 = vmatpush2.xpose.msra.mxu0 0.0
    %866 = vmatprep.subr.mxu0 0.0
    %867 = vmatpush2.xpose.msra.mxu0 0.0
    %868 = vmatprep.subr.mxu0 0.0
    %869 = vmatpush2.xpose.msra.mxu0 0.0
    %870 = vmatprep.subr.mxu0 0.0
    %871 = vmatpush2.xpose.msra.mxu0 0.0
    %872 = vmatprep.subr.mxu0 0.0
    %873 = vmatpush2.xpose.msra.mxu0 0.0
    %874 = vmatprep.subr.mxu0 0.0
    %875 = vmatpush2.xpose.msra.mxu0 0.0
    %876 = vmatprep.subr.mxu0 0.0
    %877 = vmatpush2.xpose.msra.mxu0 0.0
    %878 = vmatprep.subr.mxu0 0.0
    %879 = vmatpush2.xpose.msra.mxu0 0.0
    %880 = vmatprep.subr.mxu0 0.0
    %881 = vmatpush2.xpose.msra.mxu0 0.0
    %882 = vmatprep.subr.mxu0 0.0
    %883 = vmatpush2.xpose.msra.mxu0 0.0
    %884 = vmatprep.subr.mxu0 0.0
    %885 = vmatpush2.xpose.msra.mxu0 0.0
    %886 = vmatprep.mubr.f32.mxu0 0.0
    %887 = vmatmul.mubr.f32.gmra.mxu0 %v818
    %v888 = vpop.f32.mrf.mxu0
    %v889 = vadd.f32 0.0, %v888
    %v890 = vpop.f32.mrf.mxu0
    %891 = vdwg.mxu0
    %v892 = vmul.f32 %v811, 0.25
    %v893 = vmul.f32 %v889, 0.25
    %v894 = vsel %vm567, %v892, -inf
    %895 = vmax.xlane.f32.xlu0 %v894
    %v896 = vpop.xlane.xlu0 %895
    %v897 = vsel %vm567, %v893, -inf
    %898 = vmax.xlane.f32.xlu0 %v897
    %v899 = vpop.xlane.xlu0 %898
    %v900 = vsub.f32 %v892, %v896
    %v901 = vsub.f32 %v893, %v899
    %v902 = vmul.f32 %v900, 1.442695
    %v903 = vpow.pop %v902
    %v904 = vmul.f32 %v901, 1.442695
    %v905 = vpow.pop %v904
    %v906 = vsel %vm567, %v903, 0.0
    %907 = vadd.xlane.f32.xlu0 %v906
    %v908 = vpop.xlane.xlu0 %907
    %v909 = vsel %vm567, %v905, 0.0
    %910 = vadd.xlane.f32.xlu0 %v909
    %v911 = vpop.xlane.xlu0 %910
    %v912 = vrcp.pop %v908
    %v913 = vrcp.pop %v911
    %v914 = vmul.f32 %v903, %v912
    %v915 = vmul.f32 %v905, %v913
    %917 = vrot.lane.b32.xlu0 %v406, 112
    %v918 = vpop.permute.xlu0 %917
    %v921 = vsel %vm567, %v914, 0
    %923 = vmatprep.subr.mxu0 0.0
    %924 = vmatpush1.msra.mxu0 0.0
    %925 = vmatprep.subr.mxu0 0.0
    %926 = vmatpush1.msra.mxu0 0.0
    %927 = vmatprep.subr.mxu0 0.0
    %928 = vmatpush1.msra.mxu0 0.0
    %929 = vmatprep.subr.mxu0 0.0
    %930 = vmatpush1.msra.mxu0 0.0
    %931 = vmatprep.subr.mxu0 0.0
    %932 = vmatpush1.msra.mxu0 0.0
    %933 = vmatprep.subr.mxu0 0.0
    %934 = vmatpush1.msra.mxu0 0.0
    %935 = vmatprep.subr.mxu0 0.0
    %936 = vmatpush1.msra.mxu0 0.0
    %937 = vmatprep.subr.mxu0 0.0
    %938 = vmatpush1.msra.mxu0 0.0
    %939 = vmatprep.subr.mxu0 0.0
    %940 = vmatpush1.msra.mxu0 0.0
    %941 = vmatprep.subr.mxu0 0.0
    %942 = vmatpush1.msra.mxu0 0.0
    %943 = vmatprep.subr.mxu0 0.0
    %944 = vmatpush1.msra.mxu0 0.0
    %945 = vmatprep.subr.mxu0 0.0
    %946 = vmatpush1.msra.mxu0 0.0
    %947 = vmatprep.subr.mxu0 0.0
    %948 = vmatpush1.msra.mxu0 0.0
    %949 = vmatprep.subr.mxu0 0.0
    %950 = vmatpush1.msra.mxu0 0.0
    %951 = vmatprep.subr.mxu0 0.0
    %952 = vmatpush1.msra.mxu0 0.0
    %953 = vmatprep.subr.mxu0 0.0
    %954 = vmatpush1.msra.mxu0 %v918
    %955 = vmatprep.subr.mxu0 0.0
    %956 = vmatpush2.msra.mxu0 0.0
    %957 = vmatprep.subr.mxu0 0.0
    %958 = vmatpush2.msra.mxu0 0.0
    %959 = vmatprep.subr.mxu0 0.0
    %960 = vmatpush2.msra.mxu0 0.0
    %961 = vmatprep.subr.mxu0 0.0
    %962 = vmatpush2.msra.mxu0 0.0
    %963 = vmatprep.subr.mxu0 0.0
    %964 = vmatpush2.msra.mxu0 0.0
    %965 = vmatprep.subr.mxu0 0.0
    %966 = vmatpush2.msra.mxu0 0.0
    %967 = vmatprep.subr.mxu0 0.0
    %968 = vmatpush2.msra.mxu0 0.0
    %969 = vmatprep.subr.mxu0 0.0
    %970 = vmatpush2.msra.mxu0 0.0
    %971 = vmatprep.subr.mxu0 0.0
    %972 = vmatpush2.msra.mxu0 0.0
    %973 = vmatprep.subr.mxu0 0.0
    %974 = vmatpush2.msra.mxu0 0.0
    %975 = vmatprep.subr.mxu0 0.0
    %976 = vmatpush2.msra.mxu0 0.0
    %977 = vmatprep.subr.mxu0 0.0
    %978 = vmatpush2.msra.mxu0 0.0
    %979 = vmatprep.subr.mxu0 0.0
    %980 = vmatpush2.msra.mxu0 0.0
    %981 = vmatprep.subr.mxu0 0.0
    %982 = vmatpush2.msra.mxu0 0.0
    %983 = vmatprep.subr.mxu0 0.0
    %984 = vmatpush2.msra.mxu0 0.0
    %985 = vmatprep.subr.mxu0 0.0
    %986 = vmatpush2.msra.mxu0 0.0
    %987 = vmatprep.mubr.f32.mxu0 0.0
    %988 = vmatmul.mubr.f32.gmra.mxu0 %v921
    %v989 = vpop.f32.mrf.mxu0
    %v990 = vadd.f32 0.0, %v989
    %v991 = vpop.f32.mrf.mxu0
    %992 = vdwg.mxu0
    %994 = vrot.lane.b32.xlu0 %v409, 112
    %v995 = vpop.permute.xlu0 %994
    %v998 = vsel %vm567, %v915, 0
    %1000 = vmatprep.subr.mxu0 0.0
    %1001 = vmatpush1.msra.mxu0 0.0
    %1002 = vmatprep.subr.mxu0 0.0
    %1003 = vmatpush1.msra.mxu0 0.0
    %1004 = vmatprep.subr.mxu0 0.0
    %1005 = vmatpush1.msra.mxu0 0.0
    %1006 = vmatprep.subr.mxu0 0.0
    %1007 = vmatpush1.msra.mxu0 0.0
    %1008 = vmatprep.subr.mxu0 0.0
    %1009 = vmatpush1.msra.mxu0 0.0
    %1010 = vmatprep.subr.mxu0 0.0
    %1011 = vmatpush1.msra.mxu0 0.0
    %1012 = vmatprep.subr.mxu0 0.0
    %1013 = vmatpush1.msra.mxu0 0.0
    %1014 = vmatprep.subr.mxu0 0.0
    %1015 = vmatpush1.msra.mxu0 0.0
    %1016 = vmatprep.subr.mxu0 0.0
    %1017 = vmatpush1.msra.mxu0 0.0
    %1018 = vmatprep.subr.mxu0 0.0
    %1019 = vmatpush1.msra.mxu0 0.0
    %1020 = vmatprep.subr.mxu0 0.0
    %1021 = vmatpush1.msra.mxu0 0.0
    %1022 = vmatprep.subr.mxu0 0.0
    %1023 = vmatpush1.msra.mxu0 0.0
    %1024 = vmatprep.subr.mxu0 0.0
    %1025 = vmatpush1.msra.mxu0 0.0
    %1026 = vmatprep.subr.mxu0 0.0
    %1027 = vmatpush1.msra.mxu0 0.0
    %1028 = vmatprep.subr.mxu0 0.0
    %1029 = vmatpush1.msra.mxu0 0.0
    %1030 = vmatprep.subr.mxu0 0.0
    %1031 = vmatpush1.msra.mxu0 %v995
    %1032 = vmatprep.subr.mxu0 0.0
    %1033 = vmatpush2.msra.mxu0 0.0
    %1034 = vmatprep.subr.mxu0 0.0
    %1035 = vmatpush2.msra.mxu0 0.0
    %1036 = vmatprep.subr.mxu0 0.0
    %1037 = vmatpush2.msra.mxu0 0.0
    %1038 = vmatprep.subr.mxu0 0.0
    %1039 = vmatpush2.msra.mxu0 0.0
    %1040 = vmatprep.subr.mxu0 0.0
    %1041 = vmatpush2.msra.mxu0 0.0
    %1042 = vmatprep.subr.mxu0 0.0
    %1043 = vmatpush2.msra.mxu0 0.0
    %1044 = vmatprep.subr.mxu0 0.0
    %1045 = vmatpush2.msra.mxu0 0.0
    %1046 = vmatprep.subr.mxu0 0.0
    %1047 = vmatpush2.msra.mxu0 0.0
    %1048 = vmatprep.subr.mxu0 0.0
    %1049 = vmatpush2.msra.mxu0 0.0
    %1050 = vmatprep.subr.mxu0 0.0
    %1051 = vmatpush2.msra.mxu0 0.0
    %1052 = vmatprep.subr.mxu0 0.0
    %1053 = vmatpush2.msra.mxu0 0.0
    %1054 = vmatprep.subr.mxu0 0.0
    %1055 = vmatpush2.msra.mxu0 0.0
    %1056 = vmatprep.subr.mxu0 0.0
    %1057 = vmatpush2.msra.mxu0 0.0
    %1058 = vmatprep.subr.mxu0 0.0
    %1059 = vmatpush2.msra.mxu0 0.0
    %1060 = vmatprep.subr.mxu0 0.0
    %1061 = vmatpush2.msra.mxu0 0.0
    %1062 = vmatprep.subr.mxu0 0.0
    %1063 = vmatpush2.msra.mxu0 0.0
    %1064 = vmatprep.mubr.f32.mxu0 0.0
    %1065 = vmatmul.mubr.f32.gmra.mxu0 %v998
    %v1066 = vpop.f32.mrf.mxu0
    %v1067 = vadd.f32 0.0, %v1066
    %v1068 = vpop.f32.mrf.mxu0
    %1069 = vdwg.mxu0
    %1070 = vrot.lane.b32.xlu0 %v246, 96
    %v1071 = vpop.permute.xlu0 %1070
    %1072 = vrot.lane.b32.xlu0 %v326, 96
    %v1073 = vpop.permute.xlu0 %1072
    %v1074 = vsel %vm412, %v1071, 0
    %v1076 = vsel %vm412, %v1073, 0
    %1078 = vmatprep.subr.mxu0 0.0
    %1079 = vmatpush1.xpose.msra.mxu0 0.0
    %1080 = vmatprep.subr.mxu0 0.0
    %1081 = vmatpush1.xpose.msra.mxu0 0.0
    %1082 = vmatprep.subr.mxu0 0.0
    %1083 = vmatpush1.xpose.msra.mxu0 0.0
    %1084 = vmatprep.subr.mxu0 0.0
    %1085 = vmatpush1.xpose.msra.mxu0 0.0
    %1086 = vmatprep.subr.mxu0 0.0
    %1087 = vmatpush1.xpose.msra.mxu0 0.0
    %1088 = vmatprep.subr.mxu0 0.0
    %1089 = vmatpush1.xpose.msra.mxu0 0.0
    %1090 = vmatprep.subr.mxu0 0.0
    %1091 = vmatpush1.xpose.msra.mxu0 0.0
    %1092 = vmatprep.subr.mxu0 0.0
    %1093 = vmatpush1.xpose.msra.mxu0 0.0
    %1094 = vmatprep.subr.mxu0 0.0
    %1095 = vmatpush1.xpose.msra.mxu0 0.0
    %1096 = vmatprep.subr.mxu0 0.0
    %1097 = vmatpush1.xpose.msra.mxu0 0.0
    %1098 = vmatprep.subr.mxu0 0.0
    %1099 = vmatpush1.xpose.msra.mxu0 0.0
    %1100 = vmatprep.subr.mxu0 0.0
    %1101 = vmatpush1.xpose.msra.mxu0 0.0
    %1102 = vmatprep.subr.mxu0 0.0
    %1103 = vmatpush1.xpose.msra.mxu0 0.0
    %1104 = vmatprep.subr.mxu0 0.0
    %1105 = vmatpush1.xpose.msra.mxu0 0.0
    %1106 = vmatprep.subr.mxu0 0.0
    %1107 = vmatpush1.xpose.msra.mxu0 0.0
    %1108 = vmatprep.subr.mxu0 0.0
    %1109 = vmatpush1.xpose.msra.mxu0 %v1076
    %1110 = vmatprep.subr.mxu0 0.0
    %1111 = vmatpush2.xpose.msra.mxu0 0.0
    %1112 = vmatprep.subr.mxu0 0.0
    %1113 = vmatpush2.xpose.msra.mxu0 0.0
    %1114 = vmatprep.subr.mxu0 0.0
    %1115 = vmatpush2.xpose.msra.mxu0 0.0
    %1116 = vmatprep.subr.mxu0 0.0
    %1117 = vmatpush2.xpose.msra.mxu0 0.0
    %1118 = vmatprep.subr.mxu0 0.0
    %1119 = vmatpush2.xpose.msra.mxu0 0.0
    %1120 = vmatprep.subr.mxu0 0.0
    %1121 = vmatpush2.xpose.msra.mxu0 0.0
    %1122 = vmatprep.subr.mxu0 0.0
    %1123 = vmatpush2.xpose.msra.mxu0 0.0
    %1124 = vmatprep.subr.mxu0 0.0
    %1125 = vmatpush2.xpose.msra.mxu0 0.0
    %1126 = vmatprep.subr.mxu0 0.0
    %1127 = vmatpush2.xpose.msra.mxu0 0.0
    %1128 = vmatprep.subr.mxu0 0.0
    %1129 = vmatpush2.xpose.msra.mxu0 0.0
    %1130 = vmatprep.subr.mxu0 0.0
    %1131 = vmatpush2.xpose.msra.mxu0 0.0
    %1132 = vmatprep.subr.mxu0 0.0
    %1133 = vmatpush2.xpose.msra.mxu0 0.0
    %1134 = vmatprep.subr.mxu0 0.0
    %1135 = vmatpush2.xpose.msra.mxu0 0.0
    %1136 = vmatprep.subr.mxu0 0.0
    %1137 = vmatpush2.xpose.msra.mxu0 0.0
    %1138 = vmatprep.subr.mxu0 0.0
    %1139 = vmatpush2.xpose.msra.mxu0 0.0
    %1140 = vmatprep.subr.mxu0 0.0
    %1141 = vmatpush2.xpose.msra.mxu0 0.0
    %1142 = vmatprep.mubr.f32.mxu0 0.0
    %1143 = vmatmul.mubr.f32.gmra.mxu0 %v1074
    %v1144 = vpop.f32.mrf.mxu0
    %v1145 = vadd.f32 0.0, %v1144
    %v1146 = vpop.f32.mrf.mxu0
    %1147 = vdwg.mxu0
    %1148 = vrot.lane.b32.xlu0 %v249, 96
    %v1149 = vpop.permute.xlu0 %1148
    %1150 = vrot.lane.b32.xlu0 %v329, 96
    %v1151 = vpop.permute.xlu0 %1150
    %v1152 = vsel %vm412, %v1149, 0
    %v1154 = vsel %vm412, %v1151, 0
    %1156 = vmatprep.subr.mxu0 0.0
    %1157 = vmatpush1.xpose.msra.mxu0 0.0
    %1158 = vmatprep.subr.mxu0 0.0
    %1159 = vmatpush1.xpose.msra.mxu0 0.0
    %1160 = vmatprep.subr.mxu0 0.0
    %1161 = vmatpush1.xpose.msra.mxu0 0.0
    %1162 = vmatprep.subr.mxu0 0.0
    %1163 = vmatpush1.xpose.msra.mxu0 0.0
    %1164 = vmatprep.subr.mxu0 0.0
    %1165 = vmatpush1.xpose.msra.mxu0 0.0
    %1166 = vmatprep.subr.mxu0 0.0
    %1167 = vmatpush1.xpose.msra.mxu0 0.0
    %1168 = vmatprep.subr.mxu0 0.0
    %1169 = vmatpush1.xpose.msra.mxu0 0.0
    %1170 = vmatprep.subr.mxu0 0.0
    %1171 = vmatpush1.xpose.msra.mxu0 0.0
    %1172 = vmatprep.subr.mxu0 0.0
    %1173 = vmatpush1.xpose.msra.mxu0 0.0
    %1174 = vmatprep.subr.mxu0 0.0
    %1175 = vmatpush1.xpose.msra.mxu0 0.0
    %1176 = vmatprep.subr.mxu0 0.0
    %1177 = vmatpush1.xpose.msra.mxu0 0.0
    %1178 = vmatprep.subr.mxu0 0.0
    %1179 = vmatpush1.xpose.msra.mxu0 0.0
    %1180 = vmatprep.subr.mxu0 0.0
    %1181 = vmatpush1.xpose.msra.mxu0 0.0
    %1182 = vmatprep.subr.mxu0 0.0
    %1183 = vmatpush1.xpose.msra.mxu0 0.0
    %1184 = vmatprep.subr.mxu0 0.0
    %1185 = vmatpush1.xpose.msra.mxu0 0.0
    %1186 = vmatprep.subr.mxu0 0.0
    %1187 = vmatpush1.xpose.msra.mxu0 %v1154
    %1188 = vmatprep.subr.mxu0 0.0
    %1189 = vmatpush2.xpose.msra.mxu0 0.0
    %1190 = vmatprep.subr.mxu0 0.0
    %1191 = vmatpush2.xpose.msra.mxu0 0.0
    %1192 = vmatprep.subr.mxu0 0.0
    %1193 = vmatpush2.xpose.msra.mxu0 0.0
    %1194 = vmatprep.subr.mxu0 0.0
    %1195 = vmatpush2.xpose.msra.mxu0 0.0
    %1196 = vmatprep.subr.mxu0 0.0
    %1197 = vmatpush2.xpose.msra.mxu0 0.0
    %1198 = vmatprep.subr.mxu0 0.0
    %1199 = vmatpush2.xpose.msra.mxu0 0.0
    %1200 = vmatprep.subr.mxu0 0.0
    %1201 = vmatpush2.xpose.msra.mxu0 0.0
    %1202 = vmatprep.subr.mxu0 0.0
    %1203 = vmatpush2.xpose.msra.mxu0 0.0
    %1204 = vmatprep.subr.mxu0 0.0
    %1205 = vmatpush2.xpose.msra.mxu0 0.0
    %1206 = vmatprep.subr.mxu0 0.0
    %1207 = vmatpush2.xpose.msra.mxu0 0.0
    %1208 = vmatprep.subr.mxu0 0.0
    %1209 = vmatpush2.xpose.msra.mxu0 0.0
    %1210 = vmatprep.subr.mxu0 0.0
    %1211 = vmatpush2.xpose.msra.mxu0 0.0
    %1212 = vmatprep.subr.mxu0 0.0
    %1213 = vmatpush2.xpose.msra.mxu0 0.0
    %1214 = vmatprep.subr.mxu0 0.0
    %1215 = vmatpush2.xpose.msra.mxu0 0.0
    %1216 = vmatprep.subr.mxu0 0.0
    %1217 = vmatpush2.xpose.msra.mxu0 0.0
    %1218 = vmatprep.subr.mxu0 0.0
    %1219 = vmatpush2.xpose.msra.mxu0 0.0
    %1220 = vmatprep.mubr.f32.mxu0 0.0
    %1221 = vmatmul.mubr.f32.gmra.mxu0 %v1152
    %v1222 = vpop.f32.mrf.mxu0
    %v1223 = vadd.f32 0.0, %v1222
    %v1224 = vpop.f32.mrf.mxu0
    %1225 = vdwg.mxu0
    %v1226 = vmul.f32 %v1145, 0.25
    %v1227 = vmul.f32 %v1223, 0.25
    %v1228 = vsel %vm567, %v1226, -inf
    %1229 = vmax.xlane.f32.xlu0 %v1228
    %v1230 = vpop.xlane.xlu0 %1229
    %v1231 = vsel %vm567, %v1227, -inf
    %1232 = vmax.xlane.f32.xlu0 %v1231
    %v1233 = vpop.xlane.xlu0 %1232
    %v1234 = vsub.f32 %v1226, %v1230
    %v1235 = vsub.f32 %v1227, %v1233
    %v1236 = vmul.f32 %v1234, 1.442695
    %v1237 = vpow.pop %v1236
    %v1238 = vmul.f32 %v1235, 1.442695
    %v1239 = vpow.pop %v1238
    %v1240 = vsel %vm567, %v1237, 0.0
    %1241 = vadd.xlane.f32.xlu0 %v1240
    %v1242 = vpop.xlane.xlu0 %1241
    %v1243 = vsel %vm567, %v1239, 0.0
    %1244 = vadd.xlane.f32.xlu0 %v1243
    %v1245 = vpop.xlane.xlu0 %1244
    %v1246 = vrcp.pop %v1242
    %v1247 = vrcp.pop %v1245
    %v1248 = vmul.f32 %v1237, %v1246
    %v1249 = vmul.f32 %v1239, %v1247
    %1250 = vrot.lane.b32.xlu0 %v406, 96
    %v1251 = vpop.permute.xlu0 %1250
    %v1254 = vsel %vm567, %v1248, 0
    %1256 = vmatprep.subr.mxu0 0.0
    %1257 = vmatpush1.msra.mxu0 0.0
    %1258 = vmatprep.subr.mxu0 0.0
    %1259 = vmatpush1.msra.mxu0 0.0
    %1260 = vmatprep.subr.mxu0 0.0
    %1261 = vmatpush1.msra.mxu0 0.0
    %1262 = vmatprep.subr.mxu0 0.0
    %1263 = vmatpush1.msra.mxu0 0.0
    %1264 = vmatprep.subr.mxu0 0.0
    %1265 = vmatpush1.msra.mxu0 0.0
    %1266 = vmatprep.subr.mxu0 0.0
    %1267 = vmatpush1.msra.mxu0 0.0
    %1268 = vmatprep.subr.mxu0 0.0
    %1269 = vmatpush1.msra.mxu0 0.0
    %1270 = vmatprep.subr.mxu0 0.0
    %1271 = vmatpush1.msra.mxu0 0.0
    %1272 = vmatprep.subr.mxu0 0.0
    %1273 = vmatpush1.msra.mxu0 0.0
    %1274 = vmatprep.subr.mxu0 0.0
    %1275 = vmatpush1.msra.mxu0 0.0
    %1276 = vmatprep.subr.mxu0 0.0
    %1277 = vmatpush1.msra.mxu0 0.0
    %1278 = vmatprep.subr.mxu0 0.0
    %1279 = vmatpush1.msra.mxu0 0.0
    %1280 = vmatprep.subr.mxu0 0.0
    %1281 = vmatpush1.msra.mxu0 0.0
    %1282 = vmatprep.subr.mxu0 0.0
    %1283 = vmatpush1.msra.mxu0 0.0
    %1284 = vmatprep.subr.mxu0 0.0
    %1285 = vmatpush1.msra.mxu0 0.0
    %1286 = vmatprep.subr.mxu0 0.0
    %1287 = vmatpush1.msra.mxu0 %v1251
    %1288 = vmatprep.subr.mxu0 0.0
    %1289 = vmatpush2.msra.mxu0 0.0
    %1290 = vmatprep.subr.mxu0 0.0
    %1291 = vmatpush2.msra.mxu0 0.0
    %1292 = vmatprep.subr.mxu0 0.0
    %1293 = vmatpush2.msra.mxu0 0.0
    %1294 = vmatprep.subr.mxu0 0.0
    %1295 = vmatpush2.msra.mxu0 0.0
    %1296 = vmatprep.subr.mxu0 0.0
    %1297 = vmatpush2.msra.mxu0 0.0
    %1298 = vmatprep.subr.mxu0 0.0
    %1299 = vmatpush2.msra.mxu0 0.0
    %1300 = vmatprep.subr.mxu0 0.0
    %1301 = vmatpush2.msra.mxu0 0.0
    %1302 = vmatprep.subr.mxu0 0.0
    %1303 = vmatpush2.msra.mxu0 0.0
    %1304 = vmatprep.subr.mxu0 0.0
    %1305 = vmatpush2.msra.mxu0 0.0
    %1306 = vmatprep.subr.mxu0 0.0
    %1307 = vmatpush2.msra.mxu0 0.0
    %1308 = vmatprep.subr.mxu0 0.0
    %1309 = vmatpush2.msra.mxu0 0.0
    %1310 = vmatprep.subr.mxu0 0.0
    %1311 = vmatpush2.msra.mxu0 0.0
    %1312 = vmatprep.subr.mxu0 0.0
    %1313 = vmatpush2.msra.mxu0 0.0
    %1314 = vmatprep.subr.mxu0 0.0
    %1315 = vmatpush2.msra.mxu0 0.0
    %1316 = vmatprep.subr.mxu0 0.0
    %1317 = vmatpush2.msra.mxu0 0.0
    %1318 = vmatprep.subr.mxu0 0.0
    %1319 = vmatpush2.msra.mxu0 0.0
    %1320 = vmatprep.mubr.f32.mxu0 0.0
    %1321 = vmatmul.mubr.f32.gmra.mxu0 %v1254
    %v1322 = vpop.f32.mrf.mxu0
    %v1323 = vadd.f32 0.0, %v1322
    %v1324 = vpop.f32.mrf.mxu0
    %1325 = vdwg.mxu0
    %1326 = vrot.lane.b32.xlu0 %v409, 96
    %v1327 = vpop.permute.xlu0 %1326
    %v1330 = vsel %vm567, %v1249, 0
    %1332 = vmatprep.subr.mxu0 0.0
    %1333 = vmatpush1.msra.mxu0 0.0
    %1334 = vmatprep.subr.mxu0 0.0
    %1335 = vmatpush1.msra.mxu0 0.0
    %1336 = vmatprep.subr.mxu0 0.0
    %1337 = vmatpush1.msra.mxu0 0.0
    %1338 = vmatprep.subr.mxu0 0.0
    %1339 = vmatpush1.msra.mxu0 0.0
    %1340 = vmatprep.subr.mxu0 0.0
    %1341 = vmatpush1.msra.mxu0 0.0
    %1342 = vmatprep.subr.mxu0 0.0
    %1343 = vmatpush1.msra.mxu0 0.0
    %1344 = vmatprep.subr.mxu0 0.0
    %1345 = vmatpush1.msra.mxu0 0.0
    %1346 = vmatprep.subr.mxu0 0.0
    %1347 = vmatpush1.msra.mxu0 0.0
    %1348 = vmatprep.subr.mxu0 0.0
    %1349 = vmatpush1.msra.mxu0 0.0
    %1350 = vmatprep.subr.mxu0 0.0
    %1351 = vmatpush1.msra.mxu0 0.0
    %1352 = vmatprep.subr.mxu0 0.0
    %1353 = vmatpush1.msra.mxu0 0.0
    %1354 = vmatprep.subr.mxu0 0.0
    %1355 = vmatpush1.msra.mxu0 0.0
    %1356 = vmatprep.subr.mxu0 0.0
    %1357 = vmatpush1.msra.mxu0 0.0
    %1358 = vmatprep.subr.mxu0 0.0
    %1359 = vmatpush1.msra.mxu0 0.0
    %1360 = vmatprep.subr.mxu0 0.0
    %1361 = vmatpush1.msra.mxu0 0.0
    %1362 = vmatprep.subr.mxu0 0.0
    %1363 = vmatpush1.msra.mxu0 %v1327
    %1364 = vmatprep.subr.mxu0 0.0
    %1365 = vmatpush2.msra.mxu0 0.0
    %1366 = vmatprep.subr.mxu0 0.0
    %1367 = vmatpush2.msra.mxu0 0.0
    %1368 = vmatprep.subr.mxu0 0.0
    %1369 = vmatpush2.msra.mxu0 0.0
    %1370 = vmatprep.subr.mxu0 0.0
    %1371 = vmatpush2.msra.mxu0 0.0
    %1372 = vmatprep.subr.mxu0 0.0
    %1373 = vmatpush2.msra.mxu0 0.0
    %1374 = vmatprep.subr.mxu0 0.0
    %1375 = vmatpush2.msra.mxu0 0.0
    %1376 = vmatprep.subr.mxu0 0.0
    %1377 = vmatpush2.msra.mxu0 0.0
    %1378 = vmatprep.subr.mxu0 0.0
    %1379 = vmatpush2.msra.mxu0 0.0
    %1380 = vmatprep.subr.mxu0 0.0
    %1381 = vmatpush2.msra.mxu0 0.0
    %1382 = vmatprep.subr.mxu0 0.0
    %1383 = vmatpush2.msra.mxu0 0.0
    %1384 = vmatprep.subr.mxu0 0.0
    %1385 = vmatpush2.msra.mxu0 0.0
    %1386 = vmatprep.subr.mxu0 0.0
    %1387 = vmatpush2.msra.mxu0 0.0
    %1388 = vmatprep.subr.mxu0 0.0
    %1389 = vmatpush2.msra.mxu0 0.0
    %1390 = vmatprep.subr.mxu0 0.0
    %1391 = vmatpush2.msra.mxu0 0.0
    %1392 = vmatprep.subr.mxu0 0.0
    %1393 = vmatpush2.msra.mxu0 0.0
    %1394 = vmatprep.subr.mxu0 0.0
    %1395 = vmatpush2.msra.mxu0 0.0
    %1396 = vmatprep.mubr.f32.mxu0 0.0
    %1397 = vmatmul.mubr.f32.gmra.mxu0 %v1330
    %v1398 = vpop.f32.mrf.mxu0
    %v1399 = vadd.f32 0.0, %v1398
    %v1400 = vpop.f32.mrf.mxu0
    %1401 = vdwg.mxu0
    %1402 = vrot.lane.b32.xlu0 %v246, 80
    %v1403 = vpop.permute.xlu0 %1402
    %1404 = vrot.lane.b32.xlu0 %v326, 80
    %v1405 = vpop.permute.xlu0 %1404
    %v1406 = vsel %vm412, %v1403, 0
    %v1408 = vsel %vm412, %v1405, 0
    %1410 = vmatprep.subr.mxu0 0.0
    %1411 = vmatpush1.xpose.msra.mxu0 0.0
    %1412 = vmatprep.subr.mxu0 0.0
    %1413 = vmatpush1.xpose.msra.mxu0 0.0
    %1414 = vmatprep.subr.mxu0 0.0
    %1415 = vmatpush1.xpose.msra.mxu0 0.0
    %1416 = vmatprep.subr.mxu0 0.0
    %1417 = vmatpush1.xpose.msra.mxu0 0.0
    %1418 = vmatprep.subr.mxu0 0.0
    %1419 = vmatpush1.xpose.msra.mxu0 0.0
    %1420 = vmatprep.subr.mxu0 0.0
    %1421 = vmatpush1.xpose.msra.mxu0 0.0
    %1422 = vmatprep.subr.mxu0 0.0
    %1423 = vmatpush1.xpose.msra.mxu0 0.0
    %1424 = vmatprep.subr.mxu0 0.0
    %1425 = vmatpush1.xpose.msra.mxu0 0.0
    %1426 = vmatprep.subr.mxu0 0.0
    %1427 = vmatpush1.xpose.msra.mxu0 0.0
    %1428 = vmatprep.subr.mxu0 0.0
    %1429 = vmatpush1.xpose.msra.mxu0 0.0
    %1430 = vmatprep.subr.mxu0 0.0
    %1431 = vmatpush1.xpose.msra.mxu0 0.0
    %1432 = vmatprep.subr.mxu0 0.0
    %1433 = vmatpush1.xpose.msra.mxu0 0.0
    %1434 = vmatprep.subr.mxu0 0.0
    %1435 = vmatpush1.xpose.msra.mxu0 0.0
    %1436 = vmatprep.subr.mxu0 0.0
    %1437 = vmatpush1.xpose.msra.mxu0 0.0
    %1438 = vmatprep.subr.mxu0 0.0
    %1439 = vmatpush1.xpose.msra.mxu0 0.0
    %1440 = vmatprep.subr.mxu0 0.0
    %1441 = vmatpush1.xpose.msra.mxu0 %v1408
    %1442 = vmatprep.subr.mxu0 0.0
    %1443 = vmatpush2.xpose.msra.mxu0 0.0
    %1444 = vmatprep.subr.mxu0 0.0
    %1445 = vmatpush2.xpose.msra.mxu0 0.0
    %1446 = vmatprep.subr.mxu0 0.0
    %1447 = vmatpush2.xpose.msra.mxu0 0.0
    %1448 = vmatprep.subr.mxu0 0.0
    %1449 = vmatpush2.xpose.msra.mxu0 0.0
    %1450 = vmatprep.subr.mxu0 0.0
    %1451 = vmatpush2.xpose.msra.mxu0 0.0
    %1452 = vmatprep.subr.mxu0 0.0
    %1453 = vmatpush2.xpose.msra.mxu0 0.0
    %1454 = vmatprep.subr.mxu0 0.0
    %1455 = vmatpush2.xpose.msra.mxu0 0.0
    %1456 = vmatprep.subr.mxu0 0.0
    %1457 = vmatpush2.xpose.msra.mxu0 0.0
    %1458 = vmatprep.subr.mxu0 0.0
    %1459 = vmatpush2.xpose.msra.mxu0 0.0
    %1460 = vmatprep.subr.mxu0 0.0
    %1461 = vmatpush2.xpose.msra.mxu0 0.0
    %1462 = vmatprep.subr.mxu0 0.0
    %1463 = vmatpush2.xpose.msra.mxu0 0.0
    %1464 = vmatprep.subr.mxu0 0.0
    %1465 = vmatpush2.xpose.msra.mxu0 0.0
    %1466 = vmatprep.subr.mxu0 0.0
    %1467 = vmatpush2.xpose.msra.mxu0 0.0
    %1468 = vmatprep.subr.mxu0 0.0
    %1469 = vmatpush2.xpose.msra.mxu0 0.0
    %1470 = vmatprep.subr.mxu0 0.0
    %1471 = vmatpush2.xpose.msra.mxu0 0.0
    %1472 = vmatprep.subr.mxu0 0.0
    %1473 = vmatpush2.xpose.msra.mxu0 0.0
    %1474 = vmatprep.mubr.f32.mxu0 0.0
    %1475 = vmatmul.mubr.f32.gmra.mxu0 %v1406
    %v1476 = vpop.f32.mrf.mxu0
    %v1477 = vadd.f32 0.0, %v1476
    %v1478 = vpop.f32.mrf.mxu0
    %1479 = vdwg.mxu0
    %1480 = vrot.lane.b32.xlu0 %v249, 80
    %v1481 = vpop.permute.xlu0 %1480
    %1482 = vrot.lane.b32.xlu0 %v329, 80
    %v1483 = vpop.permute.xlu0 %1482
    %v1484 = vsel %vm412, %v1481, 0
    %v1486 = vsel %vm412, %v1483, 0
    %1488 = vmatprep.subr.mxu0 0.0
    %1489 = vmatpush1.xpose.msra.mxu0 0.0
    %1490 = vmatprep.subr.mxu0 0.0
    %1491 = vmatpush1.xpose.msra.mxu0 0.0
    %1492 = vmatprep.subr.mxu0 0.0
    %1493 = vmatpush1.xpose.msra.mxu0 0.0
    %1494 = vmatprep.subr.mxu0 0.0
    %1495 = vmatpush1.xpose.msra.mxu0 0.0
    %1496 = vmatprep.subr.mxu0 0.0
    %1497 = vmatpush1.xpose.msra.mxu0 0.0
    %1498 = vmatprep.subr.mxu0 0.0
    %1499 = vmatpush1.xpose.msra.mxu0 0.0
    %1500 = vmatprep.subr.mxu0 0.0
    %1501 = vmatpush1.xpose.msra.mxu0 0.0
    %1502 = vmatprep.subr.mxu0 0.0
    %1503 = vmatpush1.xpose.msra.mxu0 0.0
    %1504 = vmatprep.subr.mxu0 0.0
    %1505 = vmatpush1.xpose.msra.mxu0 0.0
    %1506 = vmatprep.subr.mxu0 0.0
    %1507 = vmatpush1.xpose.msra.mxu0 0.0
    %1508 = vmatprep.subr.mxu0 0.0
    %1509 = vmatpush1.xpose.msra.mxu0 0.0
    %1510 = vmatprep.subr.mxu0 0.0
    %1511 = vmatpush1.xpose.msra.mxu0 0.0
    %1512 = vmatprep.subr.mxu0 0.0
    %1513 = vmatpush1.xpose.msra.mxu0 0.0
    %1514 = vmatprep.subr.mxu0 0.0
    %1515 = vmatpush1.xpose.msra.mxu0 0.0
    %1516 = vmatprep.subr.mxu0 0.0
    %1517 = vmatpush1.xpose.msra.mxu0 0.0
    %1518 = vmatprep.subr.mxu0 0.0
    %1519 = vmatpush1.xpose.msra.mxu0 %v1486
    %1520 = vmatprep.subr.mxu0 0.0
    %1521 = vmatpush2.xpose.msra.mxu0 0.0
    %1522 = vmatprep.subr.mxu0 0.0
    %1523 = vmatpush2.xpose.msra.mxu0 0.0
    %1524 = vmatprep.subr.mxu0 0.0
    %1525 = vmatpush2.xpose.msra.mxu0 0.0
    %1526 = vmatprep.subr.mxu0 0.0
    %1527 = vmatpush2.xpose.msra.mxu0 0.0
    %1528 = vmatprep.subr.mxu0 0.0
    %1529 = vmatpush2.xpose.msra.mxu0 0.0
    %1530 = vmatprep.subr.mxu0 0.0
    %1531 = vmatpush2.xpose.msra.mxu0 0.0
    %1532 = vmatprep.subr.mxu0 0.0
    %1533 = vmatpush2.xpose.msra.mxu0 0.0
    %1534 = vmatprep.subr.mxu0 0.0
    %1535 = vmatpush2.xpose.msra.mxu0 0.0
    %1536 = vmatprep.subr.mxu0 0.0
    %1537 = vmatpush2.xpose.msra.mxu0 0.0
    %1538 = vmatprep.subr.mxu0 0.0
    %1539 = vmatpush2.xpose.msra.mxu0 0.0
    %1540 = vmatprep.subr.mxu0 0.0
    %1541 = vmatpush2.xpose.msra.mxu0 0.0
    %1542 = vmatprep.subr.mxu0 0.0
    %1543 = vmatpush2.xpose.msra.mxu0 0.0
    %1544 = vmatprep.subr.mxu0 0.0
    %1545 = vmatpush2.xpose.msra.mxu0 0.0
    %1546 = vmatprep.subr.mxu0 0.0
    %1547 = vmatpush2.xpose.msra.mxu0 0.0
    %1548 = vmatprep.subr.mxu0 0.0
    %1549 = vmatpush2.xpose.msra.mxu0 0.0
    %1550 = vmatprep.subr.mxu0 0.0
    %1551 = vmatpush2.xpose.msra.mxu0 0.0
    %1552 = vmatprep.mubr.f32.mxu0 0.0
    %1553 = vmatmul.mubr.f32.gmra.mxu0 %v1484
    %v1554 = vpop.f32.mrf.mxu0
    %v1555 = vadd.f32 0.0, %v1554
    %v1556 = vpop.f32.mrf.mxu0
    %1557 = vdwg.mxu0
    %v1558 = vmul.f32 %v1477, 0.25
    %v1559 = vmul.f32 %v1555, 0.25
    %v1560 = vsel %vm567, %v1558, -inf
    %1561 = vmax.xlane.f32.xlu0 %v1560
    %v1562 = vpop.xlane.xlu0 %1561
    %v1563 = vsel %vm567, %v1559, -inf
    %1564 = vmax.xlane.f32.xlu0 %v1563
    %v1565 = vpop.xlane.xlu0 %1564
    %v1566 = vsub.f32 %v1558, %v1562
    %v1567 = vsub.f32 %v1559, %v1565
    %v1568 = vmul.f32 %v1566, 1.442695
    %v1569 = vpow.pop %v1568
    %v1570 = vmul.f32 %v1567, 1.442695
    %v1571 = vpow.pop %v1570
    %v1572 = vsel %vm567, %v1569, 0.0
    %1573 = vadd.xlane.f32.xlu0 %v1572
    %v1574 = vpop.xlane.xlu0 %1573
    %v1575 = vsel %vm567, %v1571, 0.0
    %1576 = vadd.xlane.f32.xlu0 %v1575
    %v1577 = vpop.xlane.xlu0 %1576
    %v1578 = vrcp.pop %v1574
    %v1579 = vrcp.pop %v1577
    %v1580 = vmul.f32 %v1569, %v1578
    %v1581 = vmul.f32 %v1571, %v1579
    %1582 = vrot.lane.b32.xlu0 %v406, 80
    %v1583 = vpop.permute.xlu0 %1582
    %v1586 = vsel %vm567, %v1580, 0
    %1588 = vmatprep.subr.mxu0 0.0
    %1589 = vmatpush1.msra.mxu0 0.0
    %1590 = vmatprep.subr.mxu0 0.0
    %1591 = vmatpush1.msra.mxu0 0.0
    %1592 = vmatprep.subr.mxu0 0.0
    %1593 = vmatpush1.msra.mxu0 0.0
    %1594 = vmatprep.subr.mxu0 0.0
    %1595 = vmatpush1.msra.mxu0 0.0
    %1596 = vmatprep.subr.mxu0 0.0
    %1597 = vmatpush1.msra.mxu0 0.0
    %1598 = vmatprep.subr.mxu0 0.0
    %1599 = vmatpush1.msra.mxu0 0.0
    %1600 = vmatprep.subr.mxu0 0.0
    %1601 = vmatpush1.msra.mxu0 0.0
    %1602 = vmatprep.subr.mxu0 0.0
    %1603 = vmatpush1.msra.mxu0 0.0
    %1604 = vmatprep.subr.mxu0 0.0
    %1605 = vmatpush1.msra.mxu0 0.0
    %1606 = vmatprep.subr.mxu0 0.0
    %1607 = vmatpush1.msra.mxu0 0.0
    %1608 = vmatprep.subr.mxu0 0.0
    %1609 = vmatpush1.msra.mxu0 0.0
    %1610 = vmatprep.subr.mxu0 0.0
    %1611 = vmatpush1.msra.mxu0 0.0
    %1612 = vmatprep.subr.mxu0 0.0
    %1613 = vmatpush1.msra.mxu0 0.0
    %1614 = vmatprep.subr.mxu0 0.0
    %1615 = vmatpush1.msra.mxu0 0.0
    %1616 = vmatprep.subr.mxu0 0.0
    %1617 = vmatpush1.msra.mxu0 0.0
    %1618 = vmatprep.subr.mxu0 0.0
    %1619 = vmatpush1.msra.mxu0 %v1583
    %1620 = vmatprep.subr.mxu0 0.0
    %1621 = vmatpush2.msra.mxu0 0.0
    %1622 = vmatprep.subr.mxu0 0.0
    %1623 = vmatpush2.msra.mxu0 0.0
    %1624 = vmatprep.subr.mxu0 0.0
    %1625 = vmatpush2.msra.mxu0 0.0
    %1626 = vmatprep.subr.mxu0 0.0
    %1627 = vmatpush2.msra.mxu0 0.0
    %1628 = vmatprep.subr.mxu0 0.0
    %1629 = vmatpush2.msra.mxu0 0.0
    %1630 = vmatprep.subr.mxu0 0.0
    %1631 = vmatpush2.msra.mxu0 0.0
    %1632 = vmatprep.subr.mxu0 0.0
    %1633 = vmatpush2.msra.mxu0 0.0
    %1634 = vmatprep.subr.mxu0 0.0
    %1635 = vmatpush2.msra.mxu0 0.0
    %1636 = vmatprep.subr.mxu0 0.0
    %1637 = vmatpush2.msra.mxu0 0.0
    %1638 = vmatprep.subr.mxu0 0.0
    %1639 = vmatpush2.msra.mxu0 0.0
    %1640 = vmatprep.subr.mxu0 0.0
    %1641 = vmatpush2.msra.mxu0 0.0
    %1642 = vmatprep.subr.mxu0 0.0
    %1643 = vmatpush2.msra.mxu0 0.0
    %1644 = vmatprep.subr.mxu0 0.0
    %1645 = vmatpush2.msra.mxu0 0.0
    %1646 = vmatprep.subr.mxu0 0.0
    %1647 = vmatpush2.msra.mxu0 0.0
    %1648 = vmatprep.subr.mxu0 0.0
    %1649 = vmatpush2.msra.mxu0 0.0
    %1650 = vmatprep.subr.mxu0 0.0
    %1651 = vmatpush2.msra.mxu0 0.0
    %1652 = vmatprep.mubr.f32.mxu0 0.0
    %1653 = vmatmul.mubr.f32.gmra.mxu0 %v1586
    %v1654 = vpop.f32.mrf.mxu0
    %v1655 = vadd.f32 0.0, %v1654
    %v1656 = vpop.f32.mrf.mxu0
    %1657 = vdwg.mxu0
    %1658 = vrot.lane.b32.xlu0 %v409, 80
    %v1659 = vpop.permute.xlu0 %1658
    %v1662 = vsel %vm567, %v1581, 0
    %1664 = vmatprep.subr.mxu0 0.0
    %1665 = vmatpush1.msra.mxu0 0.0
    %1666 = vmatprep.subr.mxu0 0.0
    %1667 = vmatpush1.msra.mxu0 0.0
    %1668 = vmatprep.subr.mxu0 0.0
    %1669 = vmatpush1.msra.mxu0 0.0
    %1670 = vmatprep.subr.mxu0 0.0
    %1671 = vmatpush1.msra.mxu0 0.0
    %1672 = vmatprep.subr.mxu0 0.0
    %1673 = vmatpush1.msra.mxu0 0.0
    %1674 = vmatprep.subr.mxu0 0.0
    %1675 = vmatpush1.msra.mxu0 0.0
    %1676 = vmatprep.subr.mxu0 0.0
    %1677 = vmatpush1.msra.mxu0 0.0
    %1678 = vmatprep.subr.mxu0 0.0
    %1679 = vmatpush1.msra.mxu0 0.0
    %1680 = vmatprep.subr.mxu0 0.0
    %1681 = vmatpush1.msra.mxu0 0.0
    %1682 = vmatprep.subr.mxu0 0.0
    %1683 = vmatpush1.msra.mxu0 0.0
    %1684 = vmatprep.subr.mxu0 0.0
    %1685 = vmatpush1.msra.mxu0 0.0
    %1686 = vmatprep.subr.mxu0 0.0
    %1687 = vmatpush1.msra.mxu0 0.0
    %1688 = vmatprep.subr.mxu0 0.0
    %1689 = vmatpush1.msra.mxu0 0.0
    %1690 = vmatprep.subr.mxu0 0.0
    %1691 = vmatpush1.msra.mxu0 0.0
    %1692 = vmatprep.subr.mxu0 0.0
    %1693 = vmatpush1.msra.mxu0 0.0
    %1694 = vmatprep.subr.mxu0 0.0
    %1695 = vmatpush1.msra.mxu0 %v1659
    %1696 = vmatprep.subr.mxu0 0.0
    %1697 = vmatpush2.msra.mxu0 0.0
    %1698 = vmatprep.subr.mxu0 0.0
    %1699 = vmatpush2.msra.mxu0 0.0
    %1700 = vmatprep.subr.mxu0 0.0
    %1701 = vmatpush2.msra.mxu0 0.0
    %1702 = vmatprep.subr.mxu0 0.0
    %1703 = vmatpush2.msra.mxu0 0.0
    %1704 = vmatprep.subr.mxu0 0.0
    %1705 = vmatpush2.msra.mxu0 0.0
    %1706 = vmatprep.subr.mxu0 0.0
    %1707 = vmatpush2.msra.mxu0 0.0
    %1708 = vmatprep.subr.mxu0 0.0
    %1709 = vmatpush2.msra.mxu0 0.0
    %1710 = vmatprep.subr.mxu0 0.0
    %1711 = vmatpush2.msra.mxu0 0.0
    %1712 = vmatprep.subr.mxu0 0.0
    %1713 = vmatpush2.msra.mxu0 0.0
    %1714 = vmatprep.subr.mxu0 0.0
    %1715 = vmatpush2.msra.mxu0 0.0
    %1716 = vmatprep.subr.mxu0 0.0
    %1717 = vmatpush2.msra.mxu0 0.0
    %1718 = vmatprep.subr.mxu0 0.0
    %1719 = vmatpush2.msra.mxu0 0.0
    %1720 = vmatprep.subr.mxu0 0.0
    %1721 = vmatpush2.msra.mxu0 0.0
    %1722 = vmatprep.subr.mxu0 0.0
    %1723 = vmatpush2.msra.mxu0 0.0
    %1724 = vmatprep.subr.mxu0 0.0
    %1725 = vmatpush2.msra.mxu0 0.0
    %1726 = vmatprep.subr.mxu0 0.0
    %1727 = vmatpush2.msra.mxu0 0.0
    %1728 = vmatprep.mubr.f32.mxu0 0.0
    %1729 = vmatmul.mubr.f32.gmra.mxu0 %v1662
    %v1730 = vpop.f32.mrf.mxu0
    %v1731 = vadd.f32 0.0, %v1730
    %v1732 = vpop.f32.mrf.mxu0
    %1733 = vdwg.mxu0
    %1736 = vrot.lane.b32.xlu0 %v990, 16
    %v1737 = vpop.permute.xlu0 %1736
    %1738 = vrot.lane.b32.xlu0 %v1067, 16
    %v1739 = vpop.permute.xlu0 %1738
    %1744 = vrot.lane.b32.xlu0 %v1323, 32
    %v1745 = vpop.permute.xlu0 %1744
    %1746 = vrot.lane.b32.xlu0 %v1399, 32
    %v1747 = vpop.permute.xlu0 %1746
    %1752 = vrot.lane.b32.xlu0 %v1655, 48
    %v1753 = vpop.permute.xlu0 %1752
    %1754 = vrot.lane.b32.xlu0 %v1731, 48
    %v1755 = vpop.permute.xlu0 %1754
    %v1758 = vsel %vm412, %v660, %v1737
    %v1759 = vsel %vm412, %v733, %v1739
    %vm1760 = vcmask 261120
    %v1761 = vsel %vm1760, %v1758, %v1745
    %v1762 = vsel %vm1760, %v1759, %v1747
    %vm1763 = vcmask 392192
    %v1764 = vsel %vm1763, %v1761, %v1753
    %v1765 = vsel %vm1763, %v1762, %v1755
    %v1766 = vpack.c.bf16 %v1765, %v1764
    %v1767 = vld [vmem:[%s9] sm:$0xf]
    %v1768 = vld [vmem:[%s9 + $0x4] sm:$0xf]
    %v1769 = vld [vmem:[%s9 + $0x8] sm:$0xf]
    %v1770 = vld [vmem:[%s9 + $0xc] sm:$0xf]
    %v1771 = vld [vmem:[%s9 + $0x10] sm:$0xf]
    %v1772 = vld [vmem:[%s9 + $0x14] sm:$0xf]
    %v1773 = vld [vmem:[%s9 + $0x18] sm:$0xf]
    %v1774 = vld [vmem:[%s9 + $0x1c] sm:$0xf]
    %v1775 = vld [vmem:[%s10] sm:$0x1]
    %v1777 = vlaneseq
    %v1778 = vshrl.u32 %v1777, 7
    %v1779 = vsub.s32 0, %v1778
    %v1780 = vrot.slane %v1775, %v1779
    %v1790 = vunpack.c.l.b16 %v1767
    %v1791 = vunpack.c.l.b16 %v1768
    %v1792 = vunpack.c.l.b16 %v1769
    %v1793 = vunpack.c.l.b16 %v1770
    %v1794 = vunpack.c.l.b16 %v1771
    %v1795 = vunpack.c.l.b16 %v1772
    %v1796 = vunpack.c.l.b16 %v1773
    %v1797 = vunpack.c.l.b16 %v1774
    %v1798 = vpack.c.b16 %v1791, %v1790
    %v1799 = vpack.c.b16 %v1793, %v1792
    %v1800 = vpack.c.b16 %v1795, %v1794
    %v1801 = vpack.c.b16 %v1797, %v1796
    %v1807 = vsel %vm207, %v1766, 0
    %1809 = vmatprep.subr.bf16.mxu0 0
    %1810 = vmatpush1.bf16.msra.mxu0 0
    %1811 = vmatprep.subr.bf16.mxu0 0
    %1812 = vmatpush1.bf16.msra.mxu0 0
    %1813 = vmatprep.subr.bf16.mxu0 0
    %1814 = vmatpush1.bf16.msra.mxu0 0
    %1815 = vmatprep.subr.bf16.mxu0 0
    %1816 = vmatpush1.bf16.msra.mxu0 0
    %1817 = vmatprep.subr.bf16.mxu0 0
    %1818 = vmatpush1.bf16.msra.mxu0 %v1801
    %1819 = vmatprep.subr.bf16.mxu0 0
    %1820 = vmatpush1.bf16.msra.mxu0 %v1800
    %1821 = vmatprep.subr.bf16.mxu0 0
    %1822 = vmatpush1.bf16.msra.mxu0 %v1799
    %1823 = vmatprep.subr.bf16.mxu0 0
    %1824 = vmatpush1.bf16.msra.mxu0 %v1798
    %1825 = vmatprep.subr.bf16.mxu0 0
    %1826 = vmatpush2.bf16.msra.mxu0 0
    %1827 = vmatprep.subr.bf16.mxu0 0
    %1828 = vmatpush2.bf16.msra.mxu0 0
    %1829 = vmatprep.subr.bf16.mxu0 0
    %1830 = vmatpush2.bf16.msra.mxu0 0
    %1831 = vmatprep.subr.bf16.mxu0 0
    %1832 = vmatpush2.bf16.msra.mxu0 0
    %1833 = vmatprep.subr.bf16.mxu0 0
    %1834 = vmatpush2.bf16.msra.mxu0 0
    %1835 = vmatprep.subr.bf16.mxu0 0
    %1836 = vmatpush2.bf16.msra.mxu0 0
    %1837 = vmatprep.subr.bf16.mxu0 0
    %1838 = vmatpush2.bf16.msra.mxu0 0
    %1839 = vmatprep.subr.bf16.mxu0 0
    %1840 = vmatpush2.bf16.msra.mxu0 0
    %1841 = vmatprep.mubr.bf16.mxu0 0
    %1842 = vmatmul.mubr.bf16.gmra.mxu0 %v1807
    %v1843 = vpop.f32.mrf.mxu0
    %v1844 = vadd.f32 %v1780, %v1843
    %v1845 = vpop.f32.mrf.mxu0
    %v1846 = vpop.f32.mrf.mxu0
    %v1847 = vadd.f32 %v1780, %v1846
    %v1848 = vpop.f32.mrf.mxu0
    %1849 = vdwg.mxu0
    %v1850 = vadd.f32 %v159, %v1844
    %v1851 = vadd.f32 %v164, %v1847
    %v1852 = vld [vmem:[%s11] sm:$0x1]
    %v1853 = vld [vmem:[%s12] sm:$0x1]
    %v1854 = vsel %vm207, %v1850, 0.0
    %1855 = vadd.xlane.f32.xlu0 %v1854
    %v1856 = vpop.xlane.xlu0 %1855
    %v1857 = vsel %vm207, %v1851, 0.0
    %1858 = vadd.xlane.f32.xlu0 %v1857
    %v1859 = vpop.xlane.xlu0 %1858
    %v1860 = vrcp.pop 64.0
    %v1861 = vmul.f32 %v1856, %v1860
    %v1862 = vmul.f32 %v1859, %v1860
    %v1863 = vsub.f32 %v1850, %v1861
    %v1864 = vsub.f32 %v1851, %v1862
    %v1865 = vmul.f32 %v1863, %v1863
    %v1866 = vmul.f32 %v1864, %v1864
    %v1867 = vsel %vm207, %v1865, 0.0
    %1868 = vadd.xlane.f32.xlu0 %v1867
    %v1869 = vpop.xlane.xlu0 %1868
    %v1870 = vsel %vm207, %v1866, 0.0
    %1871 = vadd.xlane.f32.xlu0 %v1870
    %v1872 = vpop.xlane.xlu0 %1871
    %v1873 = vmul.f32 %v1869, %v1860
    %v1874 = vmul.f32 %v1872, %v1860
    %v1875 = vadd.f32 %v1873, 1e-05
    %v1876 = vadd.f32 %v1874, 1e-05
    %v1877 = vrsqrt.pop %v1875
    %v1878 = vrsqrt.pop %v1876
    %v1879 = vmul.f32 %v1863, %v1877
    %v1880 = vmul.f32 %v1864, %v1878
    %v1882 = vlaneseq
    %v1883 = vshrl.u32 %v1882, 7
    %v1884 = vsub.s32 0, %v1883
    %v1885 = vrot.slane %v1852, %v1884
    %v1887 = vmul.f32 %v1879, %v1885
    %v1888 = vmul.f32 %v1880, %v1885
    %v1890 = vlaneseq
    %v1891 = vshrl.u32 %v1890, 7
    %v1892 = vsub.s32 0, %v1891
    %v1893 = vrot.slane %v1853, %v1892
    %v1895 = vadd.f32 %v1887, %v1893
    %v1896 = vadd.f32 %v1888, %v1893
    %v1897 = vpack.c.bf16 %v1896, %v1895
    %v1898 = vld [vmem:[%s15] sm:$0xff]
    %v1899 = vld [vmem:[%s15 + $0x8] sm:$0xff]
    %v1900 = vld [vmem:[%s15 + $0x10] sm:$0xff]
    %v1901 = vld [vmem:[%s15 + $0x18] sm:$0xff]
    %v1902 = vld [vmem:[%s15 + $0x20] sm:$0xff]
    %v1903 = vld [vmem:[%s15 + $0x28] sm:$0xff]
    %v1904 = vld [vmem:[%s15 + $0x30] sm:$0xff]
    %v1905 = vld [vmem:[%s15 + $0x38] sm:$0xff]
    %v1906 = vld [vmem:[%s15 + $0x40] sm:$0xff]
    %v1907 = vld [vmem:[%s15 + $0x48] sm:$0xff]
    %v1908 = vld [vmem:[%s15 + $0x50] sm:$0xff]
    %v1909 = vld [vmem:[%s15 + $0x58] sm:$0xff]
    %v1910 = vld [vmem:[%s15 + $0x60] sm:$0xff]
    %v1911 = vld [vmem:[%s15 + $0x68] sm:$0xff]
    %v1912 = vld [vmem:[%s15 + $0x70] sm:$0xff]
    %v1913 = vld [vmem:[%s15 + $0x78] sm:$0xff]
    %v1914 = vld [vmem:[%s15 + $0x80] sm:$0xff]
    %v1915 = vld [vmem:[%s15 + $0x88] sm:$0xff]
    %v1916 = vld [vmem:[%s15 + $0x90] sm:$0xff]
    %v1917 = vld [vmem:[%s15 + $0x98] sm:$0xff]
    %v1918 = vld [vmem:[%s15 + $0xa0] sm:$0xff]
    %v1919 = vld [vmem:[%s15 + $0xa8] sm:$0xff]
    %v1920 = vld [vmem:[%s15 + $0xb0] sm:$0xff]
    %v1921 = vld [vmem:[%s15 + $0xb8] sm:$0xff]
    %v1922 = vld [vmem:[%s15 + $0xc0] sm:$0xff]
    %v1923 = vld [vmem:[%s15 + $0xc8] sm:$0xff]
    %v1924 = vld [vmem:[%s15 + $0xd0] sm:$0xff]
    %v1925 = vld [vmem:[%s15 + $0xd8] sm:$0xff]
    %v1926 = vld [vmem:[%s15 + $0xe0] sm:$0xff]
    %v1927 = vld [vmem:[%s15 + $0xe8] sm:$0xff]
    %v1928 = vld [vmem:[%s15 + $0xf0] sm:$0xff]
    %v1929 = vld [vmem:[%s15 + $0xf8] sm:$0xff]
    %v1930 = vld [vmem:[%s15 + $0x100] sm:$0xff]
    %v1931 = vld [vmem:[%s15 + $0x108] sm:$0xff]
    %v1932 = vld [vmem:[%s15 + $0x110] sm:$0xff]
    %v1933 = vld [vmem:[%s15 + $0x118] sm:$0xff]
    %v1934 = vld [vmem:[%s15 + $0x120] sm:$0xff]
    %v1935 = vld [vmem:[%s15 + $0x128] sm:$0xff]
    %v1936 = vld [vmem:[%s15 + $0x130] sm:$0xff]
    %v1937 = vld [vmem:[%s15 + $0x138] sm:$0xff]
    %v1938 = vld [vmem:[%s15 + $0x140] sm:$0xff]
    %v1939 = vld [vmem:[%s15 + $0x148] sm:$0xff]
    %v1940 = vld [vmem:[%s15 + $0x150] sm:$0xff]
    %v1941 = vld [vmem:[%s15 + $0x158] sm:$0xff]
    %v1942 = vld [vmem:[%s15 + $0x160] sm:$0xff]
    %v1943 = vld [vmem:[%s15 + $0x168] sm:$0xff]
    %v1944 = vld [vmem:[%s15 + $0x170] sm:$0xff]
    %v1945 = vld [vmem:[%s15 + $0x178] sm:$0xff]
    %v1946 = vld [vmem:[%s15 + $0x180] sm:$0xff]
    %v1947 = vld [vmem:[%s15 + $0x188] sm:$0xff]
    %v1948 = vld [vmem:[%s15 + $0x190] sm:$0xff]
    %v1949 = vld [vmem:[%s15 + $0x198] sm:$0xff]
    %v1950 = vld [vmem:[%s15 + $0x1a0] sm:$0xff]
    %v1951 = vld [vmem:[%s15 + $0x1a8] sm:$0xff]
    %v1952 = vld [vmem:[%s15 + $0x1b0] sm:$0xff]
    %v1953 = vld [vmem:[%s15 + $0x1b8] sm:$0xff]
    %v1954 = vld [vmem:[%s15 + $0x1c0] sm:$0xff]
    %v1955 = vld [vmem:[%s15 + $0x1c8] sm:$0xff]
    %v1956 = vld [vmem:[%s15 + $0x1d0] sm:$0xff]
    %v1957 = vld [vmem:[%s15 + $0x1d8] sm:$0xff]
    %v1958 = vld [vmem:[%s15 + $0x1e0] sm:$0xff]
    %v1959 = vld [vmem:[%s15 + $0x1e8] sm:$0xff]
    %v1960 = vld [vmem:[%s15 + $0x1f0] sm:$0xff]
    %v1961 = vld [vmem:[%s15 + $0x1f8] sm:$0xff]
    %v1962 = vld [vmem:[%s16] sm:$0xff]
    %v1963 = vld [vmem:[%s16 + $0x8] sm:$0xff]
    %v1966 = vlaneseq
    %v1967 = vshrl.u32 %v1966, 7
    %v1968 = vsub.s32 0, %v1967
    %v1969 = vrot.slane %v1962, %v1968
    %v1970 = vlaneseq
    %v1971 = vshrl.u32 %v1970, 7
    %v1972 = vsub.s32 1, %v1971
    %v1973 = vrot.slane %v1962, %v1972
    %v1974 = vlaneseq
    %v1975 = vshrl.u32 %v1974, 7
    %v1976 = vsub.s32 2, %v1975
    %v1977 = vrot.slane %v1962, %v1976
    %v1978 = vlaneseq
    %v1979 = vshrl.u32 %v1978, 7
    %v1980 = vsub.s32 3, %v1979
    %v1981 = vrot.slane %v1962, %v1980
    %v1982 = vlaneseq
    %v1983 = vshrl.u32 %v1982, 7
    %v1984 = vsub.s32 4, %v1983
    %v1985 = vrot.slane %v1962, %v1984
    %v1986 = vlaneseq
    %v1987 = vshrl.u32 %v1986, 7
    %v1988 = vsub.s32 5, %v1987
    %v1989 = vrot.slane %v1962, %v1988
    %v1990 = vlaneseq
    %v1991 = vshrl.u32 %v1990, 7
    %v1992 = vsub.s32 6, %v1991
    %v1993 = vrot.slane %v1962, %v1992
    %v1994 = vlaneseq
    %v1995 = vshrl.u32 %v1994, 7
    %v1996 = vsub.s32 7, %v1995
    %v1997 = vrot.slane %v1962, %v1996
    %v1998 = vlaneseq
    %v1999 = vshrl.u32 %v1998, 7
    %v2000 = vsub.s32 0, %v1999
    %v2001 = vrot.slane %v1963, %v2000
    %v2002 = vlaneseq
    %v2003 = vshrl.u32 %v2002, 7
    %v2004 = vsub.s32 1, %v2003
    %v2005 = vrot.slane %v1963, %v2004
    %v2006 = vlaneseq
    %v2007 = vshrl.u32 %v2006, 7
    %v2008 = vsub.s32 2, %v2007
    %v2009 = vrot.slane %v1963, %v2008
    %v2010 = vlaneseq
    %v2011 = vshrl.u32 %v2010, 7
    %v2012 = vsub.s32 3, %v2011
    %v2013 = vrot.slane %v1963, %v2012
    %v2014 = vlaneseq
    %v2015 = vshrl.u32 %v2014, 7
    %v2016 = vsub.s32 4, %v2015
    %v2017 = vrot.slane %v1963, %v2016
    %v2018 = vlaneseq
    %v2019 = vshrl.u32 %v2018, 7
    %v2020 = vsub.s32 5, %v2019
    %v2021 = vrot.slane %v1963, %v2020
    %v2022 = vlaneseq
    %v2023 = vshrl.u32 %v2022, 7
    %v2024 = vsub.s32 6, %v2023
    %v2025 = vrot.slane %v1963, %v2024
    %v2026 = vlaneseq
    %v2027 = vshrl.u32 %v2026, 7
    %v2028 = vsub.s32 7, %v2027
    %v2029 = vrot.slane %v1963, %v2028
    %v2110 = vunpack.c.l.b16 %v1898
    %v2111 = vunpack.c.h.b16 %v1898
    %v2112 = vunpack.c.l.b16 %v1899
    %v2113 = vunpack.c.h.b16 %v1899
    %v2114 = vunpack.c.l.b16 %v1900
    %v2115 = vunpack.c.h.b16 %v1900
    %v2116 = vunpack.c.l.b16 %v1901
    %v2117 = vunpack.c.h.b16 %v1901
    %v2118 = vunpack.c.l.b16 %v1902
    %v2119 = vunpack.c.h.b16 %v1902
    %v2120 = vunpack.c.l.b16 %v1903
    %v2121 = vunpack.c.h.b16 %v1903
    %v2122 = vunpack.c.l.b16 %v1904
    %v2123 = vunpack.c.h.b16 %v1904
    %v2124 = vunpack.c.l.b16 %v1905
    %v2125 = vunpack.c.h.b16 %v1905
    %v2126 = vunpack.c.l.b16 %v1906
    %v2127 = vunpack.c.h.b16 %v1906
    %v2128 = vunpack.c.l.b16 %v1907
    %v2129 = vunpack.c.h.b16 %v1907
    %v2130 = vunpack.c.l.b16 %v1908
    %v2131 = vunpack.c.h.b16 %v1908
    %v2132 = vunpack.c.l.b16 %v1909
    %v2133 = vunpack.c.h.b16 %v1909
    %v2134 = vunpack.c.l.b16 %v1910
    %v2135 = vunpack.c.h.b16 %v1910
    %v2136 = vunpack.c.l.b16 %v1911
    %v2137 = vunpack.c.h.b16 %v1911
    %v2138 = vunpack.c.l.b16 %v1912
    %v2139 = vunpack.c.h.b16 %v1912
    %v2140 = vunpack.c.l.b16 %v1913
    %v2141 = vunpack.c.h.b16 %v1913
    %v2142 = vunpack.c.l.b16 %v1914
    %v2143 = vunpack.c.h.b16 %v1914
    %v2144 = vunpack.c.l.b16 %v1915
    %v2145 = vunpack.c.h.b16 %v1915
    %v2146 = vunpack.c.l.b16 %v1916
    %v2147 = vunpack.c.h.b16 %v1916
    %v2148 = vunpack.c.l.b16 %v1917
    %v2149 = vunpack.c.h.b16 %v1917
    %v2150 = vunpack.c.l.b16 %v1918
    %v2151 = vunpack.c.h.b16 %v1918
    %v2152 = vunpack.c.l.b16 %v1919
    %v2153 = vunpack.c.h.b16 %v1919
    %v2154 = vunpack.c.l.b16 %v1920
    %v2155 = vunpack.c.h.b16 %v1920
    %v2156 = vunpack.c.l.b16 %v1921
    %v2157 = vunpack.c.h.b16 %v1921
    %v2158 = vunpack.c.l.b16 %v1922
    %v2159 = vunpack.c.h.b16 %v1922
    %v2160 = vunpack.c.l.b16 %v1923
    %v2161 = vunpack.c.h.b16 %v1923
    %v2162 = vunpack.c.l.b16 %v1924
    %v2163 = vunpack.c.h.b16 %v1924
    %v2164 = vunpack.c.l.b16 %v1925
    %v2165 = vunpack.c.h.b16 %v1925
    %v2166 = vunpack.c.l.b16 %v1926
    %v2167 = vunpack.c.h.b16 %v1926
    %v2168 = vunpack.c.l.b16 %v1927
    %v2169 = vunpack.c.h.b16 %v1927
    %v2170 = vunpack.c.l.b16 %v1928
    %v2171 = vunpack.c.h.b16 %v1928
    %v2172 = vunpack.c.l.b16 %v1929
    %v2173 = vunpack.c.h.b16 %v1929
    %v2174 = vunpack.c.l.b16 %v1930
    %v2175 = vunpack.c.h.b16 %v1930
    %v2176 = vunpack.c.l.b16 %v1931
    %v2177 = vunpack.c.h.b16 %v1931
    %v2178 = vunpack.c.l.b16 %v1932
    %v2179 = vunpack.c.h.b16 %v1932
    %v2180 = vunpack.c.l.b16 %v1933
    %v2181 = vunpack.c.h.b16 %v1933
    %v2182 = vunpack.c.l.b16 %v1934
    %v2183 = vunpack.c.h.b16 %v1934
    %v2184 = vunpack.c.l.b16 %v1935
    %v2185 = vunpack.c.h.b16 %v1935
    %v2186 = vunpack.c.l.b16 %v1936
    %v2187 = vunpack.c.h.b16 %v1936
    %v2188 = vunpack.c.l.b16 %v1937
    %v2189 = vunpack.c.h.b16 %v1937
    %v2190 = vunpack.c.l.b16 %v1938
    %v2191 = vunpack.c.h.b16 %v1938
    %v2192 = vunpack.c.l.b16 %v1939
    %v2193 = vunpack.c.h.b16 %v1939
    %v2194 = vunpack.c.l.b16 %v1940
    %v2195 = vunpack.c.h.b16 %v1940
    %v2196 = vunpack.c.l.b16 %v1941
    %v2197 = vunpack.c.h.b16 %v1941
    %v2198 = vunpack.c.l.b16 %v1942
    %v2199 = vunpack.c.h.b16 %v1942
    %v2200 = vunpack.c.l.b16 %v1943
    %v2201 = vunpack.c.h.b16 %v1943
    %v2202 = vunpack.c.l.b16 %v1944
    %v2203 = vunpack.c.h.b16 %v1944
    %v2204 = vunpack.c.l.b16 %v1945
    %v2205 = vunpack.c.h.b16 %v1945
    %v2206 = vunpack.c.l.b16 %v1946
    %v2207 = vunpack.c.h.b16 %v1946
    %v2208 = vunpack.c.l.b16 %v1947
    %v2209 = vunpack.c.h.b16 %v1947
    %v2210 = vunpack.c.l.b16 %v1948
    %v2211 = vunpack.c.h.b16 %v1948
    %v2212 = vunpack.c.l.b16 %v1949
    %v2213 = vunpack.c.h.b16 %v1949
    %v2214 = vunpack.c.l.b16 %v1950
    %v2215 = vunpack.c.h.b16 %v1950
    %v2216 = vunpack.c.l.b16 %v1951
    %v2217 = vunpack.c.h.b16 %v1951
    %v2218 = vunpack.c.l.b16 %v1952
    %v2219 = vunpack.c.h.b16 %v1952
    %v2220 = vunpack.c.l.b16 %v1953
    %v2221 = vunpack.c.h.b16 %v1953
    %v2222 = vunpack.c.l.b16 %v1954
    %v2223 = vunpack.c.h.b16 %v1954
    %v2224 = vunpack.c.l.b16 %v1955
    %v2225 = vunpack.c.h.b16 %v1955
    %v2226 = vunpack.c.l.b16 %v1956
    %v2227 = vunpack.c.h.b16 %v1956
    %v2228 = vunpack.c.l.b16 %v1957
    %v2229 = vunpack.c.h.b16 %v1957
    %v2230 = vunpack.c.l.b16 %v1958
    %v2231 = vunpack.c.h.b16 %v1958
    %v2232 = vunpack.c.l.b16 %v1959
    %v2233 = vunpack.c.h.b16 %v1959
    %v2234 = vunpack.c.l.b16 %v1960
    %v2235 = vunpack.c.h.b16 %v1960
    %v2236 = vunpack.c.l.b16 %v1961
    %v2237 = vunpack.c.h.b16 %v1961
    %v2238 = vpack.c.b16 %v2126, %v2110
    %v2239 = vpack.c.b16 %v2127, %v2111
    %v2240 = vpack.c.b16 %v2128, %v2112
    %v2241 = vpack.c.b16 %v2129, %v2113
    %v2242 = vpack.c.b16 %v2130, %v2114
    %v2243 = vpack.c.b16 %v2131, %v2115
    %v2244 = vpack.c.b16 %v2132, %v2116
    %v2245 = vpack.c.b16 %v2133, %v2117
    %v2246 = vpack.c.b16 %v2134, %v2118
    %v2247 = vpack.c.b16 %v2135, %v2119
    %v2248 = vpack.c.b16 %v2136, %v2120
    %v2249 = vpack.c.b16 %v2137, %v2121
    %v2250 = vpack.c.b16 %v2138, %v2122
    %v2251 = vpack.c.b16 %v2139, %v2123
    %v2252 = vpack.c.b16 %v2140, %v2124
    %v2253 = vpack.c.b16 %v2141, %v2125
    %v2254 = vpack.c.b16 %v2158, %v2142
    %v2255 = vpack.c.b16 %v2159, %v2143
    %v2256 = vpack.c.b16 %v2160, %v2144
    %v2257 = vpack.c.b16 %v2161, %v2145
    %v2258 = vpack.c.b16 %v2162, %v2146
    %v2259 = vpack.c.b16 %v2163, %v2147
    %v2260 = vpack.c.b16 %v2164, %v2148
    %v2261 = vpack.c.b16 %v2165, %v2149
    %v2262 = vpack.c.b16 %v2166, %v2150
    %v2263 = vpack.c.b16 %v2167, %v2151
    %v2264 = vpack.c.b16 %v2168, %v2152
    %v2265 = vpack.c.b16 %v2169, %v2153
    %v2266 = vpack.c.b16 %v2170, %v2154
    %v2267 = vpack.c.b16 %v2171, %v2155
    %v2268 = vpack.c.b16 %v2172, %v2156
    %v2269 = vpack.c.b16 %v2173, %v2157
    %v2270 = vpack.c.b16 %v2190, %v2174
    %v2271 = vpack.c.b16 %v2191, %v2175
    %v2272 = vpack.c.b16 %v2192, %v2176
    %v2273 = vpack.c.b16 %v2193, %v2177
    %v2274 = vpack.c.b16 %v2194, %v2178
    %v2275 = vpack.c.b16 %v2195, %v2179
    %v2276 = vpack.c.b16 %v2196, %v2180
    %v2277 = vpack.c.b16 %v2197, %v2181
    %v2278 = vpack.c.b16 %v2198, %v2182
    %v2279 = vpack.c.b16 %v2199, %v2183
    %v2280 = vpack.c.b16 %v2200, %v2184
    %v2281 = vpack.c.b16 %v2201, %v2185
    %v2282 = vpack.c.b16 %v2202, %v2186
    %v2283 = vpack.c.b16 %v2203, %v2187
    %v2284 = vpack.c.b16 %v2204, %v2188
    %v2285 = vpack.c.b16 %v2205, %v2189
    %v2286 = vpack.c.b16 %v2222, %v2206
    %v2287 = vpack.c.b16 %v2223, %v2207
    %v2288 = vpack.c.b16 %v2224, %v2208
    %v2289 = vpack.c.b16 %v2225, %v2209
    %v2290 = vpack.c.b16 %v2226, %v2210
    %v2291 = vpack.c.b16 %v2227, %v2211
    %v2292 = vpack.c.b16 %v2228, %v2212
    %v2293 = vpack.c.b16 %v2229, %v2213
    %v2294 = vpack.c.b16 %v2230, %v2214
    %v2295 = vpack.c.b16 %v2231, %v2215
    %v2296 = vpack.c.b16 %v2232, %v2216
    %v2297 = vpack.c.b16 %v2233, %v2217
    %v2298 = vpack.c.b16 %v2234, %v2218
    %v2299 = vpack.c.b16 %v2235, %v2219
    %v2300 = vpack.c.b16 %v2236, %v2220
    %v2301 = vpack.c.b16 %v2237, %v2221
    %v2367 = vsel %vm207, %v1897, 0
    %2369 = vmatprep.subr.bf16.mxu0 0
    %2370 = vmatpush1.bf16.msra.mxu0 0
    %2371 = vmatprep.subr.bf16.mxu0 0
    %2372 = vmatpush1.bf16.msra.mxu0 0
    %2373 = vmatprep.subr.bf16.mxu0 0
    %2374 = vmatpush1.bf16.msra.mxu0 0
    %2375 = vmatprep.subr.bf16.mxu0 0
    %2376 = vmatpush1.bf16.msra.mxu0 0
    %2377 = vmatprep.subr.bf16.mxu0 %v2287
    %2378 = vmatpush1.bf16.msra.mxu0 %v2286
    %2379 = vmatprep.subr.bf16.mxu0 %v2271
    %2380 = vmatpush1.bf16.msra.mxu0 %v2270
    %2381 = vmatprep.subr.bf16.mxu0 %v2255
    %2382 = vmatpush1.bf16.msra.mxu0 %v2254
    %2383 = vmatprep.subr.bf16.mxu0 %v2239
    %2384 = vmatpush1.bf16.msra.mxu0 %v2238
    %2385 = vmatprep.subr.bf16.mxu0 0
    %2386 = vmatpush2.bf16.msra.mxu0 0
    %2387 = vmatprep.subr.bf16.mxu0 0
    %2388 = vmatpush2.bf16.msra.mxu0 0
    %2389 = vmatprep.subr.bf16.mxu0 0
    %2390 = vmatpush2.bf16.msra.mxu0 0
    %2391 = vmatprep.subr.bf16.mxu0 0
    %2392 = vmatpush2.bf16.msra.mxu0 0
    %2393 = vmatprep.subr.bf16.mxu0 0
    %2394 = vmatpush2.bf16.msra.mxu0 0
    %2395 = vmatprep.subr.bf16.mxu0 0
    %2396 = vmatpush2.bf16.msra.mxu0 0
    %2397 = vmatprep.subr.bf16.mxu0 0
    %2398 = vmatpush2.bf16.msra.mxu0 0
    %2399 = vmatprep.subr.bf16.mxu0 0
    %2400 = vmatpush2.bf16.msra.mxu0 0
    %2401 = vmatprep.mubr.bf16.mxu0 0
    %2402 = vmatmul.mubr.bf16.gmra.mxu0 %v2367
    %v2403 = vpop.f32.mrf.mxu0
    %v2404 = vadd.f32 %v1969, %v2403
    %v2405 = vpop.f32.mrf.mxu0
    %v2406 = vadd.f32 %v1973, %v2405
    %v2407 = vpop.f32.mrf.mxu0
    %v2408 = vadd.f32 %v1969, %v2407
    %v2409 = vpop.f32.mrf.mxu0
    %v2410 = vadd.f32 %v1973, %v2409
    %2411 = vdwg.mxu0
    %2412 = vmatprep.subr.bf16.mxu0 0
    %2413 = vmatpush1.bf16.msra.mxu0 0
    %2414 = vmatprep.subr.bf16.mxu0 0
    %2415 = vmatpush1.bf16.msra.mxu0 0
    %2416 = vmatprep.subr.bf16.mxu0 0
    %2417 = vmatpush1.bf16.msra.mxu0 0
    %2418 = vmatprep.subr.bf16.mxu0 0
    %2419 = vmatpush1.bf16.msra.mxu0 0
    %2420 = vmatprep.subr.bf16.mxu0 %v2289
    %2421 = vmatpush1.bf16.msra.mxu0 %v2288
    %2422 = vmatprep.subr.bf16.mxu0 %v2273
    %2423 = vmatpush1.bf16.msra.mxu0 %v2272
    %2424 = vmatprep.subr.bf16.mxu0 %v2257
    %2425 = vmatpush1.bf16.msra.mxu0 %v2256
    %2426 = vmatprep.subr.bf16.mxu0 %v2241
    %2427 = vmatpush1.bf16.msra.mxu0 %v2240
    %2428 = vmatprep.subr.bf16.mxu0 0
    %2429 = vmatpush2.bf16.msra.mxu0 0
    %2430 = vmatprep.subr.bf16.mxu0 0
    %2431 = vmatpush2.bf16.msra.mxu0 0
    %2432 = vmatprep.subr.bf16.mxu0 0
    %2433 = vmatpush2.bf16.msra.mxu0 0
    %2434 = vmatprep.subr.bf16.mxu0 0
    %2435 = vmatpush2.bf16.msra.mxu0 0
    %2436 = vmatprep.subr.bf16.mxu0 0
    %2437 = vmatpush2.bf16.msra.mxu0 0
    %2438 = vmatprep.subr.bf16.mxu0 0
    %2439 = vmatpush2.bf16.msra.mxu0 0
    %2440 = vmatprep.subr.bf16.mxu0 0
    %2441 = vmatpush2.bf16.msra.mxu0 0
    %2442 = vmatprep.subr.bf16.mxu0 0
    %2443 = vmatpush2.bf16.msra.mxu0 0
    %2444 = vmatprep.mubr.bf16.mxu0 0
    %2445 = vmatmul.mubr.bf16.gmra.mxu0 %v2367
    %v2446 = vpop.f32.mrf.mxu0
    %v2447 = vadd.f32 %v1977, %v2446
    %v2448 = vpop.f32.mrf.mxu0
    %v2449 = vadd.f32 %v1981, %v2448
    %v2450 = vpop.f32.mrf.mxu0
    %v2451 = vadd.f32 %v1977, %v2450
    %v2452 = vpop.f32.mrf.mxu0
    %v2453 = vadd.f32 %v1981, %v2452
    %2454 = vdwg.mxu0
    %2455 = vmatprep.subr.bf16.mxu0 0
    %2456 = vmatpush1.bf16.msra.mxu0 0
    %2457 = vmatprep.subr.bf16.mxu0 0
    %2458 = vmatpush1.bf16.msra.mxu0 0
    %2459 = vmatprep.subr.bf16.mxu0 0
    %2460 = vmatpush1.bf16.msra.mxu0 0
    %2461 = vmatprep.subr.bf16.mxu0 0
    %2462 = vmatpush1.bf16.msra.mxu0 0
    %2463 = vmatprep.subr.bf16.mxu0 %v2291
    %2464 = vmatpush1.bf16.msra.mxu0 %v2290
    %2465 = vmatprep.subr.bf16.mxu0 %v2275
    %2466 = vmatpush1.bf16.msra.mxu0 %v2274
    %2467 = vmatprep.subr.bf16.mxu0 %v2259
    %2468 = vmatpush1.bf16.msra.mxu0 %v2258
    %2469 = vmatprep.subr.bf16.mxu0 %v2243
    %2470 = vmatpush1.bf16.msra.mxu0 %v2242
    %2471 = vmatprep.subr.bf16.mxu0 0
    %2472 = vmatpush2.bf16.msra.mxu0 0
    %2473 = vmatprep.subr.bf16.mxu0 0
    %2474 = vmatpush2.bf16.msra.mxu0 0
    %2475 = vmatprep.subr.bf16.mxu0 0
    %2476 = vmatpush2.bf16.msra.mxu0 0
    %2477 = vmatprep.subr.bf16.mxu0 0
    %2478 = vmatpush2.bf16.msra.mxu0 0
    %2479 = vmatprep.subr.bf16.mxu0 0
    %2480 = vmatpush2.bf16.msra.mxu0 0
    %2481 = vmatprep.subr.bf16.mxu0 0
    %2482 = vmatpush2.bf16.msra.mxu0 0
    %2483 = vmatprep.subr.bf16.mxu0 0
    %2484 = vmatpush2.bf16.msra.mxu0 0
    %2485 = vmatprep.subr.bf16.mxu0 0
    %2486 = vmatpush2.bf16.msra.mxu0 0
    %2487 = vmatprep.mubr.bf16.mxu0 0
    %2488 = vmatmul.mubr.bf16.gmra.mxu0 %v2367
    %v2489 = vpop.f32.mrf.mxu0
    %v2490 = vadd.f32 %v1985, %v2489
    %v2491 = vpop.f32.mrf.mxu0
    %v2492 = vadd.f32 %v1989, %v2491
    %v2493 = vpop.f32.mrf.mxu0
    %v2494 = vadd.f32 %v1985, %v2493
    %v2495 = vpop.f32.mrf.mxu0
    %v2496 = vadd.f32 %v1989, %v2495
    %2497 = vdwg.mxu0
    %2498 = vmatprep.subr.bf16.mxu0 0
    %2499 = vmatpush1.bf16.msra.mxu0 0
    %2500 = vmatprep.subr.bf16.mxu0 0
    %2501 = vmatpush1.bf16.msra.mxu0 0
    %2502 = vmatprep.subr.bf16.mxu0 0
    %2503 = vmatpush1.bf16.msra.mxu0 0
    %2504 = vmatprep.subr.bf16.mxu0 0
    %2505 = vmatpush1.bf16.msra.mxu0 0
    %2506 = vmatprep.subr.bf16.mxu0 %v2293
    %2507 = vmatpush1.bf16.msra.mxu0 %v2292
    %2508 = vmatprep.subr.bf16.mxu0 %v2277
    %2509 = vmatpush1.bf16.msra.mxu0 %v2276
    %2510 = vmatprep.subr.bf16.mxu0 %v2261
    %2511 = vmatpush1.bf16.msra.mxu0 %v2260
    %2512 = vmatprep.subr.bf16.mxu0 %v2245
    %2513 = vmatpush1.bf16.msra.mxu0 %v2244
    %2514 = vmatprep.subr.bf16.mxu0 0
    %2515 = vmatpush2.bf16.msra.mxu0 0
    %2516 = vmatprep.subr.bf16.mxu0 0
    %2517 = vmatpush2.bf16.msra.mxu0 0
    %2518 = vmatprep.subr.bf16.mxu0 0
    %2519 = vmatpush2.bf16.msra.mxu0 0
    %2520 = vmatprep.subr.bf16.mxu0 0
    %2521 = vmatpush2.bf16.msra.mxu0 0
    %2522 = vmatprep.subr.bf16.mxu0 0
    %2523 = vmatpush2.bf16.msra.mxu0 0
    %2524 = vmatprep.subr.bf16.mxu0 0
    %2525 = vmatpush2.bf16.msra.mxu0 0
    %2526 = vmatprep.subr.bf16.mxu0 0
    %2527 = vmatpush2.bf16.msra.mxu0 0
    %2528 = vmatprep.subr.bf16.mxu0 0
    %2529 = vmatpush2.bf16.msra.mxu0 0
    %2530 = vmatprep.mubr.bf16.mxu0 0
    %2531 = vmatmul.mubr.bf16.gmra.mxu0 %v2367
    %v2532 = vpop.f32.mrf.mxu0
    %v2533 = vadd.f32 %v1993, %v2532
    %v2534 = vpop.f32.mrf.mxu0
    %v2535 = vadd.f32 %v1997, %v2534
    %v2536 = vpop.f32.mrf.mxu0
    %v2537 = vadd.f32 %v1993, %v2536
    %v2538 = vpop.f32.mrf.mxu0
    %v2539 = vadd.f32 %v1997, %v2538
    %2540 = vdwg.mxu0
    %2541 = vmatprep.subr.bf16.mxu0 0
    %2542 = vmatpush1.bf16.msra.mxu0 0
    %2543 = vmatprep.subr.bf16.mxu0 0
    %2544 = vmatpush1.bf16.msra.mxu0 0
    %2545 = vmatprep.subr.bf16.mxu0 0
    %2546 = vmatpush1.bf16.msra.mxu0 0
    %2547 = vmatprep.subr.bf16.mxu0 0
    %2548 = vmatpush1.bf16.msra.mxu0 0
    %2549 = vmatprep.subr.bf16.mxu0 %v2295
    %2550 = vmatpush1.bf16.msra.mxu0 %v2294
    %2551 = vmatprep.subr.bf16.mxu0 %v2279
    %2552 = vmatpush1.bf16.msra.mxu0 %v2278
    %2553 = vmatprep.subr.bf16.mxu0 %v2263
    %2554 = vmatpush1.bf16.msra.mxu0 %v2262
    %2555 = vmatprep.subr.bf16.mxu0 %v2247
    %2556 = vmatpush1.bf16.msra.mxu0 %v2246
    %2557 = vmatprep.subr.bf16.mxu0 0
    %2558 = vmatpush2.bf16.msra.mxu0 0
    %2559 = vmatprep.subr.bf16.mxu0 0
    %2560 = vmatpush2.bf16.msra.mxu0 0
    %2561 = vmatprep.subr.bf16.mxu0 0
    %2562 = vmatpush2.bf16.msra.mxu0 0
    %2563 = vmatprep.subr.bf16.mxu0 0
    %2564 = vmatpush2.bf16.msra.mxu0 0
    %2565 = vmatprep.subr.bf16.mxu0 0
    %2566 = vmatpush2.bf16.msra.mxu0 0
    %2567 = vmatprep.subr.bf16.mxu0 0
    %2568 = vmatpush2.bf16.msra.mxu0 0
    %2569 = vmatprep.subr.bf16.mxu0 0
    %2570 = vmatpush2.bf16.msra.mxu0 0
    %2571 = vmatprep.subr.bf16.mxu0 0
    %2572 = vmatpush2.bf16.msra.mxu0 0
    %2573 = vmatprep.mubr.bf16.mxu0 0
    %2574 = vmatmul.mubr.bf16.gmra.mxu0 %v2367
    %v2575 = vpop.f32.mrf.mxu0
    %v2576 = vadd.f32 %v2001, %v2575
    %v2577 = vpop.f32.mrf.mxu0
    %v2578 = vadd.f32 %v2005, %v2577
    %v2579 = vpop.f32.mrf.mxu0
    %v2580 = vadd.f32 %v2001, %v2579
    %v2581 = vpop.f32.mrf.mxu0
    %v2582 = vadd.f32 %v2005, %v2581
    %2583 = vdwg.mxu0
    %2584 = vmatprep.subr.bf16.mxu0 0
    %2585 = vmatpush1.bf16.msra.mxu0 0
    %2586 = vmatprep.subr.bf16.mxu0 0
    %2587 = vmatpush1.bf16.msra.mxu0 0
    %2588 = vmatprep.subr.bf16.mxu0 0
    %2589 = vmatpush1.bf16.msra.mxu0 0
    %2590 = vmatprep.subr.bf16.mxu0 0
    %2591 = vmatpush1.bf16.msra.mxu0 0
    %2592 = vmatprep.subr.bf16.mxu0 %v2297
    %2593 = vmatpush1.bf16.msra.mxu0 %v2296
    %2594 = vmatprep.subr.bf16.mxu0 %v2281
    %2595 = vmatpush1.bf16.msra.mxu0 %v2280
    %2596 = vmatprep.subr.bf16.mxu0 %v2265
    %2597 = vmatpush1.bf16.msra.mxu0 %v2264
    %2598 = vmatprep.subr.bf16.mxu0 %v2249
    %2599 = vmatpush1.bf16.msra.mxu0 %v2248
    %2600 = vmatprep.subr.bf16.mxu0 0
    %2601 = vmatpush2.bf16.msra.mxu0 0
    %2602 = vmatprep.subr.bf16.mxu0 0
    %2603 = vmatpush2.bf16.msra.mxu0 0
    %2604 = vmatprep.subr.bf16.mxu0 0
    %2605 = vmatpush2.bf16.msra.mxu0 0
    %2606 = vmatprep.subr.bf16.mxu0 0
    %2607 = vmatpush2.bf16.msra.mxu0 0
    %2608 = vmatprep.subr.bf16.mxu0 0
    %2609 = vmatpush2.bf16.msra.mxu0 0
    %2610 = vmatprep.subr.bf16.mxu0 0
    %2611 = vmatpush2.bf16.msra.mxu0 0
    %2612 = vmatprep.subr.bf16.mxu0 0
    %2613 = vmatpush2.bf16.msra.mxu0 0
    %2614 = vmatprep.subr.bf16.mxu0 0
    %2615 = vmatpush2.bf16.msra.mxu0 0
    %2616 = vmatprep.mubr.bf16.mxu0 0
    %2617 = vmatmul.mubr.bf16.gmra.mxu0 %v2367
    %v2618 = vpop.f32.mrf.mxu0
    %v2619 = vadd.f32 %v2009, %v2618
    %v2620 = vpop.f32.mrf.mxu0
    %v2621 = vadd.f32 %v2013, %v2620
    %v2622 = vpop.f32.mrf.mxu0
    %v2623 = vadd.f32 %v2009, %v2622
    %v2624 = vpop.f32.mrf.mxu0
    %v2625 = vadd.f32 %v2013, %v2624
    %2626 = vdwg.mxu0
    %2627 = vmatprep.subr.bf16.mxu0 0
    %2628 = vmatpush1.bf16.msra.mxu0 0
    %2629 = vmatprep.subr.bf16.mxu0 0
    %2630 = vmatpush1.bf16.msra.mxu0 0
    %2631 = vmatprep.subr.bf16.mxu0 0
    %2632 = vmatpush1.bf16.msra.mxu0 0
    %2633 = vmatprep.subr.bf16.mxu0 0
    %2634 = vmatpush1.bf16.msra.mxu0 0
    %2635 = vmatprep.subr.bf16.mxu0 %v2299
    %2636 = vmatpush1.bf16.msra.mxu0 %v2298
    %2637 = vmatprep.subr.bf16.mxu0 %v2283
    %2638 = vmatpush1.bf16.msra.mxu0 %v2282
    %2639 = vmatprep.subr.bf16.mxu0 %v2267
    %2640 = vmatpush1.bf16.msra.mxu0 %v2266
    %2641 = vmatprep.subr.bf16.mxu0 %v2251
    %2642 = vmatpush1.bf16.msra.mxu0 %v2250
    %2643 = vmatprep.subr.bf16.mxu0 0
    %2644 = vmatpush2.bf16.msra.mxu0 0
    %2645 = vmatprep.subr.bf16.mxu0 0
    %2646 = vmatpush2.bf16.msra.mxu0 0
    %2647 = vmatprep.subr.bf16.mxu0 0
    %2648 = vmatpush2.bf16.msra.mxu0 0
    %2649 = vmatprep.subr.bf16.mxu0 0
    %2650 = vmatpush2.bf16.msra.mxu0 0
    %2651 = vmatprep.subr.bf16.mxu0 0
    %2652 = vmatpush2.bf16.msra.mxu0 0
    %2653 = vmatprep.subr.bf16.mxu0 0
    %2654 = vmatpush2.bf16.msra.mxu0 0
    %2655 = vmatprep.subr.bf16.mxu0 0
    %2656 = vmatpush2.bf16.msra.mxu0 0
    %2657 = vmatprep.subr.bf16.mxu0 0
    %2658 = vmatpush2.bf16.msra.mxu0 0
    %2659 = vmatprep.mubr.bf16.mxu0 0
    %2660 = vmatmul.mubr.bf16.gmra.mxu0 %v2367
    %v2661 = vpop.f32.mrf.mxu0
    %v2662 = vadd.f32 %v2017, %v2661
    %v2663 = vpop.f32.mrf.mxu0
    %v2664 = vadd.f32 %v2021, %v2663
    %v2665 = vpop.f32.mrf.mxu0
    %v2666 = vadd.f32 %v2017, %v2665
    %v2667 = vpop.f32.mrf.mxu0
    %v2668 = vadd.f32 %v2021, %v2667
    %2669 = vdwg.mxu0
    %2670 = vmatprep.subr.bf16.mxu0 0
    %2671 = vmatpush1.bf16.msra.mxu0 0
    %2672 = vmatprep.subr.bf16.mxu0 0
    %2673 = vmatpush1.bf16.msra.mxu0 0
    %2674 = vmatprep.subr.bf16.mxu0 0
    %2675 = vmatpush1.bf16.msra.mxu0 0
    %2676 = vmatprep.subr.bf16.mxu0 0
    %2677 = vmatpush1.bf16.msra.mxu0 0
    %2678 = vmatprep.subr.bf16.mxu0 %v2301
    %2679 = vmatpush1.bf16.msra.mxu0 %v2300
    %2680 = vmatprep.subr.bf16.mxu0 %v2285
    %2681 = vmatpush1.bf16.msra.mxu0 %v2284
    %2682 = vmatprep.subr.bf16.mxu0 %v2269
    %2683 = vmatpush1.bf16.msra.mxu0 %v2268
    %2684 = vmatprep.subr.bf16.mxu0 %v2253
    %2685 = vmatpush1.bf16.msra.mxu0 %v2252
    %2686 = vmatprep.subr.bf16.mxu0 0
    %2687 = vmatpush2.bf16.msra.mxu0 0
    %2688 = vmatprep.subr.bf16.mxu0 0
    %2689 = vmatpush2.bf16.msra.mxu0 0
    %2690 = vmatprep.subr.bf16.mxu0 0
    %2691 = vmatpush2.bf16.msra.mxu0 0
    %2692 = vmatprep.subr.bf16.mxu0 0
    %2693 = vmatpush2.bf16.msra.mxu0 0
    %2694 = vmatprep.subr.bf16.mxu0 0
    %2695 = vmatpush2.bf16.msra.mxu0 0
    %2696 = vmatprep.subr.bf16.mxu0 0
    %2697 = vmatpush2.bf16.msra.mxu0 0
    %2698 = vmatprep.subr.bf16.mxu0 0
    %2699 = vmatpush2.bf16.msra.mxu0 0
    %2700 = vmatprep.subr.bf16.mxu0 0
    %2701 = vmatpush2.bf16.msra.mxu0 0
    %2702 = vmatprep.mubr.bf16.mxu0 0
    %2703 = vmatmul.mubr.bf16.gmra.mxu0 %v2367
    %v2704 = vpop.f32.mrf.mxu0
    %v2705 = vadd.f32 %v2025, %v2704
    %v2706 = vpop.f32.mrf.mxu0
    %v2707 = vadd.f32 %v2029, %v2706
    %v2708 = vpop.f32.mrf.mxu0
    %v2709 = vadd.f32 %v2025, %v2708
    %v2710 = vpop.f32.mrf.mxu0
    %v2711 = vadd.f32 %v2029, %v2710
    %2712 = vdwg.mxu0
    %v2713 = vmax.f32 %v2404, 0.0
    %v2714 = vmax.f32 %v2406, 0.0
    %v2715 = vmax.f32 %v2447, 0.0
    %v2716 = vmax.f32 %v2449, 0.0
    %v2717 = vmax.f32 %v2490, 0.0
    %v2718 = vmax.f32 %v2492, 0.0
    %v2719 = vmax.f32 %v2533, 0.0
    %v2720 = vmax.f32 %v2535, 0.0
    %v2721 = vmax.f32 %v2576, 0.0
    %v2722 = vmax.f32 %v2578, 0.0
    %v2723 = vmax.f32 %v2619, 0.0
    %v2724 = vmax.f32 %v2621, 0.0
    %v2725 = vmax.f32 %v2662, 0.0
    %v2726 = vmax.f32 %v2664, 0.0
    %v2727 = vmax.f32 %v2705, 0.0
    %v2728 = vmax.f32 %v2707, 0.0
    %v2729 = vmax.f32 %v2408, 0.0
    %v2730 = vmax.f32 %v2410, 0.0
    %v2731 = vmax.f32 %v2451, 0.0
    %v2732 = vmax.f32 %v2453, 0.0
    %v2733 = vmax.f32 %v2494, 0.0
    %v2734 = vmax.f32 %v2496, 0.0
    %v2735 = vmax.f32 %v2537, 0.0
    %v2736 = vmax.f32 %v2539, 0.0
    %v2737 = vmax.f32 %v2580, 0.0
    %v2738 = vmax.f32 %v2582, 0.0
    %v2739 = vmax.f32 %v2623, 0.0
    %v2740 = vmax.f32 %v2625, 0.0
    %v2741 = vmax.f32 %v2666, 0.0
    %v2742 = vmax.f32 %v2668, 0.0
    %v2743 = vmax.f32 %v2709, 0.0
    %v2744 = vmax.f32 %v2711, 0.0
    %v2745 = vpack.c.bf16 %v2729, %v2713
    %v2746 = vpack.c.bf16 %v2730, %v2714
    %v2747 = vpack.c.bf16 %v2731, %v2715
    %v2748 = vpack.c.bf16 %v2732, %v2716
    %v2749 = vpack.c.bf16 %v2733, %v2717
    %v2750 = vpack.c.bf16 %v2734, %v2718
    %v2751 = vpack.c.bf16 %v2735, %v2719
    %v2752 = vpack.c.bf16 %v2736, %v2720
    %v2753 = vpack.c.bf16 %v2737, %v2721
    %v2754 = vpack.c.bf16 %v2738, %v2722
    %v2755 = vpack.c.bf16 %v2739, %v2723
    %v2756 = vpack.c.bf16 %v2740, %v2724
    %v2757 = vpack.c.bf16 %v2741, %v2725
    %v2758 = vpack.c.bf16 %v2742, %v2726
    %v2759 = vpack.c.bf16 %v2743, %v2727
    %v2760 = vpack.c.bf16 %v2744, %v2728
    %v2761 = vld [vmem:[%s17] sm:$0xf]
    %v2762 = vld [vmem:[%s17 + $0x4] sm:$0xf]
    %v2763 = vld [vmem:[%s17 + $0x8] sm:$0xf]
    %v2764 = vld [vmem:[%s17 + $0xc] sm:$0xf]
    %v2765 = vld [vmem:[%s17 + $0x10] sm:$0xf]
    %v2766 = vld [vmem:[%s17 + $0x14] sm:$0xf]
    %v2767 = vld [vmem:[%s17 + $0x18] sm:$0xf]
    %v2768 = vld [vmem:[%s17 + $0x1c] sm:$0xf]
    %v2769 = vld [vmem:[%s17 + $0x20] sm:$0xf]
    %v2770 = vld [vmem:[%s17 + $0x24] sm:$0xf]
    %v2771 = vld [vmem:[%s17 + $0x28] sm:$0xf]
    %v2772 = vld [vmem:[%s17 + $0x2c] sm:$0xf]
    %v2773 = vld [vmem:[%s17 + $0x30] sm:$0xf]
    %v2774 = vld [vmem:[%s17 + $0x34] sm:$0xf]
    %v2775 = vld [vmem:[%s17 + $0x38] sm:$0xf]
    %v2776 = vld [vmem:[%s17 + $0x3c] sm:$0xf]
    %v2777 = vld [vmem:[%s17 + $0x40] sm:$0xf]
    %v2778 = vld [vmem:[%s17 + $0x44] sm:$0xf]
    %v2779 = vld [vmem:[%s17 + $0x48] sm:$0xf]
    %v2780 = vld [vmem:[%s17 + $0x4c] sm:$0xf]
    %v2781 = vld [vmem:[%s17 + $0x50] sm:$0xf]
    %v2782 = vld [vmem:[%s17 + $0x54] sm:$0xf]
    %v2783 = vld [vmem:[%s17 + $0x58] sm:$0xf]
    %v2784 = vld [vmem:[%s17 + $0x5c] sm:$0xf]
    %v2785 = vld [vmem:[%s17 + $0x60] sm:$0xf]
    %v2786 = vld [vmem:[%s17 + $0x64] sm:$0xf]
    %v2787 = vld [vmem:[%s17 + $0x68] sm:$0xf]
    %v2788 = vld [vmem:[%s17 + $0x6c] sm:$0xf]
    %v2789 = vld [vmem:[%s17 + $0x70] sm:$0xf]
    %v2790 = vld [vmem:[%s17 + $0x74] sm:$0xf]
    %v2791 = vld [vmem:[%s17 + $0x78] sm:$0xf]
    %v2792 = vld [vmem:[%s17 + $0x7c] sm:$0xf]
    %v2793 = vld [vmem:[%s17 + $0x80] sm:$0xf]
    %v2794 = vld [vmem:[%s17 + $0x84] sm:$0xf]
    %v2795 = vld [vmem:[%s17 + $0x88] sm:$0xf]
    %v2796 = vld [vmem:[%s17 + $0x8c] sm:$0xf]
    %v2797 = vld [vmem:[%s17 + $0x90] sm:$0xf]
    %v2798 = vld [vmem:[%s17 + $0x94] sm:$0xf]
    %v2799 = vld [vmem:[%s17 + $0x98] sm:$0xf]
    %v2800 = vld [vmem:[%s17 + $0x9c] sm:$0xf]
    %v2801 = vld [vmem:[%s17 + $0xa0] sm:$0xf]
    %v2802 = vld [vmem:[%s17 + $0xa4] sm:$0xf]
    %v2803 = vld [vmem:[%s17 + $0xa8] sm:$0xf]
    %v2804 = vld [vmem:[%s17 + $0xac] sm:$0xf]
    %v2805 = vld [vmem:[%s17 + $0xb0] sm:$0xf]
    %v2806 = vld [vmem:[%s17 + $0xb4] sm:$0xf]
    %v2807 = vld [vmem:[%s17 + $0xb8] sm:$0xf]
    %v2808 = vld [vmem:[%s17 + $0xbc] sm:$0xf]
    %v2809 = vld [vmem:[%s17 + $0xc0] sm:$0xf]
    %v2810 = vld [vmem:[%s17 + $0xc4] sm:$0xf]
    %v2811 = vld [vmem:[%s17 + $0xc8] sm:$0xf]
    %v2812 = vld [vmem:[%s17 + $0xcc] sm:$0xf]
    %v2813 = vld [vmem:[%s17 + $0xd0] sm:$0xf]
    %v2814 = vld [vmem:[%s17 + $0xd4] sm:$0xf]
    %v2815 = vld [vmem:[%s17 + $0xd8] sm:$0xf]
    %v2816 = vld [vmem:[%s17 + $0xdc] sm:$0xf]
    %v2817 = vld [vmem:[%s17 + $0xe0] sm:$0xf]
    %v2818 = vld [vmem:[%s17 + $0xe4] sm:$0xf]
    %v2819 = vld [vmem:[%s17 + $0xe8] sm:$0xf]
    %v2820 = vld [vmem:[%s17 + $0xec] sm:$0xf]
    %v2821 = vld [vmem:[%s17 + $0xf0] sm:$0xf]
    %v2822 = vld [vmem:[%s17 + $0xf4] sm:$0xf]
    %v2823 = vld [vmem:[%s17 + $0xf8] sm:$0xf]
    %v2824 = vld [vmem:[%s17 + $0xfc] sm:$0xf]
    %v2825 = vld [vmem:[%s17 + $0x100] sm:$0xf]
    %v2826 = vld [vmem:[%s17 + $0x104] sm:$0xf]
    %v2827 = vld [vmem:[%s17 + $0x108] sm:$0xf]
    %v2828 = vld [vmem:[%s17 + $0x10c] sm:$0xf]
    %v2829 = vld [vmem:[%s17 + $0x110] sm:$0xf]
    %v2830 = vld [vmem:[%s17 + $0x114] sm:$0xf]
    %v2831 = vld [vmem:[%s17 + $0x118] sm:$0xf]
    %v2832 = vld [vmem:[%s17 + $0x11c] sm:$0xf]
    %v2833 = vld [vmem:[%s17 + $0x120] sm:$0xf]
    %v2834 = vld [vmem:[%s17 + $0x124] sm:$0xf]
    %v2835 = vld [vmem:[%s17 + $0x128] sm:$0xf]
    %v2836 = vld [vmem:[%s17 + $0x12c] sm:$0xf]
    %v2837 = vld [vmem:[%s17 + $0x130] sm:$0xf]
    %v2838 = vld [vmem:[%s17 + $0x134] sm:$0xf]
    %v2839 = vld [vmem:[%s17 + $0x138] sm:$0xf]
    %v2840 = vld [vmem:[%s17 + $0x13c] sm:$0xf]
    %v2841 = vld [vmem:[%s17 + $0x140] sm:$0xf]
    %v2842 = vld [vmem:[%s17 + $0x144] sm:$0xf]
    %v2843 = vld [vmem:[%s17 + $0x148] sm:$0xf]
    %v2844 = vld [vmem:[%s17 + $0x14c] sm:$0xf]
    %v2845 = vld [vmem:[%s17 + $0x150] sm:$0xf]
    %v2846 = vld [vmem:[%s17 + $0x154] sm:$0xf]
    %v2847 = vld [vmem:[%s17 + $0x158] sm:$0xf]
    %v2848 = vld [vmem:[%s17 + $0x15c] sm:$0xf]
    %v2849 = vld [vmem:[%s17 + $0x160] sm:$0xf]
    %v2850 = vld [vmem:[%s17 + $0x164] sm:$0xf]
    %v2851 = vld [vmem:[%s17 + $0x168] sm:$0xf]
    %v2852 = vld [vmem:[%s17 + $0x16c] sm:$0xf]
    %v2853 = vld [vmem:[%s17 + $0x170] sm:$0xf]
    %v2854 = vld [vmem:[%s17 + $0x174] sm:$0xf]
    %v2855 = vld [vmem:[%s17 + $0x178] sm:$0xf]
    %v2856 = vld [vmem:[%s17 + $0x17c] sm:$0xf]
    %v2857 = vld [vmem:[%s17 + $0x180] sm:$0xf]
    %v2858 = vld [vmem:[%s17 + $0x184] sm:$0xf]
    %v2859 = vld [vmem:[%s17 + $0x188] sm:$0xf]
    %v2860 = vld [vmem:[%s17 + $0x18c] sm:$0xf]
    %v2861 = vld [vmem:[%s17 + $0x190] sm:$0xf]
    %v2862 = vld [vmem:[%s17 + $0x194] sm:$0xf]
    %v2863 = vld [vmem:[%s17 + $0x198] sm:$0xf]
    %v2864 = vld [vmem:[%s17 + $0x19c] sm:$0xf]
    %v2865 = vld [vmem:[%s17 + $0x1a0] sm:$0xf]
    %v2866 = vld [vmem:[%s17 + $0x1a4] sm:$0xf]
    %v2867 = vld [vmem:[%s17 + $0x1a8] sm:$0xf]
    %v2868 = vld [vmem:[%s17 + $0x1ac] sm:$0xf]
    %v2869 = vld [vmem:[%s17 + $0x1b0] sm:$0xf]
    %v2870 = vld [vmem:[%s17 + $0x1b4] sm:$0xf]
    %v2871 = vld [vmem:[%s17 + $0x1b8] sm:$0xf]
    %v2872 = vld [vmem:[%s17 + $0x1bc] sm:$0xf]
    %v2873 = vld [vmem:[%s17 + $0x1c0] sm:$0xf]
    %v2874 = vld [vmem:[%s17 + $0x1c4] sm:$0xf]
    %v2875 = vld [vmem:[%s17 + $0x1c8] sm:$0xf]
    %v2876 = vld [vmem:[%s17 + $0x1cc] sm:$0xf]
    %v2877 = vld [vmem:[%s17 + $0x1d0] sm:$0xf]
    %v2878 = vld [vmem:[%s17 + $0x1d4] sm:$0xf]
    %v2879 = vld [vmem:[%s17 + $0x1d8] sm:$0xf]
    %v2880 = vld [vmem:[%s17 + $0x1dc] sm:$0xf]
    %v2881 = vld [vmem:[%s17 + $0x1e0] sm:$0xf]
    %v2882 = vld [vmem:[%s17 + $0x1e4] sm:$0xf]
    %v2883 = vld [vmem:[%s17 + $0x1e8] sm:$0xf]
    %v2884 = vld [vmem:[%s17 + $0x1ec] sm:$0xf]
    %v2885 = vld [vmem:[%s17 + $0x1f0] sm:$0xf]
    %v2886 = vld [vmem:[%s17 + $0x1f4] sm:$0xf]
    %v2887 = vld [vmem:[%s17 + $0x1f8] sm:$0xf]
    %v2888 = vld [vmem:[%s17 + $0x1fc] sm:$0xf]
    %v2889 = vld [vmem:[%s17 + $0x200] sm:$0xf]
    %v2890 = vld [vmem:[%s17 + $0x204] sm:$0xf]
    %v2891 = vld [vmem:[%s17 + $0x208] sm:$0xf]
    %v2892 = vld [vmem:[%s17 + $0x20c] sm:$0xf]
    %v2893 = vld [vmem:[%s17 + $0x210] sm:$0xf]
    %v2894 = vld [vmem:[%s17 + $0x214] sm:$0xf]
    %v2895 = vld [vmem:[%s17 + $0x218] sm:$0xf]
    %v2896 = vld [vmem:[%s17 + $0x21c] sm:$0xf]
    %v2897 = vld [vmem:[%s17 + $0x220] sm:$0xf]
    %v2898 = vld [vmem:[%s17 + $0x224] sm:$0xf]
    %v2899 = vld [vmem:[%s17 + $0x228] sm:$0xf]
    %v2900 = vld [vmem:[%s17 + $0x22c] sm:$0xf]
    %v2901 = vld [vmem:[%s17 + $0x230] sm:$0xf]
    %v2902 = vld [vmem:[%s17 + $0x234] sm:$0xf]
    %v2903 = vld [vmem:[%s17 + $0x238] sm:$0xf]
    %v2904 = vld [vmem:[%s17 + $0x23c] sm:$0xf]
    %v2905 = vld [vmem:[%s17 + $0x240] sm:$0xf]
    %v2906 = vld [vmem:[%s17 + $0x244] sm:$0xf]
    %v2907 = vld [vmem:[%s17 + $0x248] sm:$0xf]
    %v2908 = vld [vmem:[%s17 + $0x24c] sm:$0xf]
    %v2909 = vld [vmem:[%s17 + $0x250] sm:$0xf]
    %v2910 = vld [vmem:[%s17 + $0x254] sm:$0xf]
    %v2911 = vld [vmem:[%s17 + $0x258] sm:$0xf]
    %v2912 = vld [vmem:[%s17 + $0x25c] sm:$0xf]
    %v2913 = vld [vmem:[%s17 + $0x260] sm:$0xf]
    %v2914 = vld [vmem:[%s17 + $0x264] sm:$0xf]
    %v2915 = vld [vmem:[%s17 + $0x268] sm:$0xf]
    %v2916 = vld [vmem:[%s17 + $0x26c] sm:$0xf]
    %v2917 = vld [vmem:[%s17 + $0x270] sm:$0xf]
    %v2918 = vld [vmem:[%s17 + $0x274] sm:$0xf]
    %v2919 = vld [vmem:[%s17 + $0x278] sm:$0xf]
    %v2920 = vld [vmem:[%s17 + $0x27c] sm:$0xf]
    %v2921 = vld [vmem:[%s17 + $0x280] sm:$0xf]
    %v2922 = vld [vmem:[%s17 + $0x284] sm:$0xf]
    %v2923 = vld [vmem:[%s17 + $0x288] sm:$0xf]
    %v2924 = vld [vmem:[%s17 + $0x28c] sm:$0xf]
    %v2925 = vld [vmem:[%s17 + $0x290] sm:$0xf]
    %v2926 = vld [vmem:[%s17 + $0x294] sm:$0xf]
    %v2927 = vld [vmem:[%s17 + $0x298] sm:$0xf]
    %v2928 = vld [vmem:[%s17 + $0x29c] sm:$0xf]
    %v2929 = vld [vmem:[%s17 + $0x2a0] sm:$0xf]
    %v2930 = vld [vmem:[%s17 + $0x2a4] sm:$0xf]
    %v2931 = vld [vmem:[%s17 + $0x2a8] sm:$0xf]
    %v2932 = vld [vmem:[%s17 + $0x2ac] sm:$0xf]
    %v2933 = vld [vmem:[%s17 + $0x2b0] sm:$0xf]
    %v2934 = vld [vmem:[%s17 + $0x2b4] sm:$0xf]
    %v2935 = vld [vmem:[%s17 + $0x2b8] sm:$0xf]
    %v2936 = vld [vmem:[%s17 + $0x2bc] sm:$0xf]
    %v2937 = vld [vmem:[%s17 + $0x2c0] sm:$0xf]
    %v2938 = vld [vmem:[%s17 + $0x2c4] sm:$0xf]
    %v2939 = vld [vmem:[%s17 + $0x2c8] sm:$0xf]
    %v2940 = vld [vmem:[%s17 + $0x2cc] sm:$0xf]
    %v2941 = vld [vmem:[%s17 + $0x2d0] sm:$0xf]
    %v2942 = vld [vmem:[%s17 + $0x2d4] sm:$0xf]
    %v2943 = vld [vmem:[%s17 + $0x2d8] sm:$0xf]
    %v2944 = vld [vmem:[%s17 + $0x2dc] sm:$0xf]
    %v2945 = vld [vmem:[%s17 + $0x2e0] sm:$0xf]
    %v2946 = vld [vmem:[%s17 + $0x2e4] sm:$0xf]
    %v2947 = vld [vmem:[%s17 + $0x2e8] sm:$0xf]
    %v2948 = vld [vmem:[%s17 + $0x2ec] sm:$0xf]
    %v2949 = vld [vmem:[%s17 + $0x2f0] sm:$0xf]
    %v2950 = vld [vmem:[%s17 + $0x2f4] sm:$0xf]
    %v2951 = vld [vmem:[%s17 + $0x2f8] sm:$0xf]
    %v2952 = vld [vmem:[%s17 + $0x2fc] sm:$0xf]
    %v2953 = vld [vmem:[%s17 + $0x300] sm:$0xf]
    %v2954 = vld [vmem:[%s17 + $0x304] sm:$0xf]
    %v2955 = vld [vmem:[%s17 + $0x308] sm:$0xf]
    %v2956 = vld [vmem:[%s17 + $0x30c] sm:$0xf]
    %v2957 = vld [vmem:[%s17 + $0x310] sm:$0xf]
    %v2958 = vld [vmem:[%s17 + $0x314] sm:$0xf]
    %v2959 = vld [vmem:[%s17 + $0x318] sm:$0xf]
    %v2960 = vld [vmem:[%s17 + $0x31c] sm:$0xf]
    %v2961 = vld [vmem:[%s17 + $0x320] sm:$0xf]
    %v2962 = vld [vmem:[%s17 + $0x324] sm:$0xf]
    %v2963 = vld [vmem:[%s17 + $0x328] sm:$0xf]
    %v2964 = vld [vmem:[%s17 + $0x32c] sm:$0xf]
    %v2965 = vld [vmem:[%s17 + $0x330] sm:$0xf]
    %v2966 = vld [vmem:[%s17 + $0x334] sm:$0xf]
    %v2967 = vld [vmem:[%s17 + $0x338] sm:$0xf]
    %v2968 = vld [vmem:[%s17 + $0x33c] sm:$0xf]
    %v2969 = vld [vmem:[%s17 + $0x340] sm:$0xf]
    %v2970 = vld [vmem:[%s17 + $0x344] sm:$0xf]
    %v2971 = vld [vmem:[%s17 + $0x348] sm:$0xf]
    %v2972 = vld [vmem:[%s17 + $0x34c] sm:$0xf]
    %v2973 = vld [vmem:[%s17 + $0x350] sm:$0xf]
    %v2974 = vld [vmem:[%s17 + $0x354] sm:$0xf]
    %v2975 = vld [vmem:[%s17 + $0x358] sm:$0xf]
    %v2976 = vld [vmem:[%s17 + $0x35c] sm:$0xf]
    %v2977 = vld [vmem:[%s17 + $0x360] sm:$0xf]
    %v2978 = vld [vmem:[%s17 + $0x364] sm:$0xf]
    %v2979 = vld [vmem:[%s17 + $0x368] sm:$0xf]
    %v2980 = vld [vmem:[%s17 + $0x36c] sm:$0xf]
    %v2981 = vld [vmem:[%s17 + $0x370] sm:$0xf]
    %v2982 = vld [vmem:[%s17 + $0x374] sm:$0xf]
    %v2983 = vld [vmem:[%s17 + $0x378] sm:$0xf]
    %v2984 = vld [vmem:[%s17 + $0x37c] sm:$0xf]
    %v2985 = vld [vmem:[%s17 + $0x380] sm:$0xf]
    %v2986 = vld [vmem:[%s17 + $0x384] sm:$0xf]
    %v2987 = vld [vmem:[%s17 + $0x388] sm:$0xf]
    %v2988 = vld [vmem:[%s17 + $0x38c] sm:$0xf]
    %v2989 = vld [vmem:[%s17 + $0x390] sm:$0xf]
    %v2990 = vld [vmem:[%s17 + $0x394] sm:$0xf]
    %v2991 = vld [vmem:[%s17 + $0x398] sm:$0xf]
    %v2992 = vld [vmem:[%s17 + $0x39c] sm:$0xf]
    %v2993 = vld [vmem:[%s17 + $0x3a0] sm:$0xf]
    %v2994 = vld [vmem:[%s17 + $0x3a4] sm:$0xf]
    %v2995 = vld [vmem:[%s17 + $0x3a8] sm:$0xf]
    %v2996 = vld [vmem:[%s17 + $0x3ac] sm:$0xf]
    %v2997 = vld [vmem:[%s17 + $0x3b0] sm:$0xf]
    %v2998 = vld [vmem:[%s17 + $0x3b4] sm:$0xf]
    %v2999 = vld [vmem:[%s17 + $0x3b8] sm:$0xf]
    %v3000 = vld [vmem:[%s17 + $0x3bc] sm:$0xf]
    %v3001 = vld [vmem:[%s17 + $0x3c0] sm:$0xf]
    %v3002 = vld [vmem:[%s17 + $0x3c4] sm:$0xf]
    %v3003 = vld [vmem:[%s17 + $0x3c8] sm:$0xf]
    %v3004 = vld [vmem:[%s17 + $0x3cc] sm:$0xf]
    %v3005 = vld [vmem:[%s17 + $0x3d0] sm:$0xf]
    %v3006 = vld [vmem:[%s17 + $0x3d4] sm:$0xf]
    %v3007 = vld [vmem:[%s17 + $0x3d8] sm:$0xf]
    %v3008 = vld [vmem:[%s17 + $0x3dc] sm:$0xf]
    %v3009 = vld [vmem:[%s17 + $0x3e0] sm:$0xf]
    %v3010 = vld [vmem:[%s17 + $0x3e4] sm:$0xf]
    %v3011 = vld [vmem:[%s17 + $0x3e8] sm:$0xf]
    %v3012 = vld [vmem:[%s17 + $0x3ec] sm:$0xf]
    %v3013 = vld [vmem:[%s17 + $0x3f0] sm:$0xf]
    %v3014 = vld [vmem:[%s17 + $0x3f4] sm:$0xf]
    %v3015 = vld [vmem:[%s17 + $0x3f8] sm:$0xf]
    %v3016 = vld [vmem:[%s17 + $0x3fc] sm:$0xf]
    %v3017 = vld [vmem:[%s18] sm:$0x1]
    %v3019 = vlaneseq
    %v3020 = vshrl.u32 %v3019, 7
    %v3021 = vsub.s32 0, %v3020
    %v3022 = vrot.slane %v3017, %v3021
    %v3280 = vunpack.c.l.b16 %v2761
    %v3281 = vunpack.c.l.b16 %v2762
    %v3282 = vunpack.c.l.b16 %v2763
    %v3283 = vunpack.c.l.b16 %v2764
    %v3284 = vunpack.c.l.b16 %v2765
    %v3285 = vunpack.c.l.b16 %v2766
    %v3286 = vunpack.c.l.b16 %v2767
    %v3287 = vunpack.c.l.b16 %v2768
    %v3288 = vunpack.c.l.b16 %v2769
    %v3289 = vunpack.c.l.b16 %v2770
    %v3290 = vunpack.c.l.b16 %v2771
    %v3291 = vunpack.c.l.b16 %v2772
    %v3292 = vunpack.c.l.b16 %v2773
    %v3293 = vunpack.c.l.b16 %v2774
    %v3294 = vunpack.c.l.b16 %v2775
    %v3295 = vunpack.c.l.b16 %v2776
    %v3296 = vunpack.c.l.b16 %v2777
    %v3297 = vunpack.c.l.b16 %v2778
    %v3298 = vunpack.c.l.b16 %v2779
    %v3299 = vunpack.c.l.b16 %v2780
    %v3300 = vunpack.c.l.b16 %v2781
    %v3301 = vunpack.c.l.b16 %v2782
    %v3302 = vunpack.c.l.b16 %v2783
    %v3303 = vunpack.c.l.b16 %v2784
    %v3304 = vunpack.c.l.b16 %v2785
    %v3305 = vunpack.c.l.b16 %v2786
    %v3306 = vunpack.c.l.b16 %v2787
    %v3307 = vunpack.c.l.b16 %v2788
    %v3308 = vunpack.c.l.b16 %v2789
    %v3309 = vunpack.c.l.b16 %v2790
    %v3310 = vunpack.c.l.b16 %v2791
    %v3311 = vunpack.c.l.b16 %v2792
    %v3312 = vunpack.c.l.b16 %v2793
    %v3313 = vunpack.c.l.b16 %v2794
    %v3314 = vunpack.c.l.b16 %v2795
    %v3315 = vunpack.c.l.b16 %v2796
    %v3316 = vunpack.c.l.b16 %v2797
    %v3317 = vunpack.c.l.b16 %v2798
    %v3318 = vunpack.c.l.b16 %v2799
    %v3319 = vunpack.c.l.b16 %v2800
    %v3320 = vunpack.c.l.b16 %v2801
    %v3321 = vunpack.c.l.b16 %v2802
    %v3322 = vunpack.c.l.b16 %v2803
    %v3323 = vunpack.c.l.b16 %v2804
    %v3324 = vunpack.c.l.b16 %v2805
    %v3325 = vunpack.c.l.b16 %v2806
    %v3326 = vunpack.c.l.b16 %v2807
    %v3327 = vunpack.c.l.b16 %v2808
    %v3328 = vunpack.c.l.b16 %v2809
    %v3329 = vunpack.c.l.b16 %v2810
    %v3330 = vunpack.c.l.b16 %v2811
    %v3331 = vunpack.c.l.b16 %v2812
    %v3332 = vunpack.c.l.b16 %v2813
    %v3333 = vunpack.c.l.b16 %v2814
    %v3334 = vunpack.c.l.b16 %v2815
    %v3335 = vunpack.c.l.b16 %v2816
    %v3336 = vunpack.c.l.b16 %v2817
    %v3337 = vunpack.c.l.b16 %v2818
    %v3338 = vunpack.c.l.b16 %v2819
    %v3339 = vunpack.c.l.b16 %v2820
    %v3340 = vunpack.c.l.b16 %v2821
    %v3341 = vunpack.c.l.b16 %v2822
    %v3342 = vunpack.c.l.b16 %v2823
    %v3343 = vunpack.c.l.b16 %v2824
    %v3344 = vunpack.c.l.b16 %v2825
    %v3345 = vunpack.c.l.b16 %v2826
    %v3346 = vunpack.c.l.b16 %v2827
    %v3347 = vunpack.c.l.b16 %v2828
    %v3348 = vunpack.c.l.b16 %v2829
    %v3349 = vunpack.c.l.b16 %v2830
    %v3350 = vunpack.c.l.b16 %v2831
    %v3351 = vunpack.c.l.b16 %v2832
    %v3352 = vunpack.c.l.b16 %v2833
    %v3353 = vunpack.c.l.b16 %v2834
    %v3354 = vunpack.c.l.b16 %v2835
    %v3355 = vunpack.c.l.b16 %v2836
    %v3356 = vunpack.c.l.b16 %v2837
    %v3357 = vunpack.c.l.b16 %v2838
    %v3358 = vunpack.c.l.b16 %v2839
    %v3359 = vunpack.c.l.b16 %v2840
    %v3360 = vunpack.c.l.b16 %v2841
    %v3361 = vunpack.c.l.b16 %v2842
    %v3362 = vunpack.c.l.b16 %v2843
    %v3363 = vunpack.c.l.b16 %v2844
    %v3364 = vunpack.c.l.b16 %v2845
    %v3365 = vunpack.c.l.b16 %v2846
    %v3366 = vunpack.c.l.b16 %v2847
    %v3367 = vunpack.c.l.b16 %v2848
    %v3368 = vunpack.c.l.b16 %v2849
    %v3369 = vunpack.c.l.b16 %v2850
    %v3370 = vunpack.c.l.b16 %v2851
    %v3371 = vunpack.c.l.b16 %v2852
    %v3372 = vunpack.c.l.b16 %v2853
    %v3373 = vunpack.c.l.b16 %v2854
    %v3374 = vunpack.c.l.b16 %v2855
    %v3375 = vunpack.c.l.b16 %v2856
    %v3376 = vunpack.c.l.b16 %v2857
    %v3377 = vunpack.c.l.b16 %v2858
    %v3378 = vunpack.c.l.b16 %v2859
    %v3379 = vunpack.c.l.b16 %v2860
    %v3380 = vunpack.c.l.b16 %v2861
    %v3381 = vunpack.c.l.b16 %v2862
    %v3382 = vunpack.c.l.b16 %v2863
    %v3383 = vunpack.c.l.b16 %v2864
    %v3384 = vunpack.c.l.b16 %v2865
    %v3385 = vunpack.c.l.b16 %v2866
    %v3386 = vunpack.c.l.b16 %v2867
    %v3387 = vunpack.c.l.b16 %v2868
    %v3388 = vunpack.c.l.b16 %v2869
    %v3389 = vunpack.c.l.b16 %v2870
    %v3390 = vunpack.c.l.b16 %v2871
    %v3391 = vunpack.c.l.b16 %v2872
    %v3392 = vunpack.c.l.b16 %v2873
    %v3393 = vunpack.c.l.b16 %v2874
    %v3394 = vunpack.c.l.b16 %v2875
    %v3395 = vunpack.c.l.b16 %v2876
    %v3396 = vunpack.c.l.b16 %v2877
    %v3397 = vunpack.c.l.b16 %v2878
    %v3398 = vunpack.c.l.b16 %v2879
    %v3399 = vunpack.c.l.b16 %v2880
    %v3400 = vunpack.c.l.b16 %v2881
    %v3401 = vunpack.c.l.b16 %v2882
    %v3402 = vunpack.c.l.b16 %v2883
    %v3403 = vunpack.c.l.b16 %v2884
    %v3404 = vunpack.c.l.b16 %v2885
    %v3405 = vunpack.c.l.b16 %v2886
    %v3406 = vunpack.c.l.b16 %v2887
    %v3407 = vunpack.c.l.b16 %v2888
    %v3408 = vunpack.c.l.b16 %v2889
    %v3409 = vunpack.c.l.b16 %v2890
    %v3410 = vunpack.c.l.b16 %v2891
    %v3411 = vunpack.c.l.b16 %v2892
    %v3412 = vunpack.c.l.b16 %v2893
    %v3413 = vunpack.c.l.b16 %v2894
    %v3414 = vunpack.c.l.b16 %v2895
    %v3415 = vunpack.c.l.b16 %v2896
    %v3416 = vunpack.c.l.b16 %v2897
    %v3417 = vunpack.c.l.b16 %v2898
    %v3418 = vunpack.c.l.b16 %v2899
    %v3419 = vunpack.c.l.b16 %v2900
    %v3420 = vunpack.c.l.b16 %v2901
    %v3421 = vunpack.c.l.b16 %v2902
    %v3422 = vunpack.c.l.b16 %v2903
    %v3423 = vunpack.c.l.b16 %v2904
    %v3424 = vunpack.c.l.b16 %v2905
    %v3425 = vunpack.c.l.b16 %v2906
    %v3426 = vunpack.c.l.b16 %v2907
    %v3427 = vunpack.c.l.b16 %v2908
    %v3428 = vunpack.c.l.b16 %v2909
    %v3429 = vunpack.c.l.b16 %v2910
    %v3430 = vunpack.c.l.b16 %v2911
    %v3431 = vunpack.c.l.b16 %v2912
    %v3432 = vunpack.c.l.b16 %v2913
    %v3433 = vunpack.c.l.b16 %v2914
    %v3434 = vunpack.c.l.b16 %v2915
    %v3435 = vunpack.c.l.b16 %v2916
    %v3436 = vunpack.c.l.b16 %v2917
    %v3437 = vunpack.c.l.b16 %v2918
    %v3438 = vunpack.c.l.b16 %v2919
    %v3439 = vunpack.c.l.b16 %v2920
    %v3440 = vunpack.c.l.b16 %v2921
    %v3441 = vunpack.c.l.b16 %v2922
    %v3442 = vunpack.c.l.b16 %v2923
    %v3443 = vunpack.c.l.b16 %v2924
    %v3444 = vunpack.c.l.b16 %v2925
    %v3445 = vunpack.c.l.b16 %v2926
    %v3446 = vunpack.c.l.b16 %v2927
    %v3447 = vunpack.c.l.b16 %v2928
    %v3448 = vunpack.c.l.b16 %v2929
    %v3449 = vunpack.c.l.b16 %v2930
    %v3450 = vunpack.c.l.b16 %v2931
    %v3451 = vunpack.c.l.b16 %v2932
    %v3452 = vunpack.c.l.b16 %v2933
    %v3453 = vunpack.c.l.b16 %v2934
    %v3454 = vunpack.c.l.b16 %v2935
    %v3455 = vunpack.c.l.b16 %v2936
    %v3456 = vunpack.c.l.b16 %v2937
    %v3457 = vunpack.c.l.b16 %v2938
    %v3458 = vunpack.c.l.b16 %v2939
    %v3459 = vunpack.c.l.b16 %v2940
    %v3460 = vunpack.c.l.b16 %v2941
    %v3461 = vunpack.c.l.b16 %v2942
    %v3462 = vunpack.c.l.b16 %v2943
    %v3463 = vunpack.c.l.b16 %v2944
    %v3464 = vunpack.c.l.b16 %v2945
    %v3465 = vunpack.c.l.b16 %v2946
    %v3466 = vunpack.c.l.b16 %v2947
    %v3467 = vunpack.c.l.b16 %v2948
    %v3468 = vunpack.c.l.b16 %v2949
    %v3469 = vunpack.c.l.b16 %v2950
    %v3470 = vunpack.c.l.b16 %v2951
    %v3471 = vunpack.c.l.b16 %v2952
    %v3472 = vunpack.c.l.b16 %v2953
    %v3473 = vunpack.c.l.b16 %v2954
    %v3474 = vunpack.c.l.b16 %v2955
    %v3475 = vunpack.c.l.b16 %v2956
    %v3476 = vunpack.c.l.b16 %v2957
    %v3477 = vunpack.c.l.b16 %v2958
    %v3478 = vunpack.c.l.b16 %v2959
    %v3479 = vunpack.c.l.b16 %v2960
    %v3480 = vunpack.c.l.b16 %v2961
    %v3481 = vunpack.c.l.b16 %v2962
    %v3482 = vunpack.c.l.b16 %v2963
    %v3483 = vunpack.c.l.b16 %v2964
    %v3484 = vunpack.c.l.b16 %v2965
    %v3485 = vunpack.c.l.b16 %v2966
    %v3486 = vunpack.c.l.b16 %v2967
    %v3487 = vunpack.c.l.b16 %v2968
    %v3488 = vunpack.c.l.b16 %v2969
    %v3489 = vunpack.c.l.b16 %v2970
    %v3490 = vunpack.c.l.b16 %v2971
    %v3491 = vunpack.c.l.b16 %v2972
    %v3492 = vunpack.c.l.b16 %v2973
    %v3493 = vunpack.c.l.b16 %v2974
    %v3494 = vunpack.c.l.b16 %v2975
    %v3495 = vunpack.c.l.b16 %v2976
    %v3496 = vunpack.c.l.b16 %v2977
    %v3497 = vunpack.c.l.b16 %v2978
    %v3498 = vunpack.c.l.b16 %v2979
    %v3499 = vunpack.c.l.b16 %v2980
    %v3500 = vunpack.c.l.b16 %v2981
    %v3501 = vunpack.c.l.b16 %v2982
    %v3502 = vunpack.c.l.b16 %v2983
    %v3503 = vunpack.c.l.b16 %v2984
    %v3504 = vunpack.c.l.b16 %v2985
    %v3505 = vunpack.c.l.b16 %v2986
    %v3506 = vunpack.c.l.b16 %v2987
    %v3507 = vunpack.c.l.b16 %v2988
    %v3508 = vunpack.c.l.b16 %v2989
    %v3509 = vunpack.c.l.b16 %v2990
    %v3510 = vunpack.c.l.b16 %v2991
    %v3511 = vunpack.c.l.b16 %v2992
    %v3512 = vunpack.c.l.b16 %v2993
    %v3513 = vunpack.c.l.b16 %v2994
    %v3514 = vunpack.c.l.b16 %v2995
    %v3515 = vunpack.c.l.b16 %v2996
    %v3516 = vunpack.c.l.b16 %v2997
    %v3517 = vunpack.c.l.b16 %v2998
    %v3518 = vunpack.c.l.b16 %v2999
    %v3519 = vunpack.c.l.b16 %v3000
    %v3520 = vunpack.c.l.b16 %v3001
    %v3521 = vunpack.c.l.b16 %v3002
    %v3522 = vunpack.c.l.b16 %v3003
    %v3523 = vunpack.c.l.b16 %v3004
    %v3524 = vunpack.c.l.b16 %v3005
    %v3525 = vunpack.c.l.b16 %v3006
    %v3526 = vunpack.c.l.b16 %v3007
    %v3527 = vunpack.c.l.b16 %v3008
    %v3528 = vunpack.c.l.b16 %v3009
    %v3529 = vunpack.c.l.b16 %v3010
    %v3530 = vunpack.c.l.b16 %v3011
    %v3531 = vunpack.c.l.b16 %v3012
    %v3532 = vunpack.c.l.b16 %v3013
    %v3533 = vunpack.c.l.b16 %v3014
    %v3534 = vunpack.c.l.b16 %v3015
    %v3535 = vunpack.c.l.b16 %v3016
    %v3536 = vpack.c.b16 %v3281, %v3280
    %v3537 = vpack.c.b16 %v3283, %v3282
    %v3538 = vpack.c.b16 %v3285, %v3284
    %v3539 = vpack.c.b16 %v3287, %v3286
    %v3540 = vpack.c.b16 %v3289, %v3288
    %v3541 = vpack.c.b16 %v3291, %v3290
    %v3542 = vpack.c.b16 %v3293, %v3292
    %v3543 = vpack.c.b16 %v3295, %v3294
    %v3544 = vpack.c.b16 %v3297, %v3296
    %v3545 = vpack.c.b16 %v3299, %v3298
    %v3546 = vpack.c.b16 %v3301, %v3300
    %v3547 = vpack.c.b16 %v3303, %v3302
    %v3548 = vpack.c.b16 %v3305, %v3304
    %v3549 = vpack.c.b16 %v3307, %v3306
    %v3550 = vpack.c.b16 %v3309, %v3308
    %v3551 = vpack.c.b16 %v3311, %v3310
    %v3552 = vpack.c.b16 %v3313, %v3312
    %v3553 = vpack.c.b16 %v3315, %v3314
    %v3554 = vpack.c.b16 %v3317, %v3316
    %v3555 = vpack.c.b16 %v3319, %v3318
    %v3556 = vpack.c.b16 %v3321, %v3320
    %v3557 = vpack.c.b16 %v3323, %v3322
    %v3558 = vpack.c.b16 %v3325, %v3324
    %v3559 = vpack.c.b16 %v3327, %v3326
    %v3560 = vpack.c.b16 %v3329, %v3328
    %v3561 = vpack.c.b16 %v3331, %v3330
    %v3562 = vpack.c.b16 %v3333, %v3332
    %v3563 = vpack.c.b16 %v3335, %v3334
    %v3564 = vpack.c.b16 %v3337, %v3336
    %v3565 = vpack.c.b16 %v3339, %v3338
    %v3566 = vpack.c.b16 %v3341, %v3340
    %v3567 = vpack.c.b16 %v3343, %v3342
    %v3568 = vpack.c.b16 %v3345, %v3344
    %v3569 = vpack.c.b16 %v3347, %v3346
    %v3570 = vpack.c.b16 %v3349, %v3348
    %v3571 = vpack.c.b16 %v3351, %v3350
    %v3572 = vpack.c.b16 %v3353, %v3352
    %v3573 = vpack.c.b16 %v3355, %v3354
    %v3574 = vpack.c.b16 %v3357, %v3356
    %v3575 = vpack.c.b16 %v3359, %v3358
    %v3576 = vpack.c.b16 %v3361, %v3360
    %v3577 = vpack.c.b16 %v3363, %v3362
    %v3578 = vpack.c.b16 %v3365, %v3364
    %v3579 = vpack.c.b16 %v3367, %v3366
    %v3580 = vpack.c.b16 %v3369, %v3368
    %v3581 = vpack.c.b16 %v3371, %v3370
    %v3582 = vpack.c.b16 %v3373, %v3372
    %v3583 = vpack.c.b16 %v3375, %v3374
    %v3584 = vpack.c.b16 %v3377, %v3376
    %v3585 = vpack.c.b16 %v3379, %v3378
    %v3586 = vpack.c.b16 %v3381, %v3380
    %v3587 = vpack.c.b16 %v3383, %v3382
    %v3588 = vpack.c.b16 %v3385, %v3384
    %v3589 = vpack.c.b16 %v3387, %v3386
    %v3590 = vpack.c.b16 %v3389, %v3388
    %v3591 = vpack.c.b16 %v3391, %v3390
    %v3592 = vpack.c.b16 %v3393, %v3392
    %v3593 = vpack.c.b16 %v3395, %v3394
    %v3594 = vpack.c.b16 %v3397, %v3396
    %v3595 = vpack.c.b16 %v3399, %v3398
    %v3596 = vpack.c.b16 %v3401, %v3400
    %v3597 = vpack.c.b16 %v3403, %v3402
    %v3598 = vpack.c.b16 %v3405, %v3404
    %v3599 = vpack.c.b16 %v3407, %v3406
    %v3600 = vpack.c.b16 %v3409, %v3408
    %v3601 = vpack.c.b16 %v3411, %v3410
    %v3602 = vpack.c.b16 %v3413, %v3412
    %v3603 = vpack.c.b16 %v3415, %v3414
    %v3604 = vpack.c.b16 %v3417, %v3416
    %v3605 = vpack.c.b16 %v3419, %v3418
    %v3606 = vpack.c.b16 %v3421, %v3420
    %v3607 = vpack.c.b16 %v3423, %v3422
    %v3608 = vpack.c.b16 %v3425, %v3424
    %v3609 = vpack.c.b16 %v3427, %v3426
    %v3610 = vpack.c.b16 %v3429, %v3428
    %v3611 = vpack.c.b16 %v3431, %v3430
    %v3612 = vpack.c.b16 %v3433, %v3432
    %v3613 = vpack.c.b16 %v3435, %v3434
    %v3614 = vpack.c.b16 %v3437, %v3436
    %v3615 = vpack.c.b16 %v3439, %v3438
    %v3616 = vpack.c.b16 %v3441, %v3440
    %v3617 = vpack.c.b16 %v3443, %v3442
    %v3618 = vpack.c.b16 %v3445, %v3444
    %v3619 = vpack.c.b16 %v3447, %v3446
    %v3620 = vpack.c.b16 %v3449, %v3448
    %v3621 = vpack.c.b16 %v3451, %v3450
    %v3622 = vpack.c.b16 %v3453, %v3452
    %v3623 = vpack.c.b16 %v3455, %v3454
    %v3624 = vpack.c.b16 %v3457, %v3456
    %v3625 = vpack.c.b16 %v3459, %v3458
    %v3626 = vpack.c.b16 %v3461, %v3460
    %v3627 = vpack.c.b16 %v3463, %v3462
    %v3628 = vpack.c.b16 %v3465, %v3464
    %v3629 = vpack.c.b16 %v3467, %v3466
    %v3630 = vpack.c.b16 %v3469, %v3468
    %v3631 = vpack.c.b16 %v3471, %v3470
    %v3632 = vpack.c.b16 %v3473, %v3472
    %v3633 = vpack.c.b16 %v3475, %v3474
    %v3634 = vpack.c.b16 %v3477, %v3476
    %v3635 = vpack.c.b16 %v3479, %v3478
    %v3636 = vpack.c.b16 %v3481, %v3480
    %v3637 = vpack.c.b16 %v3483, %v3482
    %v3638 = vpack.c.b16 %v3485, %v3484
    %v3639 = vpack.c.b16 %v3487, %v3486
    %v3640 = vpack.c.b16 %v3489, %v3488
    %v3641 = vpack.c.b16 %v3491, %v3490
    %v3642 = vpack.c.b16 %v3493, %v3492
    %v3643 = vpack.c.b16 %v3495, %v3494
    %v3644 = vpack.c.b16 %v3497, %v3496
    %v3645 = vpack.c.b16 %v3499, %v3498
    %v3646 = vpack.c.b16 %v3501, %v3500
    %v3647 = vpack.c.b16 %v3503, %v3502
    %v3648 = vpack.c.b16 %v3505, %v3504
    %v3649 = vpack.c.b16 %v3507, %v3506
    %v3650 = vpack.c.b16 %v3509, %v3508
    %v3651 = vpack.c.b16 %v3511, %v3510
    %v3652 = vpack.c.b16 %v3513, %v3512
    %v3653 = vpack.c.b16 %v3515, %v3514
    %v3654 = vpack.c.b16 %v3517, %v3516
    %v3655 = vpack.c.b16 %v3519, %v3518
    %v3656 = vpack.c.b16 %v3521, %v3520
    %v3657 = vpack.c.b16 %v3523, %v3522
    %v3658 = vpack.c.b16 %v3525, %v3524
    %v3659 = vpack.c.b16 %v3527, %v3526
    %v3660 = vpack.c.b16 %v3529, %v3528
    %v3661 = vpack.c.b16 %v3531, %v3530
    %v3662 = vpack.c.b16 %v3533, %v3532
    %v3663 = vpack.c.b16 %v3535, %v3534
    %3792 = vmatprep.subr.bf16.mxu0 0
    %3793 = vmatpush1.bf16.msra.mxu0 %v3543
    %3794 = vmatprep.subr.bf16.mxu0 0
    %3795 = vmatpush1.bf16.msra.mxu0 %v3542
    %3796 = vmatprep.subr.bf16.mxu0 0
    %3797 = vmatpush1.bf16.msra.mxu0 %v3541
    %3798 = vmatprep.subr.bf16.mxu0 0
    %3799 = vmatpush1.bf16.msra.mxu0 %v3540
    %3800 = vmatprep.subr.bf16.mxu0 0
    %3801 = vmatpush1.bf16.msra.mxu0 %v3539
    %3802 = vmatprep.subr.bf16.mxu0 0
    %3803 = vmatpush1.bf16.msra.mxu0 %v3538
    %3804 = vmatprep.subr.bf16.mxu0 0
    %3805 = vmatpush1.bf16.msra.mxu0 %v3537
    %3806 = vmatprep.subr.bf16.mxu0 0
    %3807 = vmatpush1.bf16.msra.mxu0 %v3536
    %3808 = vmatprep.subr.bf16.mxu0 0
    %3809 = vmatpush2.bf16.msra.mxu0 %v3551
    %3810 = vmatprep.subr.bf16.mxu0 0
    %3811 = vmatpush2.bf16.msra.mxu0 %v3550
    %3812 = vmatprep.subr.bf16.mxu0 0
    %3813 = vmatpush2.bf16.msra.mxu0 %v3549
    %3814 = vmatprep.subr.bf16.mxu0 0
    %3815 = vmatpush2.bf16.msra.mxu0 %v3548
    %3816 = vmatprep.subr.bf16.mxu0 0
    %3817 = vmatpush2.bf16.msra.mxu0 %v3547
    %3818 = vmatprep.subr.bf16.mxu0 0
    %3819 = vmatpush2.bf16.msra.mxu0 %v3546
    %3820 = vmatprep.subr.bf16.mxu0 0
    %3821 = vmatpush2.bf16.msra.mxu0 %v3545
    %3822 = vmatprep.subr.bf16.mxu0 0
    %3823 = vmatpush2.bf16.msra.mxu0 %v3544
    %3824 = vmatprep.mubr.bf16.mxu0 %v2746
    %3825 = vmatmul.mubr.bf16.gmra.mxu0 %v2745
    %v3826 = vpop.f32.mrf.mxu0
    %v3827 = vadd.f32 %v3022, %v3826
    %v3828 = vpop.f32.mrf.mxu0
    %v3829 = vpop.f32.mrf.mxu0
    %v3830 = vadd.f32 %v3022, %v3829
    %v3831 = vpop.f32.mrf.mxu0
    %3832 = vdwg.mxu0
    %3833 = vmatprep.subr.bf16.mxu0 0
    %3834 = vmatpush1.bf16.msra.mxu0 %v3559
    %3835 = vmatprep.subr.bf16.mxu0 0
    %3836 = vmatpush1.bf16.msra.mxu0 %v3558
    %3837 = vmatprep.subr.bf16.mxu0 0
    %3838 = vmatpush1.bf16.msra.mxu0 %v3557
    %3839 = vmatprep.subr.bf16.mxu0 0
    %3840 = vmatpush1.bf16.msra.mxu0 %v3556
    %3841 = vmatprep.subr.bf16.mxu0 0
    %3842 = vmatpush1.bf16.msra.mxu0 %v3555
    %3843 = vmatprep.subr.bf16.mxu0 0
    %3844 = vmatpush1.bf16.msra.mxu0 %v3554
    %3845 = vmatprep.subr.bf16.mxu0 0
    %3846 = vmatpush1.bf16.msra.mxu0 %v3553
    %3847 = vmatprep.subr.bf16.mxu0 0
    %3848 = vmatpush1.bf16.msra.mxu0 %v3552
    %3849 = vmatprep.subr.bf16.mxu0 0
    %3850 = vmatpush2.bf16.msra.mxu0 %v3567
    %3851 = vmatprep.subr.bf16.mxu0 0
    %3852 = vmatpush2.bf16.msra.mxu0 %v3566
    %3853 = vmatprep.subr.bf16.mxu0 0
    %3854 = vmatpush2.bf16.msra.mxu0 %v3565
    %3855 = vmatprep.subr.bf16.mxu0 0
    %3856 = vmatpush2.bf16.msra.mxu0 %v3564
    %3857 = vmatprep.subr.bf16.mxu0 0
    %3858 = vmatpush2.bf16.msra.mxu0 %v3563
    %3859 = vmatprep.subr.bf16.mxu0 0
    %3860 = vmatpush2.bf16.msra.mxu0 %v3562
    %3861 = vmatprep.subr.bf16.mxu0 0
    %3862 = vmatpush2.bf16.msra.mxu0 %v3561
    %3863 = vmatprep.subr.bf16.mxu0 0
    %3864 = vmatpush2.bf16.msra.mxu0 %v3560
    %3865 = vmatprep.mubr.bf16.mxu0 %v2748
    %3866 = vmatmul.mubr.bf16.gmra.mxu0 %v2747
    %v3867 = vpop.f32.mrf.mxu0
    %v3868 = vadd.f32 %v3827, %v3867
    %v3869 = vpop.f32.mrf.mxu0
    %v3870 = vpop.f32.mrf.mxu0
    %v3871 = vadd.f32 %v3830, %v3870
    %v3872 = vpop.f32.mrf.mxu0
    %3873 = vdwg.mxu0
    %3874 = vmatprep.subr.bf16.mxu0 0
    %3875 = vmatpush1.bf16.msra.mxu0 %v3575
    %3876 = vmatprep.subr.bf16.mxu0 0
    %3877 = vmatpush1.bf16.msra.mxu0 %v3574
    %3878 = vmatprep.subr.bf16.mxu0 0
    %3879 = vmatpush1.bf16.msra.mxu0 %v3573
    %3880 = vmatprep.subr.bf16.mxu0 0
    %3881 = vmatpush1.bf16.msra.mxu0 %v3572
    %3882 = vmatprep.subr.bf16.mxu0 0
    %3883 = vmatpush1.bf16.msra.mxu0 %v3571
    %3884 = vmatprep.subr.bf16.mxu0 0
    %3885 = vmatpush1.bf16.msra.mxu0 %v3570
    %3886 = vmatprep.subr.bf16.mxu0 0
    %3887 = vmatpush1.bf16.msra.mxu0 %v3569
    %3888 = vmatprep.subr.bf16.mxu0 0
    %3889 = vmatpush1.bf16.msra.mxu0 %v3568
    %3890 = vmatprep.subr.bf16.mxu0 0
    %3891 = vmatpush2.bf16.msra.mxu0 %v3583
    %3892 = vmatprep.subr.bf16.mxu0 0
    %3893 = vmatpush2.bf16.msra.mxu0 %v3582
    %3894 = vmatprep.subr.bf16.mxu0 0
    %3895 = vmatpush2.bf16.msra.mxu0 %v3581
    %3896 = vmatprep.subr.bf16.mxu0 0
    %3897 = vmatpush2.bf16.msra.mxu0 %v3580
    %3898 = vmatprep.subr.bf16.mxu0 0
    %3899 = vmatpush2.bf16.msra.mxu0 %v3579
    %3900 = vmatprep.subr.bf16.mxu0 0
    %3901 = vmatpush2.bf16.msra.mxu0 %v3578
    %3902 = vmatprep.subr.bf16.mxu0 0
    %3903 = vmatpush2.bf16.msra.mxu0 %v3577
    %3904 = vmatprep.subr.bf16.mxu0 0
    %3905 = vmatpush2.bf16.msra.mxu0 %v3576
    %3906 = vmatprep.mubr.bf16.mxu0 %v2750
    %3907 = vmatmul.mubr.bf16.gmra.mxu0 %v2749
    %v3908 = vpop.f32.mrf.mxu0
    %v3909 = vadd.f32 %v3868, %v3908
    %v3910 = vpop.f32.mrf.mxu0
    %v3911 = vpop.f32.mrf.mxu0
    %v3912 = vadd.f32 %v3871, %v3911
    %v3913 = vpop.f32.mrf.mxu0
    %3914 = vdwg.mxu0
    %3915 = vmatprep.subr.bf16.mxu0 0
    %3916 = vmatpush1.bf16.msra.mxu0 %v3591
    %3917 = vmatprep.subr.bf16.mxu0 0
    %3918 = vmatpush1.bf16.msra.mxu0 %v3590
    %3919 = vmatprep.subr.bf16.mxu0 0
    %3920 = vmatpush1.bf16.msra.mxu0 %v3589
    %3921 = vmatprep.subr.bf16.mxu0 0
    %3922 = vmatpush1.bf16.msra.mxu0 %v3588
    %3923 = vmatprep.subr.bf16.mxu0 0
    %3924 = vmatpush1.bf16.msra.mxu0 %v3587
    %3925 = vmatprep.subr.bf16.mxu0 0
    %3926 = vmatpush1.bf16.msra.mxu0 %v3586
    %3927 = vmatprep.subr.bf16.mxu0 0
    %3928 = vmatpush1.bf16.msra.mxu0 %v3585
    %3929 = vmatprep.subr.bf16.mxu0 0
    %3930 = vmatpush1.bf16.msra.mxu0 %v3584
    %3931 = vmatprep.subr.bf16.mxu0 0
    %3932 = vmatpush2.bf16.msra.mxu0 %v3599
    %3933 = vmatprep.subr.bf16.mxu0 0
    %3934 = vmatpush2.bf16.msra.mxu0 %v3598
    %3935 = vmatprep.subr.bf16.mxu0 0
    %3936 = vmatpush2.bf16.msra.mxu0 %v3597
    %3937 = vmatprep.subr.bf16.mxu0 0
    %3938 = vmatpush2.bf16.msra.mxu0 %v3596
    %3939 = vmatprep.subr.bf16.mxu0 0
    %3940 = vmatpush2.bf16.msra.mxu0 %v3595
    %3941 = vmatprep.subr.bf16.mxu0 0
    %3942 = vmatpush2.bf16.msra.mxu0 %v3594
    %3943 = vmatprep.subr.bf16.mxu0 0
    %3944 = vmatpush2.bf16.msra.mxu0 %v3593
    %3945 = vmatprep.subr.bf16.mxu0 0
    %3946 = vmatpush2.bf16.msra.mxu0 %v3592
    %3947 = vmatprep.mubr.bf16.mxu0 %v2752
    %3948 = vmatmul.mubr.bf16.gmra.mxu0 %v2751
    %v3949 = vpop.f32.mrf.mxu0
    %v3950 = vadd.f32 %v3909, %v3949
    %v3951 = vpop.f32.mrf.mxu0
    %v3952 = vpop.f32.mrf.mxu0
    %v3953 = vadd.f32 %v3912, %v3952
    %v3954 = vpop.f32.mrf.mxu0
    %3955 = vdwg.mxu0
    %3956 = vmatprep.subr.bf16.mxu0 0
    %3957 = vmatpush1.bf16.msra.mxu0 %v3607
    %3958 = vmatprep.subr.bf16.mxu0 0
    %3959 = vmatpush1.bf16.msra.mxu0 %v3606
    %3960 = vmatprep.subr.bf16.mxu0 0
    %3961 = vmatpush1.bf16.msra.mxu0 %v3605
    %3962 = vmatprep.subr.bf16.mxu0 0
    %3963 = vmatpush1.bf16.msra.mxu0 %v3604
    %3964 = vmatprep.subr.bf16.mxu0 0
    %3965 = vmatpush1.bf16.msra.mxu0 %v3603
    %3966 = vmatprep.subr.bf16.mxu0 0
    %3967 = vmatpush1.bf16.msra.mxu0 %v3602
    %3968 = vmatprep.subr.bf16.mxu0 0
    %3969 = vmatpush1.bf16.msra.mxu0 %v3601
    %3970 = vmatprep.subr.bf16.mxu0 0
    %3971 = vmatpush1.bf16.msra.mxu0 %v3600
    %3972 = vmatprep.subr.bf16.mxu0 0
    %3973 = vmatpush2.bf16.msra.mxu0 %v3615
    %3974 = vmatprep.subr.bf16.mxu0 0
    %3975 = vmatpush2.bf16.msra.mxu0 %v3614
    %3976 = vmatprep.subr.bf16.mxu0 0
    %3977 = vmatpush2.bf16.msra.mxu0 %v3613
    %3978 = vmatprep.subr.bf16.mxu0 0
    %3979 = vmatpush2.bf16.msra.mxu0 %v3612
    %3980 = vmatprep.subr.bf16.mxu0 0
    %3981 = vmatpush2.bf16.msra.mxu0 %v3611
    %3982 = vmatprep.subr.bf16.mxu0 0
    %3983 = vmatpush2.bf16.msra.mxu0 %v3610
    %3984 = vmatprep.subr.bf16.mxu0 0
    %3985 = vmatpush2.bf16.msra.mxu0 %v3609
    %3986 = vmatprep.subr.bf16.mxu0 0
    %3987 = vmatpush2.bf16.msra.mxu0 %v3608
    %3988 = vmatprep.mubr.bf16.mxu0 %v2754
    %3989 = vmatmul.mubr.bf16.gmra.mxu0 %v2753
    %v3990 = vpop.f32.mrf.mxu0
    %v3991 = vadd.f32 %v3950, %v3990
    %v3992 = vpop.f32.mrf.mxu0
    %v3993 = vpop.f32.mrf.mxu0
    %v3994 = vadd.f32 %v3953, %v3993
    %v3995 = vpop.f32.mrf.mxu0
    %3996 = vdwg.mxu0
    %3997 = vmatprep.subr.bf16.mxu0 0
    %3998 = vmatpush1.bf16.msra.mxu0 %v3623
    %3999 = vmatprep.subr.bf16.mxu0 0
    %4000 = vmatpush1.bf16.msra.mxu0 %v3622
    %4001 = vmatprep.subr.bf16.mxu0 0
    %4002 = vmatpush1.bf16.msra.mxu0 %v3621
    %4003 = vmatprep.subr.bf16.mxu0 0
    %4004 = vmatpush1.bf16.msra.mxu0 %v3620
    %4005 = vmatprep.subr.bf16.mxu0 0
    %4006 = vmatpush1.bf16.msra.mxu0 %v3619
    %4007 = vmatprep.subr.bf16.mxu0 0
    %4008 = vmatpush1.bf16.msra.mxu0 %v3618
    %4009 = vmatprep.subr.bf16.mxu0 0
    %4010 = vmatpush1.bf16.msra.mxu0 %v3617
    %4011 = vmatprep.subr.bf16.mxu0 0
    %4012 = vmatpush1.bf16.msra.mxu0 %v3616
    %4013 = vmatprep.subr.bf16.mxu0 0
    %4014 = vmatpush2.bf16.msra.mxu0 %v3631
    %4015 = vmatprep.subr.bf16.mxu0 0
    %4016 = vmatpush2.bf16.msra.mxu0 %v3630
    %4017 = vmatprep.subr.bf16.mxu0 0
    %4018 = vmatpush2.bf16.msra.mxu0 %v3629
    %4019 = vmatprep.subr.bf16.mxu0 0
    %4020 = vmatpush2.bf16.msra.mxu0 %v3628
    %4021 = vmatprep.subr.bf16.mxu0 0
    %4022 = vmatpush2.bf16.msra.mxu0 %v3627
    %4023 = vmatprep.subr.bf16.mxu0 0
    %4024 = vmatpush2.bf16.msra.mxu0 %v3626
    %4025 = vmatprep.subr.bf16.mxu0 0
    %4026 = vmatpush2.bf16.msra.mxu0 %v3625
    %4027 = vmatprep.subr.bf16.mxu0 0
    %4028 = vmatpush2.bf16.msra.mxu0 %v3624
    %4029 = vmatprep.mubr.bf16.mxu0 %v2756
    %4030 = vmatmul.mubr.bf16.gmra.mxu0 %v2755
    %v4031 = vpop.f32.mrf.mxu0
    %v4032 = vadd.f32 %v3991, %v4031
    %v4033 = vpop.f32.mrf.mxu0
    %v4034 = vpop.f32.mrf.mxu0
    %v4035 = vadd.f32 %v3994, %v4034
    %v4036 = vpop.f32.mrf.mxu0
    %4037 = vdwg.mxu0
    %4038 = vmatprep.subr.bf16.mxu0 0
    %4039 = vmatpush1.bf16.msra.mxu0 %v3639
    %4040 = vmatprep.subr.bf16.mxu0 0
    %4041 = vmatpush1.bf16.msra.mxu0 %v3638
    %4042 = vmatprep.subr.bf16.mxu0 0
    %4043 = vmatpush1.bf16.msra.mxu0 %v3637
    %4044 = vmatprep.subr.bf16.mxu0 0
    %4045 = vmatpush1.bf16.msra.mxu0 %v3636
    %4046 = vmatprep.subr.bf16.mxu0 0
    %4047 = vmatpush1.bf16.msra.mxu0 %v3635
    %4048 = vmatprep.subr.bf16.mxu0 0
    %4049 = vmatpush1.bf16.msra.mxu0 %v3634
    %4050 = vmatprep.subr.bf16.mxu0 0
    %4051 = vmatpush1.bf16.msra.mxu0 %v3633
    %4052 = vmatprep.subr.bf16.mxu0 0
    %4053 = vmatpush1.bf16.msra.mxu0 %v3632
    %4054 = vmatprep.subr.bf16.mxu0 0
    %4055 = vmatpush2.bf16.msra.mxu0 %v3647
    %4056 = vmatprep.subr.bf16.mxu0 0
    %4057 = vmatpush2.bf16.msra.mxu0 %v3646
    %4058 = vmatprep.subr.bf16.mxu0 0
    %4059 = vmatpush2.bf16.msra.mxu0 %v3645
    %4060 = vmatprep.subr.bf16.mxu0 0
    %4061 = vmatpush2.bf16.msra.mxu0 %v3644
    %4062 = vmatprep.subr.bf16.mxu0 0
    %4063 = vmatpush2.bf16.msra.mxu0 %v3643
    %4064 = vmatprep.subr.bf16.mxu0 0
    %4065 = vmatpush2.bf16.msra.mxu0 %v3642
    %4066 = vmatprep.subr.bf16.mxu0 0
    %4067 = vmatpush2.bf16.msra.mxu0 %v3641
    %4068 = vmatprep.subr.bf16.mxu0 0
    %4069 = vmatpush2.bf16.msra.mxu0 %v3640
    %4070 = vmatprep.mubr.bf16.mxu0 %v2758
    %4071 = vmatmul.mubr.bf16.gmra.mxu0 %v2757
    %v4072 = vpop.f32.mrf.mxu0
    %v4073 = vadd.f32 %v4032, %v4072
    %v4074 = vpop.f32.mrf.mxu0
    %v4075 = vpop.f32.mrf.mxu0
    %v4076 = vadd.f32 %v4035, %v4075
    %v4077 = vpop.f32.mrf.mxu0
    %4078 = vdwg.mxu0
    %4079 = vmatprep.subr.bf16.mxu0 0
    %4080 = vmatpush1.bf16.msra.mxu0 %v3655
    %4081 = vmatprep.subr.bf16.mxu0 0
    %4082 = vmatpush1.bf16.msra.mxu0 %v3654
    %4083 = vmatprep.subr.bf16.mxu0 0
    %4084 = vmatpush1.bf16.msra.mxu0 %v3653
    %4085 = vmatprep.subr.bf16.mxu0 0
    %4086 = vmatpush1.bf16.msra.mxu0 %v3652
    %4087 = vmatprep.subr.bf16.mxu0 0
    %4088 = vmatpush1.bf16.msra.mxu0 %v3651
    %4089 = vmatprep.subr.bf16.mxu0 0
    %4090 = vmatpush1.bf16.msra.mxu0 %v3650
    %4091 = vmatprep.subr.bf16.mxu0 0
    %4092 = vmatpush1.bf16.msra.mxu0 %v3649
    %4093 = vmatprep.subr.bf16.mxu0 0
    %4094 = vmatpush1.bf16.msra.mxu0 %v3648
    %4095 = vmatprep.subr.bf16.mxu0 0
    %4096 = vmatpush2.bf16.msra.mxu0 %v3663
    %4097 = vmatprep.subr.bf16.mxu0 0
    %4098 = vmatpush2.bf16.msra.mxu0 %v3662
    %4099 = vmatprep.subr.bf16.mxu0 0
    %4100 = vmatpush2.bf16.msra.mxu0 %v3661
    %4101 = vmatprep.subr.bf16.mxu0 0
    %4102 = vmatpush2.bf16.msra.mxu0 %v3660
    %4103 = vmatprep.subr.bf16.mxu0 0
    %4104 = vmatpush2.bf16.msra.mxu0 %v3659
    %4105 = vmatprep.subr.bf16.mxu0 0
    %4106 = vmatpush2.bf16.msra.mxu0 %v3658
    %4107 = vmatprep.subr.bf16.mxu0 0
    %4108 = vmatpush2.bf16.msra.mxu0 %v3657
    %4109 = vmatprep.subr.bf16.mxu0 0
    %4110 = vmatpush2.bf16.msra.mxu0 %v3656
    %4111 = vmatprep.mubr.bf16.mxu0 %v2760
    %4112 = vmatmul.mubr.bf16.gmra.mxu0 %v2759
    %v4113 = vpop.f32.mrf.mxu0
    %v4114 = vadd.f32 %v4073, %v4113
    %v4115 = vpop.f32.mrf.mxu0
    %v4116 = vpop.f32.mrf.mxu0
    %v4117 = vadd.f32 %v4076, %v4116
    %v4118 = vpop.f32.mrf.mxu0
    %4119 = vdwg.mxu0
    %v4120 = vadd.f32 %v1895, %v4114
    %v4121 = vadd.f32 %v1896, %v4117
    %v4122 = vld [vmem:[%s13] sm:$0x1]
    %v4123 = vld [vmem:[%s14] sm:$0x1]
    %v4124 = vsel %vm207, %v4120, 0.0
    %4125 = vadd.xlane.f32.xlu0 %v4124
    %v4126 = vpop.xlane.xlu0 %4125
    %v4127 = vsel %vm207, %v4121, 0.0
    %4128 = vadd.xlane.f32.xlu0 %v4127
    %v4129 = vpop.xlane.xlu0 %4128
    %v4130 = vmul.f32 %v4126, %v1860
    %v4131 = vmul.f32 %v4129, %v1860
    %v4132 = vsub.f32 %v4120, %v4130
    %v4133 = vsub.f32 %v4121, %v4131
    %v4134 = vmul.f32 %v4132, %v4132
    %v4135 = vmul.f32 %v4133, %v4133
    %v4136 = vsel %vm207, %v4134, 0.0
    %4137 = vadd.xlane.f32.xlu0 %v4136
    %v4138 = vpop.xlane.xlu0 %4137
    %v4139 = vsel %vm207, %v4135, 0.0
    %4140 = vadd.xlane.f32.xlu0 %v4139
    %v4141 = vpop.xlane.xlu0 %4140
    %v4142 = vmul.f32 %v4138, %v1860
    %v4143 = vmul.f32 %v4141, %v1860
    %v4144 = vadd.f32 %v4142, 1e-05
    %v4145 = vadd.f32 %v4143, 1e-05
    %v4146 = vrsqrt.pop %v4144
    %v4147 = vrsqrt.pop %v4145
    %v4148 = vmul.f32 %v4132, %v4146
    %v4149 = vmul.f32 %v4133, %v4147
    %v4151 = vlaneseq
    %v4152 = vshrl.u32 %v4151, 7
    %v4153 = vsub.s32 0, %v4152
    %v4154 = vrot.slane %v4122, %v4153
    %v4156 = vmul.f32 %v4148, %v4154
    %v4157 = vmul.f32 %v4149, %v4154
    %v4159 = vlaneseq
    %v4160 = vshrl.u32 %v4159, 7
    %v4161 = vsub.s32 0, %v4160
    %v4162 = vrot.slane %v4123, %v4161
    %v4164 = vadd.f32 %v4156, %v4162
    %v4165 = vadd.f32 %v4157, %v4162
    %v4166 = vpack.c.bf16 %v4165, %v4164
    %s4167 = scalar_lea.vmem %s3, 32
    %v4168 = vld [vmem:[%s4167] sm:$0xf]
    %v4169 = vld [vmem:[%s4167 + $0x4] sm:$0xf]
    %v4170 = vld [vmem:[%s4167 + $0x8] sm:$0xf]
    %v4171 = vld [vmem:[%s4167 + $0xc] sm:$0xf]
    %v4172 = vld [vmem:[%s4167 + $0x10] sm:$0xf]
    %v4173 = vld [vmem:[%s4167 + $0x14] sm:$0xf]
    %v4174 = vld [vmem:[%s4167 + $0x18] sm:$0xf]
    %v4175 = vld [vmem:[%s4167 + $0x1c] sm:$0xf]
    %s4176 = scalar_lea.vmem %s4, 1
    %v4177 = vld [vmem:[%s4176] sm:$0x1]
    %v4179 = vlaneseq
    %v4180 = vshrl.u32 %v4179, 7
    %v4181 = vsub.s32 0, %v4180
    %v4182 = vrot.slane %v4177, %v4181
    %v4192 = vunpack.c.l.b16 %v4168
    %v4193 = vunpack.c.l.b16 %v4169
    %v4194 = vunpack.c.l.b16 %v4170
    %v4195 = vunpack.c.l.b16 %v4171
    %v4196 = vunpack.c.l.b16 %v4172
    %v4197 = vunpack.c.l.b16 %v4173
    %v4198 = vunpack.c.l.b16 %v4174
    %v4199 = vunpack.c.l.b16 %v4175
    %v4200 = vpack.c.b16 %v4193, %v4192
    %v4201 = vpack.c.b16 %v4195, %v4194
    %v4202 = vpack.c.b16 %v4197, %v4196
    %v4203 = vpack.c.b16 %v4199, %v4198
    %v4209 = vsel %vm207, %v4166, 0
    %4211 = vmatprep.subr.bf16.mxu0 0
    %4212 = vmatpush1.bf16.msra.mxu0 0
    %4213 = vmatprep.subr.bf16.mxu0 0
    %4214 = vmatpush1.bf16.msra.mxu0 0
    %4215 = vmatprep.subr.bf16.mxu0 0
    %4216 = vmatpush1.bf16.msra.mxu0 0
    %4217 = vmatprep.subr.bf16.mxu0 0
    %4218 = vmatpush1.bf16.msra.mxu0 0
    %4219 = vmatprep.subr.bf16.mxu0 0
    %4220 = vmatpush1.bf16.msra.mxu0 %v4203
    %4221 = vmatprep.subr.bf16.mxu0 0
    %4222 = vmatpush1.bf16.msra.mxu0 %v4202
    %4223 = vmatprep.subr.bf16.mxu0 0
    %4224 = vmatpush1.bf16.msra.mxu0 %v4201
    %4225 = vmatprep.subr.bf16.mxu0 0
    %4226 = vmatpush1.bf16.msra.mxu0 %v4200
    %4227 = vmatprep.subr.bf16.mxu0 0
    %4228 = vmatpush2.bf16.msra.mxu0 0
    %4229 = vmatprep.subr.bf16.mxu0 0
    %4230 = vmatpush2.bf16.msra.mxu0 0
    %4231 = vmatprep.subr.bf16.mxu0 0
    %4232 = vmatpush2.bf16.msra.mxu0 0
    %4233 = vmatprep.subr.bf16.mxu0 0
    %4234 = vmatpush2.bf16.msra.mxu0 0
    %4235 = vmatprep.subr.bf16.mxu0 0
    %4236 = vmatpush2.bf16.msra.mxu0 0
    %4237 = vmatprep.subr.bf16.mxu0 0
    %4238 = vmatpush2.bf16.msra.mxu0 0
    %4239 = vmatprep.subr.bf16.mxu0 0
    %4240 = vmatpush2.bf16.msra.mxu0 0
    %4241 = vmatprep.subr.bf16.mxu0 0
    %4242 = vmatpush2.bf16.msra.mxu0 0
    %4243 = vmatprep.mubr.bf16.mxu0 0
    %4244 = vmatmul.mubr.bf16.gmra.mxu0 %v4209
    %v4245 = vpop.f32.mrf.mxu0
    %v4246 = vadd.f32 %v4182, %v4245
    %v4247 = vpop.f32.mrf.mxu0
    %v4248 = vpop.f32.mrf.mxu0
    %v4249 = vadd.f32 %v4182, %v4248
    %v4250 = vpop.f32.mrf.mxu0
    %4251 = vdwg.mxu0
    %s4252 = scalar_lea.vmem %s5, 32
    %v4253 = vld [vmem:[%s4252] sm:$0xf]
    %v4254 = vld [vmem:[%s4252 + $0x4] sm:$0xf]
    %v4255 = vld [vmem:[%s4252 + $0x8] sm:$0xf]
    %v4256 = vld [vmem:[%s4252 + $0xc] sm:$0xf]
    %v4257 = vld [vmem:[%s4252 + $0x10] sm:$0xf]
    %v4258 = vld [vmem:[%s4252 + $0x14] sm:$0xf]
    %v4259 = vld [vmem:[%s4252 + $0x18] sm:$0xf]
    %v4260 = vld [vmem:[%s4252 + $0x1c] sm:$0xf]
    %s4261 = scalar_lea.vmem %s6, 1
    %v4262 = vld [vmem:[%s4261] sm:$0x1]
    %v4264 = vlaneseq
    %v4265 = vshrl.u32 %v4264, 7
    %v4266 = vsub.s32 0, %v4265
    %v4267 = vrot.slane %v4262, %v4266
    %v4277 = vunpack.c.l.b16 %v4253
    %v4278 = vunpack.c.l.b16 %v4254
    %v4279 = vunpack.c.l.b16 %v4255
    %v4280 = vunpack.c.l.b16 %v4256
    %v4281 = vunpack.c.l.b16 %v4257
    %v4282 = vunpack.c.l.b16 %v4258
    %v4283 = vunpack.c.l.b16 %v4259
    %v4284 = vunpack.c.l.b16 %v4260
    %v4285 = vpack.c.b16 %v4278, %v4277
    %v4286 = vpack.c.b16 %v4280, %v4279
    %v4287 = vpack.c.b16 %v4282, %v4281
    %v4288 = vpack.c.b16 %v4284, %v4283
    %4293 = vmatprep.subr.bf16.mxu0 0
    %4294 = vmatpush1.bf16.msra.mxu0 0
    %4295 = vmatprep.subr.bf16.mxu0 0
    %4296 = vmatpush1.bf16.msra.mxu0 0
    %4297 = vmatprep.subr.bf16.mxu0 0
    %4298 = vmatpush1.bf16.msra.mxu0 0
    %4299 = vmatprep.subr.bf16.mxu0 0
    %4300 = vmatpush1.bf16.msra.mxu0 0
    %4301 = vmatprep.subr.bf16.mxu0 0
    %4302 = vmatpush1.bf16.msra.mxu0 %v4288
    %4303 = vmatprep.subr.bf16.mxu0 0
    %4304 = vmatpush1.bf16.msra.mxu0 %v4287
    %4305 = vmatprep.subr.bf16.mxu0 0
    %4306 = vmatpush1.bf16.msra.mxu0 %v4286
    %4307 = vmatprep.subr.bf16.mxu0 0
    %4308 = vmatpush1.bf16.msra.mxu0 %v4285
    %4309 = vmatprep.subr.bf16.mxu0 0
    %4310 = vmatpush2.bf16.msra.mxu0 0
    %4311 = vmatprep.subr.bf16.mxu0 0
    %4312 = vmatpush2.bf16.msra.mxu0 0
    %4313 = vmatprep.subr.bf16.mxu0 0
    %4314 = vmatpush2.bf16.msra.mxu0 0
    %4315 = vmatprep.subr.bf16.mxu0 0
    %4316 = vmatpush2.bf16.msra.mxu0 0
    %4317 = vmatprep.subr.bf16.mxu0 0
    %4318 = vmatpush2.bf16.msra.mxu0 0
    %4319 = vmatprep.subr.bf16.mxu0 0
    %4320 = vmatpush2.bf16.msra.mxu0 0
    %4321 = vmatprep.subr.bf16.mxu0 0
    %4322 = vmatpush2.bf16.msra.mxu0 0
    %4323 = vmatprep.subr.bf16.mxu0 0
    %4324 = vmatpush2.bf16.msra.mxu0 0
    %4325 = vmatprep.mubr.bf16.mxu0 0
    %4326 = vmatmul.mubr.bf16.gmra.mxu0 %v4209
    %v4327 = vpop.f32.mrf.mxu0
    %v4328 = vadd.f32 %v4267, %v4327
    %v4329 = vpop.f32.mrf.mxu0
    %v4330 = vpop.f32.mrf.mxu0
    %v4331 = vadd.f32 %v4267, %v4330
    %v4332 = vpop.f32.mrf.mxu0
    %4333 = vdwg.mxu0
    %s4334 = scalar_lea.vmem %s7, 32
    %v4335 = vld [vmem:[%s4334] sm:$0xf]
    %v4336 = vld [vmem:[%s4334 + $0x4] sm:$0xf]
    %v4337 = vld [vmem:[%s4334 + $0x8] sm:$0xf]
    %v4338 = vld [vmem:[%s4334 + $0xc] sm:$0xf]
    %v4339 = vld [vmem:[%s4334 + $0x10] sm:$0xf]
    %v4340 = vld [vmem:[%s4334 + $0x14] sm:$0xf]
    %v4341 = vld [vmem:[%s4334 + $0x18] sm:$0xf]
    %v4342 = vld [vmem:[%s4334 + $0x1c] sm:$0xf]
    %s4343 = scalar_lea.vmem %s8, 1
    %v4344 = vld [vmem:[%s4343] sm:$0x1]
    %v4346 = vlaneseq
    %v4347 = vshrl.u32 %v4346, 7
    %v4348 = vsub.s32 0, %v4347
    %v4349 = vrot.slane %v4344, %v4348
    %v4359 = vunpack.c.l.b16 %v4335
    %v4360 = vunpack.c.l.b16 %v4336
    %v4361 = vunpack.c.l.b16 %v4337
    %v4362 = vunpack.c.l.b16 %v4338
    %v4363 = vunpack.c.l.b16 %v4339
    %v4364 = vunpack.c.l.b16 %v4340
    %v4365 = vunpack.c.l.b16 %v4341
    %v4366 = vunpack.c.l.b16 %v4342
    %v4367 = vpack.c.b16 %v4360, %v4359
    %v4368 = vpack.c.b16 %v4362, %v4361
    %v4369 = vpack.c.b16 %v4364, %v4363
    %v4370 = vpack.c.b16 %v4366, %v4365
    %4375 = vmatprep.subr.bf16.mxu0 0
    %4376 = vmatpush1.bf16.msra.mxu0 0
    %4377 = vmatprep.subr.bf16.mxu0 0
    %4378 = vmatpush1.bf16.msra.mxu0 0
    %4379 = vmatprep.subr.bf16.mxu0 0
    %4380 = vmatpush1.bf16.msra.mxu0 0
    %4381 = vmatprep.subr.bf16.mxu0 0
    %4382 = vmatpush1.bf16.msra.mxu0 0
    %4383 = vmatprep.subr.bf16.mxu0 0
    %4384 = vmatpush1.bf16.msra.mxu0 %v4370
    %4385 = vmatprep.subr.bf16.mxu0 0
    %4386 = vmatpush1.bf16.msra.mxu0 %v4369
    %4387 = vmatprep.subr.bf16.mxu0 0
    %4388 = vmatpush1.bf16.msra.mxu0 %v4368
    %4389 = vmatprep.subr.bf16.mxu0 0
    %4390 = vmatpush1.bf16.msra.mxu0 %v4367
    %4391 = vmatprep.subr.bf16.mxu0 0
    %4392 = vmatpush2.bf16.msra.mxu0 0
    %4393 = vmatprep.subr.bf16.mxu0 0
    %4394 = vmatpush2.bf16.msra.mxu0 0
    %4395 = vmatprep.subr.bf16.mxu0 0
    %4396 = vmatpush2.bf16.msra.mxu0 0
    %4397 = vmatprep.subr.bf16.mxu0 0
    %4398 = vmatpush2.bf16.msra.mxu0 0
    %4399 = vmatprep.subr.bf16.mxu0 0
    %4400 = vmatpush2.bf16.msra.mxu0 0
    %4401 = vmatprep.subr.bf16.mxu0 0
    %4402 = vmatpush2.bf16.msra.mxu0 0
    %4403 = vmatprep.subr.bf16.mxu0 0
    %4404 = vmatpush2.bf16.msra.mxu0 0
    %4405 = vmatprep.subr.bf16.mxu0 0
    %4406 = vmatpush2.bf16.msra.mxu0 0
    %4407 = vmatprep.mubr.bf16.mxu0 0
    %4408 = vmatmul.mubr.bf16.gmra.mxu0 %v4209
    %v4409 = vpop.f32.mrf.mxu0
    %v4410 = vadd.f32 %v4349, %v4409
    %v4411 = vpop.f32.mrf.mxu0
    %v4412 = vpop.f32.mrf.mxu0
    %v4413 = vadd.f32 %v4349, %v4412
    %v4414 = vpop.f32.mrf.mxu0
    %4415 = vdwg.mxu0
    %v4417 = vsel %vm412, %v4246, 0
    %v4420 = vsel %vm412, %v4328, 0
    %4422 = vmatprep.subr.mxu0 0.0
    %4423 = vmatpush1.xpose.msra.mxu0 0.0
    %4424 = vmatprep.subr.mxu0 0.0
    %4425 = vmatpush1.xpose.msra.mxu0 0.0
    %4426 = vmatprep.subr.mxu0 0.0
    %4427 = vmatpush1.xpose.msra.mxu0 0.0
    %4428 = vmatprep.subr.mxu0 0.0
    %4429 = vmatpush1.xpose.msra.mxu0 0.0
    %4430 = vmatprep.subr.mxu0 0.0
    %4431 = vmatpush1.xpose.msra.mxu0 0.0
    %4432 = vmatprep.subr.mxu0 0.0
    %4433 = vmatpush1.xpose.msra.mxu0 0.0
    %4434 = vmatprep.subr.mxu0 0.0
    %4435 = vmatpush1.xpose.msra.mxu0 0.0
    %4436 = vmatprep.subr.mxu0 0.0
    %4437 = vmatpush1.xpose.msra.mxu0 0.0
    %4438 = vmatprep.subr.mxu0 0.0
    %4439 = vmatpush1.xpose.msra.mxu0 0.0
    %4440 = vmatprep.subr.mxu0 0.0
    %4441 = vmatpush1.xpose.msra.mxu0 0.0
    %4442 = vmatprep.subr.mxu0 0.0
    %4443 = vmatpush1.xpose.msra.mxu0 0.0
    %4444 = vmatprep.subr.mxu0 0.0
    %4445 = vmatpush1.xpose.msra.mxu0 0.0
    %4446 = vmatprep.subr.mxu0 0.0
    %4447 = vmatpush1.xpose.msra.mxu0 0.0
    %4448 = vmatprep.subr.mxu0 0.0
    %4449 = vmatpush1.xpose.msra.mxu0 0.0
    %4450 = vmatprep.subr.mxu0 0.0
    %4451 = vmatpush1.xpose.msra.mxu0 0.0
    %4452 = vmatprep.subr.mxu0 0.0
    %4453 = vmatpush1.xpose.msra.mxu0 %v4420
    %4454 = vmatprep.subr.mxu0 0.0
    %4455 = vmatpush2.xpose.msra.mxu0 0.0
    %4456 = vmatprep.subr.mxu0 0.0
    %4457 = vmatpush2.xpose.msra.mxu0 0.0
    %4458 = vmatprep.subr.mxu0 0.0
    %4459 = vmatpush2.xpose.msra.mxu0 0.0
    %4460 = vmatprep.subr.mxu0 0.0
    %4461 = vmatpush2.xpose.msra.mxu0 0.0
    %4462 = vmatprep.subr.mxu0 0.0
    %4463 = vmatpush2.xpose.msra.mxu0 0.0
    %4464 = vmatprep.subr.mxu0 0.0
    %4465 = vmatpush2.xpose.msra.mxu0 0.0
    %4466 = vmatprep.subr.mxu0 0.0
    %4467 = vmatpush2.xpose.msra.mxu0 0.0
    %4468 = vmatprep.subr.mxu0 0.0
    %4469 = vmatpush2.xpose.msra.mxu0 0.0
    %4470 = vmatprep.subr.mxu0 0.0
    %4471 = vmatpush2.xpose.msra.mxu0 0.0
    %4472 = vmatprep.subr.mxu0 0.0
    %4473 = vmatpush2.xpose.msra.mxu0 0.0
    %4474 = vmatprep.subr.mxu0 0.0
    %4475 = vmatpush2.xpose.msra.mxu0 0.0
    %4476 = vmatprep.subr.mxu0 0.0
    %4477 = vmatpush2.xpose.msra.mxu0 0.0
    %4478 = vmatprep.subr.mxu0 0.0
    %4479 = vmatpush2.xpose.msra.mxu0 0.0
    %4480 = vmatprep.subr.mxu0 0.0
    %4481 = vmatpush2.xpose.msra.mxu0 0.0
    %4482 = vmatprep.subr.mxu0 0.0
    %4483 = vmatpush2.xpose.msra.mxu0 0.0
    %4484 = vmatprep.subr.mxu0 0.0
    %4485 = vmatpush2.xpose.msra.mxu0 0.0
    %4486 = vmatprep.mubr.f32.mxu0 0.0
    %4487 = vmatmul.mubr.f32.gmra.mxu0 %v4417
    %v4488 = vpop.f32.mrf.mxu0
    %v4489 = vadd.f32 0.0, %v4488
    %v4490 = vpop.f32.mrf.mxu0
    %4491 = vdwg.mxu0
    %v4493 = vsel %vm412, %v4249, 0
    %v4496 = vsel %vm412, %v4331, 0
    %4498 = vmatprep.subr.mxu0 0.0
    %4499 = vmatpush1.xpose.msra.mxu0 0.0
    %4500 = vmatprep.subr.mxu0 0.0
    %4501 = vmatpush1.xpose.msra.mxu0 0.0
    %4502 = vmatprep.subr.mxu0 0.0
    %4503 = vmatpush1.xpose.msra.mxu0 0.0
    %4504 = vmatprep.subr.mxu0 0.0
    %4505 = vmatpush1.xpose.msra.mxu0 0.0
    %4506 = vmatprep.subr.mxu0 0.0
    %4507 = vmatpush1.xpose.msra.mxu0 0.0
    %4508 = vmatprep.subr.mxu0 0.0
    %4509 = vmatpush1.xpose.msra.mxu0 0.0
    %4510 = vmatprep.subr.mxu0 0.0
    %4511 = vmatpush1.xpose.msra.mxu0 0.0
    %4512 = vmatprep.subr.mxu0 0.0
    %4513 = vmatpush1.xpose.msra.mxu0 0.0
    %4514 = vmatprep.subr.mxu0 0.0
    %4515 = vmatpush1.xpose.msra.mxu0 0.0
    %4516 = vmatprep.subr.mxu0 0.0
    %4517 = vmatpush1.xpose.msra.mxu0 0.0
    %4518 = vmatprep.subr.mxu0 0.0
    %4519 = vmatpush1.xpose.msra.mxu0 0.0
    %4520 = vmatprep.subr.mxu0 0.0
    %4521 = vmatpush1.xpose.msra.mxu0 0.0
    %4522 = vmatprep.subr.mxu0 0.0
    %4523 = vmatpush1.xpose.msra.mxu0 0.0
    %4524 = vmatprep.subr.mxu0 0.0
    %4525 = vmatpush1.xpose.msra.mxu0 0.0
    %4526 = vmatprep.subr.mxu0 0.0
    %4527 = vmatpush1.xpose.msra.mxu0 0.0
    %4528 = vmatprep.subr.mxu0 0.0
    %4529 = vmatpush1.xpose.msra.mxu0 %v4496
    %4530 = vmatprep.subr.mxu0 0.0
    %4531 = vmatpush2.xpose.msra.mxu0 0.0
    %4532 = vmatprep.subr.mxu0 0.0
    %4533 = vmatpush2.xpose.msra.mxu0 0.0
    %4534 = vmatprep.subr.mxu0 0.0
    %4535 = vmatpush2.xpose.msra.mxu0 0.0
    %4536 = vmatprep.subr.mxu0 0.0
    %4537 = vmatpush2.xpose.msra.mxu0 0.0
    %4538 = vmatprep.subr.mxu0 0.0
    %4539 = vmatpush2.xpose.msra.mxu0 0.0
    %4540 = vmatprep.subr.mxu0 0.0
    %4541 = vmatpush2.xpose.msra.mxu0 0.0
    %4542 = vmatprep.subr.mxu0 0.0
    %4543 = vmatpush2.xpose.msra.mxu0 0.0
    %4544 = vmatprep.subr.mxu0 0.0
    %4545 = vmatpush2.xpose.msra.mxu0 0.0
    %4546 = vmatprep.subr.mxu0 0.0
    %4547 = vmatpush2.xpose.msra.mxu0 0.0
    %4548 = vmatprep.subr.mxu0 0.0
    %4549 = vmatpush2.xpose.msra.mxu0 0.0
    %4550 = vmatprep.subr.mxu0 0.0
    %4551 = vmatpush2.xpose.msra.mxu0 0.0
    %4552 = vmatprep.subr.mxu0 0.0
    %4553 = vmatpush2.xpose.msra.mxu0 0.0
    %4554 = vmatprep.subr.mxu0 0.0
    %4555 = vmatpush2.xpose.msra.mxu0 0.0
    %4556 = vmatprep.subr.mxu0 0.0
    %4557 = vmatpush2.xpose.msra.mxu0 0.0
    %4558 = vmatprep.subr.mxu0 0.0
    %4559 = vmatpush2.xpose.msra.mxu0 0.0
    %4560 = vmatprep.subr.mxu0 0.0
    %4561 = vmatpush2.xpose.msra.mxu0 0.0
    %4562 = vmatprep.mubr.f32.mxu0 0.0
    %4563 = vmatmul.mubr.f32.gmra.mxu0 %v4493
    %v4564 = vpop.f32.mrf.mxu0
    %v4565 = vadd.f32 0.0, %v4564
    %v4566 = vpop.f32.mrf.mxu0
    %4567 = vdwg.mxu0
    %v4568 = vmul.f32 %v4489, 0.25
    %v4569 = vmul.f32 %v4565, 0.25
    %v4570 = vsel %vm567, %v4568, -inf
    %4571 = vmax.xlane.f32.xlu0 %v4570
    %v4572 = vpop.xlane.xlu0 %4571
    %v4573 = vsel %vm567, %v4569, -inf
    %4574 = vmax.xlane.f32.xlu0 %v4573
    %v4575 = vpop.xlane.xlu0 %4574
    %v4576 = vsub.f32 %v4568, %v4572
    %v4577 = vsub.f32 %v4569, %v4575
    %v4578 = vmul.f32 %v4576, 1.442695
    %v4579 = vpow.pop %v4578
    %v4580 = vmul.f32 %v4577, 1.442695
    %v4581 = vpow.pop %v4580
    %v4582 = vsel %vm567, %v4579, 0.0
    %4583 = vadd.xlane.f32.xlu0 %v4582
    %v4584 = vpop.xlane.xlu0 %4583
    %v4585 = vsel %vm567, %v4581, 0.0
    %4586 = vadd.xlane.f32.xlu0 %v4585
    %v4587 = vpop.xlane.xlu0 %4586
    %v4588 = vrcp.pop %v4584
    %v4589 = vrcp.pop %v4587
    %v4590 = vmul.f32 %v4579, %v4588
    %v4591 = vmul.f32 %v4581, %v4589
    %v4593 = vsel %vm567, %v4590, 0
    %4595 = vmatprep.subr.mxu0 0.0
    %4596 = vmatpush1.msra.mxu0 0.0
    %4597 = vmatprep.subr.mxu0 0.0
    %4598 = vmatpush1.msra.mxu0 0.0
    %4599 = vmatprep.subr.mxu0 0.0
    %4600 = vmatpush1.msra.mxu0 0.0
    %4601 = vmatprep.subr.mxu0 0.0
    %4602 = vmatpush1.msra.mxu0 0.0
    %4603 = vmatprep.subr.mxu0 0.0
    %4604 = vmatpush1.msra.mxu0 0.0
    %4605 = vmatprep.subr.mxu0 0.0
    %4606 = vmatpush1.msra.mxu0 0.0
    %4607 = vmatprep.subr.mxu0 0.0
    %4608 = vmatpush1.msra.mxu0 0.0
    %4609 = vmatprep.subr.mxu0 0.0
    %4610 = vmatpush1.msra.mxu0 0.0
    %4611 = vmatprep.subr.mxu0 0.0
    %4612 = vmatpush1.msra.mxu0 0.0
    %4613 = vmatprep.subr.mxu0 0.0
    %4614 = vmatpush1.msra.mxu0 0.0
    %4615 = vmatprep.subr.mxu0 0.0
    %4616 = vmatpush1.msra.mxu0 0.0
    %4617 = vmatprep.subr.mxu0 0.0
    %4618 = vmatpush1.msra.mxu0 0.0
    %4619 = vmatprep.subr.mxu0 0.0
    %4620 = vmatpush1.msra.mxu0 0.0
    %4621 = vmatprep.subr.mxu0 0.0
    %4622 = vmatpush1.msra.mxu0 0.0
    %4623 = vmatprep.subr.mxu0 0.0
    %4624 = vmatpush1.msra.mxu0 0.0
    %4625 = vmatprep.subr.mxu0 0.0
    %4626 = vmatpush1.msra.mxu0 %v4410
    %4627 = vmatprep.subr.mxu0 0.0
    %4628 = vmatpush2.msra.mxu0 0.0
    %4629 = vmatprep.subr.mxu0 0.0
    %4630 = vmatpush2.msra.mxu0 0.0
    %4631 = vmatprep.subr.mxu0 0.0
    %4632 = vmatpush2.msra.mxu0 0.0
    %4633 = vmatprep.subr.mxu0 0.0
    %4634 = vmatpush2.msra.mxu0 0.0
    %4635 = vmatprep.subr.mxu0 0.0
    %4636 = vmatpush2.msra.mxu0 0.0
    %4637 = vmatprep.subr.mxu0 0.0
    %4638 = vmatpush2.msra.mxu0 0.0
    %4639 = vmatprep.subr.mxu0 0.0
    %4640 = vmatpush2.msra.mxu0 0.0
    %4641 = vmatprep.subr.mxu0 0.0
    %4642 = vmatpush2.msra.mxu0 0.0
    %4643 = vmatprep.subr.mxu0 0.0
    %4644 = vmatpush2.msra.mxu0 0.0
    %4645 = vmatprep.subr.mxu0 0.0
    %4646 = vmatpush2.msra.mxu0 0.0
    %4647 = vmatprep.subr.mxu0 0.0
    %4648 = vmatpush2.msra.mxu0 0.0
    %4649 = vmatprep.subr.mxu0 0.0
    %4650 = vmatpush2.msra.mxu0 0.0
    %4651 = vmatprep.subr.mxu0 0.0
    %4652 = vmatpush2.msra.mxu0 0.0
    %4653 = vmatprep.subr.mxu0 0.0
    %4654 = vmatpush2.msra.mxu0 0.0
    %4655 = vmatprep.subr.mxu0 0.0
    %4656 = vmatpush2.msra.mxu0 0.0
    %4657 = vmatprep.subr.mxu0 0.0
    %4658 = vmatpush2.msra.mxu0 0.0
    %4659 = vmatprep.mubr.f32.mxu0 0.0
    %4660 = vmatmul.mubr.f32.gmra.mxu0 %v4593
    %v4661 = vpop.f32.mrf.mxu0
    %v4662 = vadd.f32 0.0, %v4661
    %v4663 = vpop.f32.mrf.mxu0
    %4664 = vdwg.mxu0
    %v4666 = vsel %vm567, %v4591, 0
    %4668 = vmatprep.subr.mxu0 0.0
    %4669 = vmatpush1.msra.mxu0 0.0
    %4670 = vmatprep.subr.mxu0 0.0
    %4671 = vmatpush1.msra.mxu0 0.0
    %4672 = vmatprep.subr.mxu0 0.0
    %4673 = vmatpush1.msra.mxu0 0.0
    %4674 = vmatprep.subr.mxu0 0.0
    %4675 = vmatpush1.msra.mxu0 0.0
    %4676 = vmatprep.subr.mxu0 0.0
    %4677 = vmatpush1.msra.mxu0 0.0
    %4678 = vmatprep.subr.mxu0 0.0
    %4679 = vmatpush1.msra.mxu0 0.0
    %4680 = vmatprep.subr.mxu0 0.0
    %4681 = vmatpush1.msra.mxu0 0.0
    %4682 = vmatprep.subr.mxu0 0.0
    %4683 = vmatpush1.msra.mxu0 0.0
    %4684 = vmatprep.subr.mxu0 0.0
    %4685 = vmatpush1.msra.mxu0 0.0
    %4686 = vmatprep.subr.mxu0 0.0
    %4687 = vmatpush1.msra.mxu0 0.0
    %4688 = vmatprep.subr.mxu0 0.0
    %4689 = vmatpush1.msra.mxu0 0.0
    %4690 = vmatprep.subr.mxu0 0.0
    %4691 = vmatpush1.msra.mxu0 0.0
    %4692 = vmatprep.subr.mxu0 0.0
    %4693 = vmatpush1.msra.mxu0 0.0
    %4694 = vmatprep.subr.mxu0 0.0
    %4695 = vmatpush1.msra.mxu0 0.0
    %4696 = vmatprep.subr.mxu0 0.0
    %4697 = vmatpush1.msra.mxu0 0.0
    %4698 = vmatprep.subr.mxu0 0.0
    %4699 = vmatpush1.msra.mxu0 %v4413
    %4700 = vmatprep.subr.mxu0 0.0
    %4701 = vmatpush2.msra.mxu0 0.0
    %4702 = vmatprep.subr.mxu0 0.0
    %4703 = vmatpush2.msra.mxu0 0.0
    %4704 = vmatprep.subr.mxu0 0.0
    %4705 = vmatpush2.msra.mxu0 0.0
    %4706 = vmatprep.subr.mxu0 0.0
    %4707 = vmatpush2.msra.mxu0 0.0
    %4708 = vmatprep.subr.mxu0 0.0
    %4709 = vmatpush2.msra.mxu0 0.0
    %4710 = vmatprep.subr.mxu0 0.0
    %4711 = vmatpush2.msra.mxu0 0.0
    %4712 = vmatprep.subr.mxu0 0.0
    %4713 = vmatpush2.msra.mxu0 0.0
    %4714 = vmatprep.subr.mxu0 0.0
    %4715 = vmatpush2.msra.mxu0 0.0
    %4716 = vmatprep.subr.mxu0 0.0
    %4717 = vmatpush2.msra.mxu0 0.0
    %4718 = vmatprep.subr.mxu0 0.0
    %4719 = vmatpush2.msra.mxu0 0.0
    %4720 = vmatprep.subr.mxu0 0.0
    %4721 = vmatpush2.msra.mxu0 0.0
    %4722 = vmatprep.subr.mxu0 0.0
    %4723 = vmatpush2.msra.mxu0 0.0
    %4724 = vmatprep.subr.mxu0 0.0
    %4725 = vmatpush2.msra.mxu0 0.0
    %4726 = vmatprep.subr.mxu0 0.0
    %4727 = vmatpush2.msra.mxu0 0.0
    %4728 = vmatprep.subr.mxu0 0.0
    %4729 = vmatpush2.msra.mxu0 0.0
    %4730 = vmatprep.subr.mxu0 0.0
    %4731 = vmatpush2.msra.mxu0 0.0
    %4732 = vmatprep.mubr.f32.mxu0 0.0
    %4733 = vmatmul.mubr.f32.gmra.mxu0 %v4666
    %v4734 = vpop.f32.mrf.mxu0
    %v4735 = vadd.f32 0.0, %v4734
    %v4736 = vpop.f32.mrf.mxu0
    %4737 = vdwg.mxu0
    %4738 = vrot.lane.b32.xlu0 %v4246, 112
    %v4739 = vpop.permute.xlu0 %4738
    %4740 = vrot.lane.b32.xlu0 %v4328, 112
    %v4741 = vpop.permute.xlu0 %4740
    %v4742 = vsel %vm412, %v4739, 0
    %v4744 = vsel %vm412, %v4741, 0
    %4746 = vmatprep.subr.mxu0 0.0
    %4747 = vmatpush1.xpose.msra.mxu0 0.0
    %4748 = vmatprep.subr.mxu0 0.0
    %4749 = vmatpush1.xpose.msra.mxu0 0.0
    %4750 = vmatprep.subr.mxu0 0.0
    %4751 = vmatpush1.xpose.msra.mxu0 0.0
    %4752 = vmatprep.subr.mxu0 0.0
    %4753 = vmatpush1.xpose.msra.mxu0 0.0
    %4754 = vmatprep.subr.mxu0 0.0
    %4755 = vmatpush1.xpose.msra.mxu0 0.0
    %4756 = vmatprep.subr.mxu0 0.0
    %4757 = vmatpush1.xpose.msra.mxu0 0.0
    %4758 = vmatprep.subr.mxu0 0.0
    %4759 = vmatpush1.xpose.msra.mxu0 0.0
    %4760 = vmatprep.subr.mxu0 0.0
    %4761 = vmatpush1.xpose.msra.mxu0 0.0
    %4762 = vmatprep.subr.mxu0 0.0
    %4763 = vmatpush1.xpose.msra.mxu0 0.0
    %4764 = vmatprep.subr.mxu0 0.0
    %4765 = vmatpush1.xpose.msra.mxu0 0.0
    %4766 = vmatprep.subr.mxu0 0.0
    %4767 = vmatpush1.xpose.msra.mxu0 0.0
    %4768 = vmatprep.subr.mxu0 0.0
    %4769 = vmatpush1.xpose.msra.mxu0 0.0
    %4770 = vmatprep.subr.mxu0 0.0
    %4771 = vmatpush1.xpose.msra.mxu0 0.0
    %4772 = vmatprep.subr.mxu0 0.0
    %4773 = vmatpush1.xpose.msra.mxu0 0.0
    %4774 = vmatprep.subr.mxu0 0.0
    %4775 = vmatpush1.xpose.msra.mxu0 0.0
    %4776 = vmatprep.subr.mxu0 0.0
    %4777 = vmatpush1.xpose.msra.mxu0 %v4744
    %4778 = vmatprep.subr.mxu0 0.0
    %4779 = vmatpush2.xpose.msra.mxu0 0.0
    %4780 = vmatprep.subr.mxu0 0.0
    %4781 = vmatpush2.xpose.msra.mxu0 0.0
    %4782 = vmatprep.subr.mxu0 0.0
    %4783 = vmatpush2.xpose.msra.mxu0 0.0
    %4784 = vmatprep.subr.mxu0 0.0
    %4785 = vmatpush2.xpose.msra.mxu0 0.0
    %4786 = vmatprep.subr.mxu0 0.0
    %4787 = vmatpush2.xpose.msra.mxu0 0.0
    %4788 = vmatprep.subr.mxu0 0.0
    %4789 = vmatpush2.xpose.msra.mxu0 0.0
    %4790 = vmatprep.subr.mxu0 0.0
    %4791 = vmatpush2.xpose.msra.mxu0 0.0
    %4792 = vmatprep.subr.mxu0 0.0
    %4793 = vmatpush2.xpose.msra.mxu0 0.0
    %4794 = vmatprep.subr.mxu0 0.0
    %4795 = vmatpush2.xpose.msra.mxu0 0.0
    %4796 = vmatprep.subr.mxu0 0.0
    %4797 = vmatpush2.xpose.msra.mxu0 0.0
    %4798 = vmatprep.subr.mxu0 0.0
    %4799 = vmatpush2.xpose.msra.mxu0 0.0
    %4800 = vmatprep.subr.mxu0 0.0
    %4801 = vmatpush2.xpose.msra.mxu0 0.0
    %4802 = vmatprep.subr.mxu0 0.0
    %4803 = vmatpush2.xpose.msra.mxu0 0.0
    %4804 = vmatprep.subr.mxu0 0.0
    %4805 = vmatpush2.xpose.msra.mxu0 0.0
    %4806 = vmatprep.subr.mxu0 0.0
    %4807 = vmatpush2.xpose.msra.mxu0 0.0
    %4808 = vmatprep.subr.mxu0 0.0
    %4809 = vmatpush2.xpose.msra.mxu0 0.0
    %4810 = vmatprep.mubr.f32.mxu0 0.0
    %4811 = vmatmul.mubr.f32.gmra.mxu0 %v4742
    %v4812 = vpop.f32.mrf.mxu0
    %v4813 = vadd.f32 0.0, %v4812
    %v4814 = vpop.f32.mrf.mxu0
    %4815 = vdwg.mxu0
    %4816 = vrot.lane.b32.xlu0 %v4249, 112
    %v4817 = vpop.permute.xlu0 %4816
    %4818 = vrot.lane.b32.xlu0 %v4331, 112
    %v4819 = vpop.permute.xlu0 %4818
    %v4820 = vsel %vm412, %v4817, 0
    %v4822 = vsel %vm412, %v4819, 0
    %4824 = vmatprep.subr.mxu0 0.0
    %4825 = vmatpush1.xpose.msra.mxu0 0.0
    %4826 = vmatprep.subr.mxu0 0.0
    %4827 = vmatpush1.xpose.msra.mxu0 0.0
    %4828 = vmatprep.subr.mxu0 0.0
    %4829 = vmatpush1.xpose.msra.mxu0 0.0
    %4830 = vmatprep.subr.mxu0 0.0
    %4831 = vmatpush1.xpose.msra.mxu0 0.0
    %4832 = vmatprep.subr.mxu0 0.0
    %4833 = vmatpush1.xpose.msra.mxu0 0.0
    %4834 = vmatprep.subr.mxu0 0.0
    %4835 = vmatpush1.xpose.msra.mxu0 0.0
    %4836 = vmatprep.subr.mxu0 0.0
    %4837 = vmatpush1.xpose.msra.mxu0 0.0
    %4838 = vmatprep.subr.mxu0 0.0
    %4839 = vmatpush1.xpose.msra.mxu0 0.0
    %4840 = vmatprep.subr.mxu0 0.0
    %4841 = vmatpush1.xpose.msra.mxu0 0.0
    %4842 = vmatprep.subr.mxu0 0.0
    %4843 = vmatpush1.xpose.msra.mxu0 0.0
    %4844 = vmatprep.subr.mxu0 0.0
    %4845 = vmatpush1.xpose.msra.mxu0 0.0
    %4846 = vmatprep.subr.mxu0 0.0
    %4847 = vmatpush1.xpose.msra.mxu0 0.0
    %4848 = vmatprep.subr.mxu0 0.0
    %4849 = vmatpush1.xpose.msra.mxu0 0.0
    %4850 = vmatprep.subr.mxu0 0.0
    %4851 = vmatpush1.xpose.msra.mxu0 0.0
    %4852 = vmatprep.subr.mxu0 0.0
    %4853 = vmatpush1.xpose.msra.mxu0 0.0
    %4854 = vmatprep.subr.mxu0 0.0
    %4855 = vmatpush1.xpose.msra.mxu0 %v4822
    %4856 = vmatprep.subr.mxu0 0.0
    %4857 = vmatpush2.xpose.msra.mxu0 0.0
    %4858 = vmatprep.subr.mxu0 0.0
    %4859 = vmatpush2.xpose.msra.mxu0 0.0
    %4860 = vmatprep.subr.mxu0 0.0
    %4861 = vmatpush2.xpose.msra.mxu0 0.0
    %4862 = vmatprep.subr.mxu0 0.0
    %4863 = vmatpush2.xpose.msra.mxu0 0.0
    %4864 = vmatprep.subr.mxu0 0.0
    %4865 = vmatpush2.xpose.msra.mxu0 0.0
    %4866 = vmatprep.subr.mxu0 0.0
    %4867 = vmatpush2.xpose.msra.mxu0 0.0
    %4868 = vmatprep.subr.mxu0 0.0
    %4869 = vmatpush2.xpose.msra.mxu0 0.0
    %4870 = vmatprep.subr.mxu0 0.0
    %4871 = vmatpush2.xpose.msra.mxu0 0.0
    %4872 = vmatprep.subr.mxu0 0.0
    %4873 = vmatpush2.xpose.msra.mxu0 0.0
    %4874 = vmatprep.subr.mxu0 0.0
    %4875 = vmatpush2.xpose.msra.mxu0 0.0
    %4876 = vmatprep.subr.mxu0 0.0
    %4877 = vmatpush2.xpose.msra.mxu0 0.0
    %4878 = vmatprep.subr.mxu0 0.0
    %4879 = vmatpush2.xpose.msra.mxu0 0.0
    %4880 = vmatprep.subr.mxu0 0.0
    %4881 = vmatpush2.xpose.msra.mxu0 0.0
    %4882 = vmatprep.subr.mxu0 0.0
    %4883 = vmatpush2.xpose.msra.mxu0 0.0
    %4884 = vmatprep.subr.mxu0 0.0
    %4885 = vmatpush2.xpose.msra.mxu0 0.0
    %4886 = vmatprep.subr.mxu0 0.0
    %4887 = vmatpush2.xpose.msra.mxu0 0.0
    %4888 = vmatprep.mubr.f32.mxu0 0.0
    %4889 = vmatmul.mubr.f32.gmra.mxu0 %v4820
    %v4890 = vpop.f32.mrf.mxu0
    %v4891 = vadd.f32 0.0, %v4890
    %v4892 = vpop.f32.mrf.mxu0
    %4893 = vdwg.mxu0
    %v4894 = vmul.f32 %v4813, 0.25
    %v4895 = vmul.f32 %v4891, 0.25
    %v4896 = vsel %vm567, %v4894, -inf
    %4897 = vmax.xlane.f32.xlu0 %v4896
    %v4898 = vpop.xlane.xlu0 %4897
    %v4899 = vsel %vm567, %v4895, -inf
    %4900 = vmax.xlane.f32.xlu0 %v4899
    %v4901 = vpop.xlane.xlu0 %4900
    %v4902 = vsub.f32 %v4894, %v4898
    %v4903 = vsub.f32 %v4895, %v4901
    %v4904 = vmul.f32 %v4902, 1.442695
    %v4905 = vpow.pop %v4904
    %v4906 = vmul.f32 %v4903, 1.442695
    %v4907 = vpow.pop %v4906
    %v4908 = vsel %vm567, %v4905, 0.0
    %4909 = vadd.xlane.f32.xlu0 %v4908
    %v4910 = vpop.xlane.xlu0 %4909
    %v4911 = vsel %vm567, %v4907, 0.0
    %4912 = vadd.xlane.f32.xlu0 %v4911
    %v4913 = vpop.xlane.xlu0 %4912
    %v4914 = vrcp.pop %v4910
    %v4915 = vrcp.pop %v4913
    %v4916 = vmul.f32 %v4905, %v4914
    %v4917 = vmul.f32 %v4907, %v4915
    %4919 = vrot.lane.b32.xlu0 %v4410, 112
    %v4920 = vpop.permute.xlu0 %4919
    %v4923 = vsel %vm567, %v4916, 0
    %4925 = vmatprep.subr.mxu0 0.0
    %4926 = vmatpush1.msra.mxu0 0.0
    %4927 = vmatprep.subr.mxu0 0.0
    %4928 = vmatpush1.msra.mxu0 0.0
    %4929 = vmatprep.subr.mxu0 0.0
    %4930 = vmatpush1.msra.mxu0 0.0
    %4931 = vmatprep.subr.mxu0 0.0
    %4932 = vmatpush1.msra.mxu0 0.0
    %4933 = vmatprep.subr.mxu0 0.0
    %4934 = vmatpush1.msra.mxu0 0.0
    %4935 = vmatprep.subr.mxu0 0.0
    %4936 = vmatpush1.msra.mxu0 0.0
    %4937 = vmatprep.subr.mxu0 0.0
    %4938 = vmatpush1.msra.mxu0 0.0
    %4939 = vmatprep.subr.mxu0 0.0
    %4940 = vmatpush1.msra.mxu0 0.0
    %4941 = vmatprep.subr.mxu0 0.0
    %4942 = vmatpush1.msra.mxu0 0.0
    %4943 = vmatprep.subr.mxu0 0.0
    %4944 = vmatpush1.msra.mxu0 0.0
    %4945 = vmatprep.subr.mxu0 0.0
    %4946 = vmatpush1.msra.mxu0 0.0
    %4947 = vmatprep.subr.mxu0 0.0
    %4948 = vmatpush1.msra.mxu0 0.0
    %4949 = vmatprep.subr.mxu0 0.0
    %4950 = vmatpush1.msra.mxu0 0.0
    %4951 = vmatprep.subr.mxu0 0.0
    %4952 = vmatpush1.msra.mxu0 0.0
    %4953 = vmatprep.subr.mxu0 0.0
    %4954 = vmatpush1.msra.mxu0 0.0
    %4955 = vmatprep.subr.mxu0 0.0
    %4956 = vmatpush1.msra.mxu0 %v4920
    %4957 = vmatprep.subr.mxu0 0.0
    %4958 = vmatpush2.msra.mxu0 0.0
    %4959 = vmatprep.subr.mxu0 0.0
    %4960 = vmatpush2.msra.mxu0 0.0
    %4961 = vmatprep.subr.mxu0 0.0
    %4962 = vmatpush2.msra.mxu0 0.0
    %4963 = vmatprep.subr.mxu0 0.0
    %4964 = vmatpush2.msra.mxu0 0.0
    %4965 = vmatprep.subr.mxu0 0.0
    %4966 = vmatpush2.msra.mxu0 0.0
    %4967 = vmatprep.subr.mxu0 0.0
    %4968 = vmatpush2.msra.mxu0 0.0
    %4969 = vmatprep.subr.mxu0 0.0
    %4970 = vmatpush2.msra.mxu0 0.0
    %4971 = vmatprep.subr.mxu0 0.0
    %4972 = vmatpush2.msra.mxu0 0.0
    %4973 = vmatprep.subr.mxu0 0.0
    %4974 = vmatpush2.msra.mxu0 0.0
    %4975 = vmatprep.subr.mxu0 0.0
    %4976 = vmatpush2.msra.mxu0 0.0
    %4977 = vmatprep.subr.mxu0 0.0
    %4978 = vmatpush2.msra.mxu0 0.0
    %4979 = vmatprep.subr.mxu0 0.0
    %4980 = vmatpush2.msra.mxu0 0.0
    %4981 = vmatprep.subr.mxu0 0.0
    %4982 = vmatpush2.msra.mxu0 0.0
    %4983 = vmatprep.subr.mxu0 0.0
    %4984 = vmatpush2.msra.mxu0 0.0
    %4985 = vmatprep.subr.mxu0 0.0
    %4986 = vmatpush2.msra.mxu0 0.0
    %4987 = vmatprep.subr.mxu0 0.0
    %4988 = vmatpush2.msra.mxu0 0.0
    %4989 = vmatprep.mubr.f32.mxu0 0.0
    %4990 = vmatmul.mubr.f32.gmra.mxu0 %v4923
    %v4991 = vpop.f32.mrf.mxu0
    %v4992 = vadd.f32 0.0, %v4991
    %v4993 = vpop.f32.mrf.mxu0
    %4994 = vdwg.mxu0
    %4996 = vrot.lane.b32.xlu0 %v4413, 112
    %v4997 = vpop.permute.xlu0 %4996
    %v5000 = vsel %vm567, %v4917, 0
    %5002 = vmatprep.subr.mxu0 0.0
    %5003 = vmatpush1.msra.mxu0 0.0
    %5004 = vmatprep.subr.mxu0 0.0
    %5005 = vmatpush1.msra.mxu0 0.0
    %5006 = vmatprep.subr.mxu0 0.0
    %5007 = vmatpush1.msra.mxu0 0.0
    %5008 = vmatprep.subr.mxu0 0.0
    %5009 = vmatpush1.msra.mxu0 0.0
    %5010 = vmatprep.subr.mxu0 0.0
    %5011 = vmatpush1.msra.mxu0 0.0
    %5012 = vmatprep.subr.mxu0 0.0
    %5013 = vmatpush1.msra.mxu0 0.0
    %5014 = vmatprep.subr.mxu0 0.0
    %5015 = vmatpush1.msra.mxu0 0.0
    %5016 = vmatprep.subr.mxu0 0.0
    %5017 = vmatpush1.msra.mxu0 0.0
    %5018 = vmatprep.subr.mxu0 0.0
    %5019 = vmatpush1.msra.mxu0 0.0
    %5020 = vmatprep.subr.mxu0 0.0
    %5021 = vmatpush1.msra.mxu0 0.0
    %5022 = vmatprep.subr.mxu0 0.0
    %5023 = vmatpush1.msra.mxu0 0.0
    %5024 = vmatprep.subr.mxu0 0.0
    %5025 = vmatpush1.msra.mxu0 0.0
    %5026 = vmatprep.subr.mxu0 0.0
    %5027 = vmatpush1.msra.mxu0 0.0
    %5028 = vmatprep.subr.mxu0 0.0
    %5029 = vmatpush1.msra.mxu0 0.0
    %5030 = vmatprep.subr.mxu0 0.0
    %5031 = vmatpush1.msra.mxu0 0.0
    %5032 = vmatprep.subr.mxu0 0.0
    %5033 = vmatpush1.msra.mxu0 %v4997
    %5034 = vmatprep.subr.mxu0 0.0
    %5035 = vmatpush2.msra.mxu0 0.0
    %5036 = vmatprep.subr.mxu0 0.0
    %5037 = vmatpush2.msra.mxu0 0.0
    %5038 = vmatprep.subr.mxu0 0.0
    %5039 = vmatpush2.msra.mxu0 0.0
    %5040 = vmatprep.subr.mxu0 0.0
    %5041 = vmatpush2.msra.mxu0 0.0
    %5042 = vmatprep.subr.mxu0 0.0
    %5043 = vmatpush2.msra.mxu0 0.0
    %5044 = vmatprep.subr.mxu0 0.0
    %5045 = vmatpush2.msra.mxu0 0.0
    %5046 = vmatprep.subr.mxu0 0.0
    %5047 = vmatpush2.msra.mxu0 0.0
    %5048 = vmatprep.subr.mxu0 0.0
    %5049 = vmatpush2.msra.mxu0 0.0
    %5050 = vmatprep.subr.mxu0 0.0
    %5051 = vmatpush2.msra.mxu0 0.0
    %5052 = vmatprep.subr.mxu0 0.0
    %5053 = vmatpush2.msra.mxu0 0.0
    %5054 = vmatprep.subr.mxu0 0.0
    %5055 = vmatpush2.msra.mxu0 0.0
    %5056 = vmatprep.subr.mxu0 0.0
    %5057 = vmatpush2.msra.mxu0 0.0
    %5058 = vmatprep.subr.mxu0 0.0
    %5059 = vmatpush2.msra.mxu0 0.0
    %5060 = vmatprep.subr.mxu0 0.0
    %5061 = vmatpush2.msra.mxu0 0.0
    %5062 = vmatprep.subr.mxu0 0.0
    %5063 = vmatpush2.msra.mxu0 0.0
    %5064 = vmatprep.subr.mxu0 0.0
    %5065 = vmatpush2.msra.mxu0 0.0
    %5066 = vmatprep.mubr.f32.mxu0 0.0
    %5067 = vmatmul.mubr.f32.gmra.mxu0 %v5000
    %v5068 = vpop.f32.mrf.mxu0
    %v5069 = vadd.f32 0.0, %v5068
    %v5070 = vpop.f32.mrf.mxu0
    %5071 = vdwg.mxu0
    %5072 = vrot.lane.b32.xlu0 %v4246, 96
    %v5073 = vpop.permute.xlu0 %5072
    %5074 = vrot.lane.b32.xlu0 %v4328, 96
    %v5075 = vpop.permute.xlu0 %5074
    %v5076 = vsel %vm412, %v5073, 0
    %v5078 = vsel %vm412, %v5075, 0
    %5080 = vmatprep.subr.mxu0 0.0
    %5081 = vmatpush1.xpose.msra.mxu0 0.0
    %5082 = vmatprep.subr.mxu0 0.0
    %5083 = vmatpush1.xpose.msra.mxu0 0.0
    %5084 = vmatprep.subr.mxu0 0.0
    %5085 = vmatpush1.xpose.msra.mxu0 0.0
    %5086 = vmatprep.subr.mxu0 0.0
    %5087 = vmatpush1.xpose.msra.mxu0 0.0
    %5088 = vmatprep.subr.mxu0 0.0
    %5089 = vmatpush1.xpose.msra.mxu0 0.0
    %5090 = vmatprep.subr.mxu0 0.0
    %5091 = vmatpush1.xpose.msra.mxu0 0.0
    %5092 = vmatprep.subr.mxu0 0.0
    %5093 = vmatpush1.xpose.msra.mxu0 0.0
    %5094 = vmatprep.subr.mxu0 0.0
    %5095 = vmatpush1.xpose.msra.mxu0 0.0
    %5096 = vmatprep.subr.mxu0 0.0
    %5097 = vmatpush1.xpose.msra.mxu0 0.0
    %5098 = vmatprep.subr.mxu0 0.0
    %5099 = vmatpush1.xpose.msra.mxu0 0.0
    %5100 = vmatprep.subr.mxu0 0.0
    %5101 = vmatpush1.xpose.msra.mxu0 0.0
    %5102 = vmatprep.subr.mxu0 0.0
    %5103 = vmatpush1.xpose.msra.mxu0 0.0
    %5104 = vmatprep.subr.mxu0 0.0
    %5105 = vmatpush1.xpose.msra.mxu0 0.0
    %5106 = vmatprep.subr.mxu0 0.0
    %5107 = vmatpush1.xpose.msra.mxu0 0.0
    %5108 = vmatprep.subr.mxu0 0.0
    %5109 = vmatpush1.xpose.msra.mxu0 0.0
    %5110 = vmatprep.subr.mxu0 0.0
    %5111 = vmatpush1.xpose.msra.mxu0 %v5078
    %5112 = vmatprep.subr.mxu0 0.0
    %5113 = vmatpush2.xpose.msra.mxu0 0.0
    %5114 = vmatprep.subr.mxu0 0.0
    %5115 = vmatpush2.xpose.msra.mxu0 0.0
    %5116 = vmatprep.subr.mxu0 0.0
    %5117 = vmatpush2.xpose.msra.mxu0 0.0
    %5118 = vmatprep.subr.mxu0 0.0
    %5119 = vmatpush2.xpose.msra.mxu0 0.0
    %5120 = vmatprep.subr.mxu0 0.0
    %5121 = vmatpush2.xpose.msra.mxu0 0.0
    %5122 = vmatprep.subr.mxu0 0.0
    %5123 = vmatpush2.xpose.msra.mxu0 0.0
    %5124 = vmatprep.subr.mxu0 0.0
    %5125 = vmatpush2.xpose.msra.mxu0 0.0
    %5126 = vmatprep.subr.mxu0 0.0
    %5127 = vmatpush2.xpose.msra.mxu0 0.0
    %5128 = vmatprep.subr.mxu0 0.0
    %5129 = vmatpush2.xpose.msra.mxu0 0.0
    %5130 = vmatprep.subr.mxu0 0.0
    %5131 = vmatpush2.xpose.msra.mxu0 0.0
    %5132 = vmatprep.subr.mxu0 0.0
    %5133 = vmatpush2.xpose.msra.mxu0 0.0
    %5134 = vmatprep.subr.mxu0 0.0
    %5135 = vmatpush2.xpose.msra.mxu0 0.0
    %5136 = vmatprep.subr.mxu0 0.0
    %5137 = vmatpush2.xpose.msra.mxu0 0.0
    %5138 = vmatprep.subr.mxu0 0.0
    %5139 = vmatpush2.xpose.msra.mxu0 0.0
    %5140 = vmatprep.subr.mxu0 0.0
    %5141 = vmatpush2.xpose.msra.mxu0 0.0
    %5142 = vmatprep.subr.mxu0 0.0
    %5143 = vmatpush2.xpose.msra.mxu0 0.0
    %5144 = vmatprep.mubr.f32.mxu0 0.0
    %5145 = vmatmul.mubr.f32.gmra.mxu0 %v5076
    %v5146 = vpop.f32.mrf.mxu0
    %v5147 = vadd.f32 0.0, %v5146
    %v5148 = vpop.f32.mrf.mxu0
    %5149 = vdwg.mxu0
    %5150 = vrot.lane.b32.xlu0 %v4249, 96
    %v5151 = vpop.permute.xlu0 %5150
    %5152 = vrot.lane.b32.xlu0 %v4331, 96
    %v5153 = vpop.permute.xlu0 %5152
    %v5154 = vsel %vm412, %v5151, 0
    %v5156 = vsel %vm412, %v5153, 0
    %5158 = vmatprep.subr.mxu0 0.0
    %5159 = vmatpush1.xpose.msra.mxu0 0.0
    %5160 = vmatprep.subr.mxu0 0.0
    %5161 = vmatpush1.xpose.msra.mxu0 0.0
    %5162 = vmatprep.subr.mxu0 0.0
    %5163 = vmatpush1.xpose.msra.mxu0 0.0
    %5164 = vmatprep.subr.mxu0 0.0
    %5165 = vmatpush1.xpose.msra.mxu0 0.0
    %5166 = vmatprep.subr.mxu0 0.0
    %5167 = vmatpush1.xpose.msra.mxu0 0.0
    %5168 = vmatprep.subr.mxu0 0.0
    %5169 = vmatpush1.xpose.msra.mxu0 0.0
    %5170 = vmatprep.subr.mxu0 0.0
    %5171 = vmatpush1.xpose.msra.mxu0 0.0
    %5172 = vmatprep.subr.mxu0 0.0
    %5173 = vmatpush1.xpose.msra.mxu0 0.0
    %5174 = vmatprep.subr.mxu0 0.0
    %5175 = vmatpush1.xpose.msra.mxu0 0.0
    %5176 = vmatprep.subr.mxu0 0.0
    %5177 = vmatpush1.xpose.msra.mxu0 0.0
    %5178 = vmatprep.subr.mxu0 0.0
    %5179 = vmatpush1.xpose.msra.mxu0 0.0
    %5180 = vmatprep.subr.mxu0 0.0
    %5181 = vmatpush1.xpose.msra.mxu0 0.0
    %5182 = vmatprep.subr.mxu0 0.0
    %5183 = vmatpush1.xpose.msra.mxu0 0.0
    %5184 = vmatprep.subr.mxu0 0.0
    %5185 = vmatpush1.xpose.msra.mxu0 0.0
    %5186 = vmatprep.subr.mxu0 0.0
    %5187 = vmatpush1.xpose.msra.mxu0 0.0
    %5188 = vmatprep.subr.mxu0 0.0
    %5189 = vmatpush1.xpose.msra.mxu0 %v5156
    %5190 = vmatprep.subr.mxu0 0.0
    %5191 = vmatpush2.xpose.msra.mxu0 0.0
    %5192 = vmatprep.subr.mxu0 0.0
    %5193 = vmatpush2.xpose.msra.mxu0 0.0
    %5194 = vmatprep.subr.mxu0 0.0
    %5195 = vmatpush2.xpose.msra.mxu0 0.0
    %5196 = vmatprep.subr.mxu0 0.0
    %5197 = vmatpush2.xpose.msra.mxu0 0.0
    %5198 = vmatprep.subr.mxu0 0.0
    %5199 = vmatpush2.xpose.msra.mxu0 0.0
    %5200 = vmatprep.subr.mxu0 0.0
    %5201 = vmatpush2.xpose.msra.mxu0 0.0
    %5202 = vmatprep.subr.mxu0 0.0
    %5203 = vmatpush2.xpose.msra.mxu0 0.0
    %5204 = vmatprep.subr.mxu0 0.0
    %5205 = vmatpush2.xpose.msra.mxu0 0.0
    %5206 = vmatprep.subr.mxu0 0.0
    %5207 = vmatpush2.xpose.msra.mxu0 0.0
    %5208 = vmatprep.subr.mxu0 0.0
    %5209 = vmatpush2.xpose.msra.mxu0 0.0
    %5210 = vmatprep.subr.mxu0 0.0
    %5211 = vmatpush2.xpose.msra.mxu0 0.0
    %5212 = vmatprep.subr.mxu0 0.0
    %5213 = vmatpush2.xpose.msra.mxu0 0.0
    %5214 = vmatprep.subr.mxu0 0.0
    %5215 = vmatpush2.xpose.msra.mxu0 0.0
    %5216 = vmatprep.subr.mxu0 0.0
    %5217 = vmatpush2.xpose.msra.mxu0 0.0
    %5218 = vmatprep.subr.mxu0 0.0
    %5219 = vmatpush2.xpose.msra.mxu0 0.0
    %5220 = vmatprep.subr.mxu0 0.0
    %5221 = vmatpush2.xpose.msra.mxu0 0.0
    %5222 = vmatprep.mubr.f32.mxu0 0.0
    %5223 = vmatmul.mubr.f32.gmra.mxu0 %v5154
    %v5224 = vpop.f32.mrf.mxu0
    %v5225 = vadd.f32 0.0, %v5224
    %v5226 = vpop.f32.mrf.mxu0
    %5227 = vdwg.mxu0
    %v5228 = vmul.f32 %v5147, 0.25
    %v5229 = vmul.f32 %v5225, 0.25
    %v5230 = vsel %vm567, %v5228, -inf
    %5231 = vmax.xlane.f32.xlu0 %v5230
    %v5232 = vpop.xlane.xlu0 %5231
    %v5233 = vsel %vm567, %v5229, -inf
    %5234 = vmax.xlane.f32.xlu0 %v5233
    %v5235 = vpop.xlane.xlu0 %5234
    %v5236 = vsub.f32 %v5228, %v5232
    %v5237 = vsub.f32 %v5229, %v5235
    %v5238 = vmul.f32 %v5236, 1.442695
    %v5239 = vpow.pop %v5238
    %v5240 = vmul.f32 %v5237, 1.442695
    %v5241 = vpow.pop %v5240
    %v5242 = vsel %vm567, %v5239, 0.0
    %5243 = vadd.xlane.f32.xlu0 %v5242
    %v5244 = vpop.xlane.xlu0 %5243
    %v5245 = vsel %vm567, %v5241, 0.0
    %5246 = vadd.xlane.f32.xlu0 %v5245
    %v5247 = vpop.xlane.xlu0 %5246
    %v5248 = vrcp.pop %v5244
    %v5249 = vrcp.pop %v5247
    %v5250 = vmul.f32 %v5239, %v5248
    %v5251 = vmul.f32 %v5241, %v5249
    %5252 = vrot.lane.b32.xlu0 %v4410, 96
    %v5253 = vpop.permute.xlu0 %5252
    %v5256 = vsel %vm567, %v5250, 0
    %5258 = vmatprep.subr.mxu0 0.0
    %5259 = vmatpush1.msra.mxu0 0.0
    %5260 = vmatprep.subr.mxu0 0.0
    %5261 = vmatpush1.msra.mxu0 0.0
    %5262 = vmatprep.subr.mxu0 0.0
    %5263 = vmatpush1.msra.mxu0 0.0
    %5264 = vmatprep.subr.mxu0 0.0
    %5265 = vmatpush1.msra.mxu0 0.0
    %5266 = vmatprep.subr.mxu0 0.0
    %5267 = vmatpush1.msra.mxu0 0.0
    %5268 = vmatprep.subr.mxu0 0.0
    %5269 = vmatpush1.msra.mxu0 0.0
    %5270 = vmatprep.subr.mxu0 0.0
    %5271 = vmatpush1.msra.mxu0 0.0
    %5272 = vmatprep.subr.mxu0 0.0
    %5273 = vmatpush1.msra.mxu0 0.0
    %5274 = vmatprep.subr.mxu0 0.0
    %5275 = vmatpush1.msra.mxu0 0.0
    %5276 = vmatprep.subr.mxu0 0.0
    %5277 = vmatpush1.msra.mxu0 0.0
    %5278 = vmatprep.subr.mxu0 0.0
    %5279 = vmatpush1.msra.mxu0 0.0
    %5280 = vmatprep.subr.mxu0 0.0
    %5281 = vmatpush1.msra.mxu0 0.0
    %5282 = vmatprep.subr.mxu0 0.0
    %5283 = vmatpush1.msra.mxu0 0.0
    %5284 = vmatprep.subr.mxu0 0.0
    %5285 = vmatpush1.msra.mxu0 0.0
    %5286 = vmatprep.subr.mxu0 0.0
    %5287 = vmatpush1.msra.mxu0 0.0
    %5288 = vmatprep.subr.mxu0 0.0
    %5289 = vmatpush1.msra.mxu0 %v5253
    %5290 = vmatprep.subr.mxu0 0.0
    %5291 = vmatpush2.msra.mxu0 0.0
    %5292 = vmatprep.subr.mxu0 0.0
    %5293 = vmatpush2.msra.mxu0 0.0
    %5294 = vmatprep.subr.mxu0 0.0
    %5295 = vmatpush2.msra.mxu0 0.0
    %5296 = vmatprep.subr.mxu0 0.0
    %5297 = vmatpush2.msra.mxu0 0.0
    %5298 = vmatprep.subr.mxu0 0.0
    %5299 = vmatpush2.msra.mxu0 0.0
    %5300 = vmatprep.subr.mxu0 0.0
    %5301 = vmatpush2.msra.mxu0 0.0
    %5302 = vmatprep.subr.mxu0 0.0
    %5303 = vmatpush2.msra.mxu0 0.0
    %5304 = vmatprep.subr.mxu0 0.0
    %5305 = vmatpush2.msra.mxu0 0.0
    %5306 = vmatprep.subr.mxu0 0.0
    %5307 = vmatpush2.msra.mxu0 0.0
    %5308 = vmatprep.subr.mxu0 0.0
    %5309 = vmatpush2.msra.mxu0 0.0
    %5310 = vmatprep.subr.mxu0 0.0
    %5311 = vmatpush2.msra.mxu0 0.0
    %5312 = vmatprep.subr.mxu0 0.0
    %5313 = vmatpush2.msra.mxu0 0.0
    %5314 = vmatprep.subr.mxu0 0.0
    %5315 = vmatpush2.msra.mxu0 0.0
    %5316 = vmatprep.subr.mxu0 0.0
    %5317 = vmatpush2.msra.mxu0 0.0
    %5318 = vmatprep.subr.mxu0 0.0
    %5319 = vmatpush2.msra.mxu0 0.0
    %5320 = vmatprep.subr.mxu0 0.0
    %5321 = vmatpush2.msra.mxu0 0.0
    %5322 = vmatprep.mubr.f32.mxu0 0.0
    %5323 = vmatmul.mubr.f32.gmra.mxu0 %v5256
    %v5324 = vpop.f32.mrf.mxu0
    %v5325 = vadd.f32 0.0, %v5324
    %v5326 = vpop.f32.mrf.mxu0
    %5327 = vdwg.mxu0
    %5328 = vrot.lane.b32.xlu0 %v4413, 96
    %v5329 = vpop.permute.xlu0 %5328
    %v5332 = vsel %vm567, %v5251, 0
    %5334 = vmatprep.subr.mxu0 0.0
    %5335 = vmatpush1.msra.mxu0 0.0
    %5336 = vmatprep.subr.mxu0 0.0
    %5337 = vmatpush1.msra.mxu0 0.0
    %5338 = vmatprep.subr.mxu0 0.0
    %5339 = vmatpush1.msra.mxu0 0.0
    %5340 = vmatprep.subr.mxu0 0.0
    %5341 = vmatpush1.msra.mxu0 0.0
    %5342 = vmatprep.subr.mxu0 0.0
    %5343 = vmatpush1.msra.mxu0 0.0
    %5344 = vmatprep.subr.mxu0 0.0
    %5345 = vmatpush1.msra.mxu0 0.0
    %5346 = vmatprep.subr.mxu0 0.0
    %5347 = vmatpush1.msra.mxu0 0.0
    %5348 = vmatprep.subr.mxu0 0.0
    %5349 = vmatpush1.msra.mxu0 0.0
    %5350 = vmatprep.subr.mxu0 0.0
    %5351 = vmatpush1.msra.mxu0 0.0
    %5352 = vmatprep.subr.mxu0 0.0
    %5353 = vmatpush1.msra.mxu0 0.0
    %5354 = vmatprep.subr.mxu0 0.0
    %5355 = vmatpush1.msra.mxu0 0.0
    %5356 = vmatprep.subr.mxu0 0.0
    %5357 = vmatpush1.msra.mxu0 0.0
    %5358 = vmatprep.subr.mxu0 0.0
    %5359 = vmatpush1.msra.mxu0 0.0
    %5360 = vmatprep.subr.mxu0 0.0
    %5361 = vmatpush1.msra.mxu0 0.0
    %5362 = vmatprep.subr.mxu0 0.0
    %5363 = vmatpush1.msra.mxu0 0.0
    %5364 = vmatprep.subr.mxu0 0.0
    %5365 = vmatpush1.msra.mxu0 %v5329
    %5366 = vmatprep.subr.mxu0 0.0
    %5367 = vmatpush2.msra.mxu0 0.0
    %5368 = vmatprep.subr.mxu0 0.0
    %5369 = vmatpush2.msra.mxu0 0.0
    %5370 = vmatprep.subr.mxu0 0.0
    %5371 = vmatpush2.msra.mxu0 0.0
    %5372 = vmatprep.subr.mxu0 0.0
    %5373 = vmatpush2.msra.mxu0 0.0
    %5374 = vmatprep.subr.mxu0 0.0
    %5375 = vmatpush2.msra.mxu0 0.0
    %5376 = vmatprep.subr.mxu0 0.0
    %5377 = vmatpush2.msra.mxu0 0.0
    %5378 = vmatprep.subr.mxu0 0.0
    %5379 = vmatpush2.msra.mxu0 0.0
    %5380 = vmatprep.subr.mxu0 0.0
    %5381 = vmatpush2.msra.mxu0 0.0
    %5382 = vmatprep.subr.mxu0 0.0
    %5383 = vmatpush2.msra.mxu0 0.0
    %5384 = vmatprep.subr.mxu0 0.0
    %5385 = vmatpush2.msra.mxu0 0.0
    %5386 = vmatprep.subr.mxu0 0.0
    %5387 = vmatpush2.msra.mxu0 0.0
    %5388 = vmatprep.subr.mxu0 0.0
    %5389 = vmatpush2.msra.mxu0 0.0
    %5390 = vmatprep.subr.mxu0 0.0
    %5391 = vmatpush2.msra.mxu0 0.0
    %5392 = vmatprep.subr.mxu0 0.0
    %5393 = vmatpush2.msra.mxu0 0.0
    %5394 = vmatprep.subr.mxu0 0.0
    %5395 = vmatpush2.msra.mxu0 0.0
    %5396 = vmatprep.subr.mxu0 0.0
    %5397 = vmatpush2.msra.mxu0 0.0
    %5398 = vmatprep.mubr.f32.mxu0 0.0
    %5399 = vmatmul.mubr.f32.gmra.mxu0 %v5332
    %v5400 = vpop.f32.mrf.mxu0
    %v5401 = vadd.f32 0.0, %v5400
    %v5402 = vpop.f32.mrf.mxu0
    %5403 = vdwg.mxu0
    %5404 = vrot.lane.b32.xlu0 %v4246, 80
    %v5405 = vpop.permute.xlu0 %5404
    %5406 = vrot.lane.b32.xlu0 %v4328, 80
    %v5407 = vpop.permute.xlu0 %5406
    %v5408 = vsel %vm412, %v5405, 0
    %v5410 = vsel %vm412, %v5407, 0
    %5412 = vmatprep.subr.mxu0 0.0
    %5413 = vmatpush1.xpose.msra.mxu0 0.0
    %5414 = vmatprep.subr.mxu0 0.0
    %5415 = vmatpush1.xpose.msra.mxu0 0.0
    %5416 = vmatprep.subr.mxu0 0.0
    %5417 = vmatpush1.xpose.msra.mxu0 0.0
    %5418 = vmatprep.subr.mxu0 0.0
    %5419 = vmatpush1.xpose.msra.mxu0 0.0
    %5420 = vmatprep.subr.mxu0 0.0
    %5421 = vmatpush1.xpose.msra.mxu0 0.0
    %5422 = vmatprep.subr.mxu0 0.0
    %5423 = vmatpush1.xpose.msra.mxu0 0.0
    %5424 = vmatprep.subr.mxu0 0.0
    %5425 = vmatpush1.xpose.msra.mxu0 0.0
    %5426 = vmatprep.subr.mxu0 0.0
    %5427 = vmatpush1.xpose.msra.mxu0 0.0
    %5428 = vmatprep.subr.mxu0 0.0
    %5429 = vmatpush1.xpose.msra.mxu0 0.0
    %5430 = vmatprep.subr.mxu0 0.0
    %5431 = vmatpush1.xpose.msra.mxu0 0.0
    %5432 = vmatprep.subr.mxu0 0.0
    %5433 = vmatpush1.xpose.msra.mxu0 0.0
    %5434 = vmatprep.subr.mxu0 0.0
    %5435 = vmatpush1.xpose.msra.mxu0 0.0
    %5436 = vmatprep.subr.mxu0 0.0
    %5437 = vmatpush1.xpose.msra.mxu0 0.0
    %5438 = vmatprep.subr.mxu0 0.0
    %5439 = vmatpush1.xpose.msra.mxu0 0.0
    %5440 = vmatprep.subr.mxu0 0.0
    %5441 = vmatpush1.xpose.msra.mxu0 0.0
    %5442 = vmatprep.subr.mxu0 0.0
    %5443 = vmatpush1.xpose.msra.mxu0 %v5410
    %5444 = vmatprep.subr.mxu0 0.0
    %5445 = vmatpush2.xpose.msra.mxu0 0.0
    %5446 = vmatprep.subr.mxu0 0.0
    %5447 = vmatpush2.xpose.msra.mxu0 0.0
    %5448 = vmatprep.subr.mxu0 0.0
    %5449 = vmatpush2.xpose.msra.mxu0 0.0
    %5450 = vmatprep.subr.mxu0 0.0
    %5451 = vmatpush2.xpose.msra.mxu0 0.0
    %5452 = vmatprep.subr.mxu0 0.0
    %5453 = vmatpush2.xpose.msra.mxu0 0.0
    %5454 = vmatprep.subr.mxu0 0.0
    %5455 = vmatpush2.xpose.msra.mxu0 0.0
    %5456 = vmatprep.subr.mxu0 0.0
    %5457 = vmatpush2.xpose.msra.mxu0 0.0
    %5458 = vmatprep.subr.mxu0 0.0
    %5459 = vmatpush2.xpose.msra.mxu0 0.0
    %5460 = vmatprep.subr.mxu0 0.0
    %5461 = vmatpush2.xpose.msra.mxu0 0.0
    %5462 = vmatprep.subr.mxu0 0.0
    %5463 = vmatpush2.xpose.msra.mxu0 0.0
    %5464 = vmatprep.subr.mxu0 0.0
    %5465 = vmatpush2.xpose.msra.mxu0 0.0
    %5466 = vmatprep.subr.mxu0 0.0
    %5467 = vmatpush2.xpose.msra.mxu0 0.0
    %5468 = vmatprep.subr.mxu0 0.0
    %5469 = vmatpush2.xpose.msra.mxu0 0.0
    %5470 = vmatprep.subr.mxu0 0.0
    %5471 = vmatpush2.xpose.msra.mxu0 0.0
    %5472 = vmatprep.subr.mxu0 0.0
    %5473 = vmatpush2.xpose.msra.mxu0 0.0
    %5474 = vmatprep.subr.mxu0 0.0
    %5475 = vmatpush2.xpose.msra.mxu0 0.0
    %5476 = vmatprep.mubr.f32.mxu0 0.0
    %5477 = vmatmul.mubr.f32.gmra.mxu0 %v5408
    %v5478 = vpop.f32.mrf.mxu0
    %v5479 = vadd.f32 0.0, %v5478
    %v5480 = vpop.f32.mrf.mxu0
    %5481 = vdwg.mxu0
    %5482 = vrot.lane.b32.xlu0 %v4249, 80
    %v5483 = vpop.permute.xlu0 %5482
    %5484 = vrot.lane.b32.xlu0 %v4331, 80
    %v5485 = vpop.permute.xlu0 %5484
    %v5486 = vsel %vm412, %v5483, 0
    %v5488 = vsel %vm412, %v5485, 0
    %5490 = vmatprep.subr.mxu0 0.0
    %5491 = vmatpush1.xpose.msra.mxu0 0.0
    %5492 = vmatprep.subr.mxu0 0.0
    %5493 = vmatpush1.xpose.msra.mxu0 0.0
    %5494 = vmatprep.subr.mxu0 0.0
    %5495 = vmatpush1.xpose.msra.mxu0 0.0
    %5496 = vmatprep.subr.mxu0 0.0
    %5497 = vmatpush1.xpose.msra.mxu0 0.0
    %5498 = vmatprep.subr.mxu0 0.0
    %5499 = vmatpush1.xpose.msra.mxu0 0.0
    %5500 = vmatprep.subr.mxu0 0.0
    %5501 = vmatpush1.xpose.msra.mxu0 0.0
    %5502 = vmatprep.subr.mxu0 0.0
    %5503 = vmatpush1.xpose.msra.mxu0 0.0
    %5504 = vmatprep.subr.mxu0 0.0
    %5505 = vmatpush1.xpose.msra.mxu0 0.0
    %5506 = vmatprep.subr.mxu0 0.0
    %5507 = vmatpush1.xpose.msra.mxu0 0.0
    %5508 = vmatprep.subr.mxu0 0.0
    %5509 = vmatpush1.xpose.msra.mxu0 0.0
    %5510 = vmatprep.subr.mxu0 0.0
    %5511 = vmatpush1.xpose.msra.mxu0 0.0
    %5512 = vmatprep.subr.mxu0 0.0
    %5513 = vmatpush1.xpose.msra.mxu0 0.0
    %5514 = vmatprep.subr.mxu0 0.0
    %5515 = vmatpush1.xpose.msra.mxu0 0.0
    %5516 = vmatprep.subr.mxu0 0.0
    %5517 = vmatpush1.xpose.msra.mxu0 0.0
    %5518 = vmatprep.subr.mxu0 0.0
    %5519 = vmatpush1.xpose.msra.mxu0 0.0
    %5520 = vmatprep.subr.mxu0 0.0
    %5521 = vmatpush1.xpose.msra.mxu0 %v5488
    %5522 = vmatprep.subr.mxu0 0.0
    %5523 = vmatpush2.xpose.msra.mxu0 0.0
    %5524 = vmatprep.subr.mxu0 0.0
    %5525 = vmatpush2.xpose.msra.mxu0 0.0
    %5526 = vmatprep.subr.mxu0 0.0
    %5527 = vmatpush2.xpose.msra.mxu0 0.0
    %5528 = vmatprep.subr.mxu0 0.0
    %5529 = vmatpush2.xpose.msra.mxu0 0.0
    %5530 = vmatprep.subr.mxu0 0.0
    %5531 = vmatpush2.xpose.msra.mxu0 0.0
    %5532 = vmatprep.subr.mxu0 0.0
    %5533 = vmatpush2.xpose.msra.mxu0 0.0
    %5534 = vmatprep.subr.mxu0 0.0
    %5535 = vmatpush2.xpose.msra.mxu0 0.0
    %5536 = vmatprep.subr.mxu0 0.0
    %5537 = vmatpush2.xpose.msra.mxu0 0.0
    %5538 = vmatprep.subr.mxu0 0.0
    %5539 = vmatpush2.xpose.msra.mxu0 0.0
    %5540 = vmatprep.subr.mxu0 0.0
    %5541 = vmatpush2.xpose.msra.mxu0 0.0
    %5542 = vmatprep.subr.mxu0 0.0
    %5543 = vmatpush2.xpose.msra.mxu0 0.0
    %5544 = vmatprep.subr.mxu0 0.0
    %5545 = vmatpush2.xpose.msra.mxu0 0.0
    %5546 = vmatprep.subr.mxu0 0.0
    %5547 = vmatpush2.xpose.msra.mxu0 0.0
    %5548 = vmatprep.subr.mxu0 0.0
    %5549 = vmatpush2.xpose.msra.mxu0 0.0
    %5550 = vmatprep.subr.mxu0 0.0
    %5551 = vmatpush2.xpose.msra.mxu0 0.0
    %5552 = vmatprep.subr.mxu0 0.0
    %5553 = vmatpush2.xpose.msra.mxu0 0.0
    %5554 = vmatprep.mubr.f32.mxu0 0.0
    %5555 = vmatmul.mubr.f32.gmra.mxu0 %v5486
    %v5556 = vpop.f32.mrf.mxu0
    %v5557 = vadd.f32 0.0, %v5556
    %v5558 = vpop.f32.mrf.mxu0
    %5559 = vdwg.mxu0
    %v5560 = vmul.f32 %v5479, 0.25
    %v5561 = vmul.f32 %v5557, 0.25
    %v5562 = vsel %vm567, %v5560, -inf
    %5563 = vmax.xlane.f32.xlu0 %v5562
    %v5564 = vpop.xlane.xlu0 %5563
    %v5565 = vsel %vm567, %v5561, -inf
    %5566 = vmax.xlane.f32.xlu0 %v5565
    %v5567 = vpop.xlane.xlu0 %5566
    %v5568 = vsub.f32 %v5560, %v5564
    %v5569 = vsub.f32 %v5561, %v5567
    %v5570 = vmul.f32 %v5568, 1.442695
    %v5571 = vpow.pop %v5570
    %v5572 = vmul.f32 %v5569, 1.442695
    %v5573 = vpow.pop %v5572
    %v5574 = vsel %vm567, %v5571, 0.0
    %5575 = vadd.xlane.f32.xlu0 %v5574
    %v5576 = vpop.xlane.xlu0 %5575
    %v5577 = vsel %vm567, %v5573, 0.0
    %5578 = vadd.xlane.f32.xlu0 %v5577
    %v5579 = vpop.xlane.xlu0 %5578
    %v5580 = vrcp.pop %v5576
    %v5581 = vrcp.pop %v5579
    %v5582 = vmul.f32 %v5571, %v5580
    %v5583 = vmul.f32 %v5573, %v5581
    %5584 = vrot.lane.b32.xlu0 %v4410, 80
    %v5585 = vpop.permute.xlu0 %5584
    %v5588 = vsel %vm567, %v5582, 0
    %5590 = vmatprep.subr.mxu0 0.0
    %5591 = vmatpush1.msra.mxu0 0.0
    %5592 = vmatprep.subr.mxu0 0.0
    %5593 = vmatpush1.msra.mxu0 0.0
    %5594 = vmatprep.subr.mxu0 0.0
    %5595 = vmatpush1.msra.mxu0 0.0
    %5596 = vmatprep.subr.mxu0 0.0
    %5597 = vmatpush1.msra.mxu0 0.0
    %5598 = vmatprep.subr.mxu0 0.0
    %5599 = vmatpush1.msra.mxu0 0.0
    %5600 = vmatprep.subr.mxu0 0.0
    %5601 = vmatpush1.msra.mxu0 0.0
    %5602 = vmatprep.subr.mxu0 0.0
    %5603 = vmatpush1.msra.mxu0 0.0
    %5604 = vmatprep.subr.mxu0 0.0
    %5605 = vmatpush1.msra.mxu0 0.0
    %5606 = vmatprep.subr.mxu0 0.0
    %5607 = vmatpush1.msra.mxu0 0.0
    %5608 = vmatprep.subr.mxu0 0.0
    %5609 = vmatpush1.msra.mxu0 0.0
    %5610 = vmatprep.subr.mxu0 0.0
    %5611 = vmatpush1.msra.mxu0 0.0
    %5612 = vmatprep.subr.mxu0 0.0
    %5613 = vmatpush1.msra.mxu0 0.0
    %5614 = vmatprep.subr.mxu0 0.0
    %5615 = vmatpush1.msra.mxu0 0.0
    %5616 = vmatprep.subr.mxu0 0.0
    %5617 = vmatpush1.msra.mxu0 0.0
    %5618 = vmatprep.subr.mxu0 0.0
    %5619 = vmatpush1.msra.mxu0 0.0
    %5620 = vmatprep.subr.mxu0 0.0
    %5621 = vmatpush1.msra.mxu0 %v5585
    %5622 = vmatprep.subr.mxu0 0.0
    %5623 = vmatpush2.msra.mxu0 0.0
    %5624 = vmatprep.subr.mxu0 0.0
    %5625 = vmatpush2.msra.mxu0 0.0
    %5626 = vmatprep.subr.mxu0 0.0
    %5627 = vmatpush2.msra.mxu0 0.0
    %5628 = vmatprep.subr.mxu0 0.0
    %5629 = vmatpush2.msra.mxu0 0.0
    %5630 = vmatprep.subr.mxu0 0.0
    %5631 = vmatpush2.msra.mxu0 0.0
    %5632 = vmatprep.subr.mxu0 0.0
    %5633 = vmatpush2.msra.mxu0 0.0
    %5634 = vmatprep.subr.mxu0 0.0
    %5635 = vmatpush2.msra.mxu0 0.0
    %5636 = vmatprep.subr.mxu0 0.0
    %5637 = vmatpush2.msra.mxu0 0.0
    %5638 = vmatprep.subr.mxu0 0.0
    %5639 = vmatpush2.msra.mxu0 0.0
    %5640 = vmatprep.subr.mxu0 0.0
    %5641 = vmatpush2.msra.mxu0 0.0
    %5642 = vmatprep.subr.mxu0 0.0
    %5643 = vmatpush2.msra.mxu0 0.0
    %5644 = vmatprep.subr.mxu0 0.0
    %5645 = vmatpush2.msra.mxu0 0.0
    %5646 = vmatprep.subr.mxu0 0.0
    %5647 = vmatpush2.msra.mxu0 0.0
    %5648 = vmatprep.subr.mxu0 0.0
    %5649 = vmatpush2.msra.mxu0 0.0
    %5650 = vmatprep.subr.mxu0 0.0
    %5651 = vmatpush2.msra.mxu0 0.0
    %5652 = vmatprep.subr.mxu0 0.0
    %5653 = vmatpush2.msra.mxu0 0.0
    %5654 = vmatprep.mubr.f32.mxu0 0.0
    %5655 = vmatmul.mubr.f32.gmra.mxu0 %v5588
    %v5656 = vpop.f32.mrf.mxu0
    %v5657 = vadd.f32 0.0, %v5656
    %v5658 = vpop.f32.mrf.mxu0
    %5659 = vdwg.mxu0
    %5660 = vrot.lane.b32.xlu0 %v4413, 80
    %v5661 = vpop.permute.xlu0 %5660
    %v5664 = vsel %vm567, %v5583, 0
    %5666 = vmatprep.subr.mxu0 0.0
    %5667 = vmatpush1.msra.mxu0 0.0
    %5668 = vmatprep.subr.mxu0 0.0
    %5669 = vmatpush1.msra.mxu0 0.0
    %5670 = vmatprep.subr.mxu0 0.0
    %5671 = vmatpush1.msra.mxu0 0.0
    %5672 = vmatprep.subr.mxu0 0.0
    %5673 = vmatpush1.msra.mxu0 0.0
    %5674 = vmatprep.subr.mxu0 0.0
    %5675 = vmatpush1.msra.mxu0 0.0
    %5676 = vmatprep.subr.mxu0 0.0
    %5677 = vmatpush1.msra.mxu0 0.0
    %5678 = vmatprep.subr.mxu0 0.0
    %5679 = vmatpush1.msra.mxu0 0.0
    %5680 = vmatprep.subr.mxu0 0.0
    %5681 = vmatpush1.msra.mxu0 0.0
    %5682 = vmatprep.subr.mxu0 0.0
    %5683 = vmatpush1.msra.mxu0 0.0
    %5684 = vmatprep.subr.mxu0 0.0
    %5685 = vmatpush1.msra.mxu0 0.0
    %5686 = vmatprep.subr.mxu0 0.0
    %5687 = vmatpush1.msra.mxu0 0.0
    %5688 = vmatprep.subr.mxu0 0.0
    %5689 = vmatpush1.msra.mxu0 0.0
    %5690 = vmatprep.subr.mxu0 0.0
    %5691 = vmatpush1.msra.mxu0 0.0
    %5692 = vmatprep.subr.mxu0 0.0
    %5693 = vmatpush1.msra.mxu0 0.0
    %5694 = vmatprep.subr.mxu0 0.0
    %5695 = vmatpush1.msra.mxu0 0.0
    %5696 = vmatprep.subr.mxu0 0.0
    %5697 = vmatpush1.msra.mxu0 %v5661
    %5698 = vmatprep.subr.mxu0 0.0
    %5699 = vmatpush2.msra.mxu0 0.0
    %5700 = vmatprep.subr.mxu0 0.0
    %5701 = vmatpush2.msra.mxu0 0.0
    %5702 = vmatprep.subr.mxu0 0.0
    %5703 = vmatpush2.msra.mxu0 0.0
    %5704 = vmatprep.subr.mxu0 0.0
    %5705 = vmatpush2.msra.mxu0 0.0
    %5706 = vmatprep.subr.mxu0 0.0
    %5707 = vmatpush2.msra.mxu0 0.0
    %5708 = vmatprep.subr.mxu0 0.0
    %5709 = vmatpush2.msra.mxu0 0.0
    %5710 = vmatprep.subr.mxu0 0.0
    %5711 = vmatpush2.msra.mxu0 0.0
    %5712 = vmatprep.subr.mxu0 0.0
    %5713 = vmatpush2.msra.mxu0 0.0
    %5714 = vmatprep.subr.mxu0 0.0
    %5715 = vmatpush2.msra.mxu0 0.0
    %5716 = vmatprep.subr.mxu0 0.0
    %5717 = vmatpush2.msra.mxu0 0.0
    %5718 = vmatprep.subr.mxu0 0.0
    %5719 = vmatpush2.msra.mxu0 0.0
    %5720 = vmatprep.subr.mxu0 0.0
    %5721 = vmatpush2.msra.mxu0 0.0
    %5722 = vmatprep.subr.mxu0 0.0
    %5723 = vmatpush2.msra.mxu0 0.0
    %5724 = vmatprep.subr.mxu0 0.0
    %5725 = vmatpush2.msra.mxu0 0.0
    %5726 = vmatprep.subr.mxu0 0.0
    %5727 = vmatpush2.msra.mxu0 0.0
    %5728 = vmatprep.subr.mxu0 0.0
    %5729 = vmatpush2.msra.mxu0 0.0
    %5730 = vmatprep.mubr.f32.mxu0 0.0
    %5731 = vmatmul.mubr.f32.gmra.mxu0 %v5664
    %v5732 = vpop.f32.mrf.mxu0
    %v5733 = vadd.f32 0.0, %v5732
    %v5734 = vpop.f32.mrf.mxu0
    %5735 = vdwg.mxu0
    %5738 = vrot.lane.b32.xlu0 %v4992, 16
    %v5739 = vpop.permute.xlu0 %5738
    %5740 = vrot.lane.b32.xlu0 %v5069, 16
    %v5741 = vpop.permute.xlu0 %5740
    %5746 = vrot.lane.b32.xlu0 %v5325, 32
    %v5747 = vpop.permute.xlu0 %5746
    %5748 = vrot.lane.b32.xlu0 %v5401, 32
    %v5749 = vpop.permute.xlu0 %5748
    %5754 = vrot.lane.b32.xlu0 %v5657, 48
    %v5755 = vpop.permute.xlu0 %5754
    %5756 = vrot.lane.b32.xlu0 %v5733, 48
    %v5757 = vpop.permute.xlu0 %5756
    %v5760 = vsel %vm412, %v4662, %v5739
    %v5761 = vsel %vm412, %v4735, %v5741
    %v5762 = vsel %vm1760, %v5760, %v5747
    %v5763 = vsel %vm1760, %v5761, %v5749
    %v5764 = vsel %vm1763, %v5762, %v5755
    %v5765 = vsel %vm1763, %v5763, %v5757
    %v5766 = vpack.c.bf16 %v5765, %v5764
    %s5767 = scalar_lea.vmem %s9, 32
    %v5768 = vld [vmem:[%s5767] sm:$0xf]
    %v5769 = vld [vmem:[%s5767 + $0x4] sm:$0xf]
    %v5770 = vld [vmem:[%s5767 + $0x8] sm:$0xf]
    %v5771 = vld [vmem:[%s5767 + $0xc] sm:$0xf]
    %v5772 = vld [vmem:[%s5767 + $0x10] sm:$0xf]
    %v5773 = vld [vmem:[%s5767 + $0x14] sm:$0xf]
    %v5774 = vld [vmem:[%s5767 + $0x18] sm:$0xf]
    %v5775 = vld [vmem:[%s5767 + $0x1c] sm:$0xf]
    %s5776 = scalar_lea.vmem %s10, 1
    %v5777 = vld [vmem:[%s5776] sm:$0x1]
    %v5779 = vlaneseq
    %v5780 = vshrl.u32 %v5779, 7
    %v5781 = vsub.s32 0, %v5780
    %v5782 = vrot.slane %v5777, %v5781
    %v5792 = vunpack.c.l.b16 %v5768
    %v5793 = vunpack.c.l.b16 %v5769
    %v5794 = vunpack.c.l.b16 %v5770
    %v5795 = vunpack.c.l.b16 %v5771
    %v5796 = vunpack.c.l.b16 %v5772
    %v5797 = vunpack.c.l.b16 %v5773
    %v5798 = vunpack.c.l.b16 %v5774
    %v5799 = vunpack.c.l.b16 %v5775
    %v5800 = vpack.c.b16 %v5793, %v5792
    %v5801 = vpack.c.b16 %v5795, %v5794
    %v5802 = vpack.c.b16 %v5797, %v5796
    %v5803 = vpack.c.b16 %v5799, %v5798
    %v5809 = vsel %vm207, %v5766, 0
    %5811 = vmatprep.subr.bf16.mxu0 0
    %5812 = vmatpush1.bf16.msra.mxu0 0
    %5813 = vmatprep.subr.bf16.mxu0 0
    %5814 = vmatpush1.bf16.msra.mxu0 0
    %5815 = vmatprep.subr.bf16.mxu0 0
    %5816 = vmatpush1.bf16.msra.mxu0 0
    %5817 = vmatprep.subr.bf16.mxu0 0
    %5818 = vmatpush1.bf16.msra.mxu0 0
    %5819 = vmatprep.subr.bf16.mxu0 0
    %5820 = vmatpush1.bf16.msra.mxu0 %v5803
    %5821 = vmatprep.subr.bf16.mxu0 0
    %5822 = vmatpush1.bf16.msra.mxu0 %v5802
    %5823 = vmatprep.subr.bf16.mxu0 0
    %5824 = vmatpush1.bf16.msra.mxu0 %v5801
    %5825 = vmatprep.subr.bf16.mxu0 0
    %5826 = vmatpush1.bf16.msra.mxu0 %v5800
    %5827 = vmatprep.subr.bf16.mxu0 0
    %5828 = vmatpush2.bf16.msra.mxu0 0
    %5829 = vmatprep.subr.bf16.mxu0 0
    %5830 = vmatpush2.bf16.msra.mxu0 0
    %5831 = vmatprep.subr.bf16.mxu0 0
    %5832 = vmatpush2.bf16.msra.mxu0 0
    %5833 = vmatprep.subr.bf16.mxu0 0
    %5834 = vmatpush2.bf16.msra.mxu0 0
    %5835 = vmatprep.subr.bf16.mxu0 0
    %5836 = vmatpush2.bf16.msra.mxu0 0
    %5837 = vmatprep.subr.bf16.mxu0 0
    %5838 = vmatpush2.bf16.msra.mxu0 0
    %5839 = vmatprep.subr.bf16.mxu0 0
    %5840 = vmatpush2.bf16.msra.mxu0 0
    %5841 = vmatprep.subr.bf16.mxu0 0
    %5842 = vmatpush2.bf16.msra.mxu0 0
    %5843 = vmatprep.mubr.bf16.mxu0 0
    %5844 = vmatmul.mubr.bf16.gmra.mxu0 %v5809
    %v5845 = vpop.f32.mrf.mxu0
    %v5846 = vadd.f32 %v5782, %v5845
    %v5847 = vpop.f32.mrf.mxu0
    %v5848 = vpop.f32.mrf.mxu0
    %v5849 = vadd.f32 %v5782, %v5848
    %v5850 = vpop.f32.mrf.mxu0
    %5851 = vdwg.mxu0
    %v5852 = vadd.f32 %v4164, %v5846
    %v5853 = vadd.f32 %v4165, %v5849
    %s5854 = scalar_lea.vmem %s11, 1
    %v5855 = vld [vmem:[%s5854] sm:$0x1]
    %s5856 = scalar_lea.vmem %s12, 1
    %v5857 = vld [vmem:[%s5856] sm:$0x1]
    %v5858 = vsel %vm207, %v5852, 0.0
    %5859 = vadd.xlane.f32.xlu0 %v5858
    %v5860 = vpop.xlane.xlu0 %5859
    %v5861 = vsel %vm207, %v5853, 0.0
    %5862 = vadd.xlane.f32.xlu0 %v5861
    %v5863 = vpop.xlane.xlu0 %5862
    %v5864 = vmul.f32 %v5860, %v1860
    %v5865 = vmul.f32 %v5863, %v1860
    %v5866 = vsub.f32 %v5852, %v5864
    %v5867 = vsub.f32 %v5853, %v5865
    %v5868 = vmul.f32 %v5866, %v5866
    %v5869 = vmul.f32 %v5867, %v5867
    %v5870 = vsel %vm207, %v5868, 0.0
    %5871 = vadd.xlane.f32.xlu0 %v5870
    %v5872 = vpop.xlane.xlu0 %5871
    %v5873 = vsel %vm207, %v5869, 0.0
    %5874 = vadd.xlane.f32.xlu0 %v5873
    %v5875 = vpop.xlane.xlu0 %5874
    %v5876 = vmul.f32 %v5872, %v1860
    %v5877 = vmul.f32 %v5875, %v1860
    %v5878 = vadd.f32 %v5876, 1e-05
    %v5879 = vadd.f32 %v5877, 1e-05
    %v5880 = vrsqrt.pop %v5878
    %v5881 = vrsqrt.pop %v5879
    %v5882 = vmul.f32 %v5866, %v5880
    %v5883 = vmul.f32 %v5867, %v5881
    %v5885 = vlaneseq
    %v5886 = vshrl.u32 %v5885, 7
    %v5887 = vsub.s32 0, %v5886
    %v5888 = vrot.slane %v5855, %v5887
    %v5890 = vmul.f32 %v5882, %v5888
    %v5891 = vmul.f32 %v5883, %v5888
    %v5893 = vlaneseq
    %v5894 = vshrl.u32 %v5893, 7
    %v5895 = vsub.s32 0, %v5894
    %v5896 = vrot.slane %v5857, %v5895
    %v5898 = vadd.f32 %v5890, %v5896
    %v5899 = vadd.f32 %v5891, %v5896
    %v5900 = vpack.c.bf16 %v5899, %v5898
    %s5901 = scalar_lea.vmem %s15, 512
    %v5902 = vld [vmem:[%s5901] sm:$0xff]
    %v5903 = vld [vmem:[%s5901 + $0x8] sm:$0xff]
    %v5904 = vld [vmem:[%s5901 + $0x10] sm:$0xff]
    %v5905 = vld [vmem:[%s5901 + $0x18] sm:$0xff]
    %v5906 = vld [vmem:[%s5901 + $0x20] sm:$0xff]
    %v5907 = vld [vmem:[%s5901 + $0x28] sm:$0xff]
    %v5908 = vld [vmem:[%s5901 + $0x30] sm:$0xff]
    %v5909 = vld [vmem:[%s5901 + $0x38] sm:$0xff]
    %v5910 = vld [vmem:[%s5901 + $0x40] sm:$0xff]
    %v5911 = vld [vmem:[%s5901 + $0x48] sm:$0xff]
    %v5912 = vld [vmem:[%s5901 + $0x50] sm:$0xff]
    %v5913 = vld [vmem:[%s5901 + $0x58] sm:$0xff]
    %v5914 = vld [vmem:[%s5901 + $0x60] sm:$0xff]
    %v5915 = vld [vmem:[%s5901 + $0x68] sm:$0xff]
    %v5916 = vld [vmem:[%s5901 + $0x70] sm:$0xff]
    %v5917 = vld [vmem:[%s5901 + $0x78] sm:$0xff]
    %v5918 = vld [vmem:[%s5901 + $0x80] sm:$0xff]
    %v5919 = vld [vmem:[%s5901 + $0x88] sm:$0xff]
    %v5920 = vld [vmem:[%s5901 + $0x90] sm:$0xff]
    %v5921 = vld [vmem:[%s5901 + $0x98] sm:$0xff]
    %v5922 = vld [vmem:[%s5901 + $0xa0] sm:$0xff]
    %v5923 = vld [vmem:[%s5901 + $0xa8] sm:$0xff]
    %v5924 = vld [vmem:[%s5901 + $0xb0] sm:$0xff]
    %v5925 = vld [vmem:[%s5901 + $0xb8] sm:$0xff]
    %v5926 = vld [vmem:[%s5901 + $0xc0] sm:$0xff]
    %v5927 = vld [vmem:[%s5901 + $0xc8] sm:$0xff]
    %v5928 = vld [vmem:[%s5901 + $0xd0] sm:$0xff]
    %v5929 = vld [vmem:[%s5901 + $0xd8] sm:$0xff]
    %v5930 = vld [vmem:[%s5901 + $0xe0] sm:$0xff]
    %v5931 = vld [vmem:[%s5901 + $0xe8] sm:$0xff]
    %v5932 = vld [vmem:[%s5901 + $0xf0] sm:$0xff]
    %v5933 = vld [vmem:[%s5901 + $0xf8] sm:$0xff]
    %v5934 = vld [vmem:[%s5901 + $0x100] sm:$0xff]
    %v5935 = vld [vmem:[%s5901 + $0x108] sm:$0xff]
    %v5936 = vld [vmem:[%s5901 + $0x110] sm:$0xff]
    %v5937 = vld [vmem:[%s5901 + $0x118] sm:$0xff]
    %v5938 = vld [vmem:[%s5901 + $0x120] sm:$0xff]
    %v5939 = vld [vmem:[%s5901 + $0x128] sm:$0xff]
    %v5940 = vld [vmem:[%s5901 + $0x130] sm:$0xff]
    %v5941 = vld [vmem:[%s5901 + $0x138] sm:$0xff]
    %v5942 = vld [vmem:[%s5901 + $0x140] sm:$0xff]
    %v5943 = vld [vmem:[%s5901 + $0x148] sm:$0xff]
    %v5944 = vld [vmem:[%s5901 + $0x150] sm:$0xff]
    %v5945 = vld [vmem:[%s5901 + $0x158] sm:$0xff]
    %v5946 = vld [vmem:[%s5901 + $0x160] sm:$0xff]
    %v5947 = vld [vmem:[%s5901 + $0x168] sm:$0xff]
    %v5948 = vld [vmem:[%s5901 + $0x170] sm:$0xff]
    %v5949 = vld [vmem:[%s5901 + $0x178] sm:$0xff]
    %v5950 = vld [vmem:[%s5901 + $0x180] sm:$0xff]
    %v5951 = vld [vmem:[%s5901 + $0x188] sm:$0xff]
    %v5952 = vld [vmem:[%s5901 + $0x190] sm:$0xff]
    %v5953 = vld [vmem:[%s5901 + $0x198] sm:$0xff]
    %v5954 = vld [vmem:[%s5901 + $0x1a0] sm:$0xff]
    %v5955 = vld [vmem:[%s5901 + $0x1a8] sm:$0xff]
    %v5956 = vld [vmem:[%s5901 + $0x1b0] sm:$0xff]
    %v5957 = vld [vmem:[%s5901 + $0x1b8] sm:$0xff]
    %v5958 = vld [vmem:[%s5901 + $0x1c0] sm:$0xff]
    %v5959 = vld [vmem:[%s5901 + $0x1c8] sm:$0xff]
    %v5960 = vld [vmem:[%s5901 + $0x1d0] sm:$0xff]
    %v5961 = vld [vmem:[%s5901 + $0x1d8] sm:$0xff]
    %v5962 = vld [vmem:[%s5901 + $0x1e0] sm:$0xff]
    %v5963 = vld [vmem:[%s5901 + $0x1e8] sm:$0xff]
    %v5964 = vld [vmem:[%s5901 + $0x1f0] sm:$0xff]
    %v5965 = vld [vmem:[%s5901 + $0x1f8] sm:$0xff]
    %s5966 = scalar_lea.vmem %s16, 16
    %v5967 = vld [vmem:[%s5966] sm:$0xff]
    %v5968 = vld [vmem:[%s5966 + $0x8] sm:$0xff]
    %v5971 = vlaneseq
    %v5972 = vshrl.u32 %v5971, 7
    %v5973 = vsub.s32 0, %v5972
    %v5974 = vrot.slane %v5967, %v5973
    %v5975 = vlaneseq
    %v5976 = vshrl.u32 %v5975, 7
    %v5977 = vsub.s32 1, %v5976
    %v5978 = vrot.slane %v5967, %v5977
    %v5979 = vlaneseq
    %v5980 = vshrl.u32 %v5979, 7
    %v5981 = vsub.s32 2, %v5980
    %v5982 = vrot.slane %v5967, %v5981
    %v5983 = vlaneseq
    %v5984 = vshrl.u32 %v5983, 7
    %v5985 = vsub.s32 3, %v5984
    %v5986 = vrot.slane %v5967, %v5985
    %v5987 = vlaneseq
    %v5988 = vshrl.u32 %v5987, 7
    %v5989 = vsub.s32 4, %v5988
    %v5990 = vrot.slane %v5967, %v5989
    %v5991 = vlaneseq
    %v5992 = vshrl.u32 %v5991, 7
    %v5993 = vsub.s32 5, %v5992
    %v5994 = vrot.slane %v5967, %v5993
    %v5995 = vlaneseq
    %v5996 = vshrl.u32 %v5995, 7
    %v5997 = vsub.s32 6, %v5996
    %v5998 = vrot.slane %v5967, %v5997
    %v5999 = vlaneseq
    %v6000 = vshrl.u32 %v5999, 7
    %v6001 = vsub.s32 7, %v6000
    %v6002 = vrot.slane %v5967, %v6001
    %v6003 = vlaneseq
    %v6004 = vshrl.u32 %v6003, 7
    %v6005 = vsub.s32 0, %v6004
    %v6006 = vrot.slane %v5968, %v6005
    %v6007 = vlaneseq
    %v6008 = vshrl.u32 %v6007, 7
    %v6009 = vsub.s32 1, %v6008
    %v6010 = vrot.slane %v5968, %v6009
    %v6011 = vlaneseq
    %v6012 = vshrl.u32 %v6011, 7
    %v6013 = vsub.s32 2, %v6012
    %v6014 = vrot.slane %v5968, %v6013
    %v6015 = vlaneseq
    %v6016 = vshrl.u32 %v6015, 7
    %v6017 = vsub.s32 3, %v6016
    %v6018 = vrot.slane %v5968, %v6017
    %v6019 = vlaneseq
    %v6020 = vshrl.u32 %v6019, 7
    %v6021 = vsub.s32 4, %v6020
    %v6022 = vrot.slane %v5968, %v6021
    %v6023 = vlaneseq
    %v6024 = vshrl.u32 %v6023, 7
    %v6025 = vsub.s32 5, %v6024
    %v6026 = vrot.slane %v5968, %v6025
    %v6027 = vlaneseq
    %v6028 = vshrl.u32 %v6027, 7
    %v6029 = vsub.s32 6, %v6028
    %v6030 = vrot.slane %v5968, %v6029
    %v6031 = vlaneseq
    %v6032 = vshrl.u32 %v6031, 7
    %v6033 = vsub.s32 7, %v6032
    %v6034 = vrot.slane %v5968, %v6033
    %v6115 = vunpack.c.l.b16 %v5902
    %v6116 = vunpack.c.h.b16 %v5902
    %v6117 = vunpack.c.l.b16 %v5903
    %v6118 = vunpack.c.h.b16 %v5903
    %v6119 = vunpack.c.l.b16 %v5904
    %v6120 = vunpack.c.h.b16 %v5904
    %v6121 = vunpack.c.l.b16 %v5905
    %v6122 = vunpack.c.h.b16 %v5905
    %v6123 = vunpack.c.l.b16 %v5906
    %v6124 = vunpack.c.h.b16 %v5906
    %v6125 = vunpack.c.l.b16 %v5907
    %v6126 = vunpack.c.h.b16 %v5907
    %v6127 = vunpack.c.l.b16 %v5908
    %v6128 = vunpack.c.h.b16 %v5908
    %v6129 = vunpack.c.l.b16 %v5909
    %v6130 = vunpack.c.h.b16 %v5909
    %v6131 = vunpack.c.l.b16 %v5910
    %v6132 = vunpack.c.h.b16 %v5910
    %v6133 = vunpack.c.l.b16 %v5911
    %v6134 = vunpack.c.h.b16 %v5911
    %v6135 = vunpack.c.l.b16 %v5912
    %v6136 = vunpack.c.h.b16 %v5912
    %v6137 = vunpack.c.l.b16 %v5913
    %v6138 = vunpack.c.h.b16 %v5913
    %v6139 = vunpack.c.l.b16 %v5914
    %v6140 = vunpack.c.h.b16 %v5914
    %v6141 = vunpack.c.l.b16 %v5915
    %v6142 = vunpack.c.h.b16 %v5915
    %v6143 = vunpack.c.l.b16 %v5916
    %v6144 = vunpack.c.h.b16 %v5916
    %v6145 = vunpack.c.l.b16 %v5917
    %v6146 = vunpack.c.h.b16 %v5917
    %v6147 = vunpack.c.l.b16 %v5918
    %v6148 = vunpack.c.h.b16 %v5918
    %v6149 = vunpack.c.l.b16 %v5919
    %v6150 = vunpack.c.h.b16 %v5919
    %v6151 = vunpack.c.l.b16 %v5920
    %v6152 = vunpack.c.h.b16 %v5920
    %v6153 = vunpack.c.l.b16 %v5921
    %v6154 = vunpack.c.h.b16 %v5921
    %v6155 = vunpack.c.l.b16 %v5922
    %v6156 = vunpack.c.h.b16 %v5922
    %v6157 = vunpack.c.l.b16 %v5923
    %v6158 = vunpack.c.h.b16 %v5923
    %v6159 = vunpack.c.l.b16 %v5924
    %v6160 = vunpack.c.h.b16 %v5924
    %v6161 = vunpack.c.l.b16 %v5925
    %v6162 = vunpack.c.h.b16 %v5925
    %v6163 = vunpack.c.l.b16 %v5926
    %v6164 = vunpack.c.h.b16 %v5926
    %v6165 = vunpack.c.l.b16 %v5927
    %v6166 = vunpack.c.h.b16 %v5927
    %v6167 = vunpack.c.l.b16 %v5928
    %v6168 = vunpack.c.h.b16 %v5928
    %v6169 = vunpack.c.l.b16 %v5929
    %v6170 = vunpack.c.h.b16 %v5929
    %v6171 = vunpack.c.l.b16 %v5930
    %v6172 = vunpack.c.h.b16 %v5930
    %v6173 = vunpack.c.l.b16 %v5931
    %v6174 = vunpack.c.h.b16 %v5931
    %v6175 = vunpack.c.l.b16 %v5932
    %v6176 = vunpack.c.h.b16 %v5932
    %v6177 = vunpack.c.l.b16 %v5933
    %v6178 = vunpack.c.h.b16 %v5933
    %v6179 = vunpack.c.l.b16 %v5934
    %v6180 = vunpack.c.h.b16 %v5934
    %v6181 = vunpack.c.l.b16 %v5935
    %v6182 = vunpack.c.h.b16 %v5935
    %v6183 = vunpack.c.l.b16 %v5936
    %v6184 = vunpack.c.h.b16 %v5936
    %v6185 = vunpack.c.l.b16 %v5937
    %v6186 = vunpack.c.h.b16 %v5937
    %v6187 = vunpack.c.l.b16 %v5938
    %v6188 = vunpack.c.h.b16 %v5938
    %v6189 = vunpack.c.l.b16 %v5939
    %v6190 = vunpack.c.h.b16 %v5939
    %v6191 = vunpack.c.l.b16 %v5940
    %v6192 = vunpack.c.h.b16 %v5940
    %v6193 = vunpack.c.l.b16 %v5941
    %v6194 = vunpack.c.h.b16 %v5941
    %v6195 = vunpack.c.l.b16 %v5942
    %v6196 = vunpack.c.h.b16 %v5942
    %v6197 = vunpack.c.l.b16 %v5943
    %v6198 = vunpack.c.h.b16 %v5943
    %v6199 = vunpack.c.l.b16 %v5944
    %v6200 = vunpack.c.h.b16 %v5944
    %v6201 = vunpack.c.l.b16 %v5945
    %v6202 = vunpack.c.h.b16 %v5945
    %v6203 = vunpack.c.l.b16 %v5946
    %v6204 = vunpack.c.h.b16 %v5946
    %v6205 = vunpack.c.l.b16 %v5947
    %v6206 = vunpack.c.h.b16 %v5947
    %v6207 = vunpack.c.l.b16 %v5948
    %v6208 = vunpack.c.h.b16 %v5948
    %v6209 = vunpack.c.l.b16 %v5949
    %v6210 = vunpack.c.h.b16 %v5949
    %v6211 = vunpack.c.l.b16 %v5950
    %v6212 = vunpack.c.h.b16 %v5950
    %v6213 = vunpack.c.l.b16 %v5951
    %v6214 = vunpack.c.h.b16 %v5951
    %v6215 = vunpack.c.l.b16 %v5952
    %v6216 = vunpack.c.h.b16 %v5952
    %v6217 = vunpack.c.l.b16 %v5953
    %v6218 = vunpack.c.h.b16 %v5953
    %v6219 = vunpack.c.l.b16 %v5954
    %v6220 = vunpack.c.h.b16 %v5954
    %v6221 = vunpack.c.l.b16 %v5955
    %v6222 = vunpack.c.h.b16 %v5955
    %v6223 = vunpack.c.l.b16 %v5956
    %v6224 = vunpack.c.h.b16 %v5956
    %v6225 = vunpack.c.l.b16 %v5957
    %v6226 = vunpack.c.h.b16 %v5957
    %v6227 = vunpack.c.l.b16 %v5958
    %v6228 = vunpack.c.h.b16 %v5958
    %v6229 = vunpack.c.l.b16 %v5959
    %v6230 = vunpack.c.h.b16 %v5959
    %v6231 = vunpack.c.l.b16 %v5960
    %v6232 = vunpack.c.h.b16 %v5960
    %v6233 = vunpack.c.l.b16 %v5961
    %v6234 = vunpack.c.h.b16 %v5961
    %v6235 = vunpack.c.l.b16 %v5962
    %v6236 = vunpack.c.h.b16 %v5962
    %v6237 = vunpack.c.l.b16 %v5963
    %v6238 = vunpack.c.h.b16 %v5963
    %v6239 = vunpack.c.l.b16 %v5964
    %v6240 = vunpack.c.h.b16 %v5964
    %v6241 = vunpack.c.l.b16 %v5965
    %v6242 = vunpack.c.h.b16 %v5965
    %v6243 = vpack.c.b16 %v6131, %v6115
    %v6244 = vpack.c.b16 %v6132, %v6116
    %v6245 = vpack.c.b16 %v6133, %v6117
    %v6246 = vpack.c.b16 %v6134, %v6118
    %v6247 = vpack.c.b16 %v6135, %v6119
    %v6248 = vpack.c.b16 %v6136, %v6120
    %v6249 = vpack.c.b16 %v6137, %v6121
    %v6250 = vpack.c.b16 %v6138, %v6122
    %v6251 = vpack.c.b16 %v6139, %v6123
    %v6252 = vpack.c.b16 %v6140, %v6124
    %v6253 = vpack.c.b16 %v6141, %v6125
    %v6254 = vpack.c.b16 %v6142, %v6126
    %v6255 = vpack.c.b16 %v6143, %v6127
    %v6256 = vpack.c.b16 %v6144, %v6128
    %v6257 = vpack.c.b16 %v6145, %v6129
    %v6258 = vpack.c.b16 %v6146, %v6130
    %v6259 = vpack.c.b16 %v6163, %v6147
    %v6260 = vpack.c.b16 %v6164, %v6148
    %v6261 = vpack.c.b16 %v6165, %v6149
    %v6262 = vpack.c.b16 %v6166, %v6150
    %v6263 = vpack.c.b16 %v6167, %v6151
    %v6264 = vpack.c.b16 %v6168, %v6152
    %v6265 = vpack.c.b16 %v6169, %v6153
    %v6266 = vpack.c.b16 %v6170, %v6154
    %v6267 = vpack.c.b16 %v6171, %v6155
    %v6268 = vpack.c.b16 %v6172, %v6156
    %v6269 = vpack.c.b16 %v6173, %v6157
    %v6270 = vpack.c.b16 %v6174, %v6158
    %v6271 = vpack.c.b16 %v6175, %v6159
    %v6272 = vpack.c.b16 %v6176, %v6160
    %v6273 = vpack.c.b16 %v6177, %v6161
    %v6274 = vpack.c.b16 %v6178, %v6162
    %v6275 = vpack.c.b16 %v6195, %v6179
    %v6276 = vpack.c.b16 %v6196, %v6180
    %v6277 = vpack.c.b16 %v6197, %v6181
    %v6278 = vpack.c.b16 %v6198, %v6182
    %v6279 = vpack.c.b16 %v6199, %v6183
    %v6280 = vpack.c.b16 %v6200, %v6184
    %v6281 = vpack.c.b16 %v6201, %v6185
    %v6282 = vpack.c.b16 %v6202, %v6186
    %v6283 = vpack.c.b16 %v6203, %v6187
    %v6284 = vpack.c.b16 %v6204, %v6188
    %v6285 = vpack.c.b16 %v6205, %v6189
    %v6286 = vpack.c.b16 %v6206, %v6190
    %v6287 = vpack.c.b16 %v6207, %v6191
    %v6288 = vpack.c.b16 %v6208, %v6192
    %v6289 = vpack.c.b16 %v6209, %v6193
    %v6290 = vpack.c.b16 %v6210, %v6194
    %v6291 = vpack.c.b16 %v6227, %v6211
    %v6292 = vpack.c.b16 %v6228, %v6212
    %v6293 = vpack.c.b16 %v6229, %v6213
    %v6294 = vpack.c.b16 %v6230, %v6214
    %v6295 = vpack.c.b16 %v6231, %v6215
    %v6296 = vpack.c.b16 %v6232, %v6216
    %v6297 = vpack.c.b16 %v6233, %v6217
    %v6298 = vpack.c.b16 %v6234, %v6218
    %v6299 = vpack.c.b16 %v6235, %v6219
    %v6300 = vpack.c.b16 %v6236, %v6220
    %v6301 = vpack.c.b16 %v6237, %v6221
    %v6302 = vpack.c.b16 %v6238, %v6222
    %v6303 = vpack.c.b16 %v6239, %v6223
    %v6304 = vpack.c.b16 %v6240, %v6224
    %v6305 = vpack.c.b16 %v6241, %v6225
    %v6306 = vpack.c.b16 %v6242, %v6226
    %v6372 = vsel %vm207, %v5900, 0
    %6374 = vmatprep.subr.bf16.mxu0 0
    %6375 = vmatpush1.bf16.msra.mxu0 0
    %6376 = vmatprep.subr.bf16.mxu0 0
    %6377 = vmatpush1.bf16.msra.mxu0 0
    %6378 = vmatprep.subr.bf16.mxu0 0
    %6379 = vmatpush1.bf16.msra.mxu0 0
    %6380 = vmatprep.subr.bf16.mxu0 0
    %6381 = vmatpush1.bf16.msra.mxu0 0
    %6382 = vmatprep.subr.bf16.mxu0 %v6292
    %6383 = vmatpush1.bf16.msra.mxu0 %v6291
    %6384 = vmatprep.subr.bf16.mxu0 %v6276
    %6385 = vmatpush1.bf16.msra.mxu0 %v6275
    %6386 = vmatprep.subr.bf16.mxu0 %v6260
    %6387 = vmatpush1.bf16.msra.mxu0 %v6259
    %6388 = vmatprep.subr.bf16.mxu0 %v6244
    %6389 = vmatpush1.bf16.msra.mxu0 %v6243
    %6390 = vmatprep.subr.bf16.mxu0 0
    %6391 = vmatpush2.bf16.msra.mxu0 0
    %6392 = vmatprep.subr.bf16.mxu0 0
    %6393 = vmatpush2.bf16.msra.mxu0 0
    %6394 = vmatprep.subr.bf16.mxu0 0
    %6395 = vmatpush2.bf16.msra.mxu0 0
    %6396 = vmatprep.subr.bf16.mxu0 0
    %6397 = vmatpush2.bf16.msra.mxu0 0
    %6398 = vmatprep.subr.bf16.mxu0 0
    %6399 = vmatpush2.bf16.msra.mxu0 0
    %6400 = vmatprep.subr.bf16.mxu0 0
    %6401 = vmatpush2.bf16.msra.mxu0 0
    %6402 = vmatprep.subr.bf16.mxu0 0
    %6403 = vmatpush2.bf16.msra.mxu0 0
    %6404 = vmatprep.subr.bf16.mxu0 0
    %6405 = vmatpush2.bf16.msra.mxu0 0
    %6406 = vmatprep.mubr.bf16.mxu0 0
    %6407 = vmatmul.mubr.bf16.gmra.mxu0 %v6372
    %v6408 = vpop.f32.mrf.mxu0
    %v6409 = vadd.f32 %v5974, %v6408
    %v6410 = vpop.f32.mrf.mxu0
    %v6411 = vadd.f32 %v5978, %v6410
    %v6412 = vpop.f32.mrf.mxu0
    %v6413 = vadd.f32 %v5974, %v6412
    %v6414 = vpop.f32.mrf.mxu0
    %v6415 = vadd.f32 %v5978, %v6414
    %6416 = vdwg.mxu0
    %6417 = vmatprep.subr.bf16.mxu0 0
    %6418 = vmatpush1.bf16.msra.mxu0 0
    %6419 = vmatprep.subr.bf16.mxu0 0
    %6420 = vmatpush1.bf16.msra.mxu0 0
    %6421 = vmatprep.subr.bf16.mxu0 0
    %6422 = vmatpush1.bf16.msra.mxu0 0
    %6423 = vmatprep.subr.bf16.mxu0 0
    %6424 = vmatpush1.bf16.msra.mxu0 0
    %6425 = vmatprep.subr.bf16.mxu0 %v6294
    %6426 = vmatpush1.bf16.msra.mxu0 %v6293
    %6427 = vmatprep.subr.bf16.mxu0 %v6278
    %6428 = vmatpush1.bf16.msra.mxu0 %v6277
    %6429 = vmatprep.subr.bf16.mxu0 %v6262
    %6430 = vmatpush1.bf16.msra.mxu0 %v6261
    %6431 = vmatprep.subr.bf16.mxu0 %v6246
    %6432 = vmatpush1.bf16.msra.mxu0 %v6245
    %6433 = vmatprep.subr.bf16.mxu0 0
    %6434 = vmatpush2.bf16.msra.mxu0 0
    %6435 = vmatprep.subr.bf16.mxu0 0
    %6436 = vmatpush2.bf16.msra.mxu0 0
    %6437 = vmatprep.subr.bf16.mxu0 0
    %6438 = vmatpush2.bf16.msra.mxu0 0
    %6439 = vmatprep.subr.bf16.mxu0 0
    %6440 = vmatpush2.bf16.msra.mxu0 0
    %6441 = vmatprep.subr.bf16.mxu0 0
    %6442 = vmatpush2.bf16.msra.mxu0 0
    %6443 = vmatprep.subr.bf16.mxu0 0
    %6444 = vmatpush2.bf16.msra.mxu0 0
    %6445 = vmatprep.subr.bf16.mxu0 0
    %6446 = vmatpush2.bf16.msra.mxu0 0
    %6447 = vmatprep.subr.bf16.mxu0 0
    %6448 = vmatpush2.bf16.msra.mxu0 0
    %6449 = vmatprep.mubr.bf16.mxu0 0
    %6450 = vmatmul.mubr.bf16.gmra.mxu0 %v6372
    %v6451 = vpop.f32.mrf.mxu0
    %v6452 = vadd.f32 %v5982, %v6451
    %v6453 = vpop.f32.mrf.mxu0
    %v6454 = vadd.f32 %v5986, %v6453
    %v6455 = vpop.f32.mrf.mxu0
    %v6456 = vadd.f32 %v5982, %v6455
    %v6457 = vpop.f32.mrf.mxu0
    %v6458 = vadd.f32 %v5986, %v6457
    %6459 = vdwg.mxu0
    %6460 = vmatprep.subr.bf16.mxu0 0
    %6461 = vmatpush1.bf16.msra.mxu0 0
    %6462 = vmatprep.subr.bf16.mxu0 0
    %6463 = vmatpush1.bf16.msra.mxu0 0
    %6464 = vmatprep.subr.bf16.mxu0 0
    %6465 = vmatpush1.bf16.msra.mxu0 0
    %6466 = vmatprep.subr.bf16.mxu0 0
    %6467 = vmatpush1.bf16.msra.mxu0 0
    %6468 = vmatprep.subr.bf16.mxu0 %v6296
    %6469 = vmatpush1.bf16.msra.mxu0 %v6295
    %6470 = vmatprep.subr.bf16.mxu0 %v6280
    %6471 = vmatpush1.bf16.msra.mxu0 %v6279
    %6472 = vmatprep.subr.bf16.mxu0 %v6264
    %6473 = vmatpush1.bf16.msra.mxu0 %v6263
    %6474 = vmatprep.subr.bf16.mxu0 %v6248
    %6475 = vmatpush1.bf16.msra.mxu0 %v6247
    %6476 = vmatprep.subr.bf16.mxu0 0
    %6477 = vmatpush2.bf16.msra.mxu0 0
    %6478 = vmatprep.subr.bf16.mxu0 0
    %6479 = vmatpush2.bf16.msra.mxu0 0
    %6480 = vmatprep.subr.bf16.mxu0 0
    %6481 = vmatpush2.bf16.msra.mxu0 0
    %6482 = vmatprep.subr.bf16.mxu0 0
    %6483 = vmatpush2.bf16.msra.mxu0 0
    %6484 = vmatprep.subr.bf16.mxu0 0
    %6485 = vmatpush2.bf16.msra.mxu0 0
    %6486 = vmatprep.subr.bf16.mxu0 0
    %6487 = vmatpush2.bf16.msra.mxu0 0
    %6488 = vmatprep.subr.bf16.mxu0 0
    %6489 = vmatpush2.bf16.msra.mxu0 0
    %6490 = vmatprep.subr.bf16.mxu0 0
    %6491 = vmatpush2.bf16.msra.mxu0 0
    %6492 = vmatprep.mubr.bf16.mxu0 0
    %6493 = vmatmul.mubr.bf16.gmra.mxu0 %v6372
    %v6494 = vpop.f32.mrf.mxu0
    %v6495 = vadd.f32 %v5990, %v6494
    %v6496 = vpop.f32.mrf.mxu0
    %v6497 = vadd.f32 %v5994, %v6496
    %v6498 = vpop.f32.mrf.mxu0
    %v6499 = vadd.f32 %v5990, %v6498
    %v6500 = vpop.f32.mrf.mxu0
    %v6501 = vadd.f32 %v5994, %v6500
    %6502 = vdwg.mxu0
    %6503 = vmatprep.subr.bf16.mxu0 0
    %6504 = vmatpush1.bf16.msra.mxu0 0
    %6505 = vmatprep.subr.bf16.mxu0 0
    %6506 = vmatpush1.bf16.msra.mxu0 0
    %6507 = vmatprep.subr.bf16.mxu0 0
    %6508 = vmatpush1.bf16.msra.mxu0 0
    %6509 = vmatprep.subr.bf16.mxu0 0
    %6510 = vmatpush1.bf16.msra.mxu0 0
    %6511 = vmatprep.subr.bf16.mxu0 %v6298
    %6512 = vmatpush1.bf16.msra.mxu0 %v6297
    %6513 = vmatprep.subr.bf16.mxu0 %v6282
    %6514 = vmatpush1.bf16.msra.mxu0 %v6281
    %6515 = vmatprep.subr.bf16.mxu0 %v6266
    %6516 = vmatpush1.bf16.msra.mxu0 %v6265
    %6517 = vmatprep.subr.bf16.mxu0 %v6250
    %6518 = vmatpush1.bf16.msra.mxu0 %v6249
    %6519 = vmatprep.subr.bf16.mxu0 0
    %6520 = vmatpush2.bf16.msra.mxu0 0
    %6521 = vmatprep.subr.bf16.mxu0 0
    %6522 = vmatpush2.bf16.msra.mxu0 0
    %6523 = vmatprep.subr.bf16.mxu0 0
    %6524 = vmatpush2.bf16.msra.mxu0 0
    %6525 = vmatprep.subr.bf16.mxu0 0
    %6526 = vmatpush2.bf16.msra.mxu0 0
    %6527 = vmatprep.subr.bf16.mxu0 0
    %6528 = vmatpush2.bf16.msra.mxu0 0
    %6529 = vmatprep.subr.bf16.mxu0 0
    %6530 = vmatpush2.bf16.msra.mxu0 0
    %6531 = vmatprep.subr.bf16.mxu0 0
    %6532 = vmatpush2.bf16.msra.mxu0 0
    %6533 = vmatprep.subr.bf16.mxu0 0
    %6534 = vmatpush2.bf16.msra.mxu0 0
    %6535 = vmatprep.mubr.bf16.mxu0 0
    %6536 = vmatmul.mubr.bf16.gmra.mxu0 %v6372
    %v6537 = vpop.f32.mrf.mxu0
    %v6538 = vadd.f32 %v5998, %v6537
    %v6539 = vpop.f32.mrf.mxu0
    %v6540 = vadd.f32 %v6002, %v6539
    %v6541 = vpop.f32.mrf.mxu0
    %v6542 = vadd.f32 %v5998, %v6541
    %v6543 = vpop.f32.mrf.mxu0
    %v6544 = vadd.f32 %v6002, %v6543
    %6545 = vdwg.mxu0
    %6546 = vmatprep.subr.bf16.mxu0 0
    %6547 = vmatpush1.bf16.msra.mxu0 0
    %6548 = vmatprep.subr.bf16.mxu0 0
    %6549 = vmatpush1.bf16.msra.mxu0 0
    %6550 = vmatprep.subr.bf16.mxu0 0
    %6551 = vmatpush1.bf16.msra.mxu0 0
    %6552 = vmatprep.subr.bf16.mxu0 0
    %6553 = vmatpush1.bf16.msra.mxu0 0
    %6554 = vmatprep.subr.bf16.mxu0 %v6300
    %6555 = vmatpush1.bf16.msra.mxu0 %v6299
    %6556 = vmatprep.subr.bf16.mxu0 %v6284
    %6557 = vmatpush1.bf16.msra.mxu0 %v6283
    %6558 = vmatprep.subr.bf16.mxu0 %v6268
    %6559 = vmatpush1.bf16.msra.mxu0 %v6267
    %6560 = vmatprep.subr.bf16.mxu0 %v6252
    %6561 = vmatpush1.bf16.msra.mxu0 %v6251
    %6562 = vmatprep.subr.bf16.mxu0 0
    %6563 = vmatpush2.bf16.msra.mxu0 0
    %6564 = vmatprep.subr.bf16.mxu0 0
    %6565 = vmatpush2.bf16.msra.mxu0 0
    %6566 = vmatprep.subr.bf16.mxu0 0
    %6567 = vmatpush2.bf16.msra.mxu0 0
    %6568 = vmatprep.subr.bf16.mxu0 0
    %6569 = vmatpush2.bf16.msra.mxu0 0
    %6570 = vmatprep.subr.bf16.mxu0 0
    %6571 = vmatpush2.bf16.msra.mxu0 0
    %6572 = vmatprep.subr.bf16.mxu0 0
    %6573 = vmatpush2.bf16.msra.mxu0 0
    %6574 = vmatprep.subr.bf16.mxu0 0
    %6575 = vmatpush2.bf16.msra.mxu0 0
    %6576 = vmatprep.subr.bf16.mxu0 0
    %6577 = vmatpush2.bf16.msra.mxu0 0
    %6578 = vmatprep.mubr.bf16.mxu0 0
    %6579 = vmatmul.mubr.bf16.gmra.mxu0 %v6372
    %v6580 = vpop.f32.mrf.mxu0
    %v6581 = vadd.f32 %v6006, %v6580
    %v6582 = vpop.f32.mrf.mxu0
    %v6583 = vadd.f32 %v6010, %v6582
    %v6584 = vpop.f32.mrf.mxu0
    %v6585 = vadd.f32 %v6006, %v6584
    %v6586 = vpop.f32.mrf.mxu0
    %v6587 = vadd.f32 %v6010, %v6586
    %6588 = vdwg.mxu0
    %6589 = vmatprep.subr.bf16.mxu0 0
    %6590 = vmatpush1.bf16.msra.mxu0 0
    %6591 = vmatprep.subr.bf16.mxu0 0
    %6592 = vmatpush1.bf16.msra.mxu0 0
    %6593 = vmatprep.subr.bf16.mxu0 0
    %6594 = vmatpush1.bf16.msra.mxu0 0
    %6595 = vmatprep.subr.bf16.mxu0 0
    %6596 = vmatpush1.bf16.msra.mxu0 0
    %6597 = vmatprep.subr.bf16.mxu0 %v6302
    %6598 = vmatpush1.bf16.msra.mxu0 %v6301
    %6599 = vmatprep.subr.bf16.mxu0 %v6286
    %6600 = vmatpush1.bf16.msra.mxu0 %v6285
    %6601 = vmatprep.subr.bf16.mxu0 %v6270
    %6602 = vmatpush1.bf16.msra.mxu0 %v6269
    %6603 = vmatprep.subr.bf16.mxu0 %v6254
    %6604 = vmatpush1.bf16.msra.mxu0 %v6253
    %6605 = vmatprep.subr.bf16.mxu0 0
    %6606 = vmatpush2.bf16.msra.mxu0 0
    %6607 = vmatprep.subr.bf16.mxu0 0
    %6608 = vmatpush2.bf16.msra.mxu0 0
    %6609 = vmatprep.subr.bf16.mxu0 0
    %6610 = vmatpush2.bf16.msra.mxu0 0
    %6611 = vmatprep.subr.bf16.mxu0 0
    %6612 = vmatpush2.bf16.msra.mxu0 0
    %6613 = vmatprep.subr.bf16.mxu0 0
    %6614 = vmatpush2.bf16.msra.mxu0 0
    %6615 = vmatprep.subr.bf16.mxu0 0
    %6616 = vmatpush2.bf16.msra.mxu0 0
    %6617 = vmatprep.subr.bf16.mxu0 0
    %6618 = vmatpush2.bf16.msra.mxu0 0
    %6619 = vmatprep.subr.bf16.mxu0 0
    %6620 = vmatpush2.bf16.msra.mxu0 0
    %6621 = vmatprep.mubr.bf16.mxu0 0
    %6622 = vmatmul.mubr.bf16.gmra.mxu0 %v6372
    %v6623 = vpop.f32.mrf.mxu0
    %v6624 = vadd.f32 %v6014, %v6623
    %v6625 = vpop.f32.mrf.mxu0
    %v6626 = vadd.f32 %v6018, %v6625
    %v6627 = vpop.f32.mrf.mxu0
    %v6628 = vadd.f32 %v6014, %v6627
    %v6629 = vpop.f32.mrf.mxu0
    %v6630 = vadd.f32 %v6018, %v6629
    %6631 = vdwg.mxu0
    %6632 = vmatprep.subr.bf16.mxu0 0
    %6633 = vmatpush1.bf16.msra.mxu0 0
    %6634 = vmatprep.subr.bf16.mxu0 0
    %6635 = vmatpush1.bf16.msra.mxu0 0
    %6636 = vmatprep.subr.bf16.mxu0 0
    %6637 = vmatpush1.bf16.msra.mxu0 0
    %6638 = vmatprep.subr.bf16.mxu0 0
    %6639 = vmatpush1.bf16.msra.mxu0 0
    %6640 = vmatprep.subr.bf16.mxu0 %v6304
    %6641 = vmatpush1.bf16.msra.mxu0 %v6303
    %6642 = vmatprep.subr.bf16.mxu0 %v6288
    %6643 = vmatpush1.bf16.msra.mxu0 %v6287
    %6644 = vmatprep.subr.bf16.mxu0 %v6272
    %6645 = vmatpush1.bf16.msra.mxu0 %v6271
    %6646 = vmatprep.subr.bf16.mxu0 %v6256
    %6647 = vmatpush1.bf16.msra.mxu0 %v6255
    %6648 = vmatprep.subr.bf16.mxu0 0
    %6649 = vmatpush2.bf16.msra.mxu0 0
    %6650 = vmatprep.subr.bf16.mxu0 0
    %6651 = vmatpush2.bf16.msra.mxu0 0
    %6652 = vmatprep.subr.bf16.mxu0 0
    %6653 = vmatpush2.bf16.msra.mxu0 0
    %6654 = vmatprep.subr.bf16.mxu0 0
    %6655 = vmatpush2.bf16.msra.mxu0 0
    %6656 = vmatprep.subr.bf16.mxu0 0
    %6657 = vmatpush2.bf16.msra.mxu0 0
    %6658 = vmatprep.subr.bf16.mxu0 0
    %6659 = vmatpush2.bf16.msra.mxu0 0
    %6660 = vmatprep.subr.bf16.mxu0 0
    %6661 = vmatpush2.bf16.msra.mxu0 0
    %6662 = vmatprep.subr.bf16.mxu0 0
    %6663 = vmatpush2.bf16.msra.mxu0 0
    %6664 = vmatprep.mubr.bf16.mxu0 0
    %6665 = vmatmul.mubr.bf16.gmra.mxu0 %v6372
    %v6666 = vpop.f32.mrf.mxu0
    %v6667 = vadd.f32 %v6022, %v6666
    %v6668 = vpop.f32.mrf.mxu0
    %v6669 = vadd.f32 %v6026, %v6668
    %v6670 = vpop.f32.mrf.mxu0
    %v6671 = vadd.f32 %v6022, %v6670
    %v6672 = vpop.f32.mrf.mxu0
    %v6673 = vadd.f32 %v6026, %v6672
    %6674 = vdwg.mxu0
    %6675 = vmatprep.subr.bf16.mxu0 0
    %6676 = vmatpush1.bf16.msra.mxu0 0
    %6677 = vmatprep.subr.bf16.mxu0 0
    %6678 = vmatpush1.bf16.msra.mxu0 0
    %6679 = vmatprep.subr.bf16.mxu0 0
    %6680 = vmatpush1.bf16.msra.mxu0 0
    %6681 = vmatprep.subr.bf16.mxu0 0
    %6682 = vmatpush1.bf16.msra.mxu0 0
    %6683 = vmatprep.subr.bf16.mxu0 %v6306
    %6684 = vmatpush1.bf16.msra.mxu0 %v6305
    %6685 = vmatprep.subr.bf16.mxu0 %v6290
    %6686 = vmatpush1.bf16.msra.mxu0 %v6289
    %6687 = vmatprep.subr.bf16.mxu0 %v6274
    %6688 = vmatpush1.bf16.msra.mxu0 %v6273
    %6689 = vmatprep.subr.bf16.mxu0 %v6258
    %6690 = vmatpush1.bf16.msra.mxu0 %v6257
    %6691 = vmatprep.subr.bf16.mxu0 0
    %6692 = vmatpush2.bf16.msra.mxu0 0
    %6693 = vmatprep.subr.bf16.mxu0 0
    %6694 = vmatpush2.bf16.msra.mxu0 0
    %6695 = vmatprep.subr.bf16.mxu0 0
    %6696 = vmatpush2.bf16.msra.mxu0 0
    %6697 = vmatprep.subr.bf16.mxu0 0
    %6698 = vmatpush2.bf16.msra.mxu0 0
    %6699 = vmatprep.subr.bf16.mxu0 0
    %6700 = vmatpush2.bf16.msra.mxu0 0
    %6701 = vmatprep.subr.bf16.mxu0 0
    %6702 = vmatpush2.bf16.msra.mxu0 0
    %6703 = vmatprep.subr.bf16.mxu0 0
    %6704 = vmatpush2.bf16.msra.mxu0 0
    %6705 = vmatprep.subr.bf16.mxu0 0
    %6706 = vmatpush2.bf16.msra.mxu0 0
    %6707 = vmatprep.mubr.bf16.mxu0 0
    %6708 = vmatmul.mubr.bf16.gmra.mxu0 %v6372
    %v6709 = vpop.f32.mrf.mxu0
    %v6710 = vadd.f32 %v6030, %v6709
    %v6711 = vpop.f32.mrf.mxu0
    %v6712 = vadd.f32 %v6034, %v6711
    %v6713 = vpop.f32.mrf.mxu0
    %v6714 = vadd.f32 %v6030, %v6713
    %v6715 = vpop.f32.mrf.mxu0
    %v6716 = vadd.f32 %v6034, %v6715
    %6717 = vdwg.mxu0
    %v6718 = vmax.f32 %v6409, 0.0
    %v6719 = vmax.f32 %v6411, 0.0
    %v6720 = vmax.f32 %v6452, 0.0
    %v6721 = vmax.f32 %v6454, 0.0
    %v6722 = vmax.f32 %v6495, 0.0
    %v6723 = vmax.f32 %v6497, 0.0
    %v6724 = vmax.f32 %v6538, 0.0
    %v6725 = vmax.f32 %v6540, 0.0
    %v6726 = vmax.f32 %v6581, 0.0
    %v6727 = vmax.f32 %v6583, 0.0
    %v6728 = vmax.f32 %v6624, 0.0
    %v6729 = vmax.f32 %v6626, 0.0
    %v6730 = vmax.f32 %v6667, 0.0
    %v6731 = vmax.f32 %v6669, 0.0
    %v6732 = vmax.f32 %v6710, 0.0
    %v6733 = vmax.f32 %v6712, 0.0
    %v6734 = vmax.f32 %v6413, 0.0
    %v6735 = vmax.f32 %v6415, 0.0
    %v6736 = vmax.f32 %v6456, 0.0
    %v6737 = vmax.f32 %v6458, 0.0
    %v6738 = vmax.f32 %v6499, 0.0
    %v6739 = vmax.f32 %v6501, 0.0
    %v6740 = vmax.f32 %v6542, 0.0
    %v6741 = vmax.f32 %v6544, 0.0
    %v6742 = vmax.f32 %v6585, 0.0
    %v6743 = vmax.f32 %v6587, 0.0
    %v6744 = vmax.f32 %v6628, 0.0
    %v6745 = vmax.f32 %v6630, 0.0
    %v6746 = vmax.f32 %v6671, 0.0
    %v6747 = vmax.f32 %v6673, 0.0
    %v6748 = vmax.f32 %v6714, 0.0
    %v6749 = vmax.f32 %v6716, 0.0
    %v6750 = vpack.c.bf16 %v6734, %v6718
    %v6751 = vpack.c.bf16 %v6735, %v6719
    %v6752 = vpack.c.bf16 %v6736, %v6720
    %v6753 = vpack.c.bf16 %v6737, %v6721
    %v6754 = vpack.c.bf16 %v6738, %v6722
    %v6755 = vpack.c.bf16 %v6739, %v6723
    %v6756 = vpack.c.bf16 %v6740, %v6724
    %v6757 = vpack.c.bf16 %v6741, %v6725
    %v6758 = vpack.c.bf16 %v6742, %v6726
    %v6759 = vpack.c.bf16 %v6743, %v6727
    %v6760 = vpack.c.bf16 %v6744, %v6728
    %v6761 = vpack.c.bf16 %v6745, %v6729
    %v6762 = vpack.c.bf16 %v6746, %v6730
    %v6763 = vpack.c.bf16 %v6747, %v6731
    %v6764 = vpack.c.bf16 %v6748, %v6732
    %v6765 = vpack.c.bf16 %v6749, %v6733
    %s6766 = scalar_lea.vmem %s17, 1024
    %v6767 = vld [vmem:[%s6766] sm:$0xf]
    %v6768 = vld [vmem:[%s6766 + $0x4] sm:$0xf]
    %v6769 = vld [vmem:[%s6766 + $0x8] sm:$0xf]
    %v6770 = vld [vmem:[%s6766 + $0xc] sm:$0xf]
    %v6771 = vld [vmem:[%s6766 + $0x10] sm:$0xf]
    %v6772 = vld [vmem:[%s6766 + $0x14] sm:$0xf]
    %v6773 = vld [vmem:[%s6766 + $0x18] sm:$0xf]
    %v6774 = vld [vmem:[%s6766 + $0x1c] sm:$0xf]
    %v6775 = vld [vmem:[%s6766 + $0x20] sm:$0xf]
    %v6776 = vld [vmem:[%s6766 + $0x24] sm:$0xf]
    %v6777 = vld [vmem:[%s6766 + $0x28] sm:$0xf]
    %v6778 = vld [vmem:[%s6766 + $0x2c] sm:$0xf]
    %v6779 = vld [vmem:[%s6766 + $0x30] sm:$0xf]
    %v6780 = vld [vmem:[%s6766 + $0x34] sm:$0xf]
    %v6781 = vld [vmem:[%s6766 + $0x38] sm:$0xf]
    %v6782 = vld [vmem:[%s6766 + $0x3c] sm:$0xf]
    %v6783 = vld [vmem:[%s6766 + $0x40] sm:$0xf]
    %v6784 = vld [vmem:[%s6766 + $0x44] sm:$0xf]
    %v6785 = vld [vmem:[%s6766 + $0x48] sm:$0xf]
    %v6786 = vld [vmem:[%s6766 + $0x4c] sm:$0xf]
    %v6787 = vld [vmem:[%s6766 + $0x50] sm:$0xf]
    %v6788 = vld [vmem:[%s6766 + $0x54] sm:$0xf]
    %v6789 = vld [vmem:[%s6766 + $0x58] sm:$0xf]
    %v6790 = vld [vmem:[%s6766 + $0x5c] sm:$0xf]
    %v6791 = vld [vmem:[%s6766 + $0x60] sm:$0xf]
    %v6792 = vld [vmem:[%s6766 + $0x64] sm:$0xf]
    %v6793 = vld [vmem:[%s6766 + $0x68] sm:$0xf]
    %v6794 = vld [vmem:[%s6766 + $0x6c] sm:$0xf]
    %v6795 = vld [vmem:[%s6766 + $0x70] sm:$0xf]
    %v6796 = vld [vmem:[%s6766 + $0x74] sm:$0xf]
    %v6797 = vld [vmem:[%s6766 + $0x78] sm:$0xf]
    %v6798 = vld [vmem:[%s6766 + $0x7c] sm:$0xf]
    %v6799 = vld [vmem:[%s6766 + $0x80] sm:$0xf]
    %v6800 = vld [vmem:[%s6766 + $0x84] sm:$0xf]
    %v6801 = vld [vmem:[%s6766 + $0x88] sm:$0xf]
    %v6802 = vld [vmem:[%s6766 + $0x8c] sm:$0xf]
    %v6803 = vld [vmem:[%s6766 + $0x90] sm:$0xf]
    %v6804 = vld [vmem:[%s6766 + $0x94] sm:$0xf]
    %v6805 = vld [vmem:[%s6766 + $0x98] sm:$0xf]
    %v6806 = vld [vmem:[%s6766 + $0x9c] sm:$0xf]
    %v6807 = vld [vmem:[%s6766 + $0xa0] sm:$0xf]
    %v6808 = vld [vmem:[%s6766 + $0xa4] sm:$0xf]
    %v6809 = vld [vmem:[%s6766 + $0xa8] sm:$0xf]
    %v6810 = vld [vmem:[%s6766 + $0xac] sm:$0xf]
    %v6811 = vld [vmem:[%s6766 + $0xb0] sm:$0xf]
    %v6812 = vld [vmem:[%s6766 + $0xb4] sm:$0xf]
    %v6813 = vld [vmem:[%s6766 + $0xb8] sm:$0xf]
    %v6814 = vld [vmem:[%s6766 + $0xbc] sm:$0xf]
    %v6815 = vld [vmem:[%s6766 + $0xc0] sm:$0xf]
    %v6816 = vld [vmem:[%s6766 + $0xc4] sm:$0xf]
    %v6817 = vld [vmem:[%s6766 + $0xc8] sm:$0xf]
    %v6818 = vld [vmem:[%s6766 + $0xcc] sm:$0xf]
    %v6819 = vld [vmem:[%s6766 + $0xd0] sm:$0xf]
    %v6820 = vld [vmem:[%s6766 + $0xd4] sm:$0xf]
    %v6821 = vld [vmem:[%s6766 + $0xd8] sm:$0xf]
    %v6822 = vld [vmem:[%s6766 + $0xdc] sm:$0xf]
    %v6823 = vld [vmem:[%s6766 + $0xe0] sm:$0xf]
    %v6824 = vld [vmem:[%s6766 + $0xe4] sm:$0xf]
    %v6825 = vld [vmem:[%s6766 + $0xe8] sm:$0xf]
    %v6826 = vld [vmem:[%s6766 + $0xec] sm:$0xf]
    %v6827 = vld [vmem:[%s6766 + $0xf0] sm:$0xf]
    %v6828 = vld [vmem:[%s6766 + $0xf4] sm:$0xf]
    %v6829 = vld [vmem:[%s6766 + $0xf8] sm:$0xf]
    %v6830 = vld [vmem:[%s6766 + $0xfc] sm:$0xf]
    %v6831 = vld [vmem:[%s6766 + $0x100] sm:$0xf]
    %v6832 = vld [vmem:[%s6766 + $0x104] sm:$0xf]
    %v6833 = vld [vmem:[%s6766 + $0x108] sm:$0xf]
    %v6834 = vld [vmem:[%s6766 + $0x10c] sm:$0xf]
    %v6835 = vld [vmem:[%s6766 + $0x110] sm:$0xf]
    %v6836 = vld [vmem:[%s6766 + $0x114] sm:$0xf]
    %v6837 = vld [vmem:[%s6766 + $0x118] sm:$0xf]
    %v6838 = vld [vmem:[%s6766 + $0x11c] sm:$0xf]
    %v6839 = vld [vmem:[%s6766 + $0x120] sm:$0xf]
    %v6840 = vld [vmem:[%s6766 + $0x124] sm:$0xf]
    %v6841 = vld [vmem:[%s6766 + $0x128] sm:$0xf]
    %v6842 = vld [vmem:[%s6766 + $0x12c] sm:$0xf]
    %v6843 = vld [vmem:[%s6766 + $0x130] sm:$0xf]
    %v6844 = vld [vmem:[%s6766 + $0x134] sm:$0xf]
    %v6845 = vld [vmem:[%s6766 + $0x138] sm:$0xf]
    %v6846 = vld [vmem:[%s6766 + $0x13c] sm:$0xf]
    %v6847 = vld [vmem:[%s6766 + $0x140] sm:$0xf]
    %v6848 = vld [vmem:[%s6766 + $0x144] sm:$0xf]
    %v6849 = vld [vmem:[%s6766 + $0x148] sm:$0xf]
    %v6850 = vld [vmem:[%s6766 + $0x14c] sm:$0xf]
    %v6851 = vld [vmem:[%s6766 + $0x150] sm:$0xf]
    %v6852 = vld [vmem:[%s6766 + $0x154] sm:$0xf]
    %v6853 = vld [vmem:[%s6766 + $0x158] sm:$0xf]
    %v6854 = vld [vmem:[%s6766 + $0x15c] sm:$0xf]
    %v6855 = vld [vmem:[%s6766 + $0x160] sm:$0xf]
    %v6856 = vld [vmem:[%s6766 + $0x164] sm:$0xf]
    %v6857 = vld [vmem:[%s6766 + $0x168] sm:$0xf]
    %v6858 = vld [vmem:[%s6766 + $0x16c] sm:$0xf]
    %v6859 = vld [vmem:[%s6766 + $0x170] sm:$0xf]
    %v6860 = vld [vmem:[%s6766 + $0x174] sm:$0xf]
    %v6861 = vld [vmem:[%s6766 + $0x178] sm:$0xf]
    %v6862 = vld [vmem:[%s6766 + $0x17c] sm:$0xf]
    %v6863 = vld [vmem:[%s6766 + $0x180] sm:$0xf]
    %v6864 = vld [vmem:[%s6766 + $0x184] sm:$0xf]
    %v6865 = vld [vmem:[%s6766 + $0x188] sm:$0xf]
    %v6866 = vld [vmem:[%s6766 + $0x18c] sm:$0xf]
    %v6867 = vld [vmem:[%s6766 + $0x190] sm:$0xf]
    %v6868 = vld [vmem:[%s6766 + $0x194] sm:$0xf]
    %v6869 = vld [vmem:[%s6766 + $0x198] sm:$0xf]
    %v6870 = vld [vmem:[%s6766 + $0x19c] sm:$0xf]
    %v6871 = vld [vmem:[%s6766 + $0x1a0] sm:$0xf]
    %v6872 = vld [vmem:[%s6766 + $0x1a4] sm:$0xf]
    %v6873 = vld [vmem:[%s6766 + $0x1a8] sm:$0xf]
    %v6874 = vld [vmem:[%s6766 + $0x1ac] sm:$0xf]
    %v6875 = vld [vmem:[%s6766 + $0x1b0] sm:$0xf]
    %v6876 = vld [vmem:[%s6766 + $0x1b4] sm:$0xf]
    %v6877 = vld [vmem:[%s6766 + $0x1b8] sm:$0xf]
    %v6878 = vld [vmem:[%s6766 + $0x1bc] sm:$0xf]
    %v6879 = vld [vmem:[%s6766 + $0x1c0] sm:$0xf]
    %v6880 = vld [vmem:[%s6766 + $0x1c4] sm:$0xf]
    %v6881 = vld [vmem:[%s6766 + $0x1c8] sm:$0xf]
    %v6882 = vld [vmem:[%s6766 + $0x1cc] sm:$0xf]
    %v6883 = vld [vmem:[%s6766 + $0x1d0] sm:$0xf]
    %v6884 = vld [vmem:[%s6766 + $0x1d4] sm:$0xf]
    %v6885 = vld [vmem:[%s6766 + $0x1d8] sm:$0xf]
    %v6886 = vld [vmem:[%s6766 + $0x1dc] sm:$0xf]
    %v6887 = vld [vmem:[%s6766 + $0x1e0] sm:$0xf]
    %v6888 = vld [vmem:[%s6766 + $0x1e4] sm:$0xf]
    %v6889 = vld [vmem:[%s6766 + $0x1e8] sm:$0xf]
    %v6890 = vld [vmem:[%s6766 + $0x1ec] sm:$0xf]
    %v6891 = vld [vmem:[%s6766 + $0x1f0] sm:$0xf]
    %v6892 = vld [vmem:[%s6766 + $0x1f4] sm:$0xf]
    %v6893 = vld [vmem:[%s6766 + $0x1f8] sm:$0xf]
    %v6894 = vld [vmem:[%s6766 + $0x1fc] sm:$0xf]
    %v6895 = vld [vmem:[%s6766 + $0x200] sm:$0xf]
    %v6896 = vld [vmem:[%s6766 + $0x204] sm:$0xf]
    %v6897 = vld [vmem:[%s6766 + $0x208] sm:$0xf]
    %v6898 = vld [vmem:[%s6766 + $0x20c] sm:$0xf]
    %v6899 = vld [vmem:[%s6766 + $0x210] sm:$0xf]
    %v6900 = vld [vmem:[%s6766 + $0x214] sm:$0xf]
    %v6901 = vld [vmem:[%s6766 + $0x218] sm:$0xf]
    %v6902 = vld [vmem:[%s6766 + $0x21c] sm:$0xf]
    %v6903 = vld [vmem:[%s6766 + $0x220] sm:$0xf]
    %v6904 = vld [vmem:[%s6766 + $0x224] sm:$0xf]
    %v6905 = vld [vmem:[%s6766 + $0x228] sm:$0xf]
    %v6906 = vld [vmem:[%s6766 + $0x22c] sm:$0xf]
    %v6907 = vld [vmem:[%s6766 + $0x230] sm:$0xf]
    %v6908 = vld [vmem:[%s6766 + $0x234] sm:$0xf]
    %v6909 = vld [vmem:[%s6766 + $0x238] sm:$0xf]
    %v6910 = vld [vmem:[%s6766 + $0x23c] sm:$0xf]
    %v6911 = vld [vmem:[%s6766 + $0x240] sm:$0xf]
    %v6912 = vld [vmem:[%s6766 + $0x244] sm:$0xf]
    %v6913 = vld [vmem:[%s6766 + $0x248] sm:$0xf]
    %v6914 = vld [vmem:[%s6766 + $0x24c] sm:$0xf]
    %v6915 = vld [vmem:[%s6766 + $0x250] sm:$0xf]
    %v6916 = vld [vmem:[%s6766 + $0x254] sm:$0xf]
    %v6917 = vld [vmem:[%s6766 + $0x258] sm:$0xf]
    %v6918 = vld [vmem:[%s6766 + $0x25c] sm:$0xf]
    %v6919 = vld [vmem:[%s6766 + $0x260] sm:$0xf]
    %v6920 = vld [vmem:[%s6766 + $0x264] sm:$0xf]
    %v6921 = vld [vmem:[%s6766 + $0x268] sm:$0xf]
    %v6922 = vld [vmem:[%s6766 + $0x26c] sm:$0xf]
    %v6923 = vld [vmem:[%s6766 + $0x270] sm:$0xf]
    %v6924 = vld [vmem:[%s6766 + $0x274] sm:$0xf]
    %v6925 = vld [vmem:[%s6766 + $0x278] sm:$0xf]
    %v6926 = vld [vmem:[%s6766 + $0x27c] sm:$0xf]
    %v6927 = vld [vmem:[%s6766 + $0x280] sm:$0xf]
    %v6928 = vld [vmem:[%s6766 + $0x284] sm:$0xf]
    %v6929 = vld [vmem:[%s6766 + $0x288] sm:$0xf]
    %v6930 = vld [vmem:[%s6766 + $0x28c] sm:$0xf]
    %v6931 = vld [vmem:[%s6766 + $0x290] sm:$0xf]
    %v6932 = vld [vmem:[%s6766 + $0x294] sm:$0xf]
    %v6933 = vld [vmem:[%s6766 + $0x298] sm:$0xf]
    %v6934 = vld [vmem:[%s6766 + $0x29c] sm:$0xf]
    %v6935 = vld [vmem:[%s6766 + $0x2a0] sm:$0xf]
    %v6936 = vld [vmem:[%s6766 + $0x2a4] sm:$0xf]
    %v6937 = vld [vmem:[%s6766 + $0x2a8] sm:$0xf]
    %v6938 = vld [vmem:[%s6766 + $0x2ac] sm:$0xf]
    %v6939 = vld [vmem:[%s6766 + $0x2b0] sm:$0xf]
    %v6940 = vld [vmem:[%s6766 + $0x2b4] sm:$0xf]
    %v6941 = vld [vmem:[%s6766 + $0x2b8] sm:$0xf]
    %v6942 = vld [vmem:[%s6766 + $0x2bc] sm:$0xf]
    %v6943 = vld [vmem:[%s6766 + $0x2c0] sm:$0xf]
    %v6944 = vld [vmem:[%s6766 + $0x2c4] sm:$0xf]
    %v6945 = vld [vmem:[%s6766 + $0x2c8] sm:$0xf]
    %v6946 = vld [vmem:[%s6766 + $0x2cc] sm:$0xf]
    %v6947 = vld [vmem:[%s6766 + $0x2d0] sm:$0xf]
    %v6948 = vld [vmem:[%s6766 + $0x2d4] sm:$0xf]
    %v6949 = vld [vmem:[%s6766 + $0x2d8] sm:$0xf]
    %v6950 = vld [vmem:[%s6766 + $0x2dc] sm:$0xf]
    %v6951 = vld [vmem:[%s6766 + $0x2e0] sm:$0xf]
    %v6952 = vld [vmem:[%s6766 + $0x2e4] sm:$0xf]
    %v6953 = vld [vmem:[%s6766 + $0x2e8] sm:$0xf]
    %v6954 = vld [vmem:[%s6766 + $0x2ec] sm:$0xf]
    %v6955 = vld [vmem:[%s6766 + $0x2f0] sm:$0xf]
    %v6956 = vld [vmem:[%s6766 + $0x2f4] sm:$0xf]
    %v6957 = vld [vmem:[%s6766 + $0x2f8] sm:$0xf]
    %v6958 = vld [vmem:[%s6766 + $0x2fc] sm:$0xf]
    %v6959 = vld [vmem:[%s6766 + $0x300] sm:$0xf]
    %v6960 = vld [vmem:[%s6766 + $0x304] sm:$0xf]
    %v6961 = vld [vmem:[%s6766 + $0x308] sm:$0xf]
    %v6962 = vld [vmem:[%s6766 + $0x30c] sm:$0xf]
    %v6963 = vld [vmem:[%s6766 + $0x310] sm:$0xf]
    %v6964 = vld [vmem:[%s6766 + $0x314] sm:$0xf]
    %v6965 = vld [vmem:[%s6766 + $0x318] sm:$0xf]
    %v6966 = vld [vmem:[%s6766 + $0x31c] sm:$0xf]
    %v6967 = vld [vmem:[%s6766 + $0x320] sm:$0xf]
    %v6968 = vld [vmem:[%s6766 + $0x324] sm:$0xf]
    %v6969 = vld [vmem:[%s6766 + $0x328] sm:$0xf]
    %v6970 = vld [vmem:[%s6766 + $0x32c] sm:$0xf]
    %v6971 = vld [vmem:[%s6766 + $0x330] sm:$0xf]
    %v6972 = vld [vmem:[%s6766 + $0x334] sm:$0xf]
    %v6973 = vld [vmem:[%s6766 + $0x338] sm:$0xf]
    %v6974 = vld [vmem:[%s6766 + $0x33c] sm:$0xf]
    %v6975 = vld [vmem:[%s6766 + $0x340] sm:$0xf]
    %v6976 = vld [vmem:[%s6766 + $0x344] sm:$0xf]
    %v6977 = vld [vmem:[%s6766 + $0x348] sm:$0xf]
    %v6978 = vld [vmem:[%s6766 + $0x34c] sm:$0xf]
    %v6979 = vld [vmem:[%s6766 + $0x350] sm:$0xf]
    %v6980 = vld [vmem:[%s6766 + $0x354] sm:$0xf]
    %v6981 = vld [vmem:[%s6766 + $0x358] sm:$0xf]
    %v6982 = vld [vmem:[%s6766 + $0x35c] sm:$0xf]
    %v6983 = vld [vmem:[%s6766 + $0x360] sm:$0xf]
    %v6984 = vld [vmem:[%s6766 + $0x364] sm:$0xf]
    %v6985 = vld [vmem:[%s6766 + $0x368] sm:$0xf]
    %v6986 = vld [vmem:[%s6766 + $0x36c] sm:$0xf]
    %v6987 = vld [vmem:[%s6766 + $0x370] sm:$0xf]
    %v6988 = vld [vmem:[%s6766 + $0x374] sm:$0xf]
    %v6989 = vld [vmem:[%s6766 + $0x378] sm:$0xf]
    %v6990 = vld [vmem:[%s6766 + $0x37c] sm:$0xf]
    %v6991 = vld [vmem:[%s6766 + $0x380] sm:$0xf]
    %v6992 = vld [vmem:[%s6766 + $0x384] sm:$0xf]
    %v6993 = vld [vmem:[%s6766 + $0x388] sm:$0xf]
    %v6994 = vld [vmem:[%s6766 + $0x38c] sm:$0xf]
    %v6995 = vld [vmem:[%s6766 + $0x390] sm:$0xf]
    %v6996 = vld [vmem:[%s6766 + $0x394] sm:$0xf]
    %v6997 = vld [vmem:[%s6766 + $0x398] sm:$0xf]
    %v6998 = vld [vmem:[%s6766 + $0x39c] sm:$0xf]
    %v6999 = vld [vmem:[%s6766 + $0x3a0] sm:$0xf]
    %v7000 = vld [vmem:[%s6766 + $0x3a4] sm:$0xf]
    %v7001 = vld [vmem:[%s6766 + $0x3a8] sm:$0xf]
    %v7002 = vld [vmem:[%s6766 + $0x3ac] sm:$0xf]
    %v7003 = vld [vmem:[%s6766 + $0x3b0] sm:$0xf]
    %v7004 = vld [vmem:[%s6766 + $0x3b4] sm:$0xf]
    %v7005 = vld [vmem:[%s6766 + $0x3b8] sm:$0xf]
    %v7006 = vld [vmem:[%s6766 + $0x3bc] sm:$0xf]
    %v7007 = vld [vmem:[%s6766 + $0x3c0] sm:$0xf]
    %v7008 = vld [vmem:[%s6766 + $0x3c4] sm:$0xf]
    %v7009 = vld [vmem:[%s6766 + $0x3c8] sm:$0xf]
    %v7010 = vld [vmem:[%s6766 + $0x3cc] sm:$0xf]
    %v7011 = vld [vmem:[%s6766 + $0x3d0] sm:$0xf]
    %v7012 = vld [vmem:[%s6766 + $0x3d4] sm:$0xf]
    %v7013 = vld [vmem:[%s6766 + $0x3d8] sm:$0xf]
    %v7014 = vld [vmem:[%s6766 + $0x3dc] sm:$0xf]
    %v7015 = vld [vmem:[%s6766 + $0x3e0] sm:$0xf]
    %v7016 = vld [vmem:[%s6766 + $0x3e4] sm:$0xf]
    %v7017 = vld [vmem:[%s6766 + $0x3e8] sm:$0xf]
    %v7018 = vld [vmem:[%s6766 + $0x3ec] sm:$0xf]
    %v7019 = vld [vmem:[%s6766 + $0x3f0] sm:$0xf]
    %v7020 = vld [vmem:[%s6766 + $0x3f4] sm:$0xf]
    %v7021 = vld [vmem:[%s6766 + $0x3f8] sm:$0xf]
    %v7022 = vld [vmem:[%s6766 + $0x3fc] sm:$0xf]
    %s7023 = scalar_lea.vmem %s18, 1
    %v7024 = vld [vmem:[%s7023] sm:$0x1]
    %v7026 = vlaneseq
    %v7027 = vshrl.u32 %v7026, 7
    %v7028 = vsub.s32 0, %v7027
    %v7029 = vrot.slane %v7024, %v7028
    %v7287 = vunpack.c.l.b16 %v6767
    %v7288 = vunpack.c.l.b16 %v6768
    %v7289 = vunpack.c.l.b16 %v6769
    %v7290 = vunpack.c.l.b16 %v6770
    %v7291 = vunpack.c.l.b16 %v6771
    %v7292 = vunpack.c.l.b16 %v6772
    %v7293 = vunpack.c.l.b16 %v6773
    %v7294 = vunpack.c.l.b16 %v6774
    %v7295 = vunpack.c.l.b16 %v6775
    %v7296 = vunpack.c.l.b16 %v6776
    %v7297 = vunpack.c.l.b16 %v6777
    %v7298 = vunpack.c.l.b16 %v6778
    %v7299 = vunpack.c.l.b16 %v6779
    %v7300 = vunpack.c.l.b16 %v6780
    %v7301 = vunpack.c.l.b16 %v6781
    %v7302 = vunpack.c.l.b16 %v6782
    %v7303 = vunpack.c.l.b16 %v6783
    %v7304 = vunpack.c.l.b16 %v6784
    %v7305 = vunpack.c.l.b16 %v6785
    %v7306 = vunpack.c.l.b16 %v6786
    %v7307 = vunpack.c.l.b16 %v6787
    %v7308 = vunpack.c.l.b16 %v6788
    %v7309 = vunpack.c.l.b16 %v6789
    %v7310 = vunpack.c.l.b16 %v6790
    %v7311 = vunpack.c.l.b16 %v6791
    %v7312 = vunpack.c.l.b16 %v6792
    %v7313 = vunpack.c.l.b16 %v6793
    %v7314 = vunpack.c.l.b16 %v6794
    %v7315 = vunpack.c.l.b16 %v6795
    %v7316 = vunpack.c.l.b16 %v6796
    %v7317 = vunpack.c.l.b16 %v6797
    %v7318 = vunpack.c.l.b16 %v6798
    %v7319 = vunpack.c.l.b16 %v6799
    %v7320 = vunpack.c.l.b16 %v6800
    %v7321 = vunpack.c.l.b16 %v6801
    %v7322 = vunpack.c.l.b16 %v6802
    %v7323 = vunpack.c.l.b16 %v6803
    %v7324 = vunpack.c.l.b16 %v6804
    %v7325 = vunpack.c.l.b16 %v6805
    %v7326 = vunpack.c.l.b16 %v6806
    %v7327 = vunpack.c.l.b16 %v6807
    %v7328 = vunpack.c.l.b16 %v6808
    %v7329 = vunpack.c.l.b16 %v6809
    %v7330 = vunpack.c.l.b16 %v6810
    %v7331 = vunpack.c.l.b16 %v6811
    %v7332 = vunpack.c.l.b16 %v6812
    %v7333 = vunpack.c.l.b16 %v6813
    %v7334 = vunpack.c.l.b16 %v6814
    %v7335 = vunpack.c.l.b16 %v6815
    %v7336 = vunpack.c.l.b16 %v6816
    %v7337 = vunpack.c.l.b16 %v6817
    %v7338 = vunpack.c.l.b16 %v6818
    %v7339 = vunpack.c.l.b16 %v6819
    %v7340 = vunpack.c.l.b16 %v6820
    %v7341 = vunpack.c.l.b16 %v6821
    %v7342 = vunpack.c.l.b16 %v6822
    %v7343 = vunpack.c.l.b16 %v6823
    %v7344 = vunpack.c.l.b16 %v6824
    %v7345 = vunpack.c.l.b16 %v6825
    %v7346 = vunpack.c.l.b16 %v6826
    %v7347 = vunpack.c.l.b16 %v6827
    %v7348 = vunpack.c.l.b16 %v6828
    %v7349 = vunpack.c.l.b16 %v6829
    %v7350 = vunpack.c.l.b16 %v6830
    %v7351 = vunpack.c.l.b16 %v6831
    %v7352 = vunpack.c.l.b16 %v6832
    %v7353 = vunpack.c.l.b16 %v6833
    %v7354 = vunpack.c.l.b16 %v6834
    %v7355 = vunpack.c.l.b16 %v6835
    %v7356 = vunpack.c.l.b16 %v6836
    %v7357 = vunpack.c.l.b16 %v6837
    %v7358 = vunpack.c.l.b16 %v6838
    %v7359 = vunpack.c.l.b16 %v6839
    %v7360 = vunpack.c.l.b16 %v6840
    %v7361 = vunpack.c.l.b16 %v6841
    %v7362 = vunpack.c.l.b16 %v6842
    %v7363 = vunpack.c.l.b16 %v6843
    %v7364 = vunpack.c.l.b16 %v6844
    %v7365 = vunpack.c.l.b16 %v6845
    %v7366 = vunpack.c.l.b16 %v6846
    %v7367 = vunpack.c.l.b16 %v6847
    %v7368 = vunpack.c.l.b16 %v6848
    %v7369 = vunpack.c.l.b16 %v6849
    %v7370 = vunpack.c.l.b16 %v6850
    %v7371 = vunpack.c.l.b16 %v6851
    %v7372 = vunpack.c.l.b16 %v6852
    %v7373 = vunpack.c.l.b16 %v6853
    %v7374 = vunpack.c.l.b16 %v6854
    %v7375 = vunpack.c.l.b16 %v6855
    %v7376 = vunpack.c.l.b16 %v6856
    %v7377 = vunpack.c.l.b16 %v6857
    %v7378 = vunpack.c.l.b16 %v6858
    %v7379 = vunpack.c.l.b16 %v6859
    %v7380 = vunpack.c.l.b16 %v6860
    %v7381 = vunpack.c.l.b16 %v6861
    %v7382 = vunpack.c.l.b16 %v6862
    %v7383 = vunpack.c.l.b16 %v6863
    %v7384 = vunpack.c.l.b16 %v6864
    %v7385 = vunpack.c.l.b16 %v6865
    %v7386 = vunpack.c.l.b16 %v6866
    %v7387 = vunpack.c.l.b16 %v6867
    %v7388 = vunpack.c.l.b16 %v6868
    %v7389 = vunpack.c.l.b16 %v6869
    %v7390 = vunpack.c.l.b16 %v6870
    %v7391 = vunpack.c.l.b16 %v6871
    %v7392 = vunpack.c.l.b16 %v6872
    %v7393 = vunpack.c.l.b16 %v6873
    %v7394 = vunpack.c.l.b16 %v6874
    %v7395 = vunpack.c.l.b16 %v6875
    %v7396 = vunpack.c.l.b16 %v6876
    %v7397 = vunpack.c.l.b16 %v6877
    %v7398 = vunpack.c.l.b16 %v6878
    %v7399 = vunpack.c.l.b16 %v6879
    %v7400 = vunpack.c.l.b16 %v6880
    %v7401 = vunpack.c.l.b16 %v6881
    %v7402 = vunpack.c.l.b16 %v6882
    %v7403 = vunpack.c.l.b16 %v6883
    %v7404 = vunpack.c.l.b16 %v6884
    %v7405 = vunpack.c.l.b16 %v6885
    %v7406 = vunpack.c.l.b16 %v6886
    %v7407 = vunpack.c.l.b16 %v6887
    %v7408 = vunpack.c.l.b16 %v6888
    %v7409 = vunpack.c.l.b16 %v6889
    %v7410 = vunpack.c.l.b16 %v6890
    %v7411 = vunpack.c.l.b16 %v6891
    %v7412 = vunpack.c.l.b16 %v6892
    %v7413 = vunpack.c.l.b16 %v6893
    %v7414 = vunpack.c.l.b16 %v6894
    %v7415 = vunpack.c.l.b16 %v6895
    %v7416 = vunpack.c.l.b16 %v6896
    %v7417 = vunpack.c.l.b16 %v6897
    %v7418 = vunpack.c.l.b16 %v6898
    %v7419 = vunpack.c.l.b16 %v6899
    %v7420 = vunpack.c.l.b16 %v6900
    %v7421 = vunpack.c.l.b16 %v6901
    %v7422 = vunpack.c.l.b16 %v6902
    %v7423 = vunpack.c.l.b16 %v6903
    %v7424 = vunpack.c.l.b16 %v6904
    %v7425 = vunpack.c.l.b16 %v6905
    %v7426 = vunpack.c.l.b16 %v6906
    %v7427 = vunpack.c.l.b16 %v6907
    %v7428 = vunpack.c.l.b16 %v6908
    %v7429 = vunpack.c.l.b16 %v6909
    %v7430 = vunpack.c.l.b16 %v6910
    %v7431 = vunpack.c.l.b16 %v6911
    %v7432 = vunpack.c.l.b16 %v6912
    %v7433 = vunpack.c.l.b16 %v6913
    %v7434 = vunpack.c.l.b16 %v6914
    %v7435 = vunpack.c.l.b16 %v6915
    %v7436 = vunpack.c.l.b16 %v6916
    %v7437 = vunpack.c.l.b16 %v6917
    %v7438 = vunpack.c.l.b16 %v6918
    %v7439 = vunpack.c.l.b16 %v6919
    %v7440 = vunpack.c.l.b16 %v6920
    %v7441 = vunpack.c.l.b16 %v6921
    %v7442 = vunpack.c.l.b16 %v6922
    %v7443 = vunpack.c.l.b16 %v6923
    %v7444 = vunpack.c.l.b16 %v6924
    %v7445 = vunpack.c.l.b16 %v6925
    %v7446 = vunpack.c.l.b16 %v6926
    %v7447 = vunpack.c.l.b16 %v6927
    %v7448 = vunpack.c.l.b16 %v6928
    %v7449 = vunpack.c.l.b16 %v6929
    %v7450 = vunpack.c.l.b16 %v6930
    %v7451 = vunpack.c.l.b16 %v6931
    %v7452 = vunpack.c.l.b16 %v6932
    %v7453 = vunpack.c.l.b16 %v6933
    %v7454 = vunpack.c.l.b16 %v6934
    %v7455 = vunpack.c.l.b16 %v6935
    %v7456 = vunpack.c.l.b16 %v6936
    %v7457 = vunpack.c.l.b16 %v6937
    %v7458 = vunpack.c.l.b16 %v6938
    %v7459 = vunpack.c.l.b16 %v6939
    %v7460 = vunpack.c.l.b16 %v6940
    %v7461 = vunpack.c.l.b16 %v6941
    %v7462 = vunpack.c.l.b16 %v6942
    %v7463 = vunpack.c.l.b16 %v6943
    %v7464 = vunpack.c.l.b16 %v6944
    %v7465 = vunpack.c.l.b16 %v6945
    %v7466 = vunpack.c.l.b16 %v6946
    %v7467 = vunpack.c.l.b16 %v6947
    %v7468 = vunpack.c.l.b16 %v6948
    %v7469 = vunpack.c.l.b16 %v6949
    %v7470 = vunpack.c.l.b16 %v6950
    %v7471 = vunpack.c.l.b16 %v6951
    %v7472 = vunpack.c.l.b16 %v6952
    %v7473 = vunpack.c.l.b16 %v6953
    %v7474 = vunpack.c.l.b16 %v6954
    %v7475 = vunpack.c.l.b16 %v6955
    %v7476 = vunpack.c.l.b16 %v6956
    %v7477 = vunpack.c.l.b16 %v6957
    %v7478 = vunpack.c.l.b16 %v6958
    %v7479 = vunpack.c.l.b16 %v6959
    %v7480 = vunpack.c.l.b16 %v6960
    %v7481 = vunpack.c.l.b16 %v6961
    %v7482 = vunpack.c.l.b16 %v6962
    %v7483 = vunpack.c.l.b16 %v6963
    %v7484 = vunpack.c.l.b16 %v6964
    %v7485 = vunpack.c.l.b16 %v6965
    %v7486 = vunpack.c.l.b16 %v6966
    %v7487 = vunpack.c.l.b16 %v6967
    %v7488 = vunpack.c.l.b16 %v6968
    %v7489 = vunpack.c.l.b16 %v6969
    %v7490 = vunpack.c.l.b16 %v6970
    %v7491 = vunpack.c.l.b16 %v6971
    %v7492 = vunpack.c.l.b16 %v6972
    %v7493 = vunpack.c.l.b16 %v6973
    %v7494 = vunpack.c.l.b16 %v6974
    %v7495 = vunpack.c.l.b16 %v6975
    %v7496 = vunpack.c.l.b16 %v6976
    %v7497 = vunpack.c.l.b16 %v6977
    %v7498 = vunpack.c.l.b16 %v6978
    %v7499 = vunpack.c.l.b16 %v6979
    %v7500 = vunpack.c.l.b16 %v6980
    %v7501 = vunpack.c.l.b16 %v6981
    %v7502 = vunpack.c.l.b16 %v6982
    %v7503 = vunpack.c.l.b16 %v6983
    %v7504 = vunpack.c.l.b16 %v6984
    %v7505 = vunpack.c.l.b16 %v6985
    %v7506 = vunpack.c.l.b16 %v6986
    %v7507 = vunpack.c.l.b16 %v6987
    %v7508 = vunpack.c.l.b16 %v6988
    %v7509 = vunpack.c.l.b16 %v6989
    %v7510 = vunpack.c.l.b16 %v6990
    %v7511 = vunpack.c.l.b16 %v6991
    %v7512 = vunpack.c.l.b16 %v6992
    %v7513 = vunpack.c.l.b16 %v6993
    %v7514 = vunpack.c.l.b16 %v6994
    %v7515 = vunpack.c.l.b16 %v6995
    %v7516 = vunpack.c.l.b16 %v6996
    %v7517 = vunpack.c.l.b16 %v6997
    %v7518 = vunpack.c.l.b16 %v6998
    %v7519 = vunpack.c.l.b16 %v6999
    %v7520 = vunpack.c.l.b16 %v7000
    %v7521 = vunpack.c.l.b16 %v7001
    %v7522 = vunpack.c.l.b16 %v7002
    %v7523 = vunpack.c.l.b16 %v7003
    %v7524 = vunpack.c.l.b16 %v7004
    %v7525 = vunpack.c.l.b16 %v7005
    %v7526 = vunpack.c.l.b16 %v7006
    %v7527 = vunpack.c.l.b16 %v7007
    %v7528 = vunpack.c.l.b16 %v7008
    %v7529 = vunpack.c.l.b16 %v7009
    %v7530 = vunpack.c.l.b16 %v7010
    %v7531 = vunpack.c.l.b16 %v7011
    %v7532 = vunpack.c.l.b16 %v7012
    %v7533 = vunpack.c.l.b16 %v7013
    %v7534 = vunpack.c.l.b16 %v7014
    %v7535 = vunpack.c.l.b16 %v7015
    %v7536 = vunpack.c.l.b16 %v7016
    %v7537 = vunpack.c.l.b16 %v7017
    %v7538 = vunpack.c.l.b16 %v7018
    %v7539 = vunpack.c.l.b16 %v7019
    %v7540 = vunpack.c.l.b16 %v7020
    %v7541 = vunpack.c.l.b16 %v7021
    %v7542 = vunpack.c.l.b16 %v7022
    %v7543 = vpack.c.b16 %v7288, %v7287
    %v7544 = vpack.c.b16 %v7290, %v7289
    %v7545 = vpack.c.b16 %v7292, %v7291
    %v7546 = vpack.c.b16 %v7294, %v7293
    %v7547 = vpack.c.b16 %v7296, %v7295
    %v7548 = vpack.c.b16 %v7298, %v7297
    %v7549 = vpack.c.b16 %v7300, %v7299
    %v7550 = vpack.c.b16 %v7302, %v7301
    %v7551 = vpack.c.b16 %v7304, %v7303
    %v7552 = vpack.c.b16 %v7306, %v7305
    %v7553 = vpack.c.b16 %v7308, %v7307
    %v7554 = vpack.c.b16 %v7310, %v7309
    %v7555 = vpack.c.b16 %v7312, %v7311
    %v7556 = vpack.c.b16 %v7314, %v7313
    %v7557 = vpack.c.b16 %v7316, %v7315
    %v7558 = vpack.c.b16 %v7318, %v7317
    %v7559 = vpack.c.b16 %v7320, %v7319
    %v7560 = vpack.c.b16 %v7322, %v7321
    %v7561 = vpack.c.b16 %v7324, %v7323
    %v7562 = vpack.c.b16 %v7326, %v7325
    %v7563 = vpack.c.b16 %v7328, %v7327
    %v7564 = vpack.c.b16 %v7330, %v7329
    %v7565 = vpack.c.b16 %v7332, %v7331
    %v7566 = vpack.c.b16 %v7334, %v7333
    %v7567 = vpack.c.b16 %v7336, %v7335
    %v7568 = vpack.c.b16 %v7338, %v7337
    %v7569 = vpack.c.b16 %v7340, %v7339
    %v7570 = vpack.c.b16 %v7342, %v7341
    %v7571 = vpack.c.b16 %v7344, %v7343
    %v7572 = vpack.c.b16 %v7346, %v7345
    %v7573 = vpack.c.b16 %v7348, %v7347
    %v7574 = vpack.c.b16 %v7350, %v7349
    %v7575 = vpack.c.b16 %v7352, %v7351
    %v7576 = vpack.c.b16 %v7354, %v7353
    %v7577 = vpack.c.b16 %v7356, %v7355
    %v7578 = vpack.c.b16 %v7358, %v7357
    %v7579 = vpack.c.b16 %v7360, %v7359
    %v7580 = vpack.c.b16 %v7362, %v7361
    %v7581 = vpack.c.b16 %v7364, %v7363
    %v7582 = vpack.c.b16 %v7366, %v7365
    %v7583 = vpack.c.b16 %v7368, %v7367
    %v7584 = vpack.c.b16 %v7370, %v7369
    %v7585 = vpack.c.b16 %v7372, %v7371
    %v7586 = vpack.c.b16 %v7374, %v7373
    %v7587 = vpack.c.b16 %v7376, %v7375
    %v7588 = vpack.c.b16 %v7378, %v7377
    %v7589 = vpack.c.b16 %v7380, %v7379
    %v7590 = vpack.c.b16 %v7382, %v7381
    %v7591 = vpack.c.b16 %v7384, %v7383
    %v7592 = vpack.c.b16 %v7386, %v7385
    %v7593 = vpack.c.b16 %v7388, %v7387
    %v7594 = vpack.c.b16 %v7390, %v7389
    %v7595 = vpack.c.b16 %v7392, %v7391
    %v7596 = vpack.c.b16 %v7394, %v7393
    %v7597 = vpack.c.b16 %v7396, %v7395
    %v7598 = vpack.c.b16 %v7398, %v7397
    %v7599 = vpack.c.b16 %v7400, %v7399
    %v7600 = vpack.c.b16 %v7402, %v7401
    %v7601 = vpack.c.b16 %v7404, %v7403
    %v7602 = vpack.c.b16 %v7406, %v7405
    %v7603 = vpack.c.b16 %v7408, %v7407
    %v7604 = vpack.c.b16 %v7410, %v7409
    %v7605 = vpack.c.b16 %v7412, %v7411
    %v7606 = vpack.c.b16 %v7414, %v7413
    %v7607 = vpack.c.b16 %v7416, %v7415
    %v7608 = vpack.c.b16 %v7418, %v7417
    %v7609 = vpack.c.b16 %v7420, %v7419
    %v7610 = vpack.c.b16 %v7422, %v7421
    %v7611 = vpack.c.b16 %v7424, %v7423
    %v7612 = vpack.c.b16 %v7426, %v7425
    %v7613 = vpack.c.b16 %v7428, %v7427
    %v7614 = vpack.c.b16 %v7430, %v7429
    %v7615 = vpack.c.b16 %v7432, %v7431
    %v7616 = vpack.c.b16 %v7434, %v7433
    %v7617 = vpack.c.b16 %v7436, %v7435
    %v7618 = vpack.c.b16 %v7438, %v7437
    %v7619 = vpack.c.b16 %v7440, %v7439
    %v7620 = vpack.c.b16 %v7442, %v7441
    %v7621 = vpack.c.b16 %v7444, %v7443
    %v7622 = vpack.c.b16 %v7446, %v7445
    %v7623 = vpack.c.b16 %v7448, %v7447
    %v7624 = vpack.c.b16 %v7450, %v7449
    %v7625 = vpack.c.b16 %v7452, %v7451
    %v7626 = vpack.c.b16 %v7454, %v7453
    %v7627 = vpack.c.b16 %v7456, %v7455
    %v7628 = vpack.c.b16 %v7458, %v7457
    %v7629 = vpack.c.b16 %v7460, %v7459
    %v7630 = vpack.c.b16 %v7462, %v7461
    %v7631 = vpack.c.b16 %v7464, %v7463
    %v7632 = vpack.c.b16 %v7466, %v7465
    %v7633 = vpack.c.b16 %v7468, %v7467
    %v7634 = vpack.c.b16 %v7470, %v7469
    %v7635 = vpack.c.b16 %v7472, %v7471
    %v7636 = vpack.c.b16 %v7474, %v7473
    %v7637 = vpack.c.b16 %v7476, %v7475
    %v7638 = vpack.c.b16 %v7478, %v7477
    %v7639 = vpack.c.b16 %v7480, %v7479
    %v7640 = vpack.c.b16 %v7482, %v7481
    %v7641 = vpack.c.b16 %v7484, %v7483
    %v7642 = vpack.c.b16 %v7486, %v7485
    %v7643 = vpack.c.b16 %v7488, %v7487
    %v7644 = vpack.c.b16 %v7490, %v7489
    %v7645 = vpack.c.b16 %v7492, %v7491
    %v7646 = vpack.c.b16 %v7494, %v7493
    %v7647 = vpack.c.b16 %v7496, %v7495
    %v7648 = vpack.c.b16 %v7498, %v7497
    %v7649 = vpack.c.b16 %v7500, %v7499
    %v7650 = vpack.c.b16 %v7502, %v7501
    %v7651 = vpack.c.b16 %v7504, %v7503
    %v7652 = vpack.c.b16 %v7506, %v7505
    %v7653 = vpack.c.b16 %v7508, %v7507
    %v7654 = vpack.c.b16 %v7510, %v7509
    %v7655 = vpack.c.b16 %v7512, %v7511
    %v7656 = vpack.c.b16 %v7514, %v7513
    %v7657 = vpack.c.b16 %v7516, %v7515
    %v7658 = vpack.c.b16 %v7518, %v7517
    %v7659 = vpack.c.b16 %v7520, %v7519
    %v7660 = vpack.c.b16 %v7522, %v7521
    %v7661 = vpack.c.b16 %v7524, %v7523
    %v7662 = vpack.c.b16 %v7526, %v7525
    %v7663 = vpack.c.b16 %v7528, %v7527
    %v7664 = vpack.c.b16 %v7530, %v7529
    %v7665 = vpack.c.b16 %v7532, %v7531
    %v7666 = vpack.c.b16 %v7534, %v7533
    %v7667 = vpack.c.b16 %v7536, %v7535
    %v7668 = vpack.c.b16 %v7538, %v7537
    %v7669 = vpack.c.b16 %v7540, %v7539
    %v7670 = vpack.c.b16 %v7542, %v7541
    %7799 = vmatprep.subr.bf16.mxu0 0
    %7800 = vmatpush1.bf16.msra.mxu0 %v7550
    %7801 = vmatprep.subr.bf16.mxu0 0
    %7802 = vmatpush1.bf16.msra.mxu0 %v7549
    %7803 = vmatprep.subr.bf16.mxu0 0
    %7804 = vmatpush1.bf16.msra.mxu0 %v7548
    %7805 = vmatprep.subr.bf16.mxu0 0
    %7806 = vmatpush1.bf16.msra.mxu0 %v7547
    %7807 = vmatprep.subr.bf16.mxu0 0
    %7808 = vmatpush1.bf16.msra.mxu0 %v7546
    %7809 = vmatprep.subr.bf16.mxu0 0
    %7810 = vmatpush1.bf16.msra.mxu0 %v7545
    %7811 = vmatprep.subr.bf16.mxu0 0
    %7812 = vmatpush1.bf16.msra.mxu0 %v7544
    %7813 = vmatprep.subr.bf16.mxu0 0
    %7814 = vmatpush1.bf16.msra.mxu0 %v7543
    %7815 = vmatprep.subr.bf16.mxu0 0
    %7816 = vmatpush2.bf16.msra.mxu0 %v7558
    %7817 = vmatprep.subr.bf16.mxu0 0
    %7818 = vmatpush2.bf16.msra.mxu0 %v7557
    %7819 = vmatprep.subr.bf16.mxu0 0
    %7820 = vmatpush2.bf16.msra.mxu0 %v7556
    %7821 = vmatprep.subr.bf16.mxu0 0
    %7822 = vmatpush2.bf16.msra.mxu0 %v7555
    %7823 = vmatprep.subr.bf16.mxu0 0
    %7824 = vmatpush2.bf16.msra.mxu0 %v7554
    %7825 = vmatprep.subr.bf16.mxu0 0
    %7826 = vmatpush2.bf16.msra.mxu0 %v7553
    %7827 = vmatprep.subr.bf16.mxu0 0
    %7828 = vmatpush2.bf16.msra.mxu0 %v7552
    %7829 = vmatprep.subr.bf16.mxu0 0
    %7830 = vmatpush2.bf16.msra.mxu0 %v7551
    %7831 = vmatprep.mubr.bf16.mxu0 %v6751
    %7832 = vmatmul.mubr.bf16.gmra.mxu0 %v6750
    %v7833 = vpop.f32.mrf.mxu0
    %v7834 = vadd.f32 %v7029, %v7833
    %v7835 = vpop.f32.mrf.mxu0
    %v7836 = vpop.f32.mrf.mxu0
    %v7837 = vadd.f32 %v7029, %v7836
    %v7838 = vpop.f32.mrf.mxu0
    %7839 = vdwg.mxu0
    %7840 = vmatprep.subr.bf16.mxu0 0
    %7841 = vmatpush1.bf16.msra.mxu0 %v7566
    %7842 = vmatprep.subr.bf16.mxu0 0
    %7843 = vmatpush1.bf16.msra.mxu0 %v7565
    %7844 = vmatprep.subr.bf16.mxu0 0
    %7845 = vmatpush1.bf16.msra.mxu0 %v7564
    %7846 = vmatprep.subr.bf16.mxu0 0
    %7847 = vmatpush1.bf16.msra.mxu0 %v7563
    %7848 = vmatprep.subr.bf16.mxu0 0
    %7849 = vmatpush1.bf16.msra.mxu0 %v7562
    %7850 = vmatprep.subr.bf16.mxu0 0
    %7851 = vmatpush1.bf16.msra.mxu0 %v7561
    %7852 = vmatprep.subr.bf16.mxu0 0
    %7853 = vmatpush1.bf16.msra.mxu0 %v7560
    %7854 = vmatprep.subr.bf16.mxu0 0
    %7855 = vmatpush1.bf16.msra.mxu0 %v7559
    %7856 = vmatprep.subr.bf16.mxu0 0
    %7857 = vmatpush2.bf16.msra.mxu0 %v7574
    %7858 = vmatprep.subr.bf16.mxu0 0
    %7859 = vmatpush2.bf16.msra.mxu0 %v7573
    %7860 = vmatprep.subr.bf16.mxu0 0
    %7861 = vmatpush2.bf16.msra.mxu0 %v7572
    %7862 = vmatprep.subr.bf16.mxu0 0
    %7863 = vmatpush2.bf16.msra.mxu0 %v7571
    %7864 = vmatprep.subr.bf16.mxu0 0
    %7865 = vmatpush2.bf16.msra.mxu0 %v7570
    %7866 = vmatprep.subr.bf16.mxu0 0
    %7867 = vmatpush2.bf16.msra.mxu0 %v7569
    %7868 = vmatprep.subr.bf16.mxu0 0
    %7869 = vmatpush2.bf16.msra.mxu0 %v7568
    %7870 = vmatprep.subr.bf16.mxu0 0
    %7871 = vmatpush2.bf16.msra.mxu0 %v7567
    %7872 = vmatprep.mubr.bf16.mxu0 %v6753
    %7873 = vmatmul.mubr.bf16.gmra.mxu0 %v6752
    %v7874 = vpop.f32.mrf.mxu0
    %v7875 = vadd.f32 %v7834, %v7874
    %v7876 = vpop.f32.mrf.mxu0
    %v7877 = vpop.f32.mrf.mxu0
    %v7878 = vadd.f32 %v7837, %v7877
    %v7879 = vpop.f32.mrf.mxu0
    %7880 = vdwg.mxu0
    %7881 = vmatprep.subr.bf16.mxu0 0
    %7882 = vmatpush1.bf16.msra.mxu0 %v7582
    %7883 = vmatprep.subr.bf16.mxu0 0
    %7884 = vmatpush1.bf16.msra.mxu0 %v7581
    %7885 = vmatprep.subr.bf16.mxu0 0
    %7886 = vmatpush1.bf16.msra.mxu0 %v7580
    %7887 = vmatprep.subr.bf16.mxu0 0
    %7888 = vmatpush1.bf16.msra.mxu0 %v7579
    %7889 = vmatprep.subr.bf16.mxu0 0
    %7890 = vmatpush1.bf16.msra.mxu0 %v7578
    %7891 = vmatprep.subr.bf16.mxu0 0
    %7892 = vmatpush1.bf16.msra.mxu0 %v7577
    %7893 = vmatprep.subr.bf16.mxu0 0
    %7894 = vmatpush1.bf16.msra.mxu0 %v7576
    %7895 = vmatprep.subr.bf16.mxu0 0
    %7896 = vmatpush1.bf16.msra.mxu0 %v7575
    %7897 = vmatprep.subr.bf16.mxu0 0
    %7898 = vmatpush2.bf16.msra.mxu0 %v7590
    %7899 = vmatprep.subr.bf16.mxu0 0
    %7900 = vmatpush2.bf16.msra.mxu0 %v7589
    %7901 = vmatprep.subr.bf16.mxu0 0
    %7902 = vmatpush2.bf16.msra.mxu0 %v7588
    %7903 = vmatprep.subr.bf16.mxu0 0
    %7904 = vmatpush2.bf16.msra.mxu0 %v7587
    %7905 = vmatprep.subr.bf16.mxu0 0
    %7906 = vmatpush2.bf16.msra.mxu0 %v7586
    %7907 = vmatprep.subr.bf16.mxu0 0
    %7908 = vmatpush2.bf16.msra.mxu0 %v7585
    %7909 = vmatprep.subr.bf16.mxu0 0
    %7910 = vmatpush2.bf16.msra.mxu0 %v7584
    %7911 = vmatprep.subr.bf16.mxu0 0
    %7912 = vmatpush2.bf16.msra.mxu0 %v7583
    %7913 = vmatprep.mubr.bf16.mxu0 %v6755
    %7914 = vmatmul.mubr.bf16.gmra.mxu0 %v6754
    %v7915 = vpop.f32.mrf.mxu0
    %v7916 = vadd.f32 %v7875, %v7915
    %v7917 = vpop.f32.mrf.mxu0
    %v7918 = vpop.f32.mrf.mxu0
    %v7919 = vadd.f32 %v7878, %v7918
    %v7920 = vpop.f32.mrf.mxu0
    %7921 = vdwg.mxu0
    %7922 = vmatprep.subr.bf16.mxu0 0
    %7923 = vmatpush1.bf16.msra.mxu0 %v7598
    %7924 = vmatprep.subr.bf16.mxu0 0
    %7925 = vmatpush1.bf16.msra.mxu0 %v7597
    %7926 = vmatprep.subr.bf16.mxu0 0
    %7927 = vmatpush1.bf16.msra.mxu0 %v7596
    %7928 = vmatprep.subr.bf16.mxu0 0
    %7929 = vmatpush1.bf16.msra.mxu0 %v7595
    %7930 = vmatprep.subr.bf16.mxu0 0
    %7931 = vmatpush1.bf16.msra.mxu0 %v7594
    %7932 = vmatprep.subr.bf16.mxu0 0
    %7933 = vmatpush1.bf16.msra.mxu0 %v7593
    %7934 = vmatprep.subr.bf16.mxu0 0
    %7935 = vmatpush1.bf16.msra.mxu0 %v7592
    %7936 = vmatprep.subr.bf16.mxu0 0
    %7937 = vmatpush1.bf16.msra.mxu0 %v7591
    %7938 = vmatprep.subr.bf16.mxu0 0
    %7939 = vmatpush2.bf16.msra.mxu0 %v7606
    %7940 = vmatprep.subr.bf16.mxu0 0
    %7941 = vmatpush2.bf16.msra.mxu0 %v7605
    %7942 = vmatprep.subr.bf16.mxu0 0
    %7943 = vmatpush2.bf16.msra.mxu0 %v7604
    %7944 = vmatprep.subr.bf16.mxu0 0
    %7945 = vmatpush2.bf16.msra.mxu0 %v7603
    %7946 = vmatprep.subr.bf16.mxu0 0
    %7947 = vmatpush2.bf16.msra.mxu0 %v7602
    %7948 = vmatprep.subr.bf16.mxu0 0
    %7949 = vmatpush2.bf16.msra.mxu0 %v7601
    %7950 = vmatprep.subr.bf16.mxu0 0
    %7951 = vmatpush2.bf16.msra.mxu0 %v7600
    %7952 = vmatprep.subr.bf16.mxu0 0
    %7953 = vmatpush2.bf16.msra.mxu0 %v7599
    %7954 = vmatprep.mubr.bf16.mxu0 %v6757
    %7955 = vmatmul.mubr.bf16.gmra.mxu0 %v6756
    %v7956 = vpop.f32.mrf.mxu0
    %v7957 = vadd.f32 %v7916, %v7956
    %v7958 = vpop.f32.mrf.mxu0
    %v7959 = vpop.f32.mrf.mxu0
    %v7960 = vadd.f32 %v7919, %v7959
    %v7961 = vpop.f32.mrf.mxu0
    %7962 = vdwg.mxu0
    %7963 = vmatprep.subr.bf16.mxu0 0
    %7964 = vmatpush1.bf16.msra.mxu0 %v7614
    %7965 = vmatprep.subr.bf16.mxu0 0
    %7966 = vmatpush1.bf16.msra.mxu0 %v7613
    %7967 = vmatprep.subr.bf16.mxu0 0
    %7968 = vmatpush1.bf16.msra.mxu0 %v7612
    %7969 = vmatprep.subr.bf16.mxu0 0
    %7970 = vmatpush1.bf16.msra.mxu0 %v7611
    %7971 = vmatprep.subr.bf16.mxu0 0
    %7972 = vmatpush1.bf16.msra.mxu0 %v7610
    %7973 = vmatprep.subr.bf16.mxu0 0
    %7974 = vmatpush1.bf16.msra.mxu0 %v7609
    %7975 = vmatprep.subr.bf16.mxu0 0
    %7976 = vmatpush1.bf16.msra.mxu0 %v7608
    %7977 = vmatprep.subr.bf16.mxu0 0
    %7978 = vmatpush1.bf16.msra.mxu0 %v7607
    %7979 = vmatprep.subr.bf16.mxu0 0
    %7980 = vmatpush2.bf16.msra.mxu0 %v7622
    %7981 = vmatprep.subr.bf16.mxu0 0
    %7982 = vmatpush2.bf16.msra.mxu0 %v7621
    %7983 = vmatprep.subr.bf16.mxu0 0
    %7984 = vmatpush2.bf16.msra.mxu0 %v7620
    %7985 = vmatprep.subr.bf16.mxu0 0
    %7986 = vmatpush2.bf16.msra.mxu0 %v7619
    %7987 = vmatprep.subr.bf16.mxu0 0
    %7988 = vmatpush2.bf16.msra.mxu0 %v7618
    %7989 = vmatprep.subr.bf16.mxu0 0
    %7990 = vmatpush2.bf16.msra.mxu0 %v7617
    %7991 = vmatprep.subr.bf16.mxu0 0
    %7992 = vmatpush2.bf16.msra.mxu0 %v7616
    %7993 = vmatprep.subr.bf16.mxu0 0
    %7994 = vmatpush2.bf16.msra.mxu0 %v7615
    %7995 = vmatprep.mubr.bf16.mxu0 %v6759
    %7996 = vmatmul.mubr.bf16.gmra.mxu0 %v6758
    %v7997 = vpop.f32.mrf.mxu0
    %v7998 = vadd.f32 %v7957, %v7997
    %v7999 = vpop.f32.mrf.mxu0
    %v8000 = vpop.f32.mrf.mxu0
    %v8001 = vadd.f32 %v7960, %v8000
    %v8002 = vpop.f32.mrf.mxu0
    %8003 = vdwg.mxu0
    %8004 = vmatprep.subr.bf16.mxu0 0
    %8005 = vmatpush1.bf16.msra.mxu0 %v7630
    %8006 = vmatprep.subr.bf16.mxu0 0
    %8007 = vmatpush1.bf16.msra.mxu0 %v7629
    %8008 = vmatprep.subr.bf16.mxu0 0
    %8009 = vmatpush1.bf16.msra.mxu0 %v7628
    %8010 = vmatprep.subr.bf16.mxu0 0
    %8011 = vmatpush1.bf16.msra.mxu0 %v7627
    %8012 = vmatprep.subr.bf16.mxu0 0
    %8013 = vmatpush1.bf16.msra.mxu0 %v7626
    %8014 = vmatprep.subr.bf16.mxu0 0
    %8015 = vmatpush1.bf16.msra.mxu0 %v7625
    %8016 = vmatprep.subr.bf16.mxu0 0
    %8017 = vmatpush1.bf16.msra.mxu0 %v7624
    %8018 = vmatprep.subr.bf16.mxu0 0
    %8019 = vmatpush1.bf16.msra.mxu0 %v7623
    %8020 = vmatprep.subr.bf16.mxu0 0
    %8021 = vmatpush2.bf16.msra.mxu0 %v7638
    %8022 = vmatprep.subr.bf16.mxu0 0
    %8023 = vmatpush2.bf16.msra.mxu0 %v7637
    %8024 = vmatprep.subr.bf16.mxu0 0
    %8025 = vmatpush2.bf16.msra.mxu0 %v7636
    %8026 = vmatprep.subr.bf16.mxu0 0
    %8027 = vmatpush2.bf16.msra.mxu0 %v7635
    %8028 = vmatprep.subr.bf16.mxu0 0
    %8029 = vmatpush2.bf16.msra.mxu0 %v7634
    %8030 = vmatprep.subr.bf16.mxu0 0
    %8031 = vmatpush2.bf16.msra.mxu0 %v7633
    %8032 = vmatprep.subr.bf16.mxu0 0
    %8033 = vmatpush2.bf16.msra.mxu0 %v7632
    %8034 = vmatprep.subr.bf16.mxu0 0
    %8035 = vmatpush2.bf16.msra.mxu0 %v7631
    %8036 = vmatprep.mubr.bf16.mxu0 %v6761
    %8037 = vmatmul.mubr.bf16.gmra.mxu0 %v6760
    %v8038 = vpop.f32.mrf.mxu0
    %v8039 = vadd.f32 %v7998, %v8038
    %v8040 = vpop.f32.mrf.mxu0
    %v8041 = vpop.f32.mrf.mxu0
    %v8042 = vadd.f32 %v8001, %v8041
    %v8043 = vpop.f32.mrf.mxu0
    %8044 = vdwg.mxu0
    %8045 = vmatprep.subr.bf16.mxu0 0
    %8046 = vmatpush1.bf16.msra.mxu0 %v7646
    %8047 = vmatprep.subr.bf16.mxu0 0
    %8048 = vmatpush1.bf16.msra.mxu0 %v7645
    %8049 = vmatprep.subr.bf16.mxu0 0
    %8050 = vmatpush1.bf16.msra.mxu0 %v7644
    %8051 = vmatprep.subr.bf16.mxu0 0
    %8052 = vmatpush1.bf16.msra.mxu0 %v7643
    %8053 = vmatprep.subr.bf16.mxu0 0
    %8054 = vmatpush1.bf16.msra.mxu0 %v7642
    %8055 = vmatprep.subr.bf16.mxu0 0
    %8056 = vmatpush1.bf16.msra.mxu0 %v7641
    %8057 = vmatprep.subr.bf16.mxu0 0
    %8058 = vmatpush1.bf16.msra.mxu0 %v7640
    %8059 = vmatprep.subr.bf16.mxu0 0
    %8060 = vmatpush1.bf16.msra.mxu0 %v7639
    %8061 = vmatprep.subr.bf16.mxu0 0
    %8062 = vmatpush2.bf16.msra.mxu0 %v7654
    %8063 = vmatprep.subr.bf16.mxu0 0
    %8064 = vmatpush2.bf16.msra.mxu0 %v7653
    %8065 = vmatprep.subr.bf16.mxu0 0
    %8066 = vmatpush2.bf16.msra.mxu0 %v7652
    %8067 = vmatprep.subr.bf16.mxu0 0
    %8068 = vmatpush2.bf16.msra.mxu0 %v7651
    %8069 = vmatprep.subr.bf16.mxu0 0
    %8070 = vmatpush2.bf16.msra.mxu0 %v7650
    %8071 = vmatprep.subr.bf16.mxu0 0
    %8072 = vmatpush2.bf16.msra.mxu0 %v7649
    %8073 = vmatprep.subr.bf16.mxu0 0
    %8074 = vmatpush2.bf16.msra.mxu0 %v7648
    %8075 = vmatprep.subr.bf16.mxu0 0
    %8076 = vmatpush2.bf16.msra.mxu0 %v7647
    %8077 = vmatprep.mubr.bf16.mxu0 %v6763
    %8078 = vmatmul.mubr.bf16.gmra.mxu0 %v6762
    %v8079 = vpop.f32.mrf.mxu0
    %v8080 = vadd.f32 %v8039, %v8079
    %v8081 = vpop.f32.mrf.mxu0
    %v8082 = vpop.f32.mrf.mxu0
    %v8083 = vadd.f32 %v8042, %v8082
    %v8084 = vpop.f32.mrf.mxu0
    %8085 = vdwg.mxu0
    %8086 = vmatprep.subr.bf16.mxu0 0
    %8087 = vmatpush1.bf16.msra.mxu0 %v7662
    %8088 = vmatprep.subr.bf16.mxu0 0
    %8089 = vmatpush1.bf16.msra.mxu0 %v7661
    %8090 = vmatprep.subr.bf16.mxu0 0
    %8091 = vmatpush1.bf16.msra.mxu0 %v7660
    %8092 = vmatprep.subr.bf16.mxu0 0
    %8093 = vmatpush1.bf16.msra.mxu0 %v7659
    %8094 = vmatprep.subr.bf16.mxu0 0
    %8095 = vmatpush1.bf16.msra.mxu0 %v7658
    %8096 = vmatprep.subr.bf16.mxu0 0
    %8097 = vmatpush1.bf16.msra.mxu0 %v7657
    %8098 = vmatprep.subr.bf16.mxu0 0
    %8099 = vmatpush1.bf16.msra.mxu0 %v7656
    %8100 = vmatprep.subr.bf16.mxu0 0
    %8101 = vmatpush1.bf16.msra.mxu0 %v7655
    %8102 = vmatprep.subr.bf16.mxu0 0
    %8103 = vmatpush2.bf16.msra.mxu0 %v7670
    %8104 = vmatprep.subr.bf16.mxu0 0
    %8105 = vmatpush2.bf16.msra.mxu0 %v7669
    %8106 = vmatprep.subr.bf16.mxu0 0
    %8107 = vmatpush2.bf16.msra.mxu0 %v7668
    %8108 = vmatprep.subr.bf16.mxu0 0
    %8109 = vmatpush2.bf16.msra.mxu0 %v7667
    %8110 = vmatprep.subr.bf16.mxu0 0
    %8111 = vmatpush2.bf16.msra.mxu0 %v7666
    %8112 = vmatprep.subr.bf16.mxu0 0
    %8113 = vmatpush2.bf16.msra.mxu0 %v7665
    %8114 = vmatprep.subr.bf16.mxu0 0
    %8115 = vmatpush2.bf16.msra.mxu0 %v7664
    %8116 = vmatprep.subr.bf16.mxu0 0
    %8117 = vmatpush2.bf16.msra.mxu0 %v7663
    %8118 = vmatprep.mubr.bf16.mxu0 %v6765
    %8119 = vmatmul.mubr.bf16.gmra.mxu0 %v6764
    %v8120 = vpop.f32.mrf.mxu0
    %v8121 = vadd.f32 %v8080, %v8120
    %v8122 = vpop.f32.mrf.mxu0
    %v8123 = vpop.f32.mrf.mxu0
    %v8124 = vadd.f32 %v8083, %v8123
    %v8125 = vpop.f32.mrf.mxu0
    %8126 = vdwg.mxu0
    %v8127 = vadd.f32 %v5898, %v8121
    %v8128 = vadd.f32 %v5899, %v8124
    %s8129 = scalar_lea.vmem %s13, 1
    %v8130 = vld [vmem:[%s8129] sm:$0x1]
    %s8131 = scalar_lea.vmem %s14, 1
    %v8132 = vld [vmem:[%s8131] sm:$0x1]
    %v8133 = vsel %vm207, %v8127, 0.0
    %8134 = vadd.xlane.f32.xlu0 %v8133
    %v8135 = vpop.xlane.xlu0 %8134
    %v8136 = vsel %vm207, %v8128, 0.0
    %8137 = vadd.xlane.f32.xlu0 %v8136
    %v8138 = vpop.xlane.xlu0 %8137
    %v8139 = vmul.f32 %v8135, %v1860
    %v8140 = vmul.f32 %v8138, %v1860
    %v8141 = vsub.f32 %v8127, %v8139
    %v8142 = vsub.f32 %v8128, %v8140
    %v8143 = vmul.f32 %v8141, %v8141
    %v8144 = vmul.f32 %v8142, %v8142
    %v8145 = vsel %vm207, %v8143, 0.0
    %8146 = vadd.xlane.f32.xlu0 %v8145
    %v8147 = vpop.xlane.xlu0 %8146
    %v8148 = vsel %vm207, %v8144, 0.0
    %8149 = vadd.xlane.f32.xlu0 %v8148
    %v8150 = vpop.xlane.xlu0 %8149
    %v8151 = vmul.f32 %v8147, %v1860
    %v8152 = vmul.f32 %v8150, %v1860
    %v8153 = vadd.f32 %v8151, 1e-05
    %v8154 = vadd.f32 %v8152, 1e-05
    %v8155 = vrsqrt.pop %v8153
    %v8156 = vrsqrt.pop %v8154
    %v8157 = vmul.f32 %v8141, %v8155
    %v8158 = vmul.f32 %v8142, %v8156
    %v8160 = vlaneseq
    %v8161 = vshrl.u32 %v8160, 7
    %v8162 = vsub.s32 0, %v8161
    %v8163 = vrot.slane %v8130, %v8162
    %v8165 = vmul.f32 %v8157, %v8163
    %v8166 = vmul.f32 %v8158, %v8163
    %v8168 = vlaneseq
    %v8169 = vshrl.u32 %v8168, 7
    %v8170 = vsub.s32 0, %v8169
    %v8171 = vrot.slane %v8132, %v8170
    %v8173 = vadd.f32 %v8165, %v8171
    %v8174 = vadd.f32 %v8166, %v8171
    %v8176 = vrot.slane %v8173, 7
    %v8179 = vrot.slane %v8174, 6
    %vm8181 = vcmask 1040384
    %v8182 = vsel %vm8181, %v8176, %v8179
    %v8183 = vld [vmem:[%s19] sm:$0xff]
    %v8184 = vld [vmem:[%s19 + $0x8] sm:$0xff]
    %v8185 = vld [vmem:[%s19 + $0x10] sm:$0xff]
    %v8186 = vld [vmem:[%s19 + $0x18] sm:$0xff]
    %v8187 = vld [vmem:[%s19 + $0x20] sm:$0xff]
    %v8188 = vld [vmem:[%s19 + $0x28] sm:$0xff]
    %v8189 = vld [vmem:[%s19 + $0x30] sm:$0xff]
    %v8190 = vld [vmem:[%s19 + $0x38] sm:$0xff]
    %v8191 = vld [vmem:[%s20] sm:$0x1]
    %v8193 = vlaneseq
    %v8194 = vshrl.u32 %v8193, 7
    %v8195 = vsub.s32 0, %v8194
    %v8196 = vrot.slane %v8191, %v8195
    %v8199 = vsel %vm207, %v8182, 0
    %8201 = vmatprep.subr.mxu0 0.0
    %8202 = vmatpush1.msra.mxu0 0.0
    %8203 = vmatprep.subr.mxu0 0.0
    %8204 = vmatpush1.msra.mxu0 0.0
    %8205 = vmatprep.subr.mxu0 0.0
    %8206 = vmatpush1.msra.mxu0 0.0
    %8207 = vmatprep.subr.mxu0 0.0
    %8208 = vmatpush1.msra.mxu0 0.0
    %8209 = vmatprep.subr.mxu0 0.0
    %8210 = vmatpush1.msra.mxu0 0.0
    %8211 = vmatprep.subr.mxu0 0.0
    %8212 = vmatpush1.msra.mxu0 0.0
    %8213 = vmatprep.subr.mxu0 0.0
    %8214 = vmatpush1.msra.mxu0 0.0
    %8215 = vmatprep.subr.mxu0 0.0
    %8216 = vmatpush1.msra.mxu0 0.0
    %8217 = vmatprep.subr.mxu0 0.0
    %8218 = vmatpush1.msra.mxu0 %v8190
    %8219 = vmatprep.subr.mxu0 0.0
    %8220 = vmatpush1.msra.mxu0 %v8189
    %8221 = vmatprep.subr.mxu0 0.0
    %8222 = vmatpush1.msra.mxu0 %v8188
    %8223 = vmatprep.subr.mxu0 0.0
    %8224 = vmatpush1.msra.mxu0 %v8187
    %8225 = vmatprep.subr.mxu0 0.0
    %8226 = vmatpush1.msra.mxu0 %v8186
    %8227 = vmatprep.subr.mxu0 0.0
    %8228 = vmatpush1.msra.mxu0 %v8185
    %8229 = vmatprep.subr.mxu0 0.0
    %8230 = vmatpush1.msra.mxu0 %v8184
    %8231 = vmatprep.subr.mxu0 0.0
    %8232 = vmatpush1.msra.mxu0 %v8183
    %8233 = vmatprep.subr.mxu0 0.0
    %8234 = vmatpush2.msra.mxu0 0.0
    %8235 = vmatprep.subr.mxu0 0.0
    %8236 = vmatpush2.msra.mxu0 0.0
    %8237 = vmatprep.subr.mxu0 0.0
    %8238 = vmatpush2.msra.mxu0 0.0
    %8239 = vmatprep.subr.mxu0 0.0
    %8240 = vmatpush2.msra.mxu0 0.0
    %8241 = vmatprep.subr.mxu0 0.0
    %8242 = vmatpush2.msra.mxu0 0.0
    %8243 = vmatprep.subr.mxu0 0.0
    %8244 = vmatpush2.msra.mxu0 0.0
    %8245 = vmatprep.subr.mxu0 0.0
    %8246 = vmatpush2.msra.mxu0 0.0
    %8247 = vmatprep.subr.mxu0 0.0
    %8248 = vmatpush2.msra.mxu0 0.0
    %8249 = vmatprep.subr.mxu0 0.0
    %8250 = vmatpush2.msra.mxu0 0.0
    %8251 = vmatprep.subr.mxu0 0.0
    %8252 = vmatpush2.msra.mxu0 0.0
    %8253 = vmatprep.subr.mxu0 0.0
    %8254 = vmatpush2.msra.mxu0 0.0
    %8255 = vmatprep.subr.mxu0 0.0
    %8256 = vmatpush2.msra.mxu0 0.0
    %8257 = vmatprep.subr.mxu0 0.0
    %8258 = vmatpush2.msra.mxu0 0.0
    %8259 = vmatprep.subr.mxu0 0.0
    %8260 = vmatpush2.msra.mxu0 0.0
    %8261 = vmatprep.subr.mxu0 0.0
    %8262 = vmatpush2.msra.mxu0 0.0
    %8263 = vmatprep.subr.mxu0 0.0
    %8264 = vmatpush2.msra.mxu0 0.0
    %8265 = vmatprep.mubr.f32.mxu0 0.0
    %8266 = vmatmul.mubr.f32.gmra.mxu0 %v8199
    %v8267 = vpop.f32.mrf.mxu0
    %v8268 = vadd.f32 %v8196, %v8267
    %v8269 = vpop.f32.mrf.mxu0
    %8270 = vdwg.mxu0
    %vm8271 = vcmask 41984
    %8272 = vst.msk [vmem:[#allocation2] sm:$0x3] %vm8271, %v8268
    // Predicated region
    $region86: #{tpu_custom_call.1} parent=1 // pred_check
      _
    $region87: #{tpu_custom_call.1} parent=1 // pred_check_branch
      %8274 = sbr.rel (0) target = $region89
    $region88: #{tpu_custom_call.1} parent=1 // pred_region
      %s8276 = ssub.s32 32, 32
      %8277 = vsyncadd [#allocation3], %s8276
      %s8279 = sshll.u32 [#allocation2], 4
      %s8280 = int_to_ptr.vmem [resolvable:$true] %s8279
      %8282 = dma.vmem_to_hbm [thread:$0]  %s8280, 32, %s21, [#allocation3]
    $region89: #{tpu_custom_call.1} parent=1 // pred_fallthru
      _
    // Predicated region
    $region90: #{tpu_custom_call.1} parent=1 // pred_check
      _
    $region91: #{tpu_custom_call.1} parent=1 // pred_check_branch
      %8284 = sbr.rel (0) target = $region93
    $region92: #{tpu_custom_call.1} parent=1 // pred_region
      %8285 = dma.done [#allocation3], 32
    $region93: #{tpu_custom_call.1} parent=1 // pred_fallthru
      _
    %8286 = vsyncpa [#allocation3], 1

</llo_original>
